<compile_context>
chip_gen: v6e
topology: v6e:2x2x1
jax: 0.10.0
libtpu: 0.0.40
codegen_flags: <defaults>
</compile_context>

<pallas_src>
import functools

import jax
import jax.numpy as jnp
import numpy as np
from jax.experimental import pallas as pl
from jax.experimental.pallas import tpu as pltpu


def _round_up(n, m):
    return ((n + m - 1) // m) * m


# --------------------------- per-generation tuning ---------------------------

def _device_caps():
    kind = ""
    try:
        kind = jax.devices()[0].device_kind.lower()
    except Exception:
        pass
    is_v7 = "v7" in kind
    # v7x: 64 MiB physical VMEM and 2 TCs/chip; v5e/v6e: 128 MiB, 1 TC.
    vmem_cap = (48 << 20) if is_v7 else (96 << 20)
    min_grid = 2 if is_v7 else 1
    return vmem_cap, min_grid


def _vmem_estimate(BT, L, Lp, Cpi, Cpo, K):
    bf2, f4 = 2, 4
    est = 2 * BT * Lp * Cpi * bf2                               # x tile (2-buf)
    est += 4 * BT * Cpo * f4                                    # FiLM scale/bias
    est += 2 * BT * L * Cpo * f4                                # out tile (2-buf)
    est += (K * Cpi * Cpo + K * Cpo * Cpo + Cpi * Cpo) * bf2    # weights (1-buf)
    est += BT * Lp * Cpo * f4                                   # conv2 staging
    est += BT * L * K * max(Cpi, Cpo) * bf2                     # packed operand
    est += 4 * BT * L * Cpo * f4                                # live f32 temps
    return est


def _choose_batch_tile(B, L, target_rows, min_grid):
    best = 1
    for bt in range(1, B + 1):
        if B % bt:
            continue
        if bt * L > target_rows:
            continue
        if (B // bt) < min_grid:
            continue
        if bt > best:
            best = bt
    return best


# ----------------------------- in-kernel helpers -----------------------------

def _mish(x):
    # mish(x) = x * tanh(softplus(x)) = x * ((1+e^x)^2 - 1) / ((1+e^x)^2 + 1)
    # One exp + one approx reciprocal (both EUP); clamp avoids f32 overflow.
    t = jnp.exp(jnp.minimum(x, 20.0))
    u = (1.0 + t) * (1.0 + t)
    return x * (u - 1.0) * pl.reciprocal(u + 1.0, approx=True)


def _group_norm(h, gamma, beta, M, MT, inv_n, eps=1e-5):
    # h: (BT, L, C) f32.  gamma/beta: (1, C).  M: (C, G) 0/1 membership with
    # zero rows for padded channels; MT = M.T.  Stats via one stacked matmul.
    BT = h.shape[0]
    ch_sum = jnp.sum(h, axis=1)                               # (BT, C)
    ch_sumsq = jnp.sum(h * h, axis=1)                         # (BT, C)
    stats = jnp.concatenate([ch_sum, ch_sumsq], axis=0)       # (2BT, C)
    g = jnp.dot(stats, M, preferred_element_type=jnp.float32) * inv_n
    g_mean = g[:BT]                                           # (BT, G)
    g_var = jnp.maximum(g[BT:] - g_mean * g_mean, 0.0)
    back = jnp.dot(jnp.concatenate([g_mean, g_var], axis=0), MT,
                   preferred_element_type=jnp.float32)        # (2BT, C)
    mean_c = back[:BT][:, None, :]
    var_c = back[BT:][:, None, :]
    hn = (h - mean_c) * jax.lax.rsqrt(var_c + eps)
    return hn * gamma + beta


# --------------------------------- the kernel --------------------------------

def _cond_res_block_kernel(*refs, L, pad, K, inv_n, has_res_conv):
    if has_res_conv:
        (xp_ref, sc_ref, bi_ref,
         w1_ref, b1_ref, g1_ref, bt1_ref,
         w2_ref, b2_ref, g2_ref, bt2_ref,
         m_ref, mt_ref, wr_ref, br_ref, o_ref, hp_ref) = refs
    else:
        (xp_ref, sc_ref, bi_ref,
         w1_ref, b1_ref, g1_ref, bt1_ref,
         w2_ref, b2_ref, g2_ref, bt2_ref,
         m_ref, mt_ref, o_ref, hp_ref) = refs

    BT, _, Cpo = o_ref.shape
    Cpi = xp_ref.shape[2]
    bf16 = jnp.bfloat16
    M = m_ref[...]
    MT = mt_ref[...]

    # --- block[0]: Conv1d (single packed-K matmul) -> GroupNorm -> Mish ---
    # Slice the bf16 input ref per tap (nothing big stays live), pack the K
    # shifted views along lanes and contract once against (K*Cpi, Cpo).
    xk = jnp.concatenate(
        [xp_ref[:, k:k + L, :].reshape(BT * L, Cpi) for k in range(K)],
        axis=-1)                                              # (BT*L, K*Cpi) bf16
    h = jnp.dot(xk, w1_ref[...], preferred_element_type=jnp.float32)
    h = (h + b1_ref[...]).reshape(BT, L, Cpo)
    h = _group_norm(h, g1_ref[...], bt1_ref[...], M, MT, inv_n)
    h = _mish(h)

    # --- FiLM conditioning (scale/bias precomputed per batch in the wrapper) ---
    h = sc_ref[...] * h + bi_ref[...]                          # (BT,1,C) bcast

    # --- stage conv2 input in a VMEM scratch ref (no value-level concat) ---
    zpad = jnp.zeros((BT, pad, Cpo), hp_ref.dtype)
    hp_ref[:, 0:pad, :] = zpad
    hp_ref[:, L + pad:L + 2 * pad, :] = zpad
    hp_ref[:, pad:pad + L, :] = h

    # --- block[1]: Conv1d (packed-K matmul) -> GroupNorm -> Mish ---
    hk = jnp.concatenate(
        [hp_ref[:, k:k + L, :].reshape(BT * L, Cpo).astype(bf16)
         for k in range(K)], axis=-1)                          # (BT*L, K*Cpo)
    h = jnp.dot(hk, w2_ref[...], preferred_element_type=jnp.float32)
    h = (h + b2_ref[...]).reshape(BT, L, Cpo)
    h = _group_norm(h, g2_ref[...], bt2_ref[...], M, MT, inv_n)
    h = _mish(h)

    # --- residual branch: re-read the center window from the input ref ---
    xc = xp_ref[:, pad:pad + L, :]                             # (BT, L, Cpi) bf16
    if has_res_conv:
        res = jnp.dot(xc.reshape(BT * L, Cpi), wr_ref[...],
                      preferred_element_type=jnp.float32)
        res = (res + br_ref[...]).reshape(BT, L, Cpo)
    else:
        res = xc.astype(jnp.float32)                           # Cin == Cout

    o_ref[...] = (h + res).astype(o_ref.dtype)                 # lane-dense store


# ------------------------------ python wrapper --------------------------------

def cond_res_block_1d(x_BCL, cond_BC, params, *, num_groups=8,
                      cond_predict_scale=False, batch_tile=None,
                      target_rows=1024):
    """NCL in / NCL out, exactly like the PyTorch module (x: [B, C_in, L])."""
    B, Cin, L = x_BCL.shape
    Cout, _, K = params["conv1_w"].shape
    pad = K // 2
    Lp = L + 2 * pad
    Cpi = _round_up(Cin, 128)
    Cpo = _round_up(Cout, 128)
    has_res_conv = params.get("res_w") is not None
    if not has_res_conv:
        assert Cin == Cout, "identity residual requires Cin == Cout"

    vmem_cap, min_grid = _device_caps()
    BT = batch_tile if batch_tile is not None else \
        _choose_batch_tile(B, L, target_rows, min_grid)
    # Shrink BT until the per-step VMEM estimate fits the generation's budget.
    while BT > 1 and _vmem_estimate(BT, L, Lp, Cpi, Cpo, K) > vmem_cap:
        BT = max(bt for bt in range(1, BT) if B % bt == 0)
    assert B % BT == 0
    # TODO(synk): for long L, add a second grid axis over L (per-group GN stats
    # would then need a cross-L reduction pass); full-L blocks assumed here.

    f32, bf16 = jnp.float32, jnp.bfloat16

    # Activations: channel-last, L pre-padded, channels lane-padded with zeros,
    # shipped in bf16 (halves HBM read bytes of the biggest per-step block).
    x_blc = jnp.transpose(x_BCL, (0, 2, 1)).astype(f32)
    x_pad = jnp.pad(x_blc, ((0, 0), (pad, pad), (0, Cpi - Cin))).astype(bf16)
    # TODO(synk): the wrapper transpose/pad/slice are extra HBM passes; reading
    # NCL directly and transposing on the idle XLU in-kernel would remove them.

    # cond_encoder (Mish -> Linear) hoisted; FiLM scale/bias pre-split & padded.
    c = cond_BC.astype(f32)
    emb = (c * jnp.tanh(jax.nn.softplus(c))) @ params["lin_w"].T.astype(f32) \
        + params["lin_b"].astype(f32)
    if cond_predict_scale:
        scale, bias = emb[:, :Cout], emb[:, Cout:]
    else:
        scale, bias = jnp.ones_like(emb), emb
    scale_p = jnp.pad(scale, ((0, 0), (0, Cpo - Cout)))[:, None, :]   # (B,1,Cpo)
    bias_p = jnp.pad(bias, ((0, 0), (0, Cpo - Cout)))[:, None, :]

    # Conv weights packed once for the single-matmul K-tap contraction.
    def pack_conv_w(w, ci_p, co_p):            # (Co,Ci,K) -> (K*ci_p, co_p) bf16
        kk = w.shape[2]
        wt = jnp.transpose(w, (2, 1, 0)).astype(f32)            # (K, Ci, Co)
        wt = jnp.pad(wt, ((0, 0), (0, ci_p - w.shape[1]),
                          (0, co_p - w.shape[0])))
        return wt.reshape(kk * ci_p, co_p).astype(bf16)

    def pad_vec(v):                            # (Cout,) -> (1, Cpo) f32
        return jnp.pad(v.astype(f32), (0, Cpo - Cout))[None, :]

    w1 = pack_conv_w(params["conv1_w"], Cpi, Cpo)
    w2 = pack_conv_w(params["conv2_w"], Cpo, Cpo)
    b1, g1, bt1 = map(pad_vec, (params["conv1_b"], params["gn1_g"], params["gn1_b"]))
    b2, g2, bt2 = map(pad_vec, (params["conv2_b"], params["gn2_g"], params["gn2_b"]))

    # Group-membership matrix (zero rows for padded channels).
    cg = Cout // num_groups
    M_np = np.zeros((Cpo, num_groups), np.float32)
    for ch in range(Cout):
        M_np[ch, ch // cg] = 1.0
    M = jnp.asarray(M_np)                       # (Cpo, G)
    MT = jnp.asarray(M_np.T)                    # (G, Cpo)
    inv_n = 1.0 / float(L * cg)

    operands = [x_pad, scale_p, bias_p, w1, b1, g1, bt1, w2, b2, g2, bt2, M, MT]
    if has_res_conv:
        wr = jnp.pad(params["res_w"][:, :, 0].T.astype(f32),
                     ((0, Cpi - Cin), (0, Cpo - Cout))).astype(bf16)
        operands += [wr, pad_vec(params["res_b"])]

    kernel = functools.partial(_cond_res_block_kernel, L=L, pad=pad, K=K,
                               inv_n=inv_n, has_res_conv=has_res_conv)

    vmem_limit = int(min(vmem_cap,
                         max(32 << 20,
                             2 * _vmem_estimate(BT, L, Lp, Cpi, Cpo, K))))

    def build(single_buffer_invariants):
        inv_kwargs = {}
        if single_buffer_invariants and hasattr(pl, "Buffered"):
            # Grid-invariant operands: no point double-buffering them.
            inv_kwargs = dict(pipeline_mode=pl.Buffered(1))

        def _full(arr):
            n = arr.ndim
            return pl.BlockSpec(arr.shape, lambda i, _n=n: (0,) * _n,
                                **inv_kwargs)

        in_specs = [
            pl.BlockSpec((BT, Lp, Cpi), lambda i: (i, 0, 0)),
            pl.BlockSpec((BT, 1, Cpo), lambda i: (i, 0, 0)),
            pl.BlockSpec((BT, 1, Cpo), lambda i: (i, 0, 0)),
        ] + [_full(a) for a in operands[3:]]

        return pl.pallas_call(
            kernel,
            out_shape=jax.ShapeDtypeStruct((B, L, Cpo), x_BCL.dtype),
            grid=(B // BT,),
            in_specs=in_specs,
            out_specs=pl.BlockSpec((BT, L, Cpo), lambda i: (i, 0, 0)),
            scratch_shapes=[pltpu.VMEM((BT, Lp, Cpo), jnp.float32)],
            compiler_params=pltpu.CompilerParams(
                dimension_semantics=("parallel",),
                vmem_limit_bytes=vmem_limit),
        )

    try:
        out_blc = build(True)(*operands)
    except Exception:
        # Fall back to default double-buffering if Buffered(1) is unsupported.
        out_blc = build(False)(*operands)

    # Strip channel padding, back to NCL.
    return jnp.transpose(out_blc[:, :, :Cout], (0, 2, 1))


# ------------------------- deterministic parameter init -----------------------

def make_params(key, inp_channels, out_channels, cond_dim, kernel_size,
                cond_predict_scale):
    cond_channels = out_channels * 2 if cond_predict_scale else out_channels
    ks = jax.random.split(key, 8)

    def u(k, shape, fan_in):
        bound = 1.0 / np.sqrt(fan_in)
        return jax.random.uniform(k, shape, jnp.float32, -bound, bound)

    p = {
        "conv1_w": u(ks[0], (out_channels, inp_channels, kernel_size),
                     inp_channels * kernel_size),
        "conv1_b": u(ks[1], (out_channels,), inp_channels * kernel_size),
        "gn1_g": jnp.ones((out_channels,), jnp.float32),
        "gn1_b": jnp.zeros((out_channels,), jnp.float32),
        "conv2_w": u(ks[2], (out_channels, out_channels, kernel_size),
                     out_channels * kernel_size),
        "conv2_b": u(ks[3], (out_channels,), out_channels * kernel_size),
        "gn2_g": jnp.ones((out_channels,), jnp.float32),
        "gn2_b": jnp.zeros((out_channels,), jnp.float32),
        "lin_w": u(ks[4], (cond_channels, cond_dim), cond_dim),
        "lin_b": u(ks[5], (cond_channels,), cond_dim),
    }
    if inp_channels != out_channels:
        p["res_w"] = u(ks[6], (out_channels, inp_channels, 1), inp_channels)
        p["res_b"] = u(ks[7], (out_channels,), inp_channels)
    else:
        p["res_w"] = None
        p["res_b"] = None
    return p


# ----------------------------- pure-JAX reference ------------------------------

def ref_forward(x_BCL, cond_BC, params, *, num_groups=8, cond_predict_scale=False):
    def mish(v):
        return v * jnp.tanh(jax.nn.softplus(v))

    def conv1d(x, w, b):
        pad = w.shape[-1] // 2
        y = jax.lax.conv_general_dilated(
            x, w, (1,), [(pad, pad)], dimension_numbers=("NCH", "OIH", "NCH"))
        return y + b[None, :, None]

    def gn(x, gamma, beta, G, eps=1e-5):
        B, C, L = x.shape
        xg = x.reshape(B, G, C // G, L)
        mean = xg.mean(axis=(2, 3), keepdims=True)
        var = ((xg - mean) ** 2).mean(axis=(2, 3), keepdims=True)
        xn = ((xg - mean) / jnp.sqrt(var + eps)).reshape(B, C, L)
        return xn * gamma[None, :, None] + beta[None, :, None]

    Cout = params["conv1_w"].shape[0]
    h = mish(gn(conv1d(x_BCL, params["conv1_w"], params["conv1_b"]),
                params["gn1_g"], params["gn1_b"], num_groups))
    emb = mish(cond_BC) @ params["lin_w"].T + params["lin_b"]
    if cond_predict_scale:
        emb = emb.reshape(emb.shape[0], 2, Cout)
        h = emb[:, 0, :, None] * h + emb[:, 1, :, None]
    else:
        h = h + emb[:, :, None]
    h = mish(gn(conv1d(h, params["conv2_w"], params["conv2_b"]),
                params["gn2_g"], params["gn2_b"], num_groups))
    if params.get("res_w") is not None:
        res = conv1d(x_BCL, params["res_w"], params["res_b"])
    else:
        res = x_BCL
    return h + res


# ------------------------------------ main -------------------------------------

if __name__ == "__main__":
    def run_case(B, Cin, Cout, L, cond_dim, K, G, cps, key):
        kx, kc, kp = jax.random.split(key, 3)
        x = jax.random.normal(kx, (B, Cin, L), jnp.float32)     # NCL like Conv1d
        cond = jax.random.normal(kc, (B, cond_dim), jnp.float32)
        params = make_params(kp, Cin, Cout, cond_dim, K, cps)

        out = cond_res_block_1d(x, cond, params, num_groups=G,
                                cond_predict_scale=cps)
        out = jax.block_until_ready(out)
        assert out.shape == (B, Cout, L), out.shape

        ref = ref_forward(x, cond, params, num_groups=G, cond_predict_scale=cps)
        np.testing.assert_allclose(np.asarray(out), np.asarray(ref),
                                   atol=5e-2, rtol=5e-2)

    key = jax.random.PRNGKey(0)
    k1, k2 = jax.random.split(key)
    # Case 1: residual 1x1 conv path (Cin != Cout), FiLM scale + bias, K=3.
    run_case(B=8, Cin=8, Cout=16, L=16, cond_dim=32, K=3, G=8, cps=True, key=k1)
    # Case 2: identity residual path (Cin == Cout), additive conditioning, K=5.
    run_case(B=4, Cin=16, Cout=16, L=16, cond_dim=16, K=5, G=4, cps=False, key=k2)

    print("KERNEL_OK")
</pallas_src>

<mosaic_0001>
module attributes {stable_mosaic.version = 11 : i64} {
  func.func @_cond_res_block_kernel(%arg0: i32, %arg1: memref<8x18x128xbf16, #tpu.memory_space<vmem>>, %arg2: memref<8x1x128xf32, #tpu.memory_space<vmem>>, %arg3: memref<8x1x128xf32, #tpu.memory_space<vmem>>, %arg4: memref<384x128xbf16, #tpu.memory_space<vmem>>, %arg5: memref<1x128xf32, #tpu.memory_space<vmem>>, %arg6: memref<1x128xf32, #tpu.memory_space<vmem>>, %arg7: memref<1x128xf32, #tpu.memory_space<vmem>>, %arg8: memref<384x128xbf16, #tpu.memory_space<vmem>>, %arg9: memref<1x128xf32, #tpu.memory_space<vmem>>, %arg10: memref<1x128xf32, #tpu.memory_space<vmem>>, %arg11: memref<1x128xf32, #tpu.memory_space<vmem>>, %arg12: memref<128x8xf32, #tpu.memory_space<vmem>>, %arg13: memref<8x128xf32, #tpu.memory_space<vmem>>, %arg14: memref<128x128xbf16, #tpu.memory_space<vmem>>, %arg15: memref<1x128xf32, #tpu.memory_space<vmem>>, %arg16: memref<8x16x128xf32, #tpu.memory_space<vmem>>, %arg17: memref<8x18x128xf32, #tpu.memory_space<vmem>>) attributes {dimension_semantics = [#tpu.dimension_semantics<parallel>], iteration_bounds = array<i64: 1>, scalar_prefetch = 0 : i64, scratch_operands = 1 : i64, tpu.core_type = #tpu.core_type<tc>, window_params = [{transform_indices = @transform_0, window_bounds = array<i64: 8, 18, 128>}, {transform_indices = @transform_1, window_bounds = array<i64: 8, 1, 128>}, {transform_indices = @transform_2, window_bounds = array<i64: 8, 1, 128>}, {pipeline_mode = #tpu.pipeline_mode<synchronous>, transform_indices = @transform_3, window_bounds = array<i64: 384, 128>}, {pipeline_mode = #tpu.pipeline_mode<synchronous>, transform_indices = @transform_4, window_bounds = array<i64: 1, 128>}, {pipeline_mode = #tpu.pipeline_mode<synchronous>, transform_indices = @transform_5, window_bounds = array<i64: 1, 128>}, {pipeline_mode = #tpu.pipeline_mode<synchronous>, transform_indices = @transform_6, window_bounds = array<i64: 1, 128>}, {pipeline_mode = #tpu.pipeline_mode<synchronous>, transform_indices = @transform_7, window_bounds = array<i64: 384, 128>}, {pipeline_mode = #tpu.pipeline_mode<synchronous>, transform_indices = @transform_8, window_bounds = array<i64: 1, 128>}, {pipeline_mode = #tpu.pipeline_mode<synchronous>, transform_indices = @transform_9, window_bounds = array<i64: 1, 128>}, {pipeline_mode = #tpu.pipeline_mode<synchronous>, transform_indices = @transform_10, window_bounds = array<i64: 1, 128>}, {pipeline_mode = #tpu.pipeline_mode<synchronous>, transform_indices = @transform_11, window_bounds = array<i64: 128, 8>}, {pipeline_mode = #tpu.pipeline_mode<synchronous>, transform_indices = @transform_12, window_bounds = array<i64: 8, 128>}, {pipeline_mode = #tpu.pipeline_mode<synchronous>, transform_indices = @transform_13, window_bounds = array<i64: 128, 128>}, {pipeline_mode = #tpu.pipeline_mode<synchronous>, transform_indices = @transform_14, window_bounds = array<i64: 1, 128>}, {transform_indices = @transform_15, window_bounds = array<i64: 8, 16, 128>}]} {
    %c0 = arith.constant 0 : index
    %c0_0 = arith.constant 0 : index
    %0 = vector.load %arg12[%c0, %c0_0] : memref<128x8xf32, #tpu.memory_space<vmem>>, vector<128x8xf32>
    %c0_1 = arith.constant 0 : index
    %c0_2 = arith.constant 0 : index
    %1 = vector.load %arg13[%c0_1, %c0_2] : memref<8x128xf32, #tpu.memory_space<vmem>>, vector<8x128xf32>
    %c0_3 = arith.constant 0 : index
    %c0_4 = arith.constant 0 : index
    %c0_5 = arith.constant 0 : index
    %2 = vector.load %arg1[%c0_3, %c0_4, %c0_5] : memref<8x18x128xbf16, #tpu.memory_space<vmem>>, vector<8x16x128xbf16>
    %3 = vector.shape_cast %2 : vector<8x16x128xbf16> to vector<128x128xbf16>
    %c0_6 = arith.constant 0 : index
    %c1 = arith.constant 1 : index
    %c0_7 = arith.constant 0 : index
    %4 = vector.load %arg1[%c0_6, %c1, %c0_7] : memref<8x18x128xbf16, #tpu.memory_space<vmem>>, vector<8x16x128xbf16>
    %5 = vector.shape_cast %4 : vector<8x16x128xbf16> to vector<128x128xbf16>
    %c0_8 = arith.constant 0 : index
    %c2 = arith.constant 2 : index
    %c0_9 = arith.constant 0 : index
    %6 = vector.load %arg1[%c0_8, %c2, %c0_9] : memref<8x18x128xbf16, #tpu.memory_space<vmem>>, vector<8x16x128xbf16>
    %7 = vector.shape_cast %6 : vector<8x16x128xbf16> to vector<128x128xbf16>
    %8 = tpu.concatenate %3, %5, %7 in 1 : vector<128x128xbf16>, vector<128x128xbf16>, vector<128x128xbf16> -> vector<128x384xbf16>
    %c0_10 = arith.constant 0 : index
    %c0_11 = arith.constant 0 : index
    %9 = vector.load %arg4[%c0_10, %c0_11] : memref<384x128xbf16, #tpu.memory_space<vmem>>, vector<384x128xbf16>
    %cst = arith.constant dense<0.000000e+00> : vector<128x128xf32>
    %10 = tpu.matmul %8, %9, %cst {dimension_numbers = #tpu.dot_dimension_numbers<[1], [0], [0], [1], [0, 0, 1, 1], [], []>} : vector<128x384xbf16>, vector<384x128xbf16>, vector<128x128xf32> -> vector<128x128xf32>
    %c0_12 = arith.constant 0 : index
    %c0_13 = arith.constant 0 : index
    %11 = vector.load %arg5[%c0_12, %c0_13] : memref<1x128xf32, #tpu.memory_space<vmem>>, vector<1x128xf32>
    %12 = vector.broadcast %11 : vector<1x128xf32> to vector<128x128xf32>
    %13 = arith.addf %10, %12 : vector<128x128xf32>
    %14 = vector.shape_cast %13 : vector<128x128xf32> to vector<8x16x128xf32>
    %c0_14 = arith.constant 0 : index
    %c0_15 = arith.constant 0 : index
    %15 = vector.load %arg6[%c0_14, %c0_15] : memref<1x128xf32, #tpu.memory_space<vmem>>, vector<1x128xf32>
    %c0_16 = arith.constant 0 : index
    %c0_17 = arith.constant 0 : index
    %16 = vector.load %arg7[%c0_16, %c0_17] : memref<1x128xf32, #tpu.memory_space<vmem>>, vector<1x128xf32>
    %cst_18 = arith.constant dense<0.000000e+00> : vector<8x128xf32>
    %17 = vector.multi_reduction <add>, %14, %cst_18 [1] : vector<8x16x128xf32> to vector<8x128xf32>
    %18 = arith.mulf %14, %14 : vector<8x16x128xf32>
    %cst_19 = arith.constant dense<0.000000e+00> : vector<8x128xf32>
    %19 = vector.multi_reduction <add>, %18, %cst_19 [1] : vector<8x16x128xf32> to vector<8x128xf32>
    %20 = tpu.concatenate %17, %19 in 0 : vector<8x128xf32>, vector<8x128xf32> -> vector<16x128xf32>
    %cst_20 = arith.constant dense<0.000000e+00> : vector<16x8xf32>
    %21 = tpu.matmul %20, %0, %cst_20 {dimension_numbers = #tpu.dot_dimension_numbers<[1], [0], [0], [1], [0, 0, 1, 1], [], []>} : vector<16x128xf32>, vector<128x8xf32>, vector<16x8xf32> -> vector<16x8xf32>
    %cst_21 = arith.constant 3.125000e-02 : f32
    %22 = vector.broadcast %cst_21 : f32 to vector<16x8xf32>
    %23 = arith.mulf %21, %22 : vector<16x8xf32>
    %24 = vector.extract_strided_slice %23 {offsets = [0, 0], sizes = [8, 8], strides = [1, 1]} : vector<16x8xf32> to vector<8x8xf32>
    %25 = vector.extract_strided_slice %23 {offsets = [8, 0], sizes = [8, 8], strides = [1, 1]} : vector<16x8xf32> to vector<8x8xf32>
    %26 = arith.mulf %24, %24 : vector<8x8xf32>
    %27 = arith.subf %25, %26 : vector<8x8xf32>
    %cst_22 = arith.constant 0.000000e+00 : f32
    %28 = vector.broadcast %cst_22 : f32 to vector<8x8xf32>
    %29 = arith.maximumf %27, %28 : vector<8x8xf32>
    %30 = tpu.concatenate %24, %29 in 0 : vector<8x8xf32>, vector<8x8xf32> -> vector<16x8xf32>
    %cst_23 = arith.constant dense<0.000000e+00> : vector<16x128xf32>
    %31 = tpu.matmul %30, %1, %cst_23 {dimension_numbers = #tpu.dot_dimension_numbers<[1], [0], [0], [1], [0, 0, 1, 1], [], []>} : vector<16x8xf32>, vector<8x128xf32>, vector<16x128xf32> -> vector<16x128xf32>
    %32 = vector.extract_strided_slice %31 {offsets = [0, 0], sizes = [8, 128], strides = [1, 1]} : vector<16x128xf32> to vector<8x128xf32>
    %33 = vector.shape_cast %32 : vector<8x128xf32> to vector<8x1x128xf32>
    %34 = vector.extract_strided_slice %31 {offsets = [8, 0], sizes = [8, 128], strides = [1, 1]} : vector<16x128xf32> to vector<8x128xf32>
    %35 = vector.shape_cast %34 : vector<8x128xf32> to vector<8x1x128xf32>
    %36 = vector.broadcast %33 : vector<8x1x128xf32> to vector<8x16x128xf32>
    %37 = arith.subf %14, %36 : vector<8x16x128xf32>
    %cst_24 = arith.constant 9.99999974E-6 : f32
    %38 = vector.broadcast %cst_24 : f32 to vector<8x1x128xf32>
    %39 = arith.addf %35, %38 : vector<8x1x128xf32>
    %40 = math.rsqrt %39 : vector<8x1x128xf32>
    %41 = vector.broadcast %40 : vector<8x1x128xf32> to vector<8x16x128xf32>
    %42 = arith.mulf %37, %41 : vector<8x16x128xf32>
    %43 = vector.shape_cast %15 : vector<1x128xf32> to vector<1x1x128xf32>
    %44 = vector.broadcast %43 : vector<1x1x128xf32> to vector<8x16x128xf32>
    %45 = arith.mulf %42, %44 : vector<8x16x128xf32>
    %46 = vector.shape_cast %16 : vector<1x128xf32> to vector<1x1x128xf32>
    %47 = vector.broadcast %46 : vector<1x1x128xf32> to vector<8x16x128xf32>
    %48 = arith.addf %45, %47 : vector<8x16x128xf32>
    %cst_25 = arith.constant 2.000000e+01 : f32
    %49 = vector.broadcast %cst_25 : f32 to vector<8x16x128xf32>
    %50 = arith.minimumf %48, %49 : vector<8x16x128xf32>
    %51 = math.exp %50 : vector<8x16x128xf32>
    %cst_26 = arith.constant 1.000000e+00 : f32
    %52 = vector.broadcast %cst_26 : f32 to vector<8x16x128xf32>
    %53 = arith.addf %52, %51 : vector<8x16x128xf32>
    %cst_27 = arith.constant 1.000000e+00 : f32
    %54 = vector.broadcast %cst_27 : f32 to vector<8x16x128xf32>
    %55 = arith.addf %54, %51 : vector<8x16x128xf32>
    %56 = arith.mulf %53, %55 : vector<8x16x128xf32>
    %cst_28 = arith.constant 1.000000e+00 : f32
    %57 = vector.broadcast %cst_28 : f32 to vector<8x16x128xf32>
    %58 = arith.subf %56, %57 : vector<8x16x128xf32>
    %59 = arith.mulf %48, %58 : vector<8x16x128xf32>
    %cst_29 = arith.constant 1.000000e+00 : f32
    %60 = vector.broadcast %cst_29 : f32 to vector<8x16x128xf32>
    %61 = arith.addf %56, %60 : vector<8x16x128xf32>
    %62 = tpu.reciprocal %61 {approx = true} : vector<8x16x128xf32> -> vector<8x16x128xf32>
    %63 = arith.mulf %59, %62 : vector<8x16x128xf32>
    %c0_30 = arith.constant 0 : index
    %c0_31 = arith.constant 0 : index
    %c0_32 = arith.constant 0 : index
    %64 = vector.load %arg2[%c0_30, %c0_31, %c0_32] : memref<8x1x128xf32, #tpu.memory_space<vmem>>, vector<8x1x128xf32>
    %65 = vector.broadcast %64 : vector<8x1x128xf32> to vector<8x16x128xf32>
    %66 = arith.mulf %65, %63 : vector<8x16x128xf32>
    %c0_33 = arith.constant 0 : index
    %c0_34 = arith.constant 0 : index
    %c0_35 = arith.constant 0 : index
    %67 = vector.load %arg3[%c0_33, %c0_34, %c0_35] : memref<8x1x128xf32, #tpu.memory_space<vmem>>, vector<8x1x128xf32>
    %68 = vector.broadcast %67 : vector<8x1x128xf32> to vector<8x16x128xf32>
    %69 = arith.addf %66, %68 : vector<8x16x128xf32>
    %cst_36 = arith.constant 0.000000e+00 : f32
    %70 = vector.broadcast %cst_36 : f32 to vector<8x1x128xf32>
    %c0_37 = arith.constant 0 : index
    %c0_38 = arith.constant 0 : index
    %c0_39 = arith.constant 0 : index
    %71 = vector.load %arg17[%c0_37, %c0_38, %c0_39] : memref<8x18x128xf32, #tpu.memory_space<vmem>>, vector<8x1x128xf32>
    tpu.vector_store %arg17[%c0_37, %c0_38, %c0_39], %70 {strides = array<i32>} : memref<8x18x128xf32, #tpu.memory_space<vmem>>, vector<8x1x128xf32>,
    %c0_40 = arith.constant 0 : index
    %c17 = arith.constant 17 : index
    %c0_41 = arith.constant 0 : index
    %72 = vector.load %arg17[%c0_40, %c17, %c0_41] : memref<8x18x128xf32, #tpu.memory_space<vmem>>, vector<8x1x128xf32>
    tpu.vector_store %arg17[%c0_40, %c17, %c0_41], %70 {strides = array<i32>} : memref<8x18x128xf32, #tpu.memory_space<vmem>>, vector<8x1x128xf32>,
    %c0_42 = arith.constant 0 : index
    %c1_43 = arith.constant 1 : index
    %c0_44 = arith.constant 0 : index
    %73 = vector.load %arg17[%c0_42, %c1_43, %c0_44] : memref<8x18x128xf32, #tpu.memory_space<vmem>>, vector<8x16x128xf32>
    tpu.vector_store %arg17[%c0_42, %c1_43, %c0_44], %69 {strides = array<i32>} : memref<8x18x128xf32, #tpu.memory_space<vmem>>, vector<8x16x128xf32>,
    %c0_45 = arith.constant 0 : index
    %c0_46 = arith.constant 0 : index
    %c0_47 = arith.constant 0 : index
    %74 = vector.load %arg17[%c0_45, %c0_46, %c0_47] : memref<8x18x128xf32, #tpu.memory_space<vmem>>, vector<8x16x128xf32>
    %75 = vector.shape_cast %74 : vector<8x16x128xf32> to vector<128x128xf32>
    %76 = arith.truncf %75 : vector<128x128xf32> to vector<128x128xbf16>
    %c0_48 = arith.constant 0 : index
    %c1_49 = arith.constant 1 : index
    %c0_50 = arith.constant 0 : index
    %77 = vector.load %arg17[%c0_48, %c1_49, %c0_50] : memref<8x18x128xf32, #tpu.memory_space<vmem>>, vector<8x16x128xf32>
    %78 = vector.shape_cast %77 : vector<8x16x128xf32> to vector<128x128xf32>
    %79 = arith.truncf %78 : vector<128x128xf32> to vector<128x128xbf16>
    %c0_51 = arith.constant 0 : index
    %c2_52 = arith.constant 2 : index
    %c0_53 = arith.constant 0 : index
    %80 = vector.load %arg17[%c0_51, %c2_52, %c0_53] : memref<8x18x128xf32, #tpu.memory_space<vmem>>, vector<8x16x128xf32>
    %81 = vector.shape_cast %80 : vector<8x16x128xf32> to vector<128x128xf32>
    %82 = arith.truncf %81 : vector<128x128xf32> to vector<128x128xbf16>
    %83 = tpu.concatenate %76, %79, %82 in 1 : vector<128x128xbf16>, vector<128x128xbf16>, vector<128x128xbf16> -> vector<128x384xbf16>
    %c0_54 = arith.constant 0 : index
    %c0_55 = arith.constant 0 : index
    %84 = vector.load %arg8[%c0_54, %c0_55] : memref<384x128xbf16, #tpu.memory_space<vmem>>, vector<384x128xbf16>
    %cst_56 = arith.constant dense<0.000000e+00> : vector<128x128xf32>
    %85 = tpu.matmul %83, %84, %cst_56 {dimension_numbers = #tpu.dot_dimension_numbers<[1], [0], [0], [1], [0, 0, 1, 1], [], []>} : vector<128x384xbf16>, vector<384x128xbf16>, vector<128x128xf32> -> vector<128x128xf32>
    %c0_57 = arith.constant 0 : index
    %c0_58 = arith.constant 0 : index
    %86 = vector.load %arg9[%c0_57, %c0_58] : memref<1x128xf32, #tpu.memory_space<vmem>>, vector<1x128xf32>
    %87 = vector.broadcast %86 : vector<1x128xf32> to vector<128x128xf32>
    %88 = arith.addf %85, %87 : vector<128x128xf32>
    %89 = vector.shape_cast %88 : vector<128x128xf32> to vector<8x16x128xf32>
    %c0_59 = arith.constant 0 : index
    %c0_60 = arith.constant 0 : index
    %90 = vector.load %arg10[%c0_59, %c0_60] : memref<1x128xf32, #tpu.memory_space<vmem>>, vector<1x128xf32>
    %c0_61 = arith.constant 0 : index
    %c0_62 = arith.constant 0 : index
    %91 = vector.load %arg11[%c0_61, %c0_62] : memref<1x128xf32, #tpu.memory_space<vmem>>, vector<1x128xf32>
    %cst_63 = arith.constant dense<0.000000e+00> : vector<8x128xf32>
    %92 = vector.multi_reduction <add>, %89, %cst_63 [1] : vector<8x16x128xf32> to vector<8x128xf32>
    %93 = arith.mulf %89, %89 : vector<8x16x128xf32>
    %cst_64 = arith.constant dense<0.000000e+00> : vector<8x128xf32>
    %94 = vector.multi_reduction <add>, %93, %cst_64 [1] : vector<8x16x128xf32> to vector<8x128xf32>
    %95 = tpu.concatenate %92, %94 in 0 : vector<8x128xf32>, vector<8x128xf32> -> vector<16x128xf32>
    %cst_65 = arith.constant dense<0.000000e+00> : vector<16x8xf32>
    %96 = tpu.matmul %95, %0, %cst_65 {dimension_numbers = #tpu.dot_dimension_numbers<[1], [0], [0], [1], [0, 0, 1, 1], [], []>} : vector<16x128xf32>, vector<128x8xf32>, vector<16x8xf32> -> vector<16x8xf32>
    %cst_66 = arith.constant 3.125000e-02 : f32
    %97 = vector.broadcast %cst_66 : f32 to vector<16x8xf32>
    %98 = arith.mulf %96, %97 : vector<16x8xf32>
    %99 = vector.extract_strided_slice %98 {offsets = [0, 0], sizes = [8, 8], strides = [1, 1]} : vector<16x8xf32> to vector<8x8xf32>
    %100 = vector.extract_strided_slice %98 {offsets = [8, 0], sizes = [8, 8], strides = [1, 1]} : vector<16x8xf32> to vector<8x8xf32>
    %101 = arith.mulf %99, %99 : vector<8x8xf32>
    %102 = arith.subf %100, %101 : vector<8x8xf32>
    %cst_67 = arith.constant 0.000000e+00 : f32
    %103 = vector.broadcast %cst_67 : f32 to vector<8x8xf32>
    %104 = arith.maximumf %102, %103 : vector<8x8xf32>
    %105 = tpu.concatenate %99, %104 in 0 : vector<8x8xf32>, vector<8x8xf32> -> vector<16x8xf32>
    %cst_68 = arith.constant dense<0.000000e+00> : vector<16x128xf32>
    %106 = tpu.matmul %105, %1, %cst_68 {dimension_numbers = #tpu.dot_dimension_numbers<[1], [0], [0], [1], [0, 0, 1, 1], [], []>} : vector<16x8xf32>, vector<8x128xf32>, vector<16x128xf32> -> vector<16x128xf32>
    %107 = vector.extract_strided_slice %106 {offsets = [0, 0], sizes = [8, 128], strides = [1, 1]} : vector<16x128xf32> to vector<8x128xf32>
    %108 = vector.shape_cast %107 : vector<8x128xf32> to vector<8x1x128xf32>
    %109 = vector.extract_strided_slice %106 {offsets = [8, 0], sizes = [8, 128], strides = [1, 1]} : vector<16x128xf32> to vector<8x128xf32>
    %110 = vector.shape_cast %109 : vector<8x128xf32> to vector<8x1x128xf32>
    %111 = vector.broadcast %108 : vector<8x1x128xf32> to vector<8x16x128xf32>
    %112 = arith.subf %89, %111 : vector<8x16x128xf32>
    %cst_69 = arith.constant 9.99999974E-6 : f32
    %113 = vector.broadcast %cst_69 : f32 to vector<8x1x128xf32>
    %114 = arith.addf %110, %113 : vector<8x1x128xf32>
    %115 = math.rsqrt %114 : vector<8x1x128xf32>
    %116 = vector.broadcast %115 : vector<8x1x128xf32> to vector<8x16x128xf32>
    %117 = arith.mulf %112, %116 : vector<8x16x128xf32>
    %118 = vector.shape_cast %90 : vector<1x128xf32> to vector<1x1x128xf32>
    %119 = vector.broadcast %118 : vector<1x1x128xf32> to vector<8x16x128xf32>
    %120 = arith.mulf %117, %119 : vector<8x16x128xf32>
    %121 = vector.shape_cast %91 : vector<1x128xf32> to vector<1x1x128xf32>
    %122 = vector.broadcast %121 : vector<1x1x128xf32> to vector<8x16x128xf32>
    %123 = arith.addf %120, %122 : vector<8x16x128xf32>
    %cst_70 = arith.constant 2.000000e+01 : f32
    %124 = vector.broadcast %cst_70 : f32 to vector<8x16x128xf32>
    %125 = arith.minimumf %123, %124 : vector<8x16x128xf32>
    %126 = math.exp %125 : vector<8x16x128xf32>
    %cst_71 = arith.constant 1.000000e+00 : f32
    %127 = vector.broadcast %cst_71 : f32 to vector<8x16x128xf32>
    %128 = arith.addf %127, %126 : vector<8x16x128xf32>
    %cst_72 = arith.constant 1.000000e+00 : f32
    %129 = vector.broadcast %cst_72 : f32 to vector<8x16x128xf32>
    %130 = arith.addf %129, %126 : vector<8x16x128xf32>
    %131 = arith.mulf %128, %130 : vector<8x16x128xf32>
    %cst_73 = arith.constant 1.000000e+00 : f32
    %132 = vector.broadcast %cst_73 : f32 to vector<8x16x128xf32>
    %133 = arith.subf %131, %132 : vector<8x16x128xf32>
    %134 = arith.mulf %123, %133 : vector<8x16x128xf32>
    %cst_74 = arith.constant 1.000000e+00 : f32
    %135 = vector.broadcast %cst_74 : f32 to vector<8x16x128xf32>
    %136 = arith.addf %131, %135 : vector<8x16x128xf32>
    %137 = tpu.reciprocal %136 {approx = true} : vector<8x16x128xf32> -> vector<8x16x128xf32>
    %138 = arith.mulf %134, %137 : vector<8x16x128xf32>
    %c0_75 = arith.constant 0 : index
    %c1_76 = arith.constant 1 : index
    %c0_77 = arith.constant 0 : index
    %139 = vector.load %arg1[%c0_75, %c1_76, %c0_77] : memref<8x18x128xbf16, #tpu.memory_space<vmem>>, vector<8x16x128xbf16>
    %140 = vector.shape_cast %139 : vector<8x16x128xbf16> to vector<128x128xbf16>
    %c0_78 = arith.constant 0 : index
    %c0_79 = arith.constant 0 : index
    %141 = vector.load %arg14[%c0_78, %c0_79] : memref<128x128xbf16, #tpu.memory_space<vmem>>, vector<128x128xbf16>
    %cst_80 = arith.constant dense<0.000000e+00> : vector<128x128xf32>
    %142 = tpu.matmul %140, %141, %cst_80 {dimension_numbers = #tpu.dot_dimension_numbers<[1], [0], [0], [1], [0, 0, 1, 1], [], []>} : vector<128x128xbf16>, vector<128x128xbf16>, vector<128x128xf32> -> vector<128x128xf32>
    %c0_81 = arith.constant 0 : index
    %c0_82 = arith.constant 0 : index
    %143 = vector.load %arg15[%c0_81, %c0_82] : memref<1x128xf32, #tpu.memory_space<vmem>>, vector<1x128xf32>
    %144 = vector.broadcast %143 : vector<1x128xf32> to vector<128x128xf32>
    %145 = arith.addf %142, %144 : vector<128x128xf32>
    %146 = vector.shape_cast %145 : vector<128x128xf32> to vector<8x16x128xf32>
    %147 = arith.addf %138, %146 : vector<8x16x128xf32>
    %c0_83 = arith.constant 0 : index
    %c0_84 = arith.constant 0 : index
    %c0_85 = arith.constant 0 : index
    %148 = vector.load %arg16[%c0_83, %c0_84, %c0_85] : memref<8x16x128xf32, #tpu.memory_space<vmem>>, vector<8x16x128xf32>
    tpu.vector_store %arg16[%c0_83, %c0_84, %c0_85], %147 {strides = array<i32>} : memref<8x16x128xf32, #tpu.memory_space<vmem>>, vector<8x16x128xf32>,
    return
  }
  func.func @transform_0(%arg0: i32) -> (i32, i32, i32) {
    %c0_i32 = arith.constant 0 : i32
    %c0_i32_0 = arith.constant 0 : i32
    %c0_i32_1 = arith.constant 0 : i32
    return %arg0, %c0_i32, %c0_i32_0 : i32, i32, i32
  }
  func.func @transform_1(%arg0: i32) -> (i32, i32, i32) {
    %c0_i32 = arith.constant 0 : i32
    %c0_i32_0 = arith.constant 0 : i32
    %c0_i32_1 = arith.constant 0 : i32
    return %arg0, %c0_i32, %c0_i32_0 : i32, i32, i32
  }
  func.func @transform_2(%arg0: i32) -> (i32, i32, i32) {
    %c0_i32 = arith.constant 0 : i32
    %c0_i32_0 = arith.constant 0 : i32
    %c0_i32_1 = arith.constant 0 : i32
    return %arg0, %c0_i32, %c0_i32_0 : i32, i32, i32
  }
  func.func @transform_3(%arg0: i32) -> (i32, i32) {
    %c0_i32 = arith.constant 0 : i32
    %c0_i32_0 = arith.constant 0 : i32
    %c0_i32_1 = arith.constant 0 : i32
    return %c0_i32, %c0_i32_0 : i32, i32
  }
  func.func @transform_4(%arg0: i32) -> (i32, i32) {
    %c0_i32 = arith.constant 0 : i32
    %c0_i32_0 = arith.constant 0 : i32
    %c0_i32_1 = arith.constant 0 : i32
    return %c0_i32, %c0_i32_0 : i32, i32
  }
  func.func @transform_5(%arg0: i32) -> (i32, i32) {
    %c0_i32 = arith.constant 0 : i32
    %c0_i32_0 = arith.constant 0 : i32
    %c0_i32_1 = arith.constant 0 : i32
    return %c0_i32, %c0_i32_0 : i32, i32
  }
  func.func @transform_6(%arg0: i32) -> (i32, i32) {
    %c0_i32 = arith.constant 0 : i32
    %c0_i32_0 = arith.constant 0 : i32
    %c0_i32_1 = arith.constant 0 : i32
    return %c0_i32, %c0_i32_0 : i32, i32
  }
  func.func @transform_7(%arg0: i32) -> (i32, i32) {
    %c0_i32 = arith.constant 0 : i32
    %c0_i32_0 = arith.constant 0 : i32
    %c0_i32_1 = arith.constant 0 : i32
    return %c0_i32, %c0_i32_0 : i32, i32
  }
  func.func @transform_8(%arg0: i32) -> (i32, i32) {
    %c0_i32 = arith.constant 0 : i32
    %c0_i32_0 = arith.constant 0 : i32
    %c0_i32_1 = arith.constant 0 : i32
    return %c0_i32, %c0_i32_0 : i32, i32
  }
  func.func @transform_9(%arg0: i32) -> (i32, i32) {
    %c0_i32 = arith.constant 0 : i32
    %c0_i32_0 = arith.constant 0 : i32
    %c0_i32_1 = arith.constant 0 : i32
    return %c0_i32, %c0_i32_0 : i32, i32
  }
  func.func @transform_10(%arg0: i32) -> (i32, i32) {
    %c0_i32 = arith.constant 0 : i32
    %c0_i32_0 = arith.constant 0 : i32
    %c0_i32_1 = arith.constant 0 : i32
    return %c0_i32, %c0_i32_0 : i32, i32
  }
  func.func @transform_11(%arg0: i32) -> (i32, i32) {
    %c0_i32 = arith.constant 0 : i32
    %c0_i32_0 = arith.constant 0 : i32
    %c0_i32_1 = arith.constant 0 : i32
    return %c0_i32, %c0_i32_0 : i32, i32
  }
  func.func @transform_12(%arg0: i32) -> (i32, i32) {
    %c0_i32 = arith.constant 0 : i32
    %c0_i32_0 = arith.constant 0 : i32
    %c0_i32_1 = arith.constant 0 : i32
    return %c0_i32, %c0_i32_0 : i32, i32
  }
  func.func @transform_13(%arg0: i32) -> (i32, i32) {
    %c0_i32 = arith.constant 0 : i32
    %c0_i32_0 = arith.constant 0 : i32
    %c0_i32_1 = arith.constant 0 : i32
    return %c0_i32, %c0_i32_0 : i32, i32
  }
  func.func @transform_14(%arg0: i32) -> (i32, i32) {
    %c0_i32 = arith.constant 0 : i32
    %c0_i32_0 = arith.constant 0 : i32
    %c0_i32_1 = arith.constant 0 : i32
    return %c0_i32, %c0_i32_0 : i32, i32
  }
  func.func @transform_15(%arg0: i32) -> (i32, i32, i32) {
    %c0_i32 = arith.constant 0 : i32
    %c0_i32_0 = arith.constant 0 : i32
    %c0_i32_1 = arith.constant 0 : i32
    return %arg0, %c0_i32, %c0_i32_0 : i32, i32, i32
  }
}

module attributes {stable_mosaic.version = 11 : i64} {
  func.func @_cond_res_block_kernel(%arg0: i32, %arg1: memref<8x18x128xbf16, #tpu.memory_space<vmem>>, %arg2: memref<8x1x128xf32, #tpu.memory_space<vmem>>, %arg3: memref<8x1x128xf32, #tpu.memory_space<vmem>>, %arg4: memref<384x128xbf16, #tpu.memory_space<vmem>>, %arg5: memref<1x128xf32, #tpu.memory_space<vmem>>, %arg6: memref<1x128xf32, #tpu.memory_space<vmem>>, %arg7: memref<1x128xf32, #tpu.memory_space<vmem>>, %arg8: memref<384x128xbf16, #tpu.memory_space<vmem>>, %arg9: memref<1x128xf32, #tpu.memory_space<vmem>>, %arg10: memref<1x128xf32, #tpu.memory_space<vmem>>, %arg11: memref<1x128xf32, #tpu.memory_space<vmem>>, %arg12: memref<128x8xf32, #tpu.memory_space<vmem>>, %arg13: memref<8x128xf32, #tpu.memory_space<vmem>>, %arg14: memref<128x128xbf16, #tpu.memory_space<vmem>>, %arg15: memref<1x128xf32, #tpu.memory_space<vmem>>, %arg16: memref<8x16x128xf32, #tpu.memory_space<vmem>>, %arg17: memref<8x18x128xf32, #tpu.memory_space<vmem>>) attributes {dimension_semantics = [#tpu.dimension_semantics<parallel>], iteration_bounds = array<i64: 1>, scalar_prefetch = 0 : i64, scratch_operands = 1 : i64, tpu.core_type = #tpu.core_type<tc>, window_params = [{transform_indices = @transform_0, window_bounds = array<i64: 8, 18, 128>}, {transform_indices = @transform_1, window_bounds = array<i64: 8, 1, 128>}, {transform_indices = @transform_2, window_bounds = array<i64: 8, 1, 128>}, {pipeline_mode = #tpu.pipeline_mode<synchronous>, transform_indices = @transform_3, window_bounds = array<i64: 384, 128>}, {pipeline_mode = #tpu.pipeline_mode<synchronous>, transform_indices = @transform_4, window_bounds = array<i64: 1, 128>}, {pipeline_mode = #tpu.pipeline_mode<synchronous>, transform_indices = @transform_5, window_bounds = array<i64: 1, 128>}, {pipeline_mode = #tpu.pipeline_mode<synchronous>, transform_indices = @transform_6, window_bounds = array<i64: 1, 128>}, {pipeline_mode = #tpu.pipeline_mode<synchronous>, transform_indices = @transform_7, window_bounds = array<i64: 384, 128>}, {pipeline_mode = #tpu.pipeline_mode<synchronous>, transform_indices = @transform_8, window_bounds = array<i64: 1, 128>}, {pipeline_mode = #tpu.pipeline_mode<synchronous>, transform_indices = @transform_9, window_bounds = array<i64: 1, 128>}, {pipeline_mode = #tpu.pipeline_mode<synchronous>, transform_indices = @transform_10, window_bounds = array<i64: 1, 128>}, {pipeline_mode = #tpu.pipeline_mode<synchronous>, transform_indices = @transform_11, window_bounds = array<i64: 128, 8>}, {pipeline_mode = #tpu.pipeline_mode<synchronous>, transform_indices = @transform_12, window_bounds = array<i64: 8, 128>}, {pipeline_mode = #tpu.pipeline_mode<synchronous>, transform_indices = @transform_13, window_bounds = array<i64: 128, 128>}, {pipeline_mode = #tpu.pipeline_mode<synchronous>, transform_indices = @transform_14, window_bounds = array<i64: 1, 128>}, {transform_indices = @transform_15, window_bounds = array<i64: 8, 16, 128>}]} {
    %c0 = arith.constant 0 : index
    %c0_0 = arith.constant 0 : index
    %0 = vector.load %arg12[%c0, %c0_0] : memref<128x8xf32, #tpu.memory_space<vmem>>, vector<128x8xf32>
    %c0_1 = arith.constant 0 : index
    %c0_2 = arith.constant 0 : index
    %1 = vector.load %arg13[%c0_1, %c0_2] : memref<8x128xf32, #tpu.memory_space<vmem>>, vector<8x128xf32>
    %c0_3 = arith.constant 0 : index
    %c0_4 = arith.constant 0 : index
    %c0_5 = arith.constant 0 : index
    %2 = vector.load %arg1[%c0_3, %c0_4, %c0_5] : memref<8x18x128xbf16, #tpu.memory_space<vmem>>, vector<8x16x128xbf16>
    %3 = vector.shape_cast %2 : vector<8x16x128xbf16> to vector<128x128xbf16>
    %c0_6 = arith.constant 0 : index
    %c1 = arith.constant 1 : index
    %c0_7 = arith.constant 0 : index
    %4 = vector.load %arg1[%c0_6, %c1, %c0_7] : memref<8x18x128xbf16, #tpu.memory_space<vmem>>, vector<8x16x128xbf16>
    %5 = vector.shape_cast %4 : vector<8x16x128xbf16> to vector<128x128xbf16>
    %c0_8 = arith.constant 0 : index
    %c2 = arith.constant 2 : index
    %c0_9 = arith.constant 0 : index
    %6 = vector.load %arg1[%c0_8, %c2, %c0_9] : memref<8x18x128xbf16, #tpu.memory_space<vmem>>, vector<8x16x128xbf16>
    %7 = vector.shape_cast %6 : vector<8x16x128xbf16> to vector<128x128xbf16>
    %8 = tpu.concatenate %3, %5, %7 in 1 : vector<128x128xbf16>, vector<128x128xbf16>, vector<128x128xbf16> -> vector<128x384xbf16>
    %c0_10 = arith.constant 0 : index
    %c0_11 = arith.constant 0 : index
    %9 = vector.load %arg4[%c0_10, %c0_11] : memref<384x128xbf16, #tpu.memory_space<vmem>>, vector<384x128xbf16>
    %cst = arith.constant dense<0.000000e+00> : vector<128x128xf32>
    %10 = tpu.matmul %8, %9, %cst {dimension_numbers = #tpu.dot_dimension_numbers<[1], [0], [0], [1], [0, 0, 1, 1], [], []>} : vector<128x384xbf16>, vector<384x128xbf16>, vector<128x128xf32> -> vector<128x128xf32>
    %c0_12 = arith.constant 0 : index
    %c0_13 = arith.constant 0 : index
    %11 = vector.load %arg5[%c0_12, %c0_13] : memref<1x128xf32, #tpu.memory_space<vmem>>, vector<1x128xf32>
    %12 = vector.broadcast %11 : vector<1x128xf32> to vector<128x128xf32>
    %13 = arith.addf %10, %12 : vector<128x128xf32>
    %14 = vector.shape_cast %13 : vector<128x128xf32> to vector<8x16x128xf32>
    %c0_14 = arith.constant 0 : index
    %c0_15 = arith.constant 0 : index
    %15 = vector.load %arg6[%c0_14, %c0_15] : memref<1x128xf32, #tpu.memory_space<vmem>>, vector<1x128xf32>
    %c0_16 = arith.constant 0 : index
    %c0_17 = arith.constant 0 : index
    %16 = vector.load %arg7[%c0_16, %c0_17] : memref<1x128xf32, #tpu.memory_space<vmem>>, vector<1x128xf32>
    %cst_18 = arith.constant dense<0.000000e+00> : vector<8x128xf32>
    %17 = vector.multi_reduction <add>, %14, %cst_18 [1] : vector<8x16x128xf32> to vector<8x128xf32>
    %18 = arith.mulf %14, %14 : vector<8x16x128xf32>
    %cst_19 = arith.constant dense<0.000000e+00> : vector<8x128xf32>
    %19 = vector.multi_reduction <add>, %18, %cst_19 [1] : vector<8x16x128xf32> to vector<8x128xf32>
    %20 = tpu.concatenate %17, %19 in 0 : vector<8x128xf32>, vector<8x128xf32> -> vector<16x128xf32>
    %cst_20 = arith.constant dense<0.000000e+00> : vector<16x8xf32>
    %21 = tpu.matmul %20, %0, %cst_20 {dimension_numbers = #tpu.dot_dimension_numbers<[1], [0], [0], [1], [0, 0, 1, 1], [], []>} : vector<16x128xf32>, vector<128x8xf32>, vector<16x8xf32> -> vector<16x8xf32>
    %cst_21 = arith.constant 3.125000e-02 : f32
    %22 = vector.broadcast %cst_21 : f32 to vector<16x8xf32>
    %23 = arith.mulf %21, %22 : vector<16x8xf32>
    %24 = vector.extract_strided_slice %23 {offsets = [0, 0], sizes = [8, 8], strides = [1, 1]} : vector<16x8xf32> to vector<8x8xf32>
    %25 = vector.extract_strided_slice %23 {offsets = [8, 0], sizes = [8, 8], strides = [1, 1]} : vector<16x8xf32> to vector<8x8xf32>
    %26 = arith.mulf %24, %24 : vector<8x8xf32>
    %27 = arith.subf %25, %26 : vector<8x8xf32>
    %cst_22 = arith.constant 0.000000e+00 : f32
    %28 = vector.broadcast %cst_22 : f32 to vector<8x8xf32>
    %29 = arith.maximumf %27, %28 : vector<8x8xf32>
    %30 = tpu.concatenate %24, %29 in 0 : vector<8x8xf32>, vector<8x8xf32> -> vector<16x8xf32>
    %cst_23 = arith.constant dense<0.000000e+00> : vector<16x128xf32>
    %31 = tpu.matmul %30, %1, %cst_23 {dimension_numbers = #tpu.dot_dimension_numbers<[1], [0], [0], [1], [0, 0, 1, 1], [], []>} : vector<16x8xf32>, vector<8x128xf32>, vector<16x128xf32> -> vector<16x128xf32>
    %32 = vector.extract_strided_slice %31 {offsets = [0, 0], sizes = [8, 128], strides = [1, 1]} : vector<16x128xf32> to vector<8x128xf32>
    %33 = vector.shape_cast %32 : vector<8x128xf32> to vector<8x1x128xf32>
    %34 = vector.extract_strided_slice %31 {offsets = [8, 0], sizes = [8, 128], strides = [1, 1]} : vector<16x128xf32> to vector<8x128xf32>
    %35 = vector.shape_cast %34 : vector<8x128xf32> to vector<8x1x128xf32>
    %36 = vector.broadcast %33 : vector<8x1x128xf32> to vector<8x16x128xf32>
    %37 = arith.subf %14, %36 : vector<8x16x128xf32>
    %cst_24 = arith.constant 9.99999974E-6 : f32
    %38 = vector.broadcast %cst_24 : f32 to vector<8x1x128xf32>
    %39 = arith.addf %35, %38 : vector<8x1x128xf32>
    %40 = math.rsqrt %39 : vector<8x1x128xf32>
    %41 = vector.broadcast %40 : vector<8x1x128xf32> to vector<8x16x128xf32>
    %42 = arith.mulf %37, %41 : vector<8x16x128xf32>
    %43 = vector.shape_cast %15 : vector<1x128xf32> to vector<1x1x128xf32>
    %44 = vector.broadcast %43 : vector<1x1x128xf32> to vector<8x16x128xf32>
    %45 = arith.mulf %42, %44 : vector<8x16x128xf32>
    %46 = vector.shape_cast %16 : vector<1x128xf32> to vector<1x1x128xf32>
    %47 = vector.broadcast %46 : vector<1x1x128xf32> to vector<8x16x128xf32>
    %48 = arith.addf %45, %47 : vector<8x16x128xf32>
    %cst_25 = arith.constant 2.000000e+01 : f32
    %49 = vector.broadcast %cst_25 : f32 to vector<8x16x128xf32>
    %50 = arith.minimumf %48, %49 : vector<8x16x128xf32>
    %51 = math.exp %50 : vector<8x16x128xf32>
    %cst_26 = arith.constant 1.000000e+00 : f32
    %52 = vector.broadcast %cst_26 : f32 to vector<8x16x128xf32>
    %53 = arith.addf %52, %51 : vector<8x16x128xf32>
    %cst_27 = arith.constant 1.000000e+00 : f32
    %54 = vector.broadcast %cst_27 : f32 to vector<8x16x128xf32>
    %55 = arith.addf %54, %51 : vector<8x16x128xf32>
    %56 = arith.mulf %53, %55 : vector<8x16x128xf32>
    %cst_28 = arith.constant 1.000000e+00 : f32
    %57 = vector.broadcast %cst_28 : f32 to vector<8x16x128xf32>
    %58 = arith.subf %56, %57 : vector<8x16x128xf32>
    %59 = arith.mulf %48, %58 : vector<8x16x128xf32>
    %cst_29 = arith.constant 1.000000e+00 : f32
    %60 = vector.broadcast %cst_29 : f32 to vector<8x16x128xf32>
    %61 = arith.addf %56, %60 : vector<8x16x128xf32>
    %62 = tpu.reciprocal %61 {approx = true} : vector<8x16x128xf32> -> vector<8x16x128xf32>
    %63 = arith.mulf %59, %62 : vector<8x16x128xf32>
    %c0_30 = arith.constant 0 : index
    %c0_31 = arith.constant 0 : index
    %c0_32 = arith.constant 0 : index
    %64 = vector.load %arg2[%c0_30, %c0_31, %c0_32] : memref<8x1x128xf32, #tpu.memory_space<vmem>>, vector<8x1x128xf32>
    %65 = vector.broadcast %64 : vector<8x1x128xf32> to vector<8x16x128xf32>
    %66 = arith.mulf %65, %63 : vector<8x16x128xf32>
    %c0_33 = arith.constant 0 : index
    %c0_34 = arith.constant 0 : index
    %c0_35 = arith.constant 0 : index
    %67 = vector.load %arg3[%c0_33, %c0_34, %c0_35] : memref<8x1x128xf32, #tpu.memory_space<vmem>>, vector<8x1x128xf32>
    %68 = vector.broadcast %67 : vector<8x1x128xf32> to vector<8x16x128xf32>
    %69 = arith.addf %66, %68 : vector<8x16x128xf32>
    %cst_36 = arith.constant 0.000000e+00 : f32
    %70 = vector.broadcast %cst_36 : f32 to vector<8x1x128xf32>
    %c0_37 = arith.constant 0 : index
    %c0_38 = arith.constant 0 : index
    %c0_39 = arith.constant 0 : index
    %71 = vector.load %arg17[%c0_37, %c0_38, %c0_39] : memref<8x18x128xf32, #tpu.memory_space<vmem>>, vector<8x1x128xf32>
    tpu.vector_store %arg17[%c0_37, %c0_38, %c0_39], %70 {strides = array<i32>} : memref<8x18x128xf32, #tpu.memory_space<vmem>>, vector<8x1x128xf32>,
    %c0_40 = arith.constant 0 : index
    %c17 = arith.constant 17 : index
    %c0_41 = arith.constant 0 : index
    %72 = vector.load %arg17[%c0_40, %c17, %c0_41] : memref<8x18x128xf32, #tpu.memory_space<vmem>>, vector<8x1x128xf32>
    tpu.vector_store %arg17[%c0_40, %c17, %c0_41], %70 {strides = array<i32>} : memref<8x18x128xf32, #tpu.memory_space<vmem>>, vector<8x1x128xf32>,
    %c0_42 = arith.constant 0 : index
    %c1_43 = arith.constant 1 : index
    %c0_44 = arith.constant 0 : index
    %73 = vector.load %arg17[%c0_42, %c1_43, %c0_44] : memref<8x18x128xf32, #tpu.memory_space<vmem>>, vector<8x16x128xf32>
    tpu.vector_store %arg17[%c0_42, %c1_43, %c0_44], %69 {strides = array<i32>} : memref<8x18x128xf32, #tpu.memory_space<vmem>>, vector<8x16x128xf32>,
    %c0_45 = arith.constant 0 : index
    %c0_46 = arith.constant 0 : index
    %c0_47 = arith.constant 0 : index
    %74 = vector.load %arg17[%c0_45, %c0_46, %c0_47] : memref<8x18x128xf32, #tpu.memory_space<vmem>>, vector<8x16x128xf32>
    %75 = vector.shape_cast %74 : vector<8x16x128xf32> to vector<128x128xf32>
    %76 = arith.truncf %75 : vector<128x128xf32> to vector<128x128xbf16>
    %c0_48 = arith.constant 0 : index
    %c1_49 = arith.constant 1 : index
    %c0_50 = arith.constant 0 : index
    %77 = vector.load %arg17[%c0_48, %c1_49, %c0_50] : memref<8x18x128xf32, #tpu.memory_space<vmem>>, vector<8x16x128xf32>
    %78 = vector.shape_cast %77 : vector<8x16x128xf32> to vector<128x128xf32>
    %79 = arith.truncf %78 : vector<128x128xf32> to vector<128x128xbf16>
    %c0_51 = arith.constant 0 : index
    %c2_52 = arith.constant 2 : index
    %c0_53 = arith.constant 0 : index
    %80 = vector.load %arg17[%c0_51, %c2_52, %c0_53] : memref<8x18x128xf32, #tpu.memory_space<vmem>>, vector<8x16x128xf32>
    %81 = vector.shape_cast %80 : vector<8x16x128xf32> to vector<128x128xf32>
    %82 = arith.truncf %81 : vector<128x128xf32> to vector<128x128xbf16>
    %83 = tpu.concatenate %76, %79, %82 in 1 : vector<128x128xbf16>, vector<128x128xbf16>, vector<128x128xbf16> -> vector<128x384xbf16>
    %c0_54 = arith.constant 0 : index
    %c0_55 = arith.constant 0 : index
    %84 = vector.load %arg8[%c0_54, %c0_55] : memref<384x128xbf16, #tpu.memory_space<vmem>>, vector<384x128xbf16>
    %cst_56 = arith.constant dense<0.000000e+00> : vector<128x128xf32>
    %85 = tpu.matmul %83, %84, %cst_56 {dimension_numbers = #tpu.dot_dimension_numbers<[1], [0], [0], [1], [0, 0, 1, 1], [], []>} : vector<128x384xbf16>, vector<384x128xbf16>, vector<128x128xf32> -> vector<128x128xf32>
    %c0_57 = arith.constant 0 : index
    %c0_58 = arith.constant 0 : index
    %86 = vector.load %arg9[%c0_57, %c0_58] : memref<1x128xf32, #tpu.memory_space<vmem>>, vector<1x128xf32>
    %87 = vector.broadcast %86 : vector<1x128xf32> to vector<128x128xf32>
    %88 = arith.addf %85, %87 : vector<128x128xf32>
    %89 = vector.shape_cast %88 : vector<128x128xf32> to vector<8x16x128xf32>
    %c0_59 = arith.constant 0 : index
    %c0_60 = arith.constant 0 : index
    %90 = vector.load %arg10[%c0_59, %c0_60] : memref<1x128xf32, #tpu.memory_space<vmem>>, vector<1x128xf32>
    %c0_61 = arith.constant 0 : index
    %c0_62 = arith.constant 0 : index
    %91 = vector.load %arg11[%c0_61, %c0_62] : memref<1x128xf32, #tpu.memory_space<vmem>>, vector<1x128xf32>
    %cst_63 = arith.constant dense<0.000000e+00> : vector<8x128xf32>
    %92 = vector.multi_reduction <add>, %89, %cst_63 [1] : vector<8x16x128xf32> to vector<8x128xf32>
    %93 = arith.mulf %89, %89 : vector<8x16x128xf32>
    %cst_64 = arith.constant dense<0.000000e+00> : vector<8x128xf32>
    %94 = vector.multi_reduction <add>, %93, %cst_64 [1] : vector<8x16x128xf32> to vector<8x128xf32>
    %95 = tpu.concatenate %92, %94 in 0 : vector<8x128xf32>, vector<8x128xf32> -> vector<16x128xf32>
    %cst_65 = arith.constant dense<0.000000e+00> : vector<16x8xf32>
    %96 = tpu.matmul %95, %0, %cst_65 {dimension_numbers = #tpu.dot_dimension_numbers<[1], [0], [0], [1], [0, 0, 1, 1], [], []>} : vector<16x128xf32>, vector<128x8xf32>, vector<16x8xf32> -> vector<16x8xf32>
    %cst_66 = arith.constant 3.125000e-02 : f32
    %97 = vector.broadcast %cst_66 : f32 to vector<16x8xf32>
    %98 = arith.mulf %96, %97 : vector<16x8xf32>
    %99 = vector.extract_strided_slice %98 {offsets = [0, 0], sizes = [8, 8], strides = [1, 1]} : vector<16x8xf32> to vector<8x8xf32>
    %100 = vector.extract_strided_slice %98 {offsets = [8, 0], sizes = [8, 8], strides = [1, 1]} : vector<16x8xf32> to vector<8x8xf32>
    %101 = arith.mulf %99, %99 : vector<8x8xf32>
    %102 = arith.subf %100, %101 : vector<8x8xf32>
    %cst_67 = arith.constant 0.000000e+00 : f32
    %103 = vector.broadcast %cst_67 : f32 to vector<8x8xf32>
    %104 = arith.maximumf %102, %103 : vector<8x8xf32>
    %105 = tpu.concatenate %99, %104 in 0 : vector<8x8xf32>, vector<8x8xf32> -> vector<16x8xf32>
    %cst_68 = arith.constant dense<0.000000e+00> : vector<16x128xf32>
    %106 = tpu.matmul %105, %1, %cst_68 {dimension_numbers = #tpu.dot_dimension_numbers<[1], [0], [0], [1], [0, 0, 1, 1], [], []>} : vector<16x8xf32>, vector<8x128xf32>, vector<16x128xf32> -> vector<16x128xf32>
    %107 = vector.extract_strided_slice %106 {offsets = [0, 0], sizes = [8, 128], strides = [1, 1]} : vector<16x128xf32> to vector<8x128xf32>
    %108 = vector.shape_cast %107 : vector<8x128xf32> to vector<8x1x128xf32>
    %109 = vector.extract_strided_slice %106 {offsets = [8, 0], sizes = [8, 128], strides = [1, 1]} : vector<16x128xf32> to vector<8x128xf32>
    %110 = vector.shape_cast %109 : vector<8x128xf32> to vector<8x1x128xf32>
    %111 = vector.broadcast %108 : vector<8x1x128xf32> to vector<8x16x128xf32>
    %112 = arith.subf %89, %111 : vector<8x16x128xf32>
    %cst_69 = arith.constant 9.99999974E-6 : f32
    %113 = vector.broadcast %cst_69 : f32 to vector<8x1x128xf32>
    %114 = arith.addf %110, %113 : vector<8x1x128xf32>
    %115 = math.rsqrt %114 : vector<8x1x128xf32>
    %116 = vector.broadcast %115 : vector<8x1x128xf32> to vector<8x16x128xf32>
    %117 = arith.mulf %112, %116 : vector<8x16x128xf32>
    %118 = vector.shape_cast %90 : vector<1x128xf32> to vector<1x1x128xf32>
    %119 = vector.broadcast %118 : vector<1x1x128xf32> to vector<8x16x128xf32>
    %120 = arith.mulf %117, %119 : vector<8x16x128xf32>
    %121 = vector.shape_cast %91 : vector<1x128xf32> to vector<1x1x128xf32>
    %122 = vector.broadcast %121 : vector<1x1x128xf32> to vector<8x16x128xf32>
    %123 = arith.addf %120, %122 : vector<8x16x128xf32>
    %cst_70 = arith.constant 2.000000e+01 : f32
    %124 = vector.broadcast %cst_70 : f32 to vector<8x16x128xf32>
    %125 = arith.minimumf %123, %124 : vector<8x16x128xf32>
    %126 = math.exp %125 : vector<8x16x128xf32>
    %cst_71 = arith.constant 1.000000e+00 : f32
    %127 = vector.broadcast %cst_71 : f32 to vector<8x16x128xf32>
    %128 = arith.addf %127, %126 : vector<8x16x128xf32>
    %cst_72 = arith.constant 1.000000e+00 : f32
    %129 = vector.broadcast %cst_72 : f32 to vector<8x16x128xf32>
    %130 = arith.addf %129, %126 : vector<8x16x128xf32>
    %131 = arith.mulf %128, %130 : vector<8x16x128xf32>
    %cst_73 = arith.constant 1.000000e+00 : f32
    %132 = vector.broadcast %cst_73 : f32 to vector<8x16x128xf32>
    %133 = arith.subf %131, %132 : vector<8x16x128xf32>
    %134 = arith.mulf %123, %133 : vector<8x16x128xf32>
    %cst_74 = arith.constant 1.000000e+00 : f32
    %135 = vector.broadcast %cst_74 : f32 to vector<8x16x128xf32>
    %136 = arith.addf %131, %135 : vector<8x16x128xf32>
    %137 = tpu.reciprocal %136 {approx = true} : vector<8x16x128xf32> -> vector<8x16x128xf32>
    %138 = arith.mulf %134, %137 : vector<8x16x128xf32>
    %c0_75 = arith.constant 0 : index
    %c1_76 = arith.constant 1 : index
    %c0_77 = arith.constant 0 : index
    %139 = vector.load %arg1[%c0_75, %c1_76, %c0_77] : memref<8x18x128xbf16, #tpu.memory_space<vmem>>, vector<8x16x128xbf16>
    %140 = vector.shape_cast %139 : vector<8x16x128xbf16> to vector<128x128xbf16>
    %c0_78 = arith.constant 0 : index
    %c0_79 = arith.constant 0 : index
    %141 = vector.load %arg14[%c0_78, %c0_79] : memref<128x128xbf16, #tpu.memory_space<vmem>>, vector<128x128xbf16>
    %cst_80 = arith.constant dense<0.000000e+00> : vector<128x128xf32>
    %142 = tpu.matmul %140, %141, %cst_80 {dimension_numbers = #tpu.dot_dimension_numbers<[1], [0], [0], [1], [0, 0, 1, 1], [], []>} : vector<128x128xbf16>, vector<128x128xbf16>, vector<128x128xf32> -> vector<128x128xf32>
    %c0_81 = arith.constant 0 : index
    %c0_82 = arith.constant 0 : index
    %143 = vector.load %arg15[%c0_81, %c0_82] : memref<1x128xf32, #tpu.memory_space<vmem>>, vector<1x128xf32>
    %144 = vector.broadcast %143 : vector<1x128xf32> to vector<128x128xf32>
    %145 = arith.addf %142, %144 : vector<128x128xf32>
    %146 = vector.shape_cast %145 : vector<128x128xf32> to vector<8x16x128xf32>
    %147 = arith.addf %138, %146 : vector<8x16x128xf32>
    %c0_83 = arith.constant 0 : index
    %c0_84 = arith.constant 0 : index
    %c0_85 = arith.constant 0 : index
    %148 = vector.load %arg16[%c0_83, %c0_84, %c0_85] : memref<8x16x128xf32, #tpu.memory_space<vmem>>, vector<8x16x128xf32>
    tpu.vector_store %arg16[%c0_83, %c0_84, %c0_85], %147 {strides = array<i32>} : memref<8x16x128xf32, #tpu.memory_space<vmem>>, vector<8x16x128xf32>,
    return
  }
  func.func @transform_0(%arg0: i32) -> (i32, i32, i32) {
    %c0_i32 = arith.constant 0 : i32
    %c0_i32_0 = arith.constant 0 : i32
    %c0_i32_1 = arith.constant 0 : i32
    return %arg0, %c0_i32, %c0_i32_0 : i32, i32, i32
  }
  func.func @transform_1(%arg0: i32) -> (i32, i32, i32) {
    %c0_i32 = arith.constant 0 : i32
    %c0_i32_0 = arith.constant 0 : i32
    %c0_i32_1 = arith.constant 0 : i32
    return %arg0, %c0_i32, %c0_i32_0 : i32, i32, i32
  }
  func.func @transform_2(%arg0: i32) -> (i32, i32, i32) {
    %c0_i32 = arith.constant 0 : i32
    %c0_i32_0 = arith.constant 0 : i32
    %c0_i32_1 = arith.constant 0 : i32
    return %arg0, %c0_i32, %c0_i32_0 : i32, i32, i32
  }
  func.func @transform_3(%arg0: i32) -> (i32, i32) {
    %c0_i32 = arith.constant 0 : i32
    %c0_i32_0 = arith.constant 0 : i32
    %c0_i32_1 = arith.constant 0 : i32
    return %c0_i32, %c0_i32_0 : i32, i32
  }
  func.func @transform_4(%arg0: i32) -> (i32, i32) {
    %c0_i32 = arith.constant 0 : i32
    %c0_i32_0 = arith.constant 0 : i32
    %c0_i32_1 = arith.constant 0 : i32
    return %c0_i32, %c0_i32_0 : i32, i32
  }
  func.func @transform_5(%arg0: i32) -> (i32, i32) {
    %c0_i32 = arith.constant 0 : i32
    %c0_i32_0 = arith.constant 0 : i32
    %c0_i32_1 = arith.constant 0 : i32
    return %c0_i32, %c0_i32_0 : i32, i32
  }
  func.func @transform_6(%arg0: i32) -> (i32, i32) {
    %c0_i32 = arith.constant 0 : i32
    %c0_i32_0 = arith.constant 0 : i32
    %c0_i32_1 = arith.constant 0 : i32
    return %c0_i32, %c0_i32_0 : i32, i32
  }
  func.func @transform_7(%arg0: i32) -> (i32, i32) {
    %c0_i32 = arith.constant 0 : i32
    %c0_i32_0 = arith.constant 0 : i32
    %c0_i32_1 = arith.constant 0 : i32
    return %c0_i32, %c0_i32_0 : i32, i32
  }
  func.func @transform_8(%arg0: i32) -> (i32, i32) {
    %c0_i32 = arith.constant 0 : i32
    %c0_i32_0 = arith.constant 0 : i32
    %c0_i32_1 = arith.constant 0 : i32
    return %c0_i32, %c0_i32_0 : i32, i32
  }
  func.func @transform_9(%arg0: i32) -> (i32, i32) {
    %c0_i32 = arith.constant 0 : i32
    %c0_i32_0 = arith.constant 0 : i32
    %c0_i32_1 = arith.constant 0 : i32
    return %c0_i32, %c0_i32_0 : i32, i32
  }
  func.func @transform_10(%arg0: i32) -> (i32, i32) {
    %c0_i32 = arith.constant 0 : i32
    %c0_i32_0 = arith.constant 0 : i32
    %c0_i32_1 = arith.constant 0 : i32
    return %c0_i32, %c0_i32_0 : i32, i32
  }
  func.func @transform_11(%arg0: i32) -> (i32, i32) {
    %c0_i32 = arith.constant 0 : i32
    %c0_i32_0 = arith.constant 0 : i32
    %c0_i32_1 = arith.constant 0 : i32
    return %c0_i32, %c0_i32_0 : i32, i32
  }
  func.func @transform_12(%arg0: i32) -> (i32, i32) {
    %c0_i32 = arith.constant 0 : i32
    %c0_i32_0 = arith.constant 0 : i32
    %c0_i32_1 = arith.constant 0 : i32
    return %c0_i32, %c0_i32_0 : i32, i32
  }
  func.func @transform_13(%arg0: i32) -> (i32, i32) {
    %c0_i32 = arith.constant 0 : i32
    %c0_i32_0 = arith.constant 0 : i32
    %c0_i32_1 = arith.constant 0 : i32
    return %c0_i32, %c0_i32_0 : i32, i32
  }
  func.func @transform_14(%arg0: i32) -> (i32, i32) {
    %c0_i32 = arith.constant 0 : i32
    %c0_i32_0 = arith.constant 0 : i32
    %c0_i32_1 = arith.constant 0 : i32
    return %c0_i32, %c0_i32_0 : i32, i32
  }
  func.func @transform_15(%arg0: i32) -> (i32, i32, i32) {
    %c0_i32 = arith.constant 0 : i32
    %c0_i32_0 = arith.constant 0 : i32
    %c0_i32_1 = arith.constant 0 : i32
    return %arg0, %c0_i32, %c0_i32_0 : i32, i32, i32
  }
}

</mosaic_0001>

<llo_original>
// kernel: tpu_custom_call.1
$region0: #{tpu_custom_call.1}
  #allocation0 [shape = 'u32[]', space=smem, size = 0x4, offset = 0x4, fixed_abs, tag = 'smem constant byte address 0x4 - core index']
  #allocation1 [shape = 'u32[144,128]{1,0:T(1,128)}', space=vmem, size = 0x12000, scoped, tag = 'internal scratch']
  #allocation2 [shape = 'f32[8,18,128]{2,1,0:T(8,128)}', space=vmem, size = 0x18000, scoped, tag = 'scratch operand']
  %s0 = inlined_call_operand.vmem [shape: bf16[8,18,128], index: 0, kind: input, shape index: {}]
  %s1 = inlined_call_operand.vmem [shape: f32[8,1,128], index: 1, kind: input, shape index: {}]
  %s2 = inlined_call_operand.vmem [shape: f32[8,1,128], index: 2, kind: input, shape index: {}]
  %s3 = inlined_call_operand.vmem [shape: bf16[384,128], index: 3, kind: input, shape index: {}]
  %s4 = inlined_call_operand.vmem [shape: f32[1,128], index: 4, kind: input, shape index: {}]
  %s5 = inlined_call_operand.vmem [shape: f32[1,128], index: 5, kind: input, shape index: {}]
  %s6 = inlined_call_operand.vmem [shape: f32[1,128], index: 6, kind: input, shape index: {}]
  %s7 = inlined_call_operand.hbm [shape: bf16[384,128], index: 7, kind: input, shape index: {}]
  %s8 = inlined_call_operand.vmem [shape: f32[1,128], index: 8, kind: input, shape index: {}]
  %s9 = inlined_call_operand.vmem [shape: f32[1,128], index: 9, kind: input, shape index: {}]
  %s10 = inlined_call_operand.vmem [shape: f32[1,128], index: 10, kind: input, shape index: {}]
  %s11 = inlined_call_operand.vmem [shape: f32[128,8], index: 11, kind: input, shape index: {}]
  %s12 = inlined_call_operand.vmem [shape: f32[8,128], index: 12, kind: input, shape index: {}]
  %s13 = inlined_call_operand.vmem [shape: bf16[128,128], index: 13, kind: input, shape index: {}]
  %s14 = inlined_call_operand.vmem [shape: f32[1,128], index: 14, kind: input, shape index: {}]
  %s15 = inlined_call_operand.hbm [shape: f32[8,16,128], index: 15, kind: output, shape index: {}]
  %s16 = sld [smem:[#allocation0]]
  $region74: #{tpu_custom_call.1} parent=0
    _
  %s18 = ssub.s32 1, %s16
  %s19 = scalar_select 0, %s18, %s16
  $region1: #{tpu_custom_call.1} parent=0
    #allocation3 [shape = 'u8[98304]{0}', space=vmem, size = 0x18000, scoped, tag = 'input window, operand 7, single buffered']
    #allocation4 [shape = 's32[1]{0}', space=sflag, size = 0x4, scoped, tag = 'scoped memory for tpu_custom_call.1']
    #allocation5 [shape = 's32[1]{0}', space=sflag, size = 0x4, scoped, tag = 'scoped memory for tpu_custom_call.1']
    #allocation6 [shape = 'u8[65536]{0}', space=vmem, size = 0x10000, scoped, tag = 'output window, operand 0, single buffered']
    %20 = vsyncpa [#allocation4], 0
    %21 = vsyncpa [#allocation5], 0
    // Predicated region
    $region2: #{tpu_custom_call.1} parent=1 // pred_check
      _
    $region3: #{tpu_custom_call.1} parent=1 // pred_check_branch
      %23 = sbr.rel (0) target = $region5
    $region4: #{tpu_custom_call.1} parent=1 // pred_region
      _
    $region5: #{tpu_custom_call.1} parent=1 // pred_fallthru
      _
    // Predicated region
    $region6: #{tpu_custom_call.1} parent=1 // pred_check
      _
    $region7: #{tpu_custom_call.1} parent=1 // pred_check_branch
      %25 = sbr.rel (0) target = $region9
    $region8: #{tpu_custom_call.1} parent=1 // pred_region
      _
    $region9: #{tpu_custom_call.1} parent=1 // pred_fallthru
      _
    // Predicated region
    $region10: #{tpu_custom_call.1} parent=1 // pred_check
      _
    $region11: #{tpu_custom_call.1} parent=1 // pred_check_branch
      %27 = sbr.rel (0) target = $region13
    $region12: #{tpu_custom_call.1} parent=1 // pred_region
      _
    $region13: #{tpu_custom_call.1} parent=1 // pred_fallthru
      _
    // Predicated region
    $region14: #{tpu_custom_call.1} parent=1 // pred_check
      _
    $region15: #{tpu_custom_call.1} parent=1 // pred_check_branch
      %29 = sbr.rel (0) target = $region17
    $region16: #{tpu_custom_call.1} parent=1 // pred_region
      _
    $region17: #{tpu_custom_call.1} parent=1 // pred_fallthru
      _
    // Predicated region
    $region18: #{tpu_custom_call.1} parent=1 // pred_check
      _
    $region19: #{tpu_custom_call.1} parent=1 // pred_check_branch
      %31 = sbr.rel (0) target = $region21
    $region20: #{tpu_custom_call.1} parent=1 // pred_region
      _
    $region21: #{tpu_custom_call.1} parent=1 // pred_fallthru
      _
    // Predicated region
    $region22: #{tpu_custom_call.1} parent=1 // pred_check
      _
    $region23: #{tpu_custom_call.1} parent=1 // pred_check_branch
      %33 = sbr.rel (0) target = $region25
    $region24: #{tpu_custom_call.1} parent=1 // pred_region
      _
    $region25: #{tpu_custom_call.1} parent=1 // pred_fallthru
      _
    // Predicated region
    $region26: #{tpu_custom_call.1} parent=1 // pred_check
      _
    $region27: #{tpu_custom_call.1} parent=1 // pred_check_branch
      %35 = sbr.rel (0) target = $region29
    $region28: #{tpu_custom_call.1} parent=1 // pred_region
      _
    $region29: #{tpu_custom_call.1} parent=1 // pred_fallthru
      _
    // Predicated region
    $region30: #{tpu_custom_call.1} parent=1 // pred_check
      _
    $region31: #{tpu_custom_call.1} parent=1 // pred_check_branch
      %37 = sbr.rel (0) target = $region33
    $region32: #{tpu_custom_call.1} parent=1 // pred_region
      %s39 = ssub.s32 3072, 3072
      %40 = vsyncadd [#allocation4], %s39
      %s41 = sshll.u32 [#allocation3], 4
      %s42 = int_to_ptr.vmem [resolvable:$true] %s41
      %47 = dma.hbm_to_vmem [thread:$0]  %s7, 3072, %s42, [#allocation4], 64, 64, 4
    $region33: #{tpu_custom_call.1} parent=1 // pred_fallthru
      _
    // Predicated region
    $region34: #{tpu_custom_call.1} parent=1 // pred_check
      _
    $region35: #{tpu_custom_call.1} parent=1 // pred_check_branch
      %49 = sbr.rel (0) target = $region37
    $region36: #{tpu_custom_call.1} parent=1 // pred_region
      _
    $region37: #{tpu_custom_call.1} parent=1 // pred_fallthru
      _
    // Predicated region
    $region38: #{tpu_custom_call.1} parent=1 // pred_check
      _
    $region39: #{tpu_custom_call.1} parent=1 // pred_check_branch
      %51 = sbr.rel (0) target = $region41
    $region40: #{tpu_custom_call.1} parent=1 // pred_region
      _
    $region41: #{tpu_custom_call.1} parent=1 // pred_fallthru
      _
    // Predicated region
    $region42: #{tpu_custom_call.1} parent=1 // pred_check
      _
    $region43: #{tpu_custom_call.1} parent=1 // pred_check_branch
      %53 = sbr.rel (0) target = $region45
    $region44: #{tpu_custom_call.1} parent=1 // pred_region
      _
    $region45: #{tpu_custom_call.1} parent=1 // pred_fallthru
      _
    // Predicated region
    $region46: #{tpu_custom_call.1} parent=1 // pred_check
      _
    $region47: #{tpu_custom_call.1} parent=1 // pred_check_branch
      %55 = sbr.rel (0) target = $region49
    $region48: #{tpu_custom_call.1} parent=1 // pred_region
      _
    $region49: #{tpu_custom_call.1} parent=1 // pred_fallthru
      _
    // Predicated region
    $region50: #{tpu_custom_call.1} parent=1 // pred_check
      _
    $region51: #{tpu_custom_call.1} parent=1 // pred_check_branch
      %57 = sbr.rel (0) target = $region53
    $region52: #{tpu_custom_call.1} parent=1 // pred_region
      _
    $region53: #{tpu_custom_call.1} parent=1 // pred_fallthru
      _
    // Predicated region
    $region54: #{tpu_custom_call.1} parent=1 // pred_check
      _
    $region55: #{tpu_custom_call.1} parent=1 // pred_check_branch
      %59 = sbr.rel (0) target = $region57
    $region56: #{tpu_custom_call.1} parent=1 // pred_region
      _
    $region57: #{tpu_custom_call.1} parent=1 // pred_fallthru
      _
    // Predicated region
    $region58: #{tpu_custom_call.1} parent=1 // pred_check
      _
    $region59: #{tpu_custom_call.1} parent=1 // pred_check_branch
      %61 = sbr.rel (0) target = $region61
    $region60: #{tpu_custom_call.1} parent=1 // pred_region
      _
    $region61: #{tpu_custom_call.1} parent=1 // pred_fallthru
      _
    // Predicated region
    $region62: #{tpu_custom_call.1} parent=1 // pred_check
      _
    $region63: #{tpu_custom_call.1} parent=1 // pred_check_branch
      %63 = sbr.rel (0) target = $region65
    $region64: #{tpu_custom_call.1} parent=1 // pred_region
      %64 = dma.done [#allocation4], 3072
    $region65: #{tpu_custom_call.1} parent=1 // pred_fallthru
      _
    %v66 = vld [vmem:[%s11] sm:$0xff]
    %v67 = vld [vmem:[%s11 + $0x8] sm:$0xff]
    %v68 = vld [vmem:[%s11 + $0x10] sm:$0xff]
    %v69 = vld [vmem:[%s11 + $0x18] sm:$0xff]
    %v70 = vld [vmem:[%s11 + $0x20] sm:$0xff]
    %v71 = vld [vmem:[%s11 + $0x28] sm:$0xff]
    %v72 = vld [vmem:[%s11 + $0x30] sm:$0xff]
    %v73 = vld [vmem:[%s11 + $0x38] sm:$0xff]
    %v74 = vld [vmem:[%s11 + $0x40] sm:$0xff]
    %v75 = vld [vmem:[%s11 + $0x48] sm:$0xff]
    %v76 = vld [vmem:[%s11 + $0x50] sm:$0xff]
    %v77 = vld [vmem:[%s11 + $0x58] sm:$0xff]
    %v78 = vld [vmem:[%s11 + $0x60] sm:$0xff]
    %v79 = vld [vmem:[%s11 + $0x68] sm:$0xff]
    %v80 = vld [vmem:[%s11 + $0x70] sm:$0xff]
    %v81 = vld [vmem:[%s11 + $0x78] sm:$0xff]
    %v82 = vld [vmem:[%s12] sm:$0xff]
    %v83 = vld [vmem:[%s0] sm:$0xf]
    %v84 = vld [vmem:[%s0 + $0x4] sm:$0xf]
    %v85 = vld [vmem:[%s0 + $0xc] sm:$0xf]
    %v86 = vld [vmem:[%s0 + $0x10] sm:$0xf]
    %v87 = vld [vmem:[%s0 + $0x18] sm:$0xf]
    %v88 = vld [vmem:[%s0 + $0x1c] sm:$0xf]
    %v89 = vld [vmem:[%s0 + $0x24] sm:$0xf]
    %v90 = vld [vmem:[%s0 + $0x28] sm:$0xf]
    %v91 = vld [vmem:[%s0 + $0x30] sm:$0xf]
    %v92 = vld [vmem:[%s0 + $0x34] sm:$0xf]
    %v93 = vld [vmem:[%s0 + $0x3c] sm:$0xf]
    %v94 = vld [vmem:[%s0 + $0x40] sm:$0xf]
    %v95 = vld [vmem:[%s0 + $0x48] sm:$0xf]
    %v96 = vld [vmem:[%s0 + $0x4c] sm:$0xf]
    %v97 = vld [vmem:[%s0 + $0x54] sm:$0xf]
    %v98 = vld [vmem:[%s0 + $0x58] sm:$0xf]
    %v99 = vld [vmem:[%s0 + $0x8] sm:$0x1]
    %v100 = vld [vmem:[%s0 + $0x14] sm:$0x1]
    %v101 = vld [vmem:[%s0 + $0x20] sm:$0x1]
    %v102 = vld [vmem:[%s0 + $0x2c] sm:$0x1]
    %v103 = vld [vmem:[%s0 + $0x38] sm:$0x1]
    %v104 = vld [vmem:[%s0 + $0x44] sm:$0x1]
    %v105 = vld [vmem:[%s0 + $0x50] sm:$0x1]
    %v106 = vld [vmem:[%s0 + $0x5c] sm:$0x1]
    %vm107 = vsmask.f32 3328
    %vm108 = vsmask.f32 7440
    %vm109 = vmor %vm107, %vm108
    %v111 = vshrl.u32 %v83, 16
    %v113 = vrot.slane %v111, 4
    %v114 = vshll.u32 %v83, 16
    %v116 = vrot.slane %v114, 5
    %v117 = vor.u32 %v113, %v116
    %v118 = vrot.slane %v117, 4
    %v120 = vshll.u32 %v84, 16
    %v122 = vrot.slane %v120, 5
    %v123 = vsel %vm109, %v118, %v122
    %v124 = vshrl.u32 %v84, 16
    %v126 = vrot.slane %v124, 4
    %v127 = vor.u32 %v126, %v122
    %v128 = vrot.slane %v127, 4
    %v130 = vshll.u32 %v99, 16
    %v132 = vrot.slane %v130, 5
    %v133 = vsel %vm109, %v128, %v132
    %v135 = vshrl.u32 %v85, 16
    %v137 = vrot.slane %v135, 4
    %v138 = vshll.u32 %v85, 16
    %v140 = vrot.slane %v138, 5
    %v141 = vor.u32 %v137, %v140
    %v142 = vrot.slane %v141, 4
    %v144 = vshll.u32 %v86, 16
    %v146 = vrot.slane %v144, 5
    %v147 = vsel %vm109, %v142, %v146
    %v148 = vshrl.u32 %v86, 16
    %v150 = vrot.slane %v148, 4
    %v151 = vor.u32 %v150, %v146
    %v152 = vrot.slane %v151, 4
    %v154 = vshll.u32 %v100, 16
    %v156 = vrot.slane %v154, 5
    %v157 = vsel %vm109, %v152, %v156
    %v159 = vshrl.u32 %v87, 16
    %v161 = vrot.slane %v159, 4
    %v162 = vshll.u32 %v87, 16
    %v164 = vrot.slane %v162, 5
    %v165 = vor.u32 %v161, %v164
    %v166 = vrot.slane %v165, 4
    %v168 = vshll.u32 %v88, 16
    %v170 = vrot.slane %v168, 5
    %v171 = vsel %vm109, %v166, %v170
    %v172 = vshrl.u32 %v88, 16
    %v174 = vrot.slane %v172, 4
    %v175 = vor.u32 %v174, %v170
    %v176 = vrot.slane %v175, 4
    %v178 = vshll.u32 %v101, 16
    %v180 = vrot.slane %v178, 5
    %v181 = vsel %vm109, %v176, %v180
    %v183 = vshrl.u32 %v89, 16
    %v185 = vrot.slane %v183, 4
    %v186 = vshll.u32 %v89, 16
    %v188 = vrot.slane %v186, 5
    %v189 = vor.u32 %v185, %v188
    %v190 = vrot.slane %v189, 4
    %v192 = vshll.u32 %v90, 16
    %v194 = vrot.slane %v192, 5
    %v195 = vsel %vm109, %v190, %v194
    %v196 = vshrl.u32 %v90, 16
    %v198 = vrot.slane %v196, 4
    %v199 = vor.u32 %v198, %v194
    %v200 = vrot.slane %v199, 4
    %v202 = vshll.u32 %v102, 16
    %v204 = vrot.slane %v202, 5
    %v205 = vsel %vm109, %v200, %v204
    %v207 = vshrl.u32 %v91, 16
    %v209 = vrot.slane %v207, 4
    %v210 = vshll.u32 %v91, 16
    %v212 = vrot.slane %v210, 5
    %v213 = vor.u32 %v209, %v212
    %v214 = vrot.slane %v213, 4
    %v216 = vshll.u32 %v92, 16
    %v218 = vrot.slane %v216, 5
    %v219 = vsel %vm109, %v214, %v218
    %v220 = vshrl.u32 %v92, 16
    %v222 = vrot.slane %v220, 4
    %v223 = vor.u32 %v222, %v218
    %v224 = vrot.slane %v223, 4
    %v226 = vshll.u32 %v103, 16
    %v228 = vrot.slane %v226, 5
    %v229 = vsel %vm109, %v224, %v228
    %v231 = vshrl.u32 %v93, 16
    %v233 = vrot.slane %v231, 4
    %v234 = vshll.u32 %v93, 16
    %v236 = vrot.slane %v234, 5
    %v237 = vor.u32 %v233, %v236
    %v238 = vrot.slane %v237, 4
    %v240 = vshll.u32 %v94, 16
    %v242 = vrot.slane %v240, 5
    %v243 = vsel %vm109, %v238, %v242
    %v244 = vshrl.u32 %v94, 16
    %v246 = vrot.slane %v244, 4
    %v247 = vor.u32 %v246, %v242
    %v248 = vrot.slane %v247, 4
    %v250 = vshll.u32 %v104, 16
    %v252 = vrot.slane %v250, 5
    %v253 = vsel %vm109, %v248, %v252
    %v255 = vshrl.u32 %v95, 16
    %v257 = vrot.slane %v255, 4
    %v258 = vshll.u32 %v95, 16
    %v260 = vrot.slane %v258, 5
    %v261 = vor.u32 %v257, %v260
    %v262 = vrot.slane %v261, 4
    %v264 = vshll.u32 %v96, 16
    %v266 = vrot.slane %v264, 5
    %v267 = vsel %vm109, %v262, %v266
    %v268 = vshrl.u32 %v96, 16
    %v270 = vrot.slane %v268, 4
    %v271 = vor.u32 %v270, %v266
    %v272 = vrot.slane %v271, 4
    %v274 = vshll.u32 %v105, 16
    %v276 = vrot.slane %v274, 5
    %v277 = vsel %vm109, %v272, %v276
    %v279 = vshrl.u32 %v97, 16
    %v281 = vrot.slane %v279, 4
    %v282 = vshll.u32 %v97, 16
    %v284 = vrot.slane %v282, 5
    %v285 = vor.u32 %v281, %v284
    %v286 = vrot.slane %v285, 4
    %v288 = vshll.u32 %v98, 16
    %v290 = vrot.slane %v288, 5
    %v291 = vsel %vm109, %v286, %v290
    %v292 = vshrl.u32 %v98, 16
    %v294 = vrot.slane %v292, 4
    %v295 = vor.u32 %v294, %v290
    %v296 = vrot.slane %v295, 4
    %v298 = vshll.u32 %v106, 16
    %v300 = vrot.slane %v298, 5
    %v301 = vsel %vm109, %v296, %v300
    %v302 = vld [vmem:[%s0] sm:$0xe]
    %v303 = vld [vmem:[%s0 + $0xc] sm:$0xe]
    %v304 = vld [vmem:[%s0 + $0x18] sm:$0xe]
    %v305 = vld [vmem:[%s0 + $0x24] sm:$0xe]
    %v306 = vld [vmem:[%s0 + $0x30] sm:$0xe]
    %v307 = vld [vmem:[%s0 + $0x3c] sm:$0xe]
    %v308 = vld [vmem:[%s0 + $0x48] sm:$0xe]
    %v309 = vld [vmem:[%s0 + $0x54] sm:$0xe]
    %vm334 = vcmask 1042432
    %vm335 = vcmask 1046532
    %vm336 = vmor %vm334, %vm335
    %v337 = vrot.slane %v302, 5
    %v338 = vrot.slane %v337, 4
    %v339 = vrot.slane %v84, 5
    %v340 = vsel %vm336, %v338, %v339
    %v341 = vrot.slane %v339, 4
    %v342 = vrot.slane %v99, 5
    %v343 = vsel %vm336, %v341, %v342
    %v344 = vrot.slane %v303, 5
    %v345 = vrot.slane %v344, 4
    %v346 = vrot.slane %v86, 5
    %v347 = vsel %vm336, %v345, %v346
    %v348 = vrot.slane %v346, 4
    %v349 = vrot.slane %v100, 5
    %v350 = vsel %vm336, %v348, %v349
    %v351 = vrot.slane %v304, 5
    %v352 = vrot.slane %v351, 4
    %v353 = vrot.slane %v88, 5
    %v354 = vsel %vm336, %v352, %v353
    %v355 = vrot.slane %v353, 4
    %v356 = vrot.slane %v101, 5
    %v357 = vsel %vm336, %v355, %v356
    %v358 = vrot.slane %v305, 5
    %v359 = vrot.slane %v358, 4
    %v360 = vrot.slane %v90, 5
    %v361 = vsel %vm336, %v359, %v360
    %v362 = vrot.slane %v360, 4
    %v363 = vrot.slane %v102, 5
    %v364 = vsel %vm336, %v362, %v363
    %v365 = vrot.slane %v306, 5
    %v366 = vrot.slane %v365, 4
    %v367 = vrot.slane %v92, 5
    %v368 = vsel %vm336, %v366, %v367
    %v369 = vrot.slane %v367, 4
    %v370 = vrot.slane %v103, 5
    %v371 = vsel %vm336, %v369, %v370
    %v372 = vrot.slane %v307, 5
    %v373 = vrot.slane %v372, 4
    %v374 = vrot.slane %v94, 5
    %v375 = vsel %vm336, %v373, %v374
    %v376 = vrot.slane %v374, 4
    %v377 = vrot.slane %v104, 5
    %v378 = vsel %vm336, %v376, %v377
    %v379 = vrot.slane %v308, 5
    %v380 = vrot.slane %v379, 4
    %v381 = vrot.slane %v96, 5
    %v382 = vsel %vm336, %v380, %v381
    %v383 = vrot.slane %v381, 4
    %v384 = vrot.slane %v105, 5
    %v385 = vsel %vm336, %v383, %v384
    %v386 = vrot.slane %v309, 5
    %v387 = vrot.slane %v386, 4
    %v388 = vrot.slane %v98, 5
    %v389 = vsel %vm336, %v387, %v388
    %v390 = vrot.slane %v388, 4
    %v391 = vrot.slane %v106, 5
    %v392 = vsel %vm336, %v390, %v391
    %v401 = vunpack.c.l.b16 %v83
    %v402 = vunpack.c.l.b16 %v84
    %v403 = vunpack.c.l.b16 %v85
    %v404 = vunpack.c.l.b16 %v86
    %v405 = vunpack.c.l.b16 %v87
    %v406 = vunpack.c.l.b16 %v88
    %v407 = vunpack.c.l.b16 %v89
    %v408 = vunpack.c.l.b16 %v90
    %v409 = vunpack.c.l.b16 %v91
    %v410 = vunpack.c.l.b16 %v92
    %v411 = vunpack.c.l.b16 %v93
    %v412 = vunpack.c.l.b16 %v94
    %v413 = vunpack.c.l.b16 %v95
    %v414 = vunpack.c.l.b16 %v96
    %v415 = vunpack.c.l.b16 %v97
    %v416 = vunpack.c.l.b16 %v98
    %v417 = vpack.c.b16 %v402, %v401
    %v418 = vpack.c.b16 %v404, %v403
    %v419 = vpack.c.b16 %v406, %v405
    %v420 = vpack.c.b16 %v408, %v407
    %v421 = vpack.c.b16 %v410, %v409
    %v422 = vpack.c.b16 %v412, %v411
    %v423 = vpack.c.b16 %v414, %v413
    %v424 = vpack.c.b16 %v416, %v415
    %v433 = vunpack.c.l.b16 %v123
    %v434 = vunpack.c.l.b16 %v133
    %v435 = vunpack.c.l.b16 %v147
    %v436 = vunpack.c.l.b16 %v157
    %v437 = vunpack.c.l.b16 %v171
    %v438 = vunpack.c.l.b16 %v181
    %v439 = vunpack.c.l.b16 %v195
    %v440 = vunpack.c.l.b16 %v205
    %v441 = vunpack.c.l.b16 %v219
    %v442 = vunpack.c.l.b16 %v229
    %v443 = vunpack.c.l.b16 %v243
    %v444 = vunpack.c.l.b16 %v253
    %v445 = vunpack.c.l.b16 %v267
    %v446 = vunpack.c.l.b16 %v277
    %v447 = vunpack.c.l.b16 %v291
    %v448 = vunpack.c.l.b16 %v301
    %v449 = vpack.c.b16 %v434, %v433
    %v450 = vpack.c.b16 %v436, %v435
    %v451 = vpack.c.b16 %v438, %v437
    %v452 = vpack.c.b16 %v440, %v439
    %v453 = vpack.c.b16 %v442, %v441
    %v454 = vpack.c.b16 %v444, %v443
    %v455 = vpack.c.b16 %v446, %v445
    %v456 = vpack.c.b16 %v448, %v447
    %v465 = vunpack.c.l.b16 %v340
    %v466 = vunpack.c.l.b16 %v343
    %v467 = vunpack.c.l.b16 %v347
    %v468 = vunpack.c.l.b16 %v350
    %v469 = vunpack.c.l.b16 %v354
    %v470 = vunpack.c.l.b16 %v357
    %v471 = vunpack.c.l.b16 %v361
    %v472 = vunpack.c.l.b16 %v364
    %v473 = vunpack.c.l.b16 %v368
    %v474 = vunpack.c.l.b16 %v371
    %v475 = vunpack.c.l.b16 %v375
    %v476 = vunpack.c.l.b16 %v378
    %v477 = vunpack.c.l.b16 %v382
    %v478 = vunpack.c.l.b16 %v385
    %v479 = vunpack.c.l.b16 %v389
    %v480 = vunpack.c.l.b16 %v392
    %v481 = vpack.c.b16 %v466, %v465
    %v482 = vpack.c.b16 %v468, %v467
    %v483 = vpack.c.b16 %v470, %v469
    %v484 = vpack.c.b16 %v472, %v471
    %v485 = vpack.c.b16 %v474, %v473
    %v486 = vpack.c.b16 %v476, %v475
    %v487 = vpack.c.b16 %v478, %v477
    %v488 = vpack.c.b16 %v480, %v479
    %v497 = vld [vmem:[%s3] sm:$0xf]
    %v498 = vld [vmem:[%s3 + $0x4] sm:$0xf]
    %v499 = vld [vmem:[%s3 + $0x8] sm:$0xf]
    %v500 = vld [vmem:[%s3 + $0xc] sm:$0xf]
    %v501 = vld [vmem:[%s3 + $0x10] sm:$0xf]
    %v502 = vld [vmem:[%s3 + $0x14] sm:$0xf]
    %v503 = vld [vmem:[%s3 + $0x18] sm:$0xf]
    %v504 = vld [vmem:[%s3 + $0x1c] sm:$0xf]
    %v505 = vld [vmem:[%s3 + $0x20] sm:$0xf]
    %v506 = vld [vmem:[%s3 + $0x24] sm:$0xf]
    %v507 = vld [vmem:[%s3 + $0x28] sm:$0xf]
    %v508 = vld [vmem:[%s3 + $0x2c] sm:$0xf]
    %v509 = vld [vmem:[%s3 + $0x30] sm:$0xf]
    %v510 = vld [vmem:[%s3 + $0x34] sm:$0xf]
    %v511 = vld [vmem:[%s3 + $0x38] sm:$0xf]
    %v512 = vld [vmem:[%s3 + $0x3c] sm:$0xf]
    %v513 = vld [vmem:[%s3 + $0x40] sm:$0xf]
    %v514 = vld [vmem:[%s3 + $0x44] sm:$0xf]
    %v515 = vld [vmem:[%s3 + $0x48] sm:$0xf]
    %v516 = vld [vmem:[%s3 + $0x4c] sm:$0xf]
    %v517 = vld [vmem:[%s3 + $0x50] sm:$0xf]
    %v518 = vld [vmem:[%s3 + $0x54] sm:$0xf]
    %v519 = vld [vmem:[%s3 + $0x58] sm:$0xf]
    %v520 = vld [vmem:[%s3 + $0x5c] sm:$0xf]
    %v521 = vld [vmem:[%s3 + $0x60] sm:$0xf]
    %v522 = vld [vmem:[%s3 + $0x64] sm:$0xf]
    %v523 = vld [vmem:[%s3 + $0x68] sm:$0xf]
    %v524 = vld [vmem:[%s3 + $0x6c] sm:$0xf]
    %v525 = vld [vmem:[%s3 + $0x70] sm:$0xf]
    %v526 = vld [vmem:[%s3 + $0x74] sm:$0xf]
    %v527 = vld [vmem:[%s3 + $0x78] sm:$0xf]
    %v528 = vld [vmem:[%s3 + $0x7c] sm:$0xf]
    %v529 = vld [vmem:[%s3 + $0x80] sm:$0xf]
    %v530 = vld [vmem:[%s3 + $0x84] sm:$0xf]
    %v531 = vld [vmem:[%s3 + $0x88] sm:$0xf]
    %v532 = vld [vmem:[%s3 + $0x8c] sm:$0xf]
    %v533 = vld [vmem:[%s3 + $0x90] sm:$0xf]
    %v534 = vld [vmem:[%s3 + $0x94] sm:$0xf]
    %v535 = vld [vmem:[%s3 + $0x98] sm:$0xf]
    %v536 = vld [vmem:[%s3 + $0x9c] sm:$0xf]
    %v537 = vld [vmem:[%s3 + $0xa0] sm:$0xf]
    %v538 = vld [vmem:[%s3 + $0xa4] sm:$0xf]
    %v539 = vld [vmem:[%s3 + $0xa8] sm:$0xf]
    %v540 = vld [vmem:[%s3 + $0xac] sm:$0xf]
    %v541 = vld [vmem:[%s3 + $0xb0] sm:$0xf]
    %v542 = vld [vmem:[%s3 + $0xb4] sm:$0xf]
    %v543 = vld [vmem:[%s3 + $0xb8] sm:$0xf]
    %v544 = vld [vmem:[%s3 + $0xbc] sm:$0xf]
    %v545 = vld [vmem:[%s4] sm:$0x1]
    %v547 = vlaneseq
    %v548 = vshrl.u32 %v547, 7
    %v549 = vsub.s32 0, %v548
    %v550 = vrot.slane %v545, %v549
    %v600 = vunpack.c.l.b16 %v497
    %v601 = vunpack.c.l.b16 %v498
    %v602 = vunpack.c.l.b16 %v499
    %v603 = vunpack.c.l.b16 %v500
    %v604 = vunpack.c.l.b16 %v501
    %v605 = vunpack.c.l.b16 %v502
    %v606 = vunpack.c.l.b16 %v503
    %v607 = vunpack.c.l.b16 %v504
    %v608 = vunpack.c.l.b16 %v505
    %v609 = vunpack.c.l.b16 %v506
    %v610 = vunpack.c.l.b16 %v507
    %v611 = vunpack.c.l.b16 %v508
    %v612 = vunpack.c.l.b16 %v509
    %v613 = vunpack.c.l.b16 %v510
    %v614 = vunpack.c.l.b16 %v511
    %v615 = vunpack.c.l.b16 %v512
    %v616 = vunpack.c.l.b16 %v513
    %v617 = vunpack.c.l.b16 %v514
    %v618 = vunpack.c.l.b16 %v515
    %v619 = vunpack.c.l.b16 %v516
    %v620 = vunpack.c.l.b16 %v517
    %v621 = vunpack.c.l.b16 %v518
    %v622 = vunpack.c.l.b16 %v519
    %v623 = vunpack.c.l.b16 %v520
    %v624 = vunpack.c.l.b16 %v521
    %v625 = vunpack.c.l.b16 %v522
    %v626 = vunpack.c.l.b16 %v523
    %v627 = vunpack.c.l.b16 %v524
    %v628 = vunpack.c.l.b16 %v525
    %v629 = vunpack.c.l.b16 %v526
    %v630 = vunpack.c.l.b16 %v527
    %v631 = vunpack.c.l.b16 %v528
    %v632 = vunpack.c.l.b16 %v529
    %v633 = vunpack.c.l.b16 %v530
    %v634 = vunpack.c.l.b16 %v531
    %v635 = vunpack.c.l.b16 %v532
    %v636 = vunpack.c.l.b16 %v533
    %v637 = vunpack.c.l.b16 %v534
    %v638 = vunpack.c.l.b16 %v535
    %v639 = vunpack.c.l.b16 %v536
    %v640 = vunpack.c.l.b16 %v537
    %v641 = vunpack.c.l.b16 %v538
    %v642 = vunpack.c.l.b16 %v539
    %v643 = vunpack.c.l.b16 %v540
    %v644 = vunpack.c.l.b16 %v541
    %v645 = vunpack.c.l.b16 %v542
    %v646 = vunpack.c.l.b16 %v543
    %v647 = vunpack.c.l.b16 %v544
    %v648 = vpack.c.b16 %v601, %v600
    %v649 = vpack.c.b16 %v603, %v602
    %v650 = vpack.c.b16 %v605, %v604
    %v651 = vpack.c.b16 %v607, %v606
    %v652 = vpack.c.b16 %v609, %v608
    %v653 = vpack.c.b16 %v611, %v610
    %v654 = vpack.c.b16 %v613, %v612
    %v655 = vpack.c.b16 %v615, %v614
    %v656 = vpack.c.b16 %v617, %v616
    %v657 = vpack.c.b16 %v619, %v618
    %v658 = vpack.c.b16 %v621, %v620
    %v659 = vpack.c.b16 %v623, %v622
    %v660 = vpack.c.b16 %v625, %v624
    %v661 = vpack.c.b16 %v627, %v626
    %v662 = vpack.c.b16 %v629, %v628
    %v663 = vpack.c.b16 %v631, %v630
    %v664 = vpack.c.b16 %v633, %v632
    %v665 = vpack.c.b16 %v635, %v634
    %v666 = vpack.c.b16 %v637, %v636
    %v667 = vpack.c.b16 %v639, %v638
    %v668 = vpack.c.b16 %v641, %v640
    %v669 = vpack.c.b16 %v643, %v642
    %v670 = vpack.c.b16 %v645, %v644
    %v671 = vpack.c.b16 %v647, %v646
    %696 = vmatprep.subr.bf16.mxu0 0
    %697 = vmatpush1.bf16.msra.mxu0 %v655
    %698 = vmatprep.subr.bf16.mxu0 0
    %699 = vmatpush1.bf16.msra.mxu0 %v654
    %700 = vmatprep.subr.bf16.mxu0 0
    %701 = vmatpush1.bf16.msra.mxu0 %v653
    %702 = vmatprep.subr.bf16.mxu0 0
    %703 = vmatpush1.bf16.msra.mxu0 %v652
    %704 = vmatprep.subr.bf16.mxu0 0
    %705 = vmatpush1.bf16.msra.mxu0 %v651
    %706 = vmatprep.subr.bf16.mxu0 0
    %707 = vmatpush1.bf16.msra.mxu0 %v650
    %708 = vmatprep.subr.bf16.mxu0 0
    %709 = vmatpush1.bf16.msra.mxu0 %v649
    %710 = vmatprep.subr.bf16.mxu0 0
    %711 = vmatpush1.bf16.msra.mxu0 %v648
    %712 = vmatprep.subr.bf16.mxu0 0
    %713 = vmatpush2.bf16.msra.mxu0 %v663
    %714 = vmatprep.subr.bf16.mxu0 0
    %715 = vmatpush2.bf16.msra.mxu0 %v662
    %716 = vmatprep.subr.bf16.mxu0 0
    %717 = vmatpush2.bf16.msra.mxu0 %v661
    %718 = vmatprep.subr.bf16.mxu0 0
    %719 = vmatpush2.bf16.msra.mxu0 %v660
    %720 = vmatprep.subr.bf16.mxu0 0
    %721 = vmatpush2.bf16.msra.mxu0 %v659
    %722 = vmatprep.subr.bf16.mxu0 0
    %723 = vmatpush2.bf16.msra.mxu0 %v658
    %724 = vmatprep.subr.bf16.mxu0 0
    %725 = vmatpush2.bf16.msra.mxu0 %v657
    %726 = vmatprep.subr.bf16.mxu0 0
    %727 = vmatpush2.bf16.msra.mxu0 %v656
    %728 = vmatprep.mubr.bf16.mxu0 %v449
    %729 = vmatmul.mubr.bf16.gmra.mxu0 %v417
    %v730 = vpop.f32.mrf.mxu0
    %v731 = vadd.f32 %v550, %v730
    %v732 = vpop.f32.mrf.mxu0
    %v733 = vpop.f32.mrf.mxu0
    %v734 = vadd.f32 %v550, %v733
    %v735 = vpop.f32.mrf.mxu0
    %736 = vmatprep.mubr.bf16.mxu0 %v450
    %737 = vmatmul.mubr.bf16.gmra.mxu0 %v418
    %v738 = vpop.f32.mrf.mxu0
    %v739 = vadd.f32 %v550, %v738
    %v740 = vpop.f32.mrf.mxu0
    %v741 = vpop.f32.mrf.mxu0
    %v742 = vadd.f32 %v550, %v741
    %v743 = vpop.f32.mrf.mxu0
    %744 = vmatprep.mubr.bf16.mxu0 %v451
    %745 = vmatmul.mubr.bf16.gmra.mxu0 %v419
    %v746 = vpop.f32.mrf.mxu0
    %v747 = vadd.f32 %v550, %v746
    %v748 = vpop.f32.mrf.mxu0
    %v749 = vpop.f32.mrf.mxu0
    %v750 = vadd.f32 %v550, %v749
    %v751 = vpop.f32.mrf.mxu0
    %752 = vmatprep.mubr.bf16.mxu0 %v452
    %753 = vmatmul.mubr.bf16.gmra.mxu0 %v420
    %v754 = vpop.f32.mrf.mxu0
    %v755 = vadd.f32 %v550, %v754
    %v756 = vpop.f32.mrf.mxu0
    %v757 = vpop.f32.mrf.mxu0
    %v758 = vadd.f32 %v550, %v757
    %v759 = vpop.f32.mrf.mxu0
    %760 = vmatprep.mubr.bf16.mxu0 %v453
    %761 = vmatmul.mubr.bf16.gmra.mxu0 %v421
    %v762 = vpop.f32.mrf.mxu0
    %v763 = vadd.f32 %v550, %v762
    %v764 = vpop.f32.mrf.mxu0
    %v765 = vpop.f32.mrf.mxu0
    %v766 = vadd.f32 %v550, %v765
    %v767 = vpop.f32.mrf.mxu0
    %768 = vmatprep.mubr.bf16.mxu0 %v454
    %769 = vmatmul.mubr.bf16.gmra.mxu0 %v422
    %v770 = vpop.f32.mrf.mxu0
    %v771 = vadd.f32 %v550, %v770
    %v772 = vpop.f32.mrf.mxu0
    %v773 = vpop.f32.mrf.mxu0
    %v774 = vadd.f32 %v550, %v773
    %v775 = vpop.f32.mrf.mxu0
    %776 = vmatprep.mubr.bf16.mxu0 %v455
    %777 = vmatmul.mubr.bf16.gmra.mxu0 %v423
    %v778 = vpop.f32.mrf.mxu0
    %v779 = vadd.f32 %v550, %v778
    %v780 = vpop.f32.mrf.mxu0
    %v781 = vpop.f32.mrf.mxu0
    %v782 = vadd.f32 %v550, %v781
    %v783 = vpop.f32.mrf.mxu0
    %784 = vmatprep.mubr.bf16.mxu0 %v456
    %785 = vmatmul.mubr.bf16.gmra.mxu0 %v424
    %v786 = vpop.f32.mrf.mxu0
    %v787 = vadd.f32 %v550, %v786
    %v788 = vpop.f32.mrf.mxu0
    %v789 = vpop.f32.mrf.mxu0
    %v790 = vadd.f32 %v550, %v789
    %v791 = vpop.f32.mrf.mxu0
    %792 = vdwg.mxu0
    %793 = vmatprep.subr.bf16.mxu0 0
    %794 = vmatpush1.bf16.msra.mxu0 %v671
    %795 = vmatprep.subr.bf16.mxu0 0
    %796 = vmatpush1.bf16.msra.mxu0 %v670
    %797 = vmatprep.subr.bf16.mxu0 0
    %798 = vmatpush1.bf16.msra.mxu0 %v669
    %799 = vmatprep.subr.bf16.mxu0 0
    %800 = vmatpush1.bf16.msra.mxu0 %v668
    %801 = vmatprep.subr.bf16.mxu0 0
    %802 = vmatpush1.bf16.msra.mxu0 %v667
    %803 = vmatprep.subr.bf16.mxu0 0
    %804 = vmatpush1.bf16.msra.mxu0 %v666
    %805 = vmatprep.subr.bf16.mxu0 0
    %806 = vmatpush1.bf16.msra.mxu0 %v665
    %807 = vmatprep.subr.bf16.mxu0 0
    %808 = vmatpush1.bf16.msra.mxu0 %v664
    %809 = vmatprep.subr.bf16.mxu0 0
    %810 = vmatpush2.bf16.msra.mxu0 0
    %811 = vmatprep.subr.bf16.mxu0 0
    %812 = vmatpush2.bf16.msra.mxu0 0
    %813 = vmatprep.subr.bf16.mxu0 0
    %814 = vmatpush2.bf16.msra.mxu0 0
    %815 = vmatprep.subr.bf16.mxu0 0
    %816 = vmatpush2.bf16.msra.mxu0 0
    %817 = vmatprep.subr.bf16.mxu0 0
    %818 = vmatpush2.bf16.msra.mxu0 0
    %819 = vmatprep.subr.bf16.mxu0 0
    %820 = vmatpush2.bf16.msra.mxu0 0
    %821 = vmatprep.subr.bf16.mxu0 0
    %822 = vmatpush2.bf16.msra.mxu0 0
    %823 = vmatprep.subr.bf16.mxu0 0
    %824 = vmatpush2.bf16.msra.mxu0 0
    %825 = vmatprep.mubr.bf16.mxu0 0
    %826 = vmatmul.mubr.bf16.gmra.mxu0 %v481
    %v827 = vpop.f32.mrf.mxu0
    %v828 = vadd.f32 %v731, %v827
    %v829 = vpop.f32.mrf.mxu0
    %v830 = vpop.f32.mrf.mxu0
    %v831 = vadd.f32 %v734, %v830
    %v832 = vpop.f32.mrf.mxu0
    %833 = vmatprep.mubr.bf16.mxu0 0
    %834 = vmatmul.mubr.bf16.gmra.mxu0 %v482
    %v835 = vpop.f32.mrf.mxu0
    %v836 = vadd.f32 %v739, %v835
    %v837 = vpop.f32.mrf.mxu0
    %v838 = vpop.f32.mrf.mxu0
    %v839 = vadd.f32 %v742, %v838
    %v840 = vpop.f32.mrf.mxu0
    %841 = vmatprep.mubr.bf16.mxu0 0
    %842 = vmatmul.mubr.bf16.gmra.mxu0 %v483
    %v843 = vpop.f32.mrf.mxu0
    %v844 = vadd.f32 %v747, %v843
    %v845 = vpop.f32.mrf.mxu0
    %v846 = vpop.f32.mrf.mxu0
    %v847 = vadd.f32 %v750, %v846
    %v848 = vpop.f32.mrf.mxu0
    %849 = vmatprep.mubr.bf16.mxu0 0
    %850 = vmatmul.mubr.bf16.gmra.mxu0 %v484
    %v851 = vpop.f32.mrf.mxu0
    %v852 = vadd.f32 %v755, %v851
    %v853 = vpop.f32.mrf.mxu0
    %v854 = vpop.f32.mrf.mxu0
    %v855 = vadd.f32 %v758, %v854
    %v856 = vpop.f32.mrf.mxu0
    %857 = vmatprep.mubr.bf16.mxu0 0
    %858 = vmatmul.mubr.bf16.gmra.mxu0 %v485
    %v859 = vpop.f32.mrf.mxu0
    %v860 = vadd.f32 %v763, %v859
    %v861 = vpop.f32.mrf.mxu0
    %v862 = vpop.f32.mrf.mxu0
    %v863 = vadd.f32 %v766, %v862
    %v864 = vpop.f32.mrf.mxu0
    %865 = vmatprep.mubr.bf16.mxu0 0
    %866 = vmatmul.mubr.bf16.gmra.mxu0 %v486
    %v867 = vpop.f32.mrf.mxu0
    %v868 = vadd.f32 %v771, %v867
    %v869 = vpop.f32.mrf.mxu0
    %v870 = vpop.f32.mrf.mxu0
    %v871 = vadd.f32 %v774, %v870
    %v872 = vpop.f32.mrf.mxu0
    %873 = vmatprep.mubr.bf16.mxu0 0
    %874 = vmatmul.mubr.bf16.gmra.mxu0 %v487
    %v875 = vpop.f32.mrf.mxu0
    %v876 = vadd.f32 %v779, %v875
    %v877 = vpop.f32.mrf.mxu0
    %v878 = vpop.f32.mrf.mxu0
    %v879 = vadd.f32 %v782, %v878
    %v880 = vpop.f32.mrf.mxu0
    %881 = vmatprep.mubr.bf16.mxu0 0
    %882 = vmatmul.mubr.bf16.gmra.mxu0 %v488
    %v883 = vpop.f32.mrf.mxu0
    %v884 = vadd.f32 %v787, %v883
    %v885 = vpop.f32.mrf.mxu0
    %v886 = vpop.f32.mrf.mxu0
    %v887 = vadd.f32 %v790, %v886
    %v888 = vpop.f32.mrf.mxu0
    %889 = vdwg.mxu0
    %v890 = vld [vmem:[%s5] sm:$0x1]
    %v891 = vld [vmem:[%s6] sm:$0x1]
    %v892 = vadd.f32 %v828, %v831
    %v893 = vrot.slane %v892, 4
    %v894 = vadd.f32 %v892, %v893
    %v895 = vrot.slane %v894, 2
    %v896 = vadd.f32 %v894, %v895
    %v897 = vrot.slane %v896, 1
    %v898 = vadd.f32 %v896, %v897
    %v899 = vadd.f32 %v836, %v839
    %v900 = vrot.slane %v899, 4
    %v901 = vadd.f32 %v899, %v900
    %v902 = vrot.slane %v901, 2
    %v903 = vadd.f32 %v901, %v902
    %v904 = vrot.slane %v903, 1
    %v905 = vadd.f32 %v903, %v904
    %v906 = vadd.f32 %v844, %v847
    %v907 = vrot.slane %v906, 4
    %v908 = vadd.f32 %v906, %v907
    %v909 = vrot.slane %v908, 2
    %v910 = vadd.f32 %v908, %v909
    %v911 = vrot.slane %v910, 1
    %v912 = vadd.f32 %v910, %v911
    %v913 = vadd.f32 %v852, %v855
    %v914 = vrot.slane %v913, 4
    %v915 = vadd.f32 %v913, %v914
    %v916 = vrot.slane %v915, 2
    %v917 = vadd.f32 %v915, %v916
    %v918 = vrot.slane %v917, 1
    %v919 = vadd.f32 %v917, %v918
    %v920 = vadd.f32 %v860, %v863
    %v921 = vrot.slane %v920, 4
    %v922 = vadd.f32 %v920, %v921
    %v923 = vrot.slane %v922, 2
    %v924 = vadd.f32 %v922, %v923
    %v925 = vrot.slane %v924, 1
    %v926 = vadd.f32 %v924, %v925
    %v927 = vadd.f32 %v868, %v871
    %v928 = vrot.slane %v927, 4
    %v929 = vadd.f32 %v927, %v928
    %v930 = vrot.slane %v929, 2
    %v931 = vadd.f32 %v929, %v930
    %v932 = vrot.slane %v931, 1
    %v933 = vadd.f32 %v931, %v932
    %v934 = vadd.f32 %v876, %v879
    %v935 = vrot.slane %v934, 4
    %v936 = vadd.f32 %v934, %v935
    %v937 = vrot.slane %v936, 2
    %v938 = vadd.f32 %v936, %v937
    %v939 = vrot.slane %v938, 1
    %v940 = vadd.f32 %v938, %v939
    %v941 = vadd.f32 %v884, %v887
    %v942 = vrot.slane %v941, 4
    %v943 = vadd.f32 %v941, %v942
    %v944 = vrot.slane %v943, 2
    %v945 = vadd.f32 %v943, %v944
    %v946 = vrot.slane %v945, 1
    %v947 = vadd.f32 %v945, %v946
    %v948 = vmul.f32 %v828, %v828
    %v949 = vmul.f32 %v831, %v831
    %v950 = vmul.f32 %v836, %v836
    %v951 = vmul.f32 %v839, %v839
    %v952 = vmul.f32 %v844, %v844
    %v953 = vmul.f32 %v847, %v847
    %v954 = vmul.f32 %v852, %v852
    %v955 = vmul.f32 %v855, %v855
    %v956 = vmul.f32 %v860, %v860
    %v957 = vmul.f32 %v863, %v863
    %v958 = vmul.f32 %v868, %v868
    %v959 = vmul.f32 %v871, %v871
    %v960 = vmul.f32 %v876, %v876
    %v961 = vmul.f32 %v879, %v879
    %v962 = vmul.f32 %v884, %v884
    %v963 = vmul.f32 %v887, %v887
    %v964 = vadd.f32 %v948, %v949
    %v965 = vrot.slane %v964, 4
    %v966 = vadd.f32 %v964, %v965
    %v967 = vrot.slane %v966, 2
    %v968 = vadd.f32 %v966, %v967
    %v969 = vrot.slane %v968, 1
    %v970 = vadd.f32 %v968, %v969
    %v971 = vadd.f32 %v950, %v951
    %v972 = vrot.slane %v971, 4
    %v973 = vadd.f32 %v971, %v972
    %v974 = vrot.slane %v973, 2
    %v975 = vadd.f32 %v973, %v974
    %v976 = vrot.slane %v975, 1
    %v977 = vadd.f32 %v975, %v976
    %v978 = vadd.f32 %v952, %v953
    %v979 = vrot.slane %v978, 4
    %v980 = vadd.f32 %v978, %v979
    %v981 = vrot.slane %v980, 2
    %v982 = vadd.f32 %v980, %v981
    %v983 = vrot.slane %v982, 1
    %v984 = vadd.f32 %v982, %v983
    %v985 = vadd.f32 %v954, %v955
    %v986 = vrot.slane %v985, 4
    %v987 = vadd.f32 %v985, %v986
    %v988 = vrot.slane %v987, 2
    %v989 = vadd.f32 %v987, %v988
    %v990 = vrot.slane %v989, 1
    %v991 = vadd.f32 %v989, %v990
    %v992 = vadd.f32 %v956, %v957
    %v993 = vrot.slane %v992, 4
    %v994 = vadd.f32 %v992, %v993
    %v995 = vrot.slane %v994, 2
    %v996 = vadd.f32 %v994, %v995
    %v997 = vrot.slane %v996, 1
    %v998 = vadd.f32 %v996, %v997
    %v999 = vadd.f32 %v958, %v959
    %v1000 = vrot.slane %v999, 4
    %v1001 = vadd.f32 %v999, %v1000
    %v1002 = vrot.slane %v1001, 2
    %v1003 = vadd.f32 %v1001, %v1002
    %v1004 = vrot.slane %v1003, 1
    %v1005 = vadd.f32 %v1003, %v1004
    %v1006 = vadd.f32 %v960, %v961
    %v1007 = vrot.slane %v1006, 4
    %v1008 = vadd.f32 %v1006, %v1007
    %v1009 = vrot.slane %v1008, 2
    %v1010 = vadd.f32 %v1008, %v1009
    %v1011 = vrot.slane %v1010, 1
    %v1012 = vadd.f32 %v1010, %v1011
    %v1013 = vadd.f32 %v962, %v963
    %v1014 = vrot.slane %v1013, 4
    %v1015 = vadd.f32 %v1013, %v1014
    %v1016 = vrot.slane %v1015, 2
    %v1017 = vadd.f32 %v1015, %v1016
    %v1018 = vrot.slane %v1017, 1
    %v1019 = vadd.f32 %v1017, %v1018
    %vm1028 = vcmask 1041409
    %v1029 = vsel %vm1028, %v905, %v898
    %vm1030 = vcmask 1042434
    %v1031 = vsel %vm1030, %v912, %v1029
    %vm1032 = vcmask 1043459
    %v1033 = vsel %vm1032, %v919, %v1031
    %vm1034 = vcmask 1044484
    %v1035 = vsel %vm1034, %v926, %v1033
    %vm1036 = vcmask 1045509
    %v1037 = vsel %vm1036, %v933, %v1035
    %vm1038 = vcmask 1046534
    %v1039 = vsel %vm1038, %v940, %v1037
    %vm1040 = vcmask 1047559
    %v1041 = vsel %vm1040, %v947, %v1039
    %v1051 = vsel %vm1028, %v977, %v970
    %v1052 = vsel %vm1030, %v984, %v1051
    %v1053 = vsel %vm1032, %v991, %v1052
    %v1054 = vsel %vm1034, %v998, %v1053
    %v1055 = vsel %vm1036, %v1005, %v1054
    %v1056 = vsel %vm1038, %v1012, %v1055
    %v1057 = vsel %vm1040, %v1019, %v1056
    %1059 = vmatprep.subr.mxu0 0.0
    %1060 = vmatpush1.msra.mxu0 %v81
    %1061 = vmatprep.subr.mxu0 0.0
    %1062 = vmatpush1.msra.mxu0 %v80
    %1063 = vmatprep.subr.mxu0 0.0
    %1064 = vmatpush1.msra.mxu0 %v79
    %1065 = vmatprep.subr.mxu0 0.0
    %1066 = vmatpush1.msra.mxu0 %v78
    %1067 = vmatprep.subr.mxu0 0.0
    %1068 = vmatpush1.msra.mxu0 %v77
    %1069 = vmatprep.subr.mxu0 0.0
    %1070 = vmatpush1.msra.mxu0 %v76
    %1071 = vmatprep.subr.mxu0 0.0
    %1072 = vmatpush1.msra.mxu0 %v75
    %1073 = vmatprep.subr.mxu0 0.0
    %1074 = vmatpush1.msra.mxu0 %v74
    %1075 = vmatprep.subr.mxu0 0.0
    %1076 = vmatpush1.msra.mxu0 %v73
    %1077 = vmatprep.subr.mxu0 0.0
    %1078 = vmatpush1.msra.mxu0 %v72
    %1079 = vmatprep.subr.mxu0 0.0
    %1080 = vmatpush1.msra.mxu0 %v71
    %1081 = vmatprep.subr.mxu0 0.0
    %1082 = vmatpush1.msra.mxu0 %v70
    %1083 = vmatprep.subr.mxu0 0.0
    %1084 = vmatpush1.msra.mxu0 %v69
    %1085 = vmatprep.subr.mxu0 0.0
    %1086 = vmatpush1.msra.mxu0 %v68
    %1087 = vmatprep.subr.mxu0 0.0
    %1088 = vmatpush1.msra.mxu0 %v67
    %1089 = vmatprep.subr.mxu0 0.0
    %1090 = vmatpush1.msra.mxu0 %v66
    %1091 = vmatprep.subr.mxu0 0.0
    %1092 = vmatpush2.msra.mxu0 0.0
    %1093 = vmatprep.subr.mxu0 0.0
    %1094 = vmatpush2.msra.mxu0 0.0
    %1095 = vmatprep.subr.mxu0 0.0
    %1096 = vmatpush2.msra.mxu0 0.0
    %1097 = vmatprep.subr.mxu0 0.0
    %1098 = vmatpush2.msra.mxu0 0.0
    %1099 = vmatprep.subr.mxu0 0.0
    %1100 = vmatpush2.msra.mxu0 0.0
    %1101 = vmatprep.subr.mxu0 0.0
    %1102 = vmatpush2.msra.mxu0 0.0
    %1103 = vmatprep.subr.mxu0 0.0
    %1104 = vmatpush2.msra.mxu0 0.0
    %1105 = vmatprep.subr.mxu0 0.0
    %1106 = vmatpush2.msra.mxu0 0.0
    %1107 = vmatprep.subr.mxu0 0.0
    %1108 = vmatpush2.msra.mxu0 0.0
    %1109 = vmatprep.subr.mxu0 0.0
    %1110 = vmatpush2.msra.mxu0 0.0
    %1111 = vmatprep.subr.mxu0 0.0
    %1112 = vmatpush2.msra.mxu0 0.0
    %1113 = vmatprep.subr.mxu0 0.0
    %1114 = vmatpush2.msra.mxu0 0.0
    %1115 = vmatprep.subr.mxu0 0.0
    %1116 = vmatpush2.msra.mxu0 0.0
    %1117 = vmatprep.subr.mxu0 0.0
    %1118 = vmatpush2.msra.mxu0 0.0
    %1119 = vmatprep.subr.mxu0 0.0
    %1120 = vmatpush2.msra.mxu0 0.0
    %1121 = vmatprep.subr.mxu0 0.0
    %1122 = vmatpush2.msra.mxu0 0.0
    %1123 = vmatprep.mubr.f32.mxu0 0.0
    %1124 = vmatmul.mubr.f32.gmra.mxu0 %v1041
    %v1125 = vpop.f32.mrf.mxu0
    %v1126 = vadd.f32 0.0, %v1125
    %v1127 = vpop.f32.mrf.mxu0
    %1128 = vmatprep.mubr.f32.mxu0 0.0
    %1129 = vmatmul.mubr.f32.gmra.mxu0 %v1057
    %v1130 = vpop.f32.mrf.mxu0
    %v1131 = vadd.f32 0.0, %v1130
    %v1132 = vpop.f32.mrf.mxu0
    %1133 = vdwg.mxu0
    %v1134 = vmul.f32 %v1126, 0.03125
    %v1135 = vmul.f32 %v1131, 0.03125
    %v1136 = vmul.f32 %v1134, %v1134
    %v1137 = vsub.f32 %v1135, %v1136
    %v1138 = vmax.f32 %v1137, 0.0
    %vm1139 = vcmask 64512
    %v1141 = vsel %vm1139, %v1134, 0
    %v1144 = vsel %vm1139, %v1138, 0
    %1146 = vmatprep.subr.mxu0 0.0
    %1147 = vmatpush1.msra.mxu0 0.0
    %1148 = vmatprep.subr.mxu0 0.0
    %1149 = vmatpush1.msra.mxu0 0.0
    %1150 = vmatprep.subr.mxu0 0.0
    %1151 = vmatpush1.msra.mxu0 0.0
    %1152 = vmatprep.subr.mxu0 0.0
    %1153 = vmatpush1.msra.mxu0 0.0
    %1154 = vmatprep.subr.mxu0 0.0
    %1155 = vmatpush1.msra.mxu0 0.0
    %1156 = vmatprep.subr.mxu0 0.0
    %1157 = vmatpush1.msra.mxu0 0.0
    %1158 = vmatprep.subr.mxu0 0.0
    %1159 = vmatpush1.msra.mxu0 0.0
    %1160 = vmatprep.subr.mxu0 0.0
    %1161 = vmatpush1.msra.mxu0 0.0
    %1162 = vmatprep.subr.mxu0 0.0
    %1163 = vmatpush1.msra.mxu0 0.0
    %1164 = vmatprep.subr.mxu0 0.0
    %1165 = vmatpush1.msra.mxu0 0.0
    %1166 = vmatprep.subr.mxu0 0.0
    %1167 = vmatpush1.msra.mxu0 0.0
    %1168 = vmatprep.subr.mxu0 0.0
    %1169 = vmatpush1.msra.mxu0 0.0
    %1170 = vmatprep.subr.mxu0 0.0
    %1171 = vmatpush1.msra.mxu0 0.0
    %1172 = vmatprep.subr.mxu0 0.0
    %1173 = vmatpush1.msra.mxu0 0.0
    %1174 = vmatprep.subr.mxu0 0.0
    %1175 = vmatpush1.msra.mxu0 0.0
    %1176 = vmatprep.subr.mxu0 0.0
    %1177 = vmatpush1.msra.mxu0 %v82
    %1178 = vmatprep.subr.mxu0 0.0
    %1179 = vmatpush2.msra.mxu0 0.0
    %1180 = vmatprep.subr.mxu0 0.0
    %1181 = vmatpush2.msra.mxu0 0.0
    %1182 = vmatprep.subr.mxu0 0.0
    %1183 = vmatpush2.msra.mxu0 0.0
    %1184 = vmatprep.subr.mxu0 0.0
    %1185 = vmatpush2.msra.mxu0 0.0
    %1186 = vmatprep.subr.mxu0 0.0
    %1187 = vmatpush2.msra.mxu0 0.0
    %1188 = vmatprep.subr.mxu0 0.0
    %1189 = vmatpush2.msra.mxu0 0.0
    %1190 = vmatprep.subr.mxu0 0.0
    %1191 = vmatpush2.msra.mxu0 0.0
    %1192 = vmatprep.subr.mxu0 0.0
    %1193 = vmatpush2.msra.mxu0 0.0
    %1194 = vmatprep.subr.mxu0 0.0
    %1195 = vmatpush2.msra.mxu0 0.0
    %1196 = vmatprep.subr.mxu0 0.0
    %1197 = vmatpush2.msra.mxu0 0.0
    %1198 = vmatprep.subr.mxu0 0.0
    %1199 = vmatpush2.msra.mxu0 0.0
    %1200 = vmatprep.subr.mxu0 0.0
    %1201 = vmatpush2.msra.mxu0 0.0
    %1202 = vmatprep.subr.mxu0 0.0
    %1203 = vmatpush2.msra.mxu0 0.0
    %1204 = vmatprep.subr.mxu0 0.0
    %1205 = vmatpush2.msra.mxu0 0.0
    %1206 = vmatprep.subr.mxu0 0.0
    %1207 = vmatpush2.msra.mxu0 0.0
    %1208 = vmatprep.subr.mxu0 0.0
    %1209 = vmatpush2.msra.mxu0 0.0
    %1210 = vmatprep.mubr.f32.mxu0 0.0
    %1211 = vmatmul.mubr.f32.gmra.mxu0 %v1141
    %v1212 = vpop.f32.mrf.mxu0
    %v1213 = vadd.f32 0.0, %v1212
    %v1214 = vpop.f32.mrf.mxu0
    %1215 = vmatprep.mubr.f32.mxu0 0.0
    %1216 = vmatmul.mubr.f32.gmra.mxu0 %v1144
    %v1217 = vpop.f32.mrf.mxu0
    %v1218 = vadd.f32 0.0, %v1217
    %v1219 = vpop.f32.mrf.mxu0
    %1220 = vdwg.mxu0
    %v1222 = vcombine.high %v1213, %v1213
    %v1224 = vunpack.c.l.s4 1966171168
    %v1225 = vunpack.c.0.s8 %v1224
    %v1226 = vlaneseq
    %v1227 = vshrl.u32 %v1226, 7
    %v1228 = vsub.s32 %v1225, %v1227
    %v1229 = vrot.slane %v1213, %v1228
    %v1231 = vunpack.c.l.s4 1966171168
    %v1232 = vunpack.c.0.s8 %v1231
    %v1233 = vlaneseq
    %v1234 = vshrl.u32 %v1233, 7
    %v1235 = vsub.s32 %v1232, %v1234
    %v1236 = vrot.slane %v1222, %v1235
    %v1237 = vcombine.high %v1229, %v1229
    %v1238 = vcombine.high %v1236, %v1236
    %v1240 = vunpack.c.l.s4 1966171168
    %v1241 = vunpack.c.0.s8 %v1240
    %v1242 = vlaneseq
    %v1243 = vshrl.u32 %v1242, 7
    %v1244 = vsub.s32 %v1241, %v1243
    %v1245 = vrot.slane %v1229, %v1244
    %v1247 = vunpack.c.l.s4 1966171168
    %v1248 = vunpack.c.0.s8 %v1247
    %v1249 = vlaneseq
    %v1250 = vshrl.u32 %v1249, 7
    %v1251 = vsub.s32 %v1248, %v1250
    %v1252 = vrot.slane %v1236, %v1251
    %v1254 = vunpack.c.l.s4 1966171168
    %v1255 = vunpack.c.0.s8 %v1254
    %v1256 = vlaneseq
    %v1257 = vshrl.u32 %v1256, 7
    %v1258 = vsub.s32 %v1255, %v1257
    %v1259 = vrot.slane %v1237, %v1258
    %v1261 = vunpack.c.l.s4 1966171168
    %v1262 = vunpack.c.0.s8 %v1261
    %v1263 = vlaneseq
    %v1264 = vshrl.u32 %v1263, 7
    %v1265 = vsub.s32 %v1262, %v1264
    %v1266 = vrot.slane %v1238, %v1265
    %v1267 = vcombine.high %v1245, %v1245
    %v1268 = vcombine.high %v1252, %v1252
    %v1269 = vcombine.high %v1259, %v1259
    %v1270 = vcombine.high %v1266, %v1266
    %v1272 = vcombine.high %v1218, %v1218
    %v1274 = vunpack.c.l.s4 1966171168
    %v1275 = vunpack.c.0.s8 %v1274
    %v1276 = vlaneseq
    %v1277 = vshrl.u32 %v1276, 7
    %v1278 = vsub.s32 %v1275, %v1277
    %v1279 = vrot.slane %v1218, %v1278
    %v1281 = vunpack.c.l.s4 1966171168
    %v1282 = vunpack.c.0.s8 %v1281
    %v1283 = vlaneseq
    %v1284 = vshrl.u32 %v1283, 7
    %v1285 = vsub.s32 %v1282, %v1284
    %v1286 = vrot.slane %v1272, %v1285
    %v1287 = vcombine.high %v1279, %v1279
    %v1288 = vcombine.high %v1286, %v1286
    %v1290 = vunpack.c.l.s4 1966171168
    %v1291 = vunpack.c.0.s8 %v1290
    %v1292 = vlaneseq
    %v1293 = vshrl.u32 %v1292, 7
    %v1294 = vsub.s32 %v1291, %v1293
    %v1295 = vrot.slane %v1279, %v1294
    %v1297 = vunpack.c.l.s4 1966171168
    %v1298 = vunpack.c.0.s8 %v1297
    %v1299 = vlaneseq
    %v1300 = vshrl.u32 %v1299, 7
    %v1301 = vsub.s32 %v1298, %v1300
    %v1302 = vrot.slane %v1286, %v1301
    %v1304 = vunpack.c.l.s4 1966171168
    %v1305 = vunpack.c.0.s8 %v1304
    %v1306 = vlaneseq
    %v1307 = vshrl.u32 %v1306, 7
    %v1308 = vsub.s32 %v1305, %v1307
    %v1309 = vrot.slane %v1287, %v1308
    %v1311 = vunpack.c.l.s4 1966171168
    %v1312 = vunpack.c.0.s8 %v1311
    %v1313 = vlaneseq
    %v1314 = vshrl.u32 %v1313, 7
    %v1315 = vsub.s32 %v1312, %v1314
    %v1316 = vrot.slane %v1288, %v1315
    %v1317 = vcombine.high %v1295, %v1295
    %v1318 = vcombine.high %v1302, %v1302
    %v1319 = vcombine.high %v1309, %v1309
    %v1320 = vcombine.high %v1316, %v1316
    %v1329 = vlaneseq
    %v1330 = vshrl.u32 %v1329, 7
    %v1331 = vsub.s32 0, %v1330
    %v1332 = vrot.slane %v1245, %v1331
    %v1333 = vlaneseq
    %v1334 = vshrl.u32 %v1333, 7
    %v1335 = vsub.s32 0, %v1334
    %v1336 = vrot.slane %v1259, %v1335
    %v1337 = vlaneseq
    %v1338 = vshrl.u32 %v1337, 7
    %v1339 = vsub.s32 0, %v1338
    %v1340 = vrot.slane %v1267, %v1339
    %v1341 = vlaneseq
    %v1342 = vshrl.u32 %v1341, 7
    %v1343 = vsub.s32 0, %v1342
    %v1344 = vrot.slane %v1269, %v1343
    %v1345 = vlaneseq
    %v1346 = vshrl.u32 %v1345, 7
    %v1347 = vsub.s32 0, %v1346
    %v1348 = vrot.slane %v1252, %v1347
    %v1349 = vlaneseq
    %v1350 = vshrl.u32 %v1349, 7
    %v1351 = vsub.s32 0, %v1350
    %v1352 = vrot.slane %v1266, %v1351
    %v1353 = vlaneseq
    %v1354 = vshrl.u32 %v1353, 7
    %v1355 = vsub.s32 0, %v1354
    %v1356 = vrot.slane %v1268, %v1355
    %v1357 = vlaneseq
    %v1358 = vshrl.u32 %v1357, 7
    %v1359 = vsub.s32 0, %v1358
    %v1360 = vrot.slane %v1270, %v1359
    %v1369 = vsub.f32 %v828, %v1332
    %v1370 = vsub.f32 %v831, %v1332
    %v1371 = vsub.f32 %v836, %v1336
    %v1372 = vsub.f32 %v839, %v1336
    %v1373 = vsub.f32 %v844, %v1340
    %v1374 = vsub.f32 %v847, %v1340
    %v1375 = vsub.f32 %v852, %v1344
    %v1376 = vsub.f32 %v855, %v1344
    %v1377 = vsub.f32 %v860, %v1348
    %v1378 = vsub.f32 %v863, %v1348
    %v1379 = vsub.f32 %v868, %v1352
    %v1380 = vsub.f32 %v871, %v1352
    %v1381 = vsub.f32 %v876, %v1356
    %v1382 = vsub.f32 %v879, %v1356
    %v1383 = vsub.f32 %v884, %v1360
    %v1384 = vsub.f32 %v887, %v1360
    %v1385 = vadd.f32 %v1295, 1e-05
    %v1386 = vadd.f32 %v1309, 1e-05
    %v1387 = vadd.f32 %v1317, 1e-05
    %v1388 = vadd.f32 %v1319, 1e-05
    %v1389 = vadd.f32 %v1302, 1e-05
    %v1390 = vadd.f32 %v1316, 1e-05
    %v1391 = vadd.f32 %v1318, 1e-05
    %v1392 = vadd.f32 %v1320, 1e-05
    %v1393 = vrsqrt.pop %v1385
    %v1394 = vrsqrt.pop %v1386
    %v1395 = vrsqrt.pop %v1387
    %v1396 = vrsqrt.pop %v1388
    %v1397 = vrsqrt.pop %v1389
    %v1398 = vrsqrt.pop %v1390
    %v1399 = vrsqrt.pop %v1391
    %v1400 = vrsqrt.pop %v1392
    %v1409 = vlaneseq
    %v1410 = vshrl.u32 %v1409, 7
    %v1411 = vsub.s32 0, %v1410
    %v1412 = vrot.slane %v1393, %v1411
    %v1413 = vlaneseq
    %v1414 = vshrl.u32 %v1413, 7
    %v1415 = vsub.s32 0, %v1414
    %v1416 = vrot.slane %v1394, %v1415
    %v1417 = vlaneseq
    %v1418 = vshrl.u32 %v1417, 7
    %v1419 = vsub.s32 0, %v1418
    %v1420 = vrot.slane %v1395, %v1419
    %v1421 = vlaneseq
    %v1422 = vshrl.u32 %v1421, 7
    %v1423 = vsub.s32 0, %v1422
    %v1424 = vrot.slane %v1396, %v1423
    %v1425 = vlaneseq
    %v1426 = vshrl.u32 %v1425, 7
    %v1427 = vsub.s32 0, %v1426
    %v1428 = vrot.slane %v1397, %v1427
    %v1429 = vlaneseq
    %v1430 = vshrl.u32 %v1429, 7
    %v1431 = vsub.s32 0, %v1430
    %v1432 = vrot.slane %v1398, %v1431
    %v1433 = vlaneseq
    %v1434 = vshrl.u32 %v1433, 7
    %v1435 = vsub.s32 0, %v1434
    %v1436 = vrot.slane %v1399, %v1435
    %v1437 = vlaneseq
    %v1438 = vshrl.u32 %v1437, 7
    %v1439 = vsub.s32 0, %v1438
    %v1440 = vrot.slane %v1400, %v1439
    %v1449 = vmul.f32 %v1369, %v1412
    %v1450 = vmul.f32 %v1370, %v1412
    %v1451 = vmul.f32 %v1371, %v1416
    %v1452 = vmul.f32 %v1372, %v1416
    %v1453 = vmul.f32 %v1373, %v1420
    %v1454 = vmul.f32 %v1374, %v1420
    %v1455 = vmul.f32 %v1375, %v1424
    %v1456 = vmul.f32 %v1376, %v1424
    %v1457 = vmul.f32 %v1377, %v1428
    %v1458 = vmul.f32 %v1378, %v1428
    %v1459 = vmul.f32 %v1379, %v1432
    %v1460 = vmul.f32 %v1380, %v1432
    %v1461 = vmul.f32 %v1381, %v1436
    %v1462 = vmul.f32 %v1382, %v1436
    %v1463 = vmul.f32 %v1383, %v1440
    %v1464 = vmul.f32 %v1384, %v1440
    %v1466 = vlaneseq
    %v1467 = vshrl.u32 %v1466, 7
    %v1468 = vsub.s32 0, %v1467
    %v1469 = vrot.slane %v890, %v1468
    %v1471 = vmul.f32 %v1449, %v1469
    %v1472 = vmul.f32 %v1450, %v1469
    %v1473 = vmul.f32 %v1451, %v1469
    %v1474 = vmul.f32 %v1452, %v1469
    %v1475 = vmul.f32 %v1453, %v1469
    %v1476 = vmul.f32 %v1454, %v1469
    %v1477 = vmul.f32 %v1455, %v1469
    %v1478 = vmul.f32 %v1456, %v1469
    %v1479 = vmul.f32 %v1457, %v1469
    %v1480 = vmul.f32 %v1458, %v1469
    %v1481 = vmul.f32 %v1459, %v1469
    %v1482 = vmul.f32 %v1460, %v1469
    %v1483 = vmul.f32 %v1461, %v1469
    %v1484 = vmul.f32 %v1462, %v1469
    %v1485 = vmul.f32 %v1463, %v1469
    %v1486 = vmul.f32 %v1464, %v1469
    %v1488 = vlaneseq
    %v1489 = vshrl.u32 %v1488, 7
    %v1490 = vsub.s32 0, %v1489
    %v1491 = vrot.slane %v891, %v1490
    %v1493 = vadd.f32 %v1471, %v1491
    %v1494 = vadd.f32 %v1472, %v1491
    %v1495 = vadd.f32 %v1473, %v1491
    %v1496 = vadd.f32 %v1474, %v1491
    %v1497 = vadd.f32 %v1475, %v1491
    %v1498 = vadd.f32 %v1476, %v1491
    %v1499 = vadd.f32 %v1477, %v1491
    %v1500 = vadd.f32 %v1478, %v1491
    %v1501 = vadd.f32 %v1479, %v1491
    %v1502 = vadd.f32 %v1480, %v1491
    %v1503 = vadd.f32 %v1481, %v1491
    %v1504 = vadd.f32 %v1482, %v1491
    %v1505 = vadd.f32 %v1483, %v1491
    %v1506 = vadd.f32 %v1484, %v1491
    %v1507 = vadd.f32 %v1485, %v1491
    %v1508 = vadd.f32 %v1486, %v1491
    %v1509 = vmin.f32 %v1493, 20.0
    %v1510 = vmin.f32 %v1494, 20.0
    %v1511 = vmin.f32 %v1495, 20.0
    %v1512 = vmin.f32 %v1496, 20.0
    %v1513 = vmin.f32 %v1497, 20.0
    %v1514 = vmin.f32 %v1498, 20.0
    %v1515 = vmin.f32 %v1499, 20.0
    %v1516 = vmin.f32 %v1500, 20.0
    %v1517 = vmin.f32 %v1501, 20.0
    %v1518 = vmin.f32 %v1502, 20.0
    %v1519 = vmin.f32 %v1503, 20.0
    %v1520 = vmin.f32 %v1504, 20.0
    %v1521 = vmin.f32 %v1505, 20.0
    %v1522 = vmin.f32 %v1506, 20.0
    %v1523 = vmin.f32 %v1507, 20.0
    %v1524 = vmin.f32 %v1508, 20.0
    %v1525 = vmul.f32 %v1509, 1.442695
    %v1526 = vpow.pop %v1525
    %v1527 = vmul.f32 %v1510, 1.442695
    %v1528 = vpow.pop %v1527
    %v1529 = vmul.f32 %v1511, 1.442695
    %v1530 = vpow.pop %v1529
    %v1531 = vmul.f32 %v1512, 1.442695
    %v1532 = vpow.pop %v1531
    %v1533 = vmul.f32 %v1513, 1.442695
    %v1534 = vpow.pop %v1533
    %v1535 = vmul.f32 %v1514, 1.442695
    %v1536 = vpow.pop %v1535
    %v1537 = vmul.f32 %v1515, 1.442695
    %v1538 = vpow.pop %v1537
    %v1539 = vmul.f32 %v1516, 1.442695
    %v1540 = vpow.pop %v1539
    %v1541 = vmul.f32 %v1517, 1.442695
    %v1542 = vpow.pop %v1541
    %v1543 = vmul.f32 %v1518, 1.442695
    %v1544 = vpow.pop %v1543
    %v1545 = vmul.f32 %v1519, 1.442695
    %v1546 = vpow.pop %v1545
    %v1547 = vmul.f32 %v1520, 1.442695
    %v1548 = vpow.pop %v1547
    %v1549 = vmul.f32 %v1521, 1.442695
    %v1550 = vpow.pop %v1549
    %v1551 = vmul.f32 %v1522, 1.442695
    %v1552 = vpow.pop %v1551
    %v1553 = vmul.f32 %v1523, 1.442695
    %v1554 = vpow.pop %v1553
    %v1555 = vmul.f32 %v1524, 1.442695
    %v1556 = vpow.pop %v1555
    %v1557 = vadd.f32 %v1526, 1.0
    %v1558 = vadd.f32 %v1528, 1.0
    %v1559 = vadd.f32 %v1530, 1.0
    %v1560 = vadd.f32 %v1532, 1.0
    %v1561 = vadd.f32 %v1534, 1.0
    %v1562 = vadd.f32 %v1536, 1.0
    %v1563 = vadd.f32 %v1538, 1.0
    %v1564 = vadd.f32 %v1540, 1.0
    %v1565 = vadd.f32 %v1542, 1.0
    %v1566 = vadd.f32 %v1544, 1.0
    %v1567 = vadd.f32 %v1546, 1.0
    %v1568 = vadd.f32 %v1548, 1.0
    %v1569 = vadd.f32 %v1550, 1.0
    %v1570 = vadd.f32 %v1552, 1.0
    %v1571 = vadd.f32 %v1554, 1.0
    %v1572 = vadd.f32 %v1556, 1.0
    %v1573 = vmul.f32 %v1557, %v1557
    %v1574 = vmul.f32 %v1558, %v1558
    %v1575 = vmul.f32 %v1559, %v1559
    %v1576 = vmul.f32 %v1560, %v1560
    %v1577 = vmul.f32 %v1561, %v1561
    %v1578 = vmul.f32 %v1562, %v1562
    %v1579 = vmul.f32 %v1563, %v1563
    %v1580 = vmul.f32 %v1564, %v1564
    %v1581 = vmul.f32 %v1565, %v1565
    %v1582 = vmul.f32 %v1566, %v1566
    %v1583 = vmul.f32 %v1567, %v1567
    %v1584 = vmul.f32 %v1568, %v1568
    %v1585 = vmul.f32 %v1569, %v1569
    %v1586 = vmul.f32 %v1570, %v1570
    %v1587 = vmul.f32 %v1571, %v1571
    %v1588 = vmul.f32 %v1572, %v1572
    %v1589 = vsub.f32 %v1573, 1.0
    %v1590 = vsub.f32 %v1574, 1.0
    %v1591 = vsub.f32 %v1575, 1.0
    %v1592 = vsub.f32 %v1576, 1.0
    %v1593 = vsub.f32 %v1577, 1.0
    %v1594 = vsub.f32 %v1578, 1.0
    %v1595 = vsub.f32 %v1579, 1.0
    %v1596 = vsub.f32 %v1580, 1.0
    %v1597 = vsub.f32 %v1581, 1.0
    %v1598 = vsub.f32 %v1582, 1.0
    %v1599 = vsub.f32 %v1583, 1.0
    %v1600 = vsub.f32 %v1584, 1.0
    %v1601 = vsub.f32 %v1585, 1.0
    %v1602 = vsub.f32 %v1586, 1.0
    %v1603 = vsub.f32 %v1587, 1.0
    %v1604 = vsub.f32 %v1588, 1.0
    %v1605 = vmul.f32 %v1493, %v1589
    %v1606 = vmul.f32 %v1494, %v1590
    %v1607 = vmul.f32 %v1495, %v1591
    %v1608 = vmul.f32 %v1496, %v1592
    %v1609 = vmul.f32 %v1497, %v1593
    %v1610 = vmul.f32 %v1498, %v1594
    %v1611 = vmul.f32 %v1499, %v1595
    %v1612 = vmul.f32 %v1500, %v1596
    %v1613 = vmul.f32 %v1501, %v1597
    %v1614 = vmul.f32 %v1502, %v1598
    %v1615 = vmul.f32 %v1503, %v1599
    %v1616 = vmul.f32 %v1504, %v1600
    %v1617 = vmul.f32 %v1505, %v1601
    %v1618 = vmul.f32 %v1506, %v1602
    %v1619 = vmul.f32 %v1507, %v1603
    %v1620 = vmul.f32 %v1508, %v1604
    %v1621 = vadd.f32 %v1573, 1.0
    %v1622 = vadd.f32 %v1574, 1.0
    %v1623 = vadd.f32 %v1575, 1.0
    %v1624 = vadd.f32 %v1576, 1.0
    %v1625 = vadd.f32 %v1577, 1.0
    %v1626 = vadd.f32 %v1578, 1.0
    %v1627 = vadd.f32 %v1579, 1.0
    %v1628 = vadd.f32 %v1580, 1.0
    %v1629 = vadd.f32 %v1581, 1.0
    %v1630 = vadd.f32 %v1582, 1.0
    %v1631 = vadd.f32 %v1583, 1.0
    %v1632 = vadd.f32 %v1584, 1.0
    %v1633 = vadd.f32 %v1585, 1.0
    %v1634 = vadd.f32 %v1586, 1.0
    %v1635 = vadd.f32 %v1587, 1.0
    %v1636 = vadd.f32 %v1588, 1.0
    %v1637 = vrcp.pop %v1621
    %v1638 = vrcp.pop %v1622
    %v1639 = vrcp.pop %v1623
    %v1640 = vrcp.pop %v1624
    %v1641 = vrcp.pop %v1625
    %v1642 = vrcp.pop %v1626
    %v1643 = vrcp.pop %v1627
    %v1644 = vrcp.pop %v1628
    %v1645 = vrcp.pop %v1629
    %v1646 = vrcp.pop %v1630
    %v1647 = vrcp.pop %v1631
    %v1648 = vrcp.pop %v1632
    %v1649 = vrcp.pop %v1633
    %v1650 = vrcp.pop %v1634
    %v1651 = vrcp.pop %v1635
    %v1652 = vrcp.pop %v1636
    %v1653 = vmul.f32 %v1605, %v1637
    %v1654 = vmul.f32 %v1606, %v1638
    %v1655 = vmul.f32 %v1607, %v1639
    %v1656 = vmul.f32 %v1608, %v1640
    %v1657 = vmul.f32 %v1609, %v1641
    %v1658 = vmul.f32 %v1610, %v1642
    %v1659 = vmul.f32 %v1611, %v1643
    %v1660 = vmul.f32 %v1612, %v1644
    %v1661 = vmul.f32 %v1613, %v1645
    %v1662 = vmul.f32 %v1614, %v1646
    %v1663 = vmul.f32 %v1615, %v1647
    %v1664 = vmul.f32 %v1616, %v1648
    %v1665 = vmul.f32 %v1617, %v1649
    %v1666 = vmul.f32 %v1618, %v1650
    %v1667 = vmul.f32 %v1619, %v1651
    %v1668 = vmul.f32 %v1620, %v1652
    %v1669 = vld [vmem:[%s1] sm:$0x1]
    %v1670 = vld [vmem:[%s1 + $0x1] sm:$0x1]
    %v1671 = vld [vmem:[%s1 + $0x2] sm:$0x1]
    %v1672 = vld [vmem:[%s1 + $0x3] sm:$0x1]
    %v1673 = vld [vmem:[%s1 + $0x4] sm:$0x1]
    %v1674 = vld [vmem:[%s1 + $0x5] sm:$0x1]
    %v1675 = vld [vmem:[%s1 + $0x6] sm:$0x1]
    %v1676 = vld [vmem:[%s1 + $0x7] sm:$0x1]
    %v1685 = vlaneseq
    %v1686 = vshrl.u32 %v1685, 7
    %v1687 = vsub.s32 0, %v1686
    %v1688 = vrot.slane %v1669, %v1687
    %v1689 = vlaneseq
    %v1690 = vshrl.u32 %v1689, 7
    %v1691 = vsub.s32 0, %v1690
    %v1692 = vrot.slane %v1670, %v1691
    %v1693 = vlaneseq
    %v1694 = vshrl.u32 %v1693, 7
    %v1695 = vsub.s32 0, %v1694
    %v1696 = vrot.slane %v1671, %v1695
    %v1697 = vlaneseq
    %v1698 = vshrl.u32 %v1697, 7
    %v1699 = vsub.s32 0, %v1698
    %v1700 = vrot.slane %v1672, %v1699
    %v1701 = vlaneseq
    %v1702 = vshrl.u32 %v1701, 7
    %v1703 = vsub.s32 0, %v1702
    %v1704 = vrot.slane %v1673, %v1703
    %v1705 = vlaneseq
    %v1706 = vshrl.u32 %v1705, 7
    %v1707 = vsub.s32 0, %v1706
    %v1708 = vrot.slane %v1674, %v1707
    %v1709 = vlaneseq
    %v1710 = vshrl.u32 %v1709, 7
    %v1711 = vsub.s32 0, %v1710
    %v1712 = vrot.slane %v1675, %v1711
    %v1713 = vlaneseq
    %v1714 = vshrl.u32 %v1713, 7
    %v1715 = vsub.s32 0, %v1714
    %v1716 = vrot.slane %v1676, %v1715
    %v1725 = vmul.f32 %v1688, %v1653
    %v1726 = vmul.f32 %v1688, %v1654
    %v1727 = vmul.f32 %v1692, %v1655
    %v1728 = vmul.f32 %v1692, %v1656
    %v1729 = vmul.f32 %v1696, %v1657
    %v1730 = vmul.f32 %v1696, %v1658
    %v1731 = vmul.f32 %v1700, %v1659
    %v1732 = vmul.f32 %v1700, %v1660
    %v1733 = vmul.f32 %v1704, %v1661
    %v1734 = vmul.f32 %v1704, %v1662
    %v1735 = vmul.f32 %v1708, %v1663
    %v1736 = vmul.f32 %v1708, %v1664
    %v1737 = vmul.f32 %v1712, %v1665
    %v1738 = vmul.f32 %v1712, %v1666
    %v1739 = vmul.f32 %v1716, %v1667
    %v1740 = vmul.f32 %v1716, %v1668
    %v1741 = vld [vmem:[%s2] sm:$0x1]
    %v1742 = vld [vmem:[%s2 + $0x1] sm:$0x1]
    %v1743 = vld [vmem:[%s2 + $0x2] sm:$0x1]
    %v1744 = vld [vmem:[%s2 + $0x3] sm:$0x1]
    %v1745 = vld [vmem:[%s2 + $0x4] sm:$0x1]
    %v1746 = vld [vmem:[%s2 + $0x5] sm:$0x1]
    %v1747 = vld [vmem:[%s2 + $0x6] sm:$0x1]
    %v1748 = vld [vmem:[%s2 + $0x7] sm:$0x1]
    %v1757 = vlaneseq
    %v1758 = vshrl.u32 %v1757, 7
    %v1759 = vsub.s32 0, %v1758
    %v1760 = vrot.slane %v1741, %v1759
    %v1761 = vlaneseq
    %v1762 = vshrl.u32 %v1761, 7
    %v1763 = vsub.s32 0, %v1762
    %v1764 = vrot.slane %v1742, %v1763
    %v1765 = vlaneseq
    %v1766 = vshrl.u32 %v1765, 7
    %v1767 = vsub.s32 0, %v1766
    %v1768 = vrot.slane %v1743, %v1767
    %v1769 = vlaneseq
    %v1770 = vshrl.u32 %v1769, 7
    %v1771 = vsub.s32 0, %v1770
    %v1772 = vrot.slane %v1744, %v1771
    %v1773 = vlaneseq
    %v1774 = vshrl.u32 %v1773, 7
    %v1775 = vsub.s32 0, %v1774
    %v1776 = vrot.slane %v1745, %v1775
    %v1777 = vlaneseq
    %v1778 = vshrl.u32 %v1777, 7
    %v1779 = vsub.s32 0, %v1778
    %v1780 = vrot.slane %v1746, %v1779
    %v1781 = vlaneseq
    %v1782 = vshrl.u32 %v1781, 7
    %v1783 = vsub.s32 0, %v1782
    %v1784 = vrot.slane %v1747, %v1783
    %v1785 = vlaneseq
    %v1786 = vshrl.u32 %v1785, 7
    %v1787 = vsub.s32 0, %v1786
    %v1788 = vrot.slane %v1748, %v1787
    %v1797 = vadd.f32 %v1725, %v1760
    %v1798 = vadd.f32 %v1726, %v1760
    %v1799 = vadd.f32 %v1727, %v1764
    %v1800 = vadd.f32 %v1728, %v1764
    %v1801 = vadd.f32 %v1729, %v1768
    %v1802 = vadd.f32 %v1730, %v1768
    %v1803 = vadd.f32 %v1731, %v1772
    %v1804 = vadd.f32 %v1732, %v1772
    %v1805 = vadd.f32 %v1733, %v1776
    %v1806 = vadd.f32 %v1734, %v1776
    %v1807 = vadd.f32 %v1735, %v1780
    %v1808 = vadd.f32 %v1736, %v1780
    %v1809 = vadd.f32 %v1737, %v1784
    %v1810 = vadd.f32 %v1738, %v1784
    %v1811 = vadd.f32 %v1739, %v1788
    %v1812 = vadd.f32 %v1740, %v1788
    %1813 = vst [vmem:[#allocation2] sm:$0x1] 0.0
    %1814 = vst [vmem:[#allocation2 + $0x18] sm:$0x1] 0.0
    %1815 = vst [vmem:[#allocation2 + $0x30] sm:$0x1] 0.0
    %1816 = vst [vmem:[#allocation2 + $0x48] sm:$0x1] 0.0
    %1817 = vst [vmem:[#allocation2 + $0x60] sm:$0x1] 0.0
    %1818 = vst [vmem:[#allocation2 + $0x78] sm:$0x1] 0.0
    %1819 = vst [vmem:[#allocation2 + $0x90] sm:$0x1] 0.0
    %1820 = vst [vmem:[#allocation2 + $0xa8] sm:$0x1] 0.0
    %1821 = vst [vmem:[#allocation2 + $0x11] sm:$0x1] 0.0
    %1822 = vst [vmem:[#allocation2 + $0x29] sm:$0x1] 0.0
    %1823 = vst [vmem:[#allocation2 + $0x41] sm:$0x1] 0.0
    %1824 = vst [vmem:[#allocation2 + $0x59] sm:$0x1] 0.0
    %1825 = vst [vmem:[#allocation2 + $0x71] sm:$0x1] 0.0
    %1826 = vst [vmem:[#allocation2 + $0x89] sm:$0x1] 0.0
    %1827 = vst [vmem:[#allocation2 + $0xa1] sm:$0x1] 0.0
    %1828 = vst [vmem:[#allocation2 + $0xb9] sm:$0x1] 0.0
    %1829 = vst [vmem:[#allocation2 + $0x1] sm:$0xff] %v1797
    %1830 = vst [vmem:[#allocation2 + $0x9] sm:$0xff] %v1798
    %1831 = vst [vmem:[#allocation2 + $0x19] sm:$0xff] %v1799
    %1832 = vst [vmem:[#allocation2 + $0x21] sm:$0xff] %v1800
    %1833 = vst [vmem:[#allocation2 + $0x31] sm:$0xff] %v1801
    %1834 = vst [vmem:[#allocation2 + $0x39] sm:$0xff] %v1802
    %1835 = vst [vmem:[#allocation2 + $0x49] sm:$0xff] %v1803
    %1836 = vst [vmem:[#allocation2 + $0x51] sm:$0xff] %v1804
    %1837 = vst [vmem:[#allocation2 + $0x61] sm:$0xff] %v1805
    %1838 = vst [vmem:[#allocation2 + $0x69] sm:$0xff] %v1806
    %1839 = vst [vmem:[#allocation2 + $0x79] sm:$0xff] %v1807
    %1840 = vst [vmem:[#allocation2 + $0x81] sm:$0xff] %v1808
    %1841 = vst [vmem:[#allocation2 + $0x91] sm:$0xff] %v1809
    %1842 = vst [vmem:[#allocation2 + $0x99] sm:$0xff] %v1810
    %1843 = vst [vmem:[#allocation2 + $0xa9] sm:$0xff] %v1811
    %1844 = vst [vmem:[#allocation2 + $0xb1] sm:$0xff] %v1812
    %v1845 = vld [vmem:[#allocation2] sm:$0xff]
    %v1846 = vld [vmem:[#allocation2 + $0x8] sm:$0xff]
    %v1847 = vld [vmem:[#allocation2 + $0x18] sm:$0xff]
    %v1848 = vld [vmem:[#allocation2 + $0x20] sm:$0xff]
    %v1849 = vld [vmem:[#allocation2 + $0x30] sm:$0xff]
    %v1850 = vld [vmem:[#allocation2 + $0x38] sm:$0xff]
    %v1851 = vld [vmem:[#allocation2 + $0x48] sm:$0xff]
    %v1852 = vld [vmem:[#allocation2 + $0x50] sm:$0xff]
    %v1853 = vld [vmem:[#allocation2 + $0x60] sm:$0xff]
    %v1854 = vld [vmem:[#allocation2 + $0x68] sm:$0xff]
    %v1855 = vld [vmem:[#allocation2 + $0x78] sm:$0xff]
    %v1856 = vld [vmem:[#allocation2 + $0x80] sm:$0xff]
    %v1857 = vld [vmem:[#allocation2 + $0x90] sm:$0xff]
    %v1858 = vld [vmem:[#allocation2 + $0x98] sm:$0xff]
    %v1859 = vld [vmem:[#allocation2 + $0xa8] sm:$0xff]
    %v1860 = vld [vmem:[#allocation2 + $0xb0] sm:$0xff]
    %v1861 = vpack.c.bf16 %v1846, %v1845
    %v1862 = vpack.c.bf16 %v1848, %v1847
    %v1863 = vpack.c.bf16 %v1850, %v1849
    %v1864 = vpack.c.bf16 %v1852, %v1851
    %v1865 = vpack.c.bf16 %v1854, %v1853
    %v1866 = vpack.c.bf16 %v1856, %v1855
    %v1867 = vpack.c.bf16 %v1858, %v1857
    %v1868 = vpack.c.bf16 %v1860, %v1859
    %v1869 = vld [vmem:[#allocation2 + $0x1] sm:$0xff]
    %v1870 = vld [vmem:[#allocation2 + $0x9] sm:$0xff]
    %v1871 = vld [vmem:[#allocation2 + $0x19] sm:$0xff]
    %v1872 = vld [vmem:[#allocation2 + $0x21] sm:$0xff]
    %v1873 = vld [vmem:[#allocation2 + $0x31] sm:$0xff]
    %v1874 = vld [vmem:[#allocation2 + $0x39] sm:$0xff]
    %v1875 = vld [vmem:[#allocation2 + $0x49] sm:$0xff]
    %v1876 = vld [vmem:[#allocation2 + $0x51] sm:$0xff]
    %v1877 = vld [vmem:[#allocation2 + $0x61] sm:$0xff]
    %v1878 = vld [vmem:[#allocation2 + $0x69] sm:$0xff]
    %v1879 = vld [vmem:[#allocation2 + $0x79] sm:$0xff]
    %v1880 = vld [vmem:[#allocation2 + $0x81] sm:$0xff]
    %v1881 = vld [vmem:[#allocation2 + $0x91] sm:$0xff]
    %v1882 = vld [vmem:[#allocation2 + $0x99] sm:$0xff]
    %v1883 = vld [vmem:[#allocation2 + $0xa9] sm:$0xff]
    %v1884 = vld [vmem:[#allocation2 + $0xb1] sm:$0xff]
    %v1885 = vpack.c.bf16 %v1870, %v1869
    %v1886 = vpack.c.bf16 %v1872, %v1871
    %v1887 = vpack.c.bf16 %v1874, %v1873
    %v1888 = vpack.c.bf16 %v1876, %v1875
    %v1889 = vpack.c.bf16 %v1878, %v1877
    %v1890 = vpack.c.bf16 %v1880, %v1879
    %v1891 = vpack.c.bf16 %v1882, %v1881
    %v1892 = vpack.c.bf16 %v1884, %v1883
    %v1893 = vld [vmem:[#allocation2 + $0x2] sm:$0xff]
    %v1894 = vld [vmem:[#allocation2 + $0xa] sm:$0xff]
    %v1895 = vld [vmem:[#allocation2 + $0x1a] sm:$0xff]
    %v1896 = vld [vmem:[#allocation2 + $0x22] sm:$0xff]
    %v1897 = vld [vmem:[#allocation2 + $0x32] sm:$0xff]
    %v1898 = vld [vmem:[#allocation2 + $0x3a] sm:$0xff]
    %v1899 = vld [vmem:[#allocation2 + $0x4a] sm:$0xff]
    %v1900 = vld [vmem:[#allocation2 + $0x52] sm:$0xff]
    %v1901 = vld [vmem:[#allocation2 + $0x62] sm:$0xff]
    %v1902 = vld [vmem:[#allocation2 + $0x6a] sm:$0xff]
    %v1903 = vld [vmem:[#allocation2 + $0x7a] sm:$0xff]
    %v1904 = vld [vmem:[#allocation2 + $0x82] sm:$0xff]
    %v1905 = vld [vmem:[#allocation2 + $0x92] sm:$0xff]
    %v1906 = vld [vmem:[#allocation2 + $0x9a] sm:$0xff]
    %v1907 = vld [vmem:[#allocation2 + $0xaa] sm:$0xff]
    %v1908 = vld [vmem:[#allocation2 + $0xb2] sm:$0xff]
    %v1909 = vpack.c.bf16 %v1894, %v1893
    %v1910 = vpack.c.bf16 %v1896, %v1895
    %v1911 = vpack.c.bf16 %v1898, %v1897
    %v1912 = vpack.c.bf16 %v1900, %v1899
    %v1913 = vpack.c.bf16 %v1902, %v1901
    %v1914 = vpack.c.bf16 %v1904, %v1903
    %v1915 = vpack.c.bf16 %v1906, %v1905
    %v1916 = vpack.c.bf16 %v1908, %v1907
    %v1917 = vld [vmem:[#allocation3] sm:$0xf]
    %v1918 = vld [vmem:[#allocation3 + $0x4] sm:$0xf]
    %v1919 = vld [vmem:[#allocation3 + $0x8] sm:$0xf]
    %v1920 = vld [vmem:[#allocation3 + $0xc] sm:$0xf]
    %v1921 = vld [vmem:[#allocation3 + $0x10] sm:$0xf]
    %v1922 = vld [vmem:[#allocation3 + $0x14] sm:$0xf]
    %v1923 = vld [vmem:[#allocation3 + $0x18] sm:$0xf]
    %v1924 = vld [vmem:[#allocation3 + $0x1c] sm:$0xf]
    %v1925 = vld [vmem:[#allocation3 + $0x20] sm:$0xf]
    %v1926 = vld [vmem:[#allocation3 + $0x24] sm:$0xf]
    %v1927 = vld [vmem:[#allocation3 + $0x28] sm:$0xf]
    %v1928 = vld [vmem:[#allocation3 + $0x2c] sm:$0xf]
    %v1929 = vld [vmem:[#allocation3 + $0x30] sm:$0xf]
    %v1930 = vld [vmem:[#allocation3 + $0x34] sm:$0xf]
    %v1931 = vld [vmem:[#allocation3 + $0x38] sm:$0xf]
    %v1932 = vld [vmem:[#allocation3 + $0x3c] sm:$0xf]
    %v1933 = vld [vmem:[#allocation3 + $0x40] sm:$0xf]
    %v1934 = vld [vmem:[#allocation3 + $0x44] sm:$0xf]
    %v1935 = vld [vmem:[#allocation3 + $0x48] sm:$0xf]
    %v1936 = vld [vmem:[#allocation3 + $0x4c] sm:$0xf]
    %v1937 = vld [vmem:[#allocation3 + $0x50] sm:$0xf]
    %v1938 = vld [vmem:[#allocation3 + $0x54] sm:$0xf]
    %v1939 = vld [vmem:[#allocation3 + $0x58] sm:$0xf]
    %v1940 = vld [vmem:[#allocation3 + $0x5c] sm:$0xf]
    %v1941 = vld [vmem:[#allocation3 + $0x60] sm:$0xf]
    %v1942 = vld [vmem:[#allocation3 + $0x64] sm:$0xf]
    %v1943 = vld [vmem:[#allocation3 + $0x68] sm:$0xf]
    %v1944 = vld [vmem:[#allocation3 + $0x6c] sm:$0xf]
    %v1945 = vld [vmem:[#allocation3 + $0x70] sm:$0xf]
    %v1946 = vld [vmem:[#allocation3 + $0x74] sm:$0xf]
    %v1947 = vld [vmem:[#allocation3 + $0x78] sm:$0xf]
    %v1948 = vld [vmem:[#allocation3 + $0x7c] sm:$0xf]
    %v1949 = vld [vmem:[#allocation3 + $0x80] sm:$0xf]
    %v1950 = vld [vmem:[#allocation3 + $0x84] sm:$0xf]
    %v1951 = vld [vmem:[#allocation3 + $0x88] sm:$0xf]
    %v1952 = vld [vmem:[#allocation3 + $0x8c] sm:$0xf]
    %v1953 = vld [vmem:[#allocation3 + $0x90] sm:$0xf]
    %v1954 = vld [vmem:[#allocation3 + $0x94] sm:$0xf]
    %v1955 = vld [vmem:[#allocation3 + $0x98] sm:$0xf]
    %v1956 = vld [vmem:[#allocation3 + $0x9c] sm:$0xf]
    %v1957 = vld [vmem:[#allocation3 + $0xa0] sm:$0xf]
    %v1958 = vld [vmem:[#allocation3 + $0xa4] sm:$0xf]
    %v1959 = vld [vmem:[#allocation3 + $0xa8] sm:$0xf]
    %v1960 = vld [vmem:[#allocation3 + $0xac] sm:$0xf]
    %v1961 = vld [vmem:[#allocation3 + $0xb0] sm:$0xf]
    %v1962 = vld [vmem:[#allocation3 + $0xb4] sm:$0xf]
    %v1963 = vld [vmem:[#allocation3 + $0xb8] sm:$0xf]
    %v1964 = vld [vmem:[#allocation3 + $0xbc] sm:$0xf]
    %v1965 = vld [vmem:[%s8] sm:$0x1]
    %v1967 = vlaneseq
    %v1968 = vshrl.u32 %v1967, 7
    %v1969 = vsub.s32 0, %v1968
    %v1970 = vrot.slane %v1965, %v1969
    %v2020 = vunpack.c.l.b16 %v1917
    %v2021 = vunpack.c.l.b16 %v1918
    %v2022 = vunpack.c.l.b16 %v1919
    %v2023 = vunpack.c.l.b16 %v1920
    %v2024 = vunpack.c.l.b16 %v1921
    %v2025 = vunpack.c.l.b16 %v1922
    %v2026 = vunpack.c.l.b16 %v1923
    %v2027 = vunpack.c.l.b16 %v1924
    %v2028 = vunpack.c.l.b16 %v1925
    %v2029 = vunpack.c.l.b16 %v1926
    %v2030 = vunpack.c.l.b16 %v1927
    %v2031 = vunpack.c.l.b16 %v1928
    %v2032 = vunpack.c.l.b16 %v1929
    %v2033 = vunpack.c.l.b16 %v1930
    %v2034 = vunpack.c.l.b16 %v1931
    %v2035 = vunpack.c.l.b16 %v1932
    %v2036 = vunpack.c.l.b16 %v1933
    %v2037 = vunpack.c.l.b16 %v1934
    %v2038 = vunpack.c.l.b16 %v1935
    %v2039 = vunpack.c.l.b16 %v1936
    %v2040 = vunpack.c.l.b16 %v1937
    %v2041 = vunpack.c.l.b16 %v1938
    %v2042 = vunpack.c.l.b16 %v1939
    %v2043 = vunpack.c.l.b16 %v1940
    %v2044 = vunpack.c.l.b16 %v1941
    %v2045 = vunpack.c.l.b16 %v1942
    %v2046 = vunpack.c.l.b16 %v1943
    %v2047 = vunpack.c.l.b16 %v1944
    %v2048 = vunpack.c.l.b16 %v1945
    %v2049 = vunpack.c.l.b16 %v1946
    %v2050 = vunpack.c.l.b16 %v1947
    %v2051 = vunpack.c.l.b16 %v1948
    %v2052 = vunpack.c.l.b16 %v1949
    %v2053 = vunpack.c.l.b16 %v1950
    %v2054 = vunpack.c.l.b16 %v1951
    %v2055 = vunpack.c.l.b16 %v1952
    %v2056 = vunpack.c.l.b16 %v1953
    %v2057 = vunpack.c.l.b16 %v1954
    %v2058 = vunpack.c.l.b16 %v1955
    %v2059 = vunpack.c.l.b16 %v1956
    %v2060 = vunpack.c.l.b16 %v1957
    %v2061 = vunpack.c.l.b16 %v1958
    %v2062 = vunpack.c.l.b16 %v1959
    %v2063 = vunpack.c.l.b16 %v1960
    %v2064 = vunpack.c.l.b16 %v1961
    %v2065 = vunpack.c.l.b16 %v1962
    %v2066 = vunpack.c.l.b16 %v1963
    %v2067 = vunpack.c.l.b16 %v1964
    %v2068 = vpack.c.b16 %v2021, %v2020
    %v2069 = vpack.c.b16 %v2023, %v2022
    %v2070 = vpack.c.b16 %v2025, %v2024
    %v2071 = vpack.c.b16 %v2027, %v2026
    %v2072 = vpack.c.b16 %v2029, %v2028
    %v2073 = vpack.c.b16 %v2031, %v2030
    %v2074 = vpack.c.b16 %v2033, %v2032
    %v2075 = vpack.c.b16 %v2035, %v2034
    %v2076 = vpack.c.b16 %v2037, %v2036
    %v2077 = vpack.c.b16 %v2039, %v2038
    %v2078 = vpack.c.b16 %v2041, %v2040
    %v2079 = vpack.c.b16 %v2043, %v2042
    %v2080 = vpack.c.b16 %v2045, %v2044
    %v2081 = vpack.c.b16 %v2047, %v2046
    %v2082 = vpack.c.b16 %v2049, %v2048
    %v2083 = vpack.c.b16 %v2051, %v2050
    %v2084 = vpack.c.b16 %v2053, %v2052
    %v2085 = vpack.c.b16 %v2055, %v2054
    %v2086 = vpack.c.b16 %v2057, %v2056
    %v2087 = vpack.c.b16 %v2059, %v2058
    %v2088 = vpack.c.b16 %v2061, %v2060
    %v2089 = vpack.c.b16 %v2063, %v2062
    %v2090 = vpack.c.b16 %v2065, %v2064
    %v2091 = vpack.c.b16 %v2067, %v2066
    %2116 = vmatprep.subr.bf16.mxu0 0
    %2117 = vmatpush1.bf16.msra.mxu0 %v2075
    %2118 = vmatprep.subr.bf16.mxu0 0
    %2119 = vmatpush1.bf16.msra.mxu0 %v2074
    %2120 = vmatprep.subr.bf16.mxu0 0
    %2121 = vmatpush1.bf16.msra.mxu0 %v2073
    %2122 = vmatprep.subr.bf16.mxu0 0
    %2123 = vmatpush1.bf16.msra.mxu0 %v2072
    %2124 = vmatprep.subr.bf16.mxu0 0
    %2125 = vmatpush1.bf16.msra.mxu0 %v2071
    %2126 = vmatprep.subr.bf16.mxu0 0
    %2127 = vmatpush1.bf16.msra.mxu0 %v2070
    %2128 = vmatprep.subr.bf16.mxu0 0
    %2129 = vmatpush1.bf16.msra.mxu0 %v2069
    %2130 = vmatprep.subr.bf16.mxu0 0
    %2131 = vmatpush1.bf16.msra.mxu0 %v2068
    %2132 = vmatprep.subr.bf16.mxu0 0
    %2133 = vmatpush2.bf16.msra.mxu0 %v2083
    %2134 = vmatprep.subr.bf16.mxu0 0
    %2135 = vmatpush2.bf16.msra.mxu0 %v2082
    %2136 = vmatprep.subr.bf16.mxu0 0
    %2137 = vmatpush2.bf16.msra.mxu0 %v2081
    %2138 = vmatprep.subr.bf16.mxu0 0
    %2139 = vmatpush2.bf16.msra.mxu0 %v2080
    %2140 = vmatprep.subr.bf16.mxu0 0
    %2141 = vmatpush2.bf16.msra.mxu0 %v2079
    %2142 = vmatprep.subr.bf16.mxu0 0
    %2143 = vmatpush2.bf16.msra.mxu0 %v2078
    %2144 = vmatprep.subr.bf16.mxu0 0
    %2145 = vmatpush2.bf16.msra.mxu0 %v2077
    %2146 = vmatprep.subr.bf16.mxu0 0
    %2147 = vmatpush2.bf16.msra.mxu0 %v2076
    %2148 = vmatprep.mubr.bf16.mxu0 %v1885
    %2149 = vmatmul.mubr.bf16.gmra.mxu0 %v1861
    %v2150 = vpop.f32.mrf.mxu0
    %v2151 = vadd.f32 %v1970, %v2150
    %v2152 = vpop.f32.mrf.mxu0
    %v2153 = vpop.f32.mrf.mxu0
    %v2154 = vadd.f32 %v1970, %v2153
    %v2155 = vpop.f32.mrf.mxu0
    %2156 = vmatprep.mubr.bf16.mxu0 %v1886
    %2157 = vmatmul.mubr.bf16.gmra.mxu0 %v1862
    %v2158 = vpop.f32.mrf.mxu0
    %v2159 = vadd.f32 %v1970, %v2158
    %v2160 = vpop.f32.mrf.mxu0
    %v2161 = vpop.f32.mrf.mxu0
    %v2162 = vadd.f32 %v1970, %v2161
    %v2163 = vpop.f32.mrf.mxu0
    %2164 = vmatprep.mubr.bf16.mxu0 %v1887
    %2165 = vmatmul.mubr.bf16.gmra.mxu0 %v1863
    %v2166 = vpop.f32.mrf.mxu0
    %v2167 = vadd.f32 %v1970, %v2166
    %v2168 = vpop.f32.mrf.mxu0
    %v2169 = vpop.f32.mrf.mxu0
    %v2170 = vadd.f32 %v1970, %v2169
    %v2171 = vpop.f32.mrf.mxu0
    %2172 = vmatprep.mubr.bf16.mxu0 %v1888
    %2173 = vmatmul.mubr.bf16.gmra.mxu0 %v1864
    %v2174 = vpop.f32.mrf.mxu0
    %v2175 = vadd.f32 %v1970, %v2174
    %v2176 = vpop.f32.mrf.mxu0
    %v2177 = vpop.f32.mrf.mxu0
    %v2178 = vadd.f32 %v1970, %v2177
    %v2179 = vpop.f32.mrf.mxu0
    %2180 = vmatprep.mubr.bf16.mxu0 %v1889
    %2181 = vmatmul.mubr.bf16.gmra.mxu0 %v1865
    %v2182 = vpop.f32.mrf.mxu0
    %v2183 = vadd.f32 %v1970, %v2182
    %v2184 = vpop.f32.mrf.mxu0
    %v2185 = vpop.f32.mrf.mxu0
    %v2186 = vadd.f32 %v1970, %v2185
    %v2187 = vpop.f32.mrf.mxu0
    %2188 = vmatprep.mubr.bf16.mxu0 %v1890
    %2189 = vmatmul.mubr.bf16.gmra.mxu0 %v1866
    %v2190 = vpop.f32.mrf.mxu0
    %v2191 = vadd.f32 %v1970, %v2190
    %v2192 = vpop.f32.mrf.mxu0
    %v2193 = vpop.f32.mrf.mxu0
    %v2194 = vadd.f32 %v1970, %v2193
    %v2195 = vpop.f32.mrf.mxu0
    %2196 = vmatprep.mubr.bf16.mxu0 %v1891
    %2197 = vmatmul.mubr.bf16.gmra.mxu0 %v1867
    %v2198 = vpop.f32.mrf.mxu0
    %v2199 = vadd.f32 %v1970, %v2198
    %v2200 = vpop.f32.mrf.mxu0
    %v2201 = vpop.f32.mrf.mxu0
    %v2202 = vadd.f32 %v1970, %v2201
    %v2203 = vpop.f32.mrf.mxu0
    %2204 = vmatprep.mubr.bf16.mxu0 %v1892
    %2205 = vmatmul.mubr.bf16.gmra.mxu0 %v1868
    %v2206 = vpop.f32.mrf.mxu0
    %v2207 = vadd.f32 %v1970, %v2206
    %v2208 = vpop.f32.mrf.mxu0
    %v2209 = vpop.f32.mrf.mxu0
    %v2210 = vadd.f32 %v1970, %v2209
    %v2211 = vpop.f32.mrf.mxu0
    %2212 = vdwg.mxu0
    %2213 = vmatprep.subr.bf16.mxu0 0
    %2214 = vmatpush1.bf16.msra.mxu0 %v2091
    %2215 = vmatprep.subr.bf16.mxu0 0
    %2216 = vmatpush1.bf16.msra.mxu0 %v2090
    %2217 = vmatprep.subr.bf16.mxu0 0
    %2218 = vmatpush1.bf16.msra.mxu0 %v2089
    %2219 = vmatprep.subr.bf16.mxu0 0
    %2220 = vmatpush1.bf16.msra.mxu0 %v2088
    %2221 = vmatprep.subr.bf16.mxu0 0
    %2222 = vmatpush1.bf16.msra.mxu0 %v2087
    %2223 = vmatprep.subr.bf16.mxu0 0
    %2224 = vmatpush1.bf16.msra.mxu0 %v2086
    %2225 = vmatprep.subr.bf16.mxu0 0
    %2226 = vmatpush1.bf16.msra.mxu0 %v2085
    %2227 = vmatprep.subr.bf16.mxu0 0
    %2228 = vmatpush1.bf16.msra.mxu0 %v2084
    %2229 = vmatprep.subr.bf16.mxu0 0
    %2230 = vmatpush2.bf16.msra.mxu0 0
    %2231 = vmatprep.subr.bf16.mxu0 0
    %2232 = vmatpush2.bf16.msra.mxu0 0
    %2233 = vmatprep.subr.bf16.mxu0 0
    %2234 = vmatpush2.bf16.msra.mxu0 0
    %2235 = vmatprep.subr.bf16.mxu0 0
    %2236 = vmatpush2.bf16.msra.mxu0 0
    %2237 = vmatprep.subr.bf16.mxu0 0
    %2238 = vmatpush2.bf16.msra.mxu0 0
    %2239 = vmatprep.subr.bf16.mxu0 0
    %2240 = vmatpush2.bf16.msra.mxu0 0
    %2241 = vmatprep.subr.bf16.mxu0 0
    %2242 = vmatpush2.bf16.msra.mxu0 0
    %2243 = vmatprep.subr.bf16.mxu0 0
    %2244 = vmatpush2.bf16.msra.mxu0 0
    %2245 = vmatprep.mubr.bf16.mxu0 0
    %2246 = vmatmul.mubr.bf16.gmra.mxu0 %v1909
    %v2247 = vpop.f32.mrf.mxu0
    %v2248 = vadd.f32 %v2151, %v2247
    %v2249 = vpop.f32.mrf.mxu0
    %v2250 = vpop.f32.mrf.mxu0
    %v2251 = vadd.f32 %v2154, %v2250
    %v2252 = vpop.f32.mrf.mxu0
    %2253 = vmatprep.mubr.bf16.mxu0 0
    %2254 = vmatmul.mubr.bf16.gmra.mxu0 %v1910
    %v2255 = vpop.f32.mrf.mxu0
    %v2256 = vadd.f32 %v2159, %v2255
    %v2257 = vpop.f32.mrf.mxu0
    %v2258 = vpop.f32.mrf.mxu0
    %v2259 = vadd.f32 %v2162, %v2258
    %v2260 = vpop.f32.mrf.mxu0
    %2261 = vmatprep.mubr.bf16.mxu0 0
    %2262 = vmatmul.mubr.bf16.gmra.mxu0 %v1911
    %v2263 = vpop.f32.mrf.mxu0
    %v2264 = vadd.f32 %v2167, %v2263
    %v2265 = vpop.f32.mrf.mxu0
    %v2266 = vpop.f32.mrf.mxu0
    %v2267 = vadd.f32 %v2170, %v2266
    %v2268 = vpop.f32.mrf.mxu0
    %2269 = vmatprep.mubr.bf16.mxu0 0
    %2270 = vmatmul.mubr.bf16.gmra.mxu0 %v1912
    %v2271 = vpop.f32.mrf.mxu0
    %v2272 = vadd.f32 %v2175, %v2271
    %v2273 = vpop.f32.mrf.mxu0
    %v2274 = vpop.f32.mrf.mxu0
    %v2275 = vadd.f32 %v2178, %v2274
    %v2276 = vpop.f32.mrf.mxu0
    %2277 = vmatprep.mubr.bf16.mxu0 0
    %2278 = vmatmul.mubr.bf16.gmra.mxu0 %v1913
    %v2279 = vpop.f32.mrf.mxu0
    %v2280 = vadd.f32 %v2183, %v2279
    %v2281 = vpop.f32.mrf.mxu0
    %v2282 = vpop.f32.mrf.mxu0
    %v2283 = vadd.f32 %v2186, %v2282
    %v2284 = vpop.f32.mrf.mxu0
    %2285 = vmatprep.mubr.bf16.mxu0 0
    %2286 = vmatmul.mubr.bf16.gmra.mxu0 %v1914
    %v2287 = vpop.f32.mrf.mxu0
    %v2288 = vadd.f32 %v2191, %v2287
    %v2289 = vpop.f32.mrf.mxu0
    %v2290 = vpop.f32.mrf.mxu0
    %v2291 = vadd.f32 %v2194, %v2290
    %v2292 = vpop.f32.mrf.mxu0
    %2293 = vmatprep.mubr.bf16.mxu0 0
    %2294 = vmatmul.mubr.bf16.gmra.mxu0 %v1915
    %v2295 = vpop.f32.mrf.mxu0
    %v2296 = vadd.f32 %v2199, %v2295
    %v2297 = vpop.f32.mrf.mxu0
    %v2298 = vpop.f32.mrf.mxu0
    %v2299 = vadd.f32 %v2202, %v2298
    %v2300 = vpop.f32.mrf.mxu0
    %2301 = vmatprep.mubr.bf16.mxu0 0
    %2302 = vmatmul.mubr.bf16.gmra.mxu0 %v1916
    %v2303 = vpop.f32.mrf.mxu0
    %v2304 = vadd.f32 %v2207, %v2303
    %v2305 = vpop.f32.mrf.mxu0
    %v2306 = vpop.f32.mrf.mxu0
    %v2307 = vadd.f32 %v2210, %v2306
    %v2308 = vpop.f32.mrf.mxu0
    %2309 = vdwg.mxu0
    %v2310 = vld [vmem:[%s9] sm:$0x1]
    %v2311 = vld [vmem:[%s10] sm:$0x1]
    %v2312 = vadd.f32 %v2248, %v2251
    %v2313 = vrot.slane %v2312, 4
    %v2314 = vadd.f32 %v2312, %v2313
    %v2315 = vrot.slane %v2314, 2
    %v2316 = vadd.f32 %v2314, %v2315
    %v2317 = vrot.slane %v2316, 1
    %v2318 = vadd.f32 %v2316, %v2317
    %v2319 = vadd.f32 %v2256, %v2259
    %v2320 = vrot.slane %v2319, 4
    %v2321 = vadd.f32 %v2319, %v2320
    %v2322 = vrot.slane %v2321, 2
    %v2323 = vadd.f32 %v2321, %v2322
    %v2324 = vrot.slane %v2323, 1
    %v2325 = vadd.f32 %v2323, %v2324
    %v2326 = vadd.f32 %v2264, %v2267
    %v2327 = vrot.slane %v2326, 4
    %v2328 = vadd.f32 %v2326, %v2327
    %v2329 = vrot.slane %v2328, 2
    %v2330 = vadd.f32 %v2328, %v2329
    %v2331 = vrot.slane %v2330, 1
    %v2332 = vadd.f32 %v2330, %v2331
    %v2333 = vadd.f32 %v2272, %v2275
    %v2334 = vrot.slane %v2333, 4
    %v2335 = vadd.f32 %v2333, %v2334
    %v2336 = vrot.slane %v2335, 2
    %v2337 = vadd.f32 %v2335, %v2336
    %v2338 = vrot.slane %v2337, 1
    %v2339 = vadd.f32 %v2337, %v2338
    %v2340 = vadd.f32 %v2280, %v2283
    %v2341 = vrot.slane %v2340, 4
    %v2342 = vadd.f32 %v2340, %v2341
    %v2343 = vrot.slane %v2342, 2
    %v2344 = vadd.f32 %v2342, %v2343
    %v2345 = vrot.slane %v2344, 1
    %v2346 = vadd.f32 %v2344, %v2345
    %v2347 = vadd.f32 %v2288, %v2291
    %v2348 = vrot.slane %v2347, 4
    %v2349 = vadd.f32 %v2347, %v2348
    %v2350 = vrot.slane %v2349, 2
    %v2351 = vadd.f32 %v2349, %v2350
    %v2352 = vrot.slane %v2351, 1
    %v2353 = vadd.f32 %v2351, %v2352
    %v2354 = vadd.f32 %v2296, %v2299
    %v2355 = vrot.slane %v2354, 4
    %v2356 = vadd.f32 %v2354, %v2355
    %v2357 = vrot.slane %v2356, 2
    %v2358 = vadd.f32 %v2356, %v2357
    %v2359 = vrot.slane %v2358, 1
    %v2360 = vadd.f32 %v2358, %v2359
    %v2361 = vadd.f32 %v2304, %v2307
    %v2362 = vrot.slane %v2361, 4
    %v2363 = vadd.f32 %v2361, %v2362
    %v2364 = vrot.slane %v2363, 2
    %v2365 = vadd.f32 %v2363, %v2364
    %v2366 = vrot.slane %v2365, 1
    %v2367 = vadd.f32 %v2365, %v2366
    %v2368 = vmul.f32 %v2248, %v2248
    %v2369 = vmul.f32 %v2251, %v2251
    %v2370 = vmul.f32 %v2256, %v2256
    %v2371 = vmul.f32 %v2259, %v2259
    %v2372 = vmul.f32 %v2264, %v2264
    %v2373 = vmul.f32 %v2267, %v2267
    %v2374 = vmul.f32 %v2272, %v2272
    %v2375 = vmul.f32 %v2275, %v2275
    %v2376 = vmul.f32 %v2280, %v2280
    %v2377 = vmul.f32 %v2283, %v2283
    %v2378 = vmul.f32 %v2288, %v2288
    %v2379 = vmul.f32 %v2291, %v2291
    %v2380 = vmul.f32 %v2296, %v2296
    %v2381 = vmul.f32 %v2299, %v2299
    %v2382 = vmul.f32 %v2304, %v2304
    %v2383 = vmul.f32 %v2307, %v2307
    %v2384 = vadd.f32 %v2368, %v2369
    %v2385 = vrot.slane %v2384, 4
    %v2386 = vadd.f32 %v2384, %v2385
    %v2387 = vrot.slane %v2386, 2
    %v2388 = vadd.f32 %v2386, %v2387
    %v2389 = vrot.slane %v2388, 1
    %v2390 = vadd.f32 %v2388, %v2389
    %v2391 = vadd.f32 %v2370, %v2371
    %v2392 = vrot.slane %v2391, 4
    %v2393 = vadd.f32 %v2391, %v2392
    %v2394 = vrot.slane %v2393, 2
    %v2395 = vadd.f32 %v2393, %v2394
    %v2396 = vrot.slane %v2395, 1
    %v2397 = vadd.f32 %v2395, %v2396
    %v2398 = vadd.f32 %v2372, %v2373
    %v2399 = vrot.slane %v2398, 4
    %v2400 = vadd.f32 %v2398, %v2399
    %v2401 = vrot.slane %v2400, 2
    %v2402 = vadd.f32 %v2400, %v2401
    %v2403 = vrot.slane %v2402, 1
    %v2404 = vadd.f32 %v2402, %v2403
    %v2405 = vadd.f32 %v2374, %v2375
    %v2406 = vrot.slane %v2405, 4
    %v2407 = vadd.f32 %v2405, %v2406
    %v2408 = vrot.slane %v2407, 2
    %v2409 = vadd.f32 %v2407, %v2408
    %v2410 = vrot.slane %v2409, 1
    %v2411 = vadd.f32 %v2409, %v2410
    %v2412 = vadd.f32 %v2376, %v2377
    %v2413 = vrot.slane %v2412, 4
    %v2414 = vadd.f32 %v2412, %v2413
    %v2415 = vrot.slane %v2414, 2
    %v2416 = vadd.f32 %v2414, %v2415
    %v2417 = vrot.slane %v2416, 1
    %v2418 = vadd.f32 %v2416, %v2417
    %v2419 = vadd.f32 %v2378, %v2379
    %v2420 = vrot.slane %v2419, 4
    %v2421 = vadd.f32 %v2419, %v2420
    %v2422 = vrot.slane %v2421, 2
    %v2423 = vadd.f32 %v2421, %v2422
    %v2424 = vrot.slane %v2423, 1
    %v2425 = vadd.f32 %v2423, %v2424
    %v2426 = vadd.f32 %v2380, %v2381
    %v2427 = vrot.slane %v2426, 4
    %v2428 = vadd.f32 %v2426, %v2427
    %v2429 = vrot.slane %v2428, 2
    %v2430 = vadd.f32 %v2428, %v2429
    %v2431 = vrot.slane %v2430, 1
    %v2432 = vadd.f32 %v2430, %v2431
    %v2433 = vadd.f32 %v2382, %v2383
    %v2434 = vrot.slane %v2433, 4
    %v2435 = vadd.f32 %v2433, %v2434
    %v2436 = vrot.slane %v2435, 2
    %v2437 = vadd.f32 %v2435, %v2436
    %v2438 = vrot.slane %v2437, 1
    %v2439 = vadd.f32 %v2437, %v2438
    %v2448 = vsel %vm1028, %v2325, %v2318
    %v2449 = vsel %vm1030, %v2332, %v2448
    %v2450 = vsel %vm1032, %v2339, %v2449
    %v2451 = vsel %vm1034, %v2346, %v2450
    %v2452 = vsel %vm1036, %v2353, %v2451
    %v2453 = vsel %vm1038, %v2360, %v2452
    %v2454 = vsel %vm1040, %v2367, %v2453
    %v2464 = vsel %vm1028, %v2397, %v2390
    %v2465 = vsel %vm1030, %v2404, %v2464
    %v2466 = vsel %vm1032, %v2411, %v2465
    %v2467 = vsel %vm1034, %v2418, %v2466
    %v2468 = vsel %vm1036, %v2425, %v2467
    %v2469 = vsel %vm1038, %v2432, %v2468
    %v2470 = vsel %vm1040, %v2439, %v2469
    %2472 = vmatprep.subr.mxu0 0.0
    %2473 = vmatpush1.msra.mxu0 %v81
    %2474 = vmatprep.subr.mxu0 0.0
    %2475 = vmatpush1.msra.mxu0 %v80
    %2476 = vmatprep.subr.mxu0 0.0
    %2477 = vmatpush1.msra.mxu0 %v79
    %2478 = vmatprep.subr.mxu0 0.0
    %2479 = vmatpush1.msra.mxu0 %v78
    %2480 = vmatprep.subr.mxu0 0.0
    %2481 = vmatpush1.msra.mxu0 %v77
    %2482 = vmatprep.subr.mxu0 0.0
    %2483 = vmatpush1.msra.mxu0 %v76
    %2484 = vmatprep.subr.mxu0 0.0
    %2485 = vmatpush1.msra.mxu0 %v75
    %2486 = vmatprep.subr.mxu0 0.0
    %2487 = vmatpush1.msra.mxu0 %v74
    %2488 = vmatprep.subr.mxu0 0.0
    %2489 = vmatpush1.msra.mxu0 %v73
    %2490 = vmatprep.subr.mxu0 0.0
    %2491 = vmatpush1.msra.mxu0 %v72
    %2492 = vmatprep.subr.mxu0 0.0
    %2493 = vmatpush1.msra.mxu0 %v71
    %2494 = vmatprep.subr.mxu0 0.0
    %2495 = vmatpush1.msra.mxu0 %v70
    %2496 = vmatprep.subr.mxu0 0.0
    %2497 = vmatpush1.msra.mxu0 %v69
    %2498 = vmatprep.subr.mxu0 0.0
    %2499 = vmatpush1.msra.mxu0 %v68
    %2500 = vmatprep.subr.mxu0 0.0
    %2501 = vmatpush1.msra.mxu0 %v67
    %2502 = vmatprep.subr.mxu0 0.0
    %2503 = vmatpush1.msra.mxu0 %v66
    %2504 = vmatprep.subr.mxu0 0.0
    %2505 = vmatpush2.msra.mxu0 0.0
    %2506 = vmatprep.subr.mxu0 0.0
    %2507 = vmatpush2.msra.mxu0 0.0
    %2508 = vmatprep.subr.mxu0 0.0
    %2509 = vmatpush2.msra.mxu0 0.0
    %2510 = vmatprep.subr.mxu0 0.0
    %2511 = vmatpush2.msra.mxu0 0.0
    %2512 = vmatprep.subr.mxu0 0.0
    %2513 = vmatpush2.msra.mxu0 0.0
    %2514 = vmatprep.subr.mxu0 0.0
    %2515 = vmatpush2.msra.mxu0 0.0
    %2516 = vmatprep.subr.mxu0 0.0
    %2517 = vmatpush2.msra.mxu0 0.0
    %2518 = vmatprep.subr.mxu0 0.0
    %2519 = vmatpush2.msra.mxu0 0.0
    %2520 = vmatprep.subr.mxu0 0.0
    %2521 = vmatpush2.msra.mxu0 0.0
    %2522 = vmatprep.subr.mxu0 0.0
    %2523 = vmatpush2.msra.mxu0 0.0
    %2524 = vmatprep.subr.mxu0 0.0
    %2525 = vmatpush2.msra.mxu0 0.0
    %2526 = vmatprep.subr.mxu0 0.0
    %2527 = vmatpush2.msra.mxu0 0.0
    %2528 = vmatprep.subr.mxu0 0.0
    %2529 = vmatpush2.msra.mxu0 0.0
    %2530 = vmatprep.subr.mxu0 0.0
    %2531 = vmatpush2.msra.mxu0 0.0
    %2532 = vmatprep.subr.mxu0 0.0
    %2533 = vmatpush2.msra.mxu0 0.0
    %2534 = vmatprep.subr.mxu0 0.0
    %2535 = vmatpush2.msra.mxu0 0.0
    %2536 = vmatprep.mubr.f32.mxu0 0.0
    %2537 = vmatmul.mubr.f32.gmra.mxu0 %v2454
    %v2538 = vpop.f32.mrf.mxu0
    %v2539 = vadd.f32 0.0, %v2538
    %v2540 = vpop.f32.mrf.mxu0
    %2541 = vmatprep.mubr.f32.mxu0 0.0
    %2542 = vmatmul.mubr.f32.gmra.mxu0 %v2470
    %v2543 = vpop.f32.mrf.mxu0
    %v2544 = vadd.f32 0.0, %v2543
    %v2545 = vpop.f32.mrf.mxu0
    %2546 = vdwg.mxu0
    %v2547 = vmul.f32 %v2539, 0.03125
    %v2548 = vmul.f32 %v2544, 0.03125
    %v2549 = vmul.f32 %v2547, %v2547
    %v2550 = vsub.f32 %v2548, %v2549
    %v2551 = vmax.f32 %v2550, 0.0
    %v2553 = vsel %vm1139, %v2547, 0
    %v2556 = vsel %vm1139, %v2551, 0
    %2558 = vmatprep.subr.mxu0 0.0
    %2559 = vmatpush1.msra.mxu0 0.0
    %2560 = vmatprep.subr.mxu0 0.0
    %2561 = vmatpush1.msra.mxu0 0.0
    %2562 = vmatprep.subr.mxu0 0.0
    %2563 = vmatpush1.msra.mxu0 0.0
    %2564 = vmatprep.subr.mxu0 0.0
    %2565 = vmatpush1.msra.mxu0 0.0
    %2566 = vmatprep.subr.mxu0 0.0
    %2567 = vmatpush1.msra.mxu0 0.0
    %2568 = vmatprep.subr.mxu0 0.0
    %2569 = vmatpush1.msra.mxu0 0.0
    %2570 = vmatprep.subr.mxu0 0.0
    %2571 = vmatpush1.msra.mxu0 0.0
    %2572 = vmatprep.subr.mxu0 0.0
    %2573 = vmatpush1.msra.mxu0 0.0
    %2574 = vmatprep.subr.mxu0 0.0
    %2575 = vmatpush1.msra.mxu0 0.0
    %2576 = vmatprep.subr.mxu0 0.0
    %2577 = vmatpush1.msra.mxu0 0.0
    %2578 = vmatprep.subr.mxu0 0.0
    %2579 = vmatpush1.msra.mxu0 0.0
    %2580 = vmatprep.subr.mxu0 0.0
    %2581 = vmatpush1.msra.mxu0 0.0
    %2582 = vmatprep.subr.mxu0 0.0
    %2583 = vmatpush1.msra.mxu0 0.0
    %2584 = vmatprep.subr.mxu0 0.0
    %2585 = vmatpush1.msra.mxu0 0.0
    %2586 = vmatprep.subr.mxu0 0.0
    %2587 = vmatpush1.msra.mxu0 0.0
    %2588 = vmatprep.subr.mxu0 0.0
    %2589 = vmatpush1.msra.mxu0 %v82
    %2590 = vmatprep.subr.mxu0 0.0
    %2591 = vmatpush2.msra.mxu0 0.0
    %2592 = vmatprep.subr.mxu0 0.0
    %2593 = vmatpush2.msra.mxu0 0.0
    %2594 = vmatprep.subr.mxu0 0.0
    %2595 = vmatpush2.msra.mxu0 0.0
    %2596 = vmatprep.subr.mxu0 0.0
    %2597 = vmatpush2.msra.mxu0 0.0
    %2598 = vmatprep.subr.mxu0 0.0
    %2599 = vmatpush2.msra.mxu0 0.0
    %2600 = vmatprep.subr.mxu0 0.0
    %2601 = vmatpush2.msra.mxu0 0.0
    %2602 = vmatprep.subr.mxu0 0.0
    %2603 = vmatpush2.msra.mxu0 0.0
    %2604 = vmatprep.subr.mxu0 0.0
    %2605 = vmatpush2.msra.mxu0 0.0
    %2606 = vmatprep.subr.mxu0 0.0
    %2607 = vmatpush2.msra.mxu0 0.0
    %2608 = vmatprep.subr.mxu0 0.0
    %2609 = vmatpush2.msra.mxu0 0.0
    %2610 = vmatprep.subr.mxu0 0.0
    %2611 = vmatpush2.msra.mxu0 0.0
    %2612 = vmatprep.subr.mxu0 0.0
    %2613 = vmatpush2.msra.mxu0 0.0
    %2614 = vmatprep.subr.mxu0 0.0
    %2615 = vmatpush2.msra.mxu0 0.0
    %2616 = vmatprep.subr.mxu0 0.0
    %2617 = vmatpush2.msra.mxu0 0.0
    %2618 = vmatprep.subr.mxu0 0.0
    %2619 = vmatpush2.msra.mxu0 0.0
    %2620 = vmatprep.subr.mxu0 0.0
    %2621 = vmatpush2.msra.mxu0 0.0
    %2622 = vmatprep.mubr.f32.mxu0 0.0
    %2623 = vmatmul.mubr.f32.gmra.mxu0 %v2553
    %v2624 = vpop.f32.mrf.mxu0
    %v2625 = vadd.f32 0.0, %v2624
    %v2626 = vpop.f32.mrf.mxu0
    %2627 = vmatprep.mubr.f32.mxu0 0.0
    %2628 = vmatmul.mubr.f32.gmra.mxu0 %v2556
    %v2629 = vpop.f32.mrf.mxu0
    %v2630 = vadd.f32 0.0, %v2629
    %v2631 = vpop.f32.mrf.mxu0
    %2632 = vdwg.mxu0
    %v2634 = vcombine.high %v2625, %v2625
    %v2636 = vunpack.c.l.s4 1966171168
    %v2637 = vunpack.c.0.s8 %v2636
    %v2638 = vlaneseq
    %v2639 = vshrl.u32 %v2638, 7
    %v2640 = vsub.s32 %v2637, %v2639
    %v2641 = vrot.slane %v2625, %v2640
    %v2643 = vunpack.c.l.s4 1966171168
    %v2644 = vunpack.c.0.s8 %v2643
    %v2645 = vlaneseq
    %v2646 = vshrl.u32 %v2645, 7
    %v2647 = vsub.s32 %v2644, %v2646
    %v2648 = vrot.slane %v2634, %v2647
    %v2649 = vcombine.high %v2641, %v2641
    %v2650 = vcombine.high %v2648, %v2648
    %v2652 = vunpack.c.l.s4 1966171168
    %v2653 = vunpack.c.0.s8 %v2652
    %v2654 = vlaneseq
    %v2655 = vshrl.u32 %v2654, 7
    %v2656 = vsub.s32 %v2653, %v2655
    %v2657 = vrot.slane %v2641, %v2656
    %v2659 = vunpack.c.l.s4 1966171168
    %v2660 = vunpack.c.0.s8 %v2659
    %v2661 = vlaneseq
    %v2662 = vshrl.u32 %v2661, 7
    %v2663 = vsub.s32 %v2660, %v2662
    %v2664 = vrot.slane %v2648, %v2663
    %v2666 = vunpack.c.l.s4 1966171168
    %v2667 = vunpack.c.0.s8 %v2666
    %v2668 = vlaneseq
    %v2669 = vshrl.u32 %v2668, 7
    %v2670 = vsub.s32 %v2667, %v2669
    %v2671 = vrot.slane %v2649, %v2670
    %v2673 = vunpack.c.l.s4 1966171168
    %v2674 = vunpack.c.0.s8 %v2673
    %v2675 = vlaneseq
    %v2676 = vshrl.u32 %v2675, 7
    %v2677 = vsub.s32 %v2674, %v2676
    %v2678 = vrot.slane %v2650, %v2677
    %v2679 = vcombine.high %v2657, %v2657
    %v2680 = vcombine.high %v2664, %v2664
    %v2681 = vcombine.high %v2671, %v2671
    %v2682 = vcombine.high %v2678, %v2678
    %v2684 = vcombine.high %v2630, %v2630
    %v2686 = vunpack.c.l.s4 1966171168
    %v2687 = vunpack.c.0.s8 %v2686
    %v2688 = vlaneseq
    %v2689 = vshrl.u32 %v2688, 7
    %v2690 = vsub.s32 %v2687, %v2689
    %v2691 = vrot.slane %v2630, %v2690
    %v2693 = vunpack.c.l.s4 1966171168
    %v2694 = vunpack.c.0.s8 %v2693
    %v2695 = vlaneseq
    %v2696 = vshrl.u32 %v2695, 7
    %v2697 = vsub.s32 %v2694, %v2696
    %v2698 = vrot.slane %v2684, %v2697
    %v2699 = vcombine.high %v2691, %v2691
    %v2700 = vcombine.high %v2698, %v2698
    %v2702 = vunpack.c.l.s4 1966171168
    %v2703 = vunpack.c.0.s8 %v2702
    %v2704 = vlaneseq
    %v2705 = vshrl.u32 %v2704, 7
    %v2706 = vsub.s32 %v2703, %v2705
    %v2707 = vrot.slane %v2691, %v2706
    %v2709 = vunpack.c.l.s4 1966171168
    %v2710 = vunpack.c.0.s8 %v2709
    %v2711 = vlaneseq
    %v2712 = vshrl.u32 %v2711, 7
    %v2713 = vsub.s32 %v2710, %v2712
    %v2714 = vrot.slane %v2698, %v2713
    %v2716 = vunpack.c.l.s4 1966171168
    %v2717 = vunpack.c.0.s8 %v2716
    %v2718 = vlaneseq
    %v2719 = vshrl.u32 %v2718, 7
    %v2720 = vsub.s32 %v2717, %v2719
    %v2721 = vrot.slane %v2699, %v2720
    %v2723 = vunpack.c.l.s4 1966171168
    %v2724 = vunpack.c.0.s8 %v2723
    %v2725 = vlaneseq
    %v2726 = vshrl.u32 %v2725, 7
    %v2727 = vsub.s32 %v2724, %v2726
    %v2728 = vrot.slane %v2700, %v2727
    %v2729 = vcombine.high %v2707, %v2707
    %v2730 = vcombine.high %v2714, %v2714
    %v2731 = vcombine.high %v2721, %v2721
    %v2732 = vcombine.high %v2728, %v2728
    %v2741 = vlaneseq
    %v2742 = vshrl.u32 %v2741, 7
    %v2743 = vsub.s32 0, %v2742
    %v2744 = vrot.slane %v2657, %v2743
    %v2745 = vlaneseq
    %v2746 = vshrl.u32 %v2745, 7
    %v2747 = vsub.s32 0, %v2746
    %v2748 = vrot.slane %v2671, %v2747
    %v2749 = vlaneseq
    %v2750 = vshrl.u32 %v2749, 7
    %v2751 = vsub.s32 0, %v2750
    %v2752 = vrot.slane %v2679, %v2751
    %v2753 = vlaneseq
    %v2754 = vshrl.u32 %v2753, 7
    %v2755 = vsub.s32 0, %v2754
    %v2756 = vrot.slane %v2681, %v2755
    %v2757 = vlaneseq
    %v2758 = vshrl.u32 %v2757, 7
    %v2759 = vsub.s32 0, %v2758
    %v2760 = vrot.slane %v2664, %v2759
    %v2761 = vlaneseq
    %v2762 = vshrl.u32 %v2761, 7
    %v2763 = vsub.s32 0, %v2762
    %v2764 = vrot.slane %v2678, %v2763
    %v2765 = vlaneseq
    %v2766 = vshrl.u32 %v2765, 7
    %v2767 = vsub.s32 0, %v2766
    %v2768 = vrot.slane %v2680, %v2767
    %v2769 = vlaneseq
    %v2770 = vshrl.u32 %v2769, 7
    %v2771 = vsub.s32 0, %v2770
    %v2772 = vrot.slane %v2682, %v2771
    %v2781 = vsub.f32 %v2248, %v2744
    %v2782 = vsub.f32 %v2251, %v2744
    %v2783 = vsub.f32 %v2256, %v2748
    %v2784 = vsub.f32 %v2259, %v2748
    %v2785 = vsub.f32 %v2264, %v2752
    %v2786 = vsub.f32 %v2267, %v2752
    %v2787 = vsub.f32 %v2272, %v2756
    %v2788 = vsub.f32 %v2275, %v2756
    %v2789 = vsub.f32 %v2280, %v2760
    %v2790 = vsub.f32 %v2283, %v2760
    %v2791 = vsub.f32 %v2288, %v2764
    %v2792 = vsub.f32 %v2291, %v2764
    %v2793 = vsub.f32 %v2296, %v2768
    %v2794 = vsub.f32 %v2299, %v2768
    %v2795 = vsub.f32 %v2304, %v2772
    %v2796 = vsub.f32 %v2307, %v2772
    %v2797 = vadd.f32 %v2707, 1e-05
    %v2798 = vadd.f32 %v2721, 1e-05
    %v2799 = vadd.f32 %v2729, 1e-05
    %v2800 = vadd.f32 %v2731, 1e-05
    %v2801 = vadd.f32 %v2714, 1e-05
    %v2802 = vadd.f32 %v2728, 1e-05
    %v2803 = vadd.f32 %v2730, 1e-05
    %v2804 = vadd.f32 %v2732, 1e-05
    %v2805 = vrsqrt.pop %v2797
    %v2806 = vrsqrt.pop %v2798
    %v2807 = vrsqrt.pop %v2799
    %v2808 = vrsqrt.pop %v2800
    %v2809 = vrsqrt.pop %v2801
    %v2810 = vrsqrt.pop %v2802
    %v2811 = vrsqrt.pop %v2803
    %v2812 = vrsqrt.pop %v2804
    %v2821 = vlaneseq
    %v2822 = vshrl.u32 %v2821, 7
    %v2823 = vsub.s32 0, %v2822
    %v2824 = vrot.slane %v2805, %v2823
    %v2825 = vlaneseq
    %v2826 = vshrl.u32 %v2825, 7
    %v2827 = vsub.s32 0, %v2826
    %v2828 = vrot.slane %v2806, %v2827
    %v2829 = vlaneseq
    %v2830 = vshrl.u32 %v2829, 7
    %v2831 = vsub.s32 0, %v2830
    %v2832 = vrot.slane %v2807, %v2831
    %v2833 = vlaneseq
    %v2834 = vshrl.u32 %v2833, 7
    %v2835 = vsub.s32 0, %v2834
    %v2836 = vrot.slane %v2808, %v2835
    %v2837 = vlaneseq
    %v2838 = vshrl.u32 %v2837, 7
    %v2839 = vsub.s32 0, %v2838
    %v2840 = vrot.slane %v2809, %v2839
    %v2841 = vlaneseq
    %v2842 = vshrl.u32 %v2841, 7
    %v2843 = vsub.s32 0, %v2842
    %v2844 = vrot.slane %v2810, %v2843
    %v2845 = vlaneseq
    %v2846 = vshrl.u32 %v2845, 7
    %v2847 = vsub.s32 0, %v2846
    %v2848 = vrot.slane %v2811, %v2847
    %v2849 = vlaneseq
    %v2850 = vshrl.u32 %v2849, 7
    %v2851 = vsub.s32 0, %v2850
    %v2852 = vrot.slane %v2812, %v2851
    %v2861 = vmul.f32 %v2781, %v2824
    %v2862 = vmul.f32 %v2782, %v2824
    %v2863 = vmul.f32 %v2783, %v2828
    %v2864 = vmul.f32 %v2784, %v2828
    %v2865 = vmul.f32 %v2785, %v2832
    %v2866 = vmul.f32 %v2786, %v2832
    %v2867 = vmul.f32 %v2787, %v2836
    %v2868 = vmul.f32 %v2788, %v2836
    %v2869 = vmul.f32 %v2789, %v2840
    %v2870 = vmul.f32 %v2790, %v2840
    %v2871 = vmul.f32 %v2791, %v2844
    %v2872 = vmul.f32 %v2792, %v2844
    %v2873 = vmul.f32 %v2793, %v2848
    %v2874 = vmul.f32 %v2794, %v2848
    %v2875 = vmul.f32 %v2795, %v2852
    %v2876 = vmul.f32 %v2796, %v2852
    %v2878 = vlaneseq
    %v2879 = vshrl.u32 %v2878, 7
    %v2880 = vsub.s32 0, %v2879
    %v2881 = vrot.slane %v2310, %v2880
    %v2883 = vmul.f32 %v2861, %v2881
    %v2884 = vmul.f32 %v2862, %v2881
    %v2885 = vmul.f32 %v2863, %v2881
    %v2886 = vmul.f32 %v2864, %v2881
    %v2887 = vmul.f32 %v2865, %v2881
    %v2888 = vmul.f32 %v2866, %v2881
    %v2889 = vmul.f32 %v2867, %v2881
    %v2890 = vmul.f32 %v2868, %v2881
    %v2891 = vmul.f32 %v2869, %v2881
    %v2892 = vmul.f32 %v2870, %v2881
    %v2893 = vmul.f32 %v2871, %v2881
    %v2894 = vmul.f32 %v2872, %v2881
    %v2895 = vmul.f32 %v2873, %v2881
    %v2896 = vmul.f32 %v2874, %v2881
    %v2897 = vmul.f32 %v2875, %v2881
    %v2898 = vmul.f32 %v2876, %v2881
    %v2900 = vlaneseq
    %v2901 = vshrl.u32 %v2900, 7
    %v2902 = vsub.s32 0, %v2901
    %v2903 = vrot.slane %v2311, %v2902
    %v2905 = vadd.f32 %v2883, %v2903
    %v2906 = vadd.f32 %v2884, %v2903
    %v2907 = vadd.f32 %v2885, %v2903
    %v2908 = vadd.f32 %v2886, %v2903
    %v2909 = vadd.f32 %v2887, %v2903
    %v2910 = vadd.f32 %v2888, %v2903
    %v2911 = vadd.f32 %v2889, %v2903
    %v2912 = vadd.f32 %v2890, %v2903
    %v2913 = vadd.f32 %v2891, %v2903
    %v2914 = vadd.f32 %v2892, %v2903
    %v2915 = vadd.f32 %v2893, %v2903
    %v2916 = vadd.f32 %v2894, %v2903
    %v2917 = vadd.f32 %v2895, %v2903
    %v2918 = vadd.f32 %v2896, %v2903
    %v2919 = vadd.f32 %v2897, %v2903
    %v2920 = vadd.f32 %v2898, %v2903
    %v2921 = vmin.f32 %v2905, 20.0
    %v2922 = vmin.f32 %v2906, 20.0
    %v2923 = vmin.f32 %v2907, 20.0
    %v2924 = vmin.f32 %v2908, 20.0
    %v2925 = vmin.f32 %v2909, 20.0
    %v2926 = vmin.f32 %v2910, 20.0
    %v2927 = vmin.f32 %v2911, 20.0
    %v2928 = vmin.f32 %v2912, 20.0
    %v2929 = vmin.f32 %v2913, 20.0
    %v2930 = vmin.f32 %v2914, 20.0
    %v2931 = vmin.f32 %v2915, 20.0
    %v2932 = vmin.f32 %v2916, 20.0
    %v2933 = vmin.f32 %v2917, 20.0
    %v2934 = vmin.f32 %v2918, 20.0
    %v2935 = vmin.f32 %v2919, 20.0
    %v2936 = vmin.f32 %v2920, 20.0
    %v2937 = vmul.f32 %v2921, 1.442695
    %v2938 = vpow.pop %v2937
    %v2939 = vmul.f32 %v2922, 1.442695
    %v2940 = vpow.pop %v2939
    %v2941 = vmul.f32 %v2923, 1.442695
    %v2942 = vpow.pop %v2941
    %v2943 = vmul.f32 %v2924, 1.442695
    %v2944 = vpow.pop %v2943
    %v2945 = vmul.f32 %v2925, 1.442695
    %v2946 = vpow.pop %v2945
    %v2947 = vmul.f32 %v2926, 1.442695
    %v2948 = vpow.pop %v2947
    %v2949 = vmul.f32 %v2927, 1.442695
    %v2950 = vpow.pop %v2949
    %v2951 = vmul.f32 %v2928, 1.442695
    %v2952 = vpow.pop %v2951
    %v2953 = vmul.f32 %v2929, 1.442695
    %v2954 = vpow.pop %v2953
    %v2955 = vmul.f32 %v2930, 1.442695
    %v2956 = vpow.pop %v2955
    %v2957 = vmul.f32 %v2931, 1.442695
    %v2958 = vpow.pop %v2957
    %v2959 = vmul.f32 %v2932, 1.442695
    %v2960 = vpow.pop %v2959
    %v2961 = vmul.f32 %v2933, 1.442695
    %v2962 = vpow.pop %v2961
    %v2963 = vmul.f32 %v2934, 1.442695
    %v2964 = vpow.pop %v2963
    %v2965 = vmul.f32 %v2935, 1.442695
    %v2966 = vpow.pop %v2965
    %v2967 = vmul.f32 %v2936, 1.442695
    %v2968 = vpow.pop %v2967
    %v2969 = vadd.f32 %v2938, 1.0
    %v2970 = vadd.f32 %v2940, 1.0
    %v2971 = vadd.f32 %v2942, 1.0
    %v2972 = vadd.f32 %v2944, 1.0
    %v2973 = vadd.f32 %v2946, 1.0
    %v2974 = vadd.f32 %v2948, 1.0
    %v2975 = vadd.f32 %v2950, 1.0
    %v2976 = vadd.f32 %v2952, 1.0
    %v2977 = vadd.f32 %v2954, 1.0
    %v2978 = vadd.f32 %v2956, 1.0
    %v2979 = vadd.f32 %v2958, 1.0
    %v2980 = vadd.f32 %v2960, 1.0
    %v2981 = vadd.f32 %v2962, 1.0
    %v2982 = vadd.f32 %v2964, 1.0
    %v2983 = vadd.f32 %v2966, 1.0
    %v2984 = vadd.f32 %v2968, 1.0
    %v2985 = vmul.f32 %v2969, %v2969
    %v2986 = vmul.f32 %v2970, %v2970
    %v2987 = vmul.f32 %v2971, %v2971
    %v2988 = vmul.f32 %v2972, %v2972
    %v2989 = vmul.f32 %v2973, %v2973
    %v2990 = vmul.f32 %v2974, %v2974
    %v2991 = vmul.f32 %v2975, %v2975
    %v2992 = vmul.f32 %v2976, %v2976
    %v2993 = vmul.f32 %v2977, %v2977
    %v2994 = vmul.f32 %v2978, %v2978
    %v2995 = vmul.f32 %v2979, %v2979
    %v2996 = vmul.f32 %v2980, %v2980
    %v2997 = vmul.f32 %v2981, %v2981
    %v2998 = vmul.f32 %v2982, %v2982
    %v2999 = vmul.f32 %v2983, %v2983
    %v3000 = vmul.f32 %v2984, %v2984
    %v3001 = vsub.f32 %v2985, 1.0
    %v3002 = vsub.f32 %v2986, 1.0
    %v3003 = vsub.f32 %v2987, 1.0
    %v3004 = vsub.f32 %v2988, 1.0
    %v3005 = vsub.f32 %v2989, 1.0
    %v3006 = vsub.f32 %v2990, 1.0
    %v3007 = vsub.f32 %v2991, 1.0
    %v3008 = vsub.f32 %v2992, 1.0
    %v3009 = vsub.f32 %v2993, 1.0
    %v3010 = vsub.f32 %v2994, 1.0
    %v3011 = vsub.f32 %v2995, 1.0
    %v3012 = vsub.f32 %v2996, 1.0
    %v3013 = vsub.f32 %v2997, 1.0
    %v3014 = vsub.f32 %v2998, 1.0
    %v3015 = vsub.f32 %v2999, 1.0
    %v3016 = vsub.f32 %v3000, 1.0
    %v3017 = vmul.f32 %v2905, %v3001
    %v3018 = vmul.f32 %v2906, %v3002
    %v3019 = vmul.f32 %v2907, %v3003
    %v3020 = vmul.f32 %v2908, %v3004
    %v3021 = vmul.f32 %v2909, %v3005
    %v3022 = vmul.f32 %v2910, %v3006
    %v3023 = vmul.f32 %v2911, %v3007
    %v3024 = vmul.f32 %v2912, %v3008
    %v3025 = vmul.f32 %v2913, %v3009
    %v3026 = vmul.f32 %v2914, %v3010
    %v3027 = vmul.f32 %v2915, %v3011
    %v3028 = vmul.f32 %v2916, %v3012
    %v3029 = vmul.f32 %v2917, %v3013
    %v3030 = vmul.f32 %v2918, %v3014
    %v3031 = vmul.f32 %v2919, %v3015
    %v3032 = vmul.f32 %v2920, %v3016
    %v3033 = vadd.f32 %v2985, 1.0
    %v3034 = vadd.f32 %v2986, 1.0
    %v3035 = vadd.f32 %v2987, 1.0
    %v3036 = vadd.f32 %v2988, 1.0
    %v3037 = vadd.f32 %v2989, 1.0
    %v3038 = vadd.f32 %v2990, 1.0
    %v3039 = vadd.f32 %v2991, 1.0
    %v3040 = vadd.f32 %v2992, 1.0
    %v3041 = vadd.f32 %v2993, 1.0
    %v3042 = vadd.f32 %v2994, 1.0
    %v3043 = vadd.f32 %v2995, 1.0
    %v3044 = vadd.f32 %v2996, 1.0
    %v3045 = vadd.f32 %v2997, 1.0
    %v3046 = vadd.f32 %v2998, 1.0
    %v3047 = vadd.f32 %v2999, 1.0
    %v3048 = vadd.f32 %v3000, 1.0
    %v3049 = vrcp.pop %v3033
    %v3050 = vrcp.pop %v3034
    %v3051 = vrcp.pop %v3035
    %v3052 = vrcp.pop %v3036
    %v3053 = vrcp.pop %v3037
    %v3054 = vrcp.pop %v3038
    %v3055 = vrcp.pop %v3039
    %v3056 = vrcp.pop %v3040
    %v3057 = vrcp.pop %v3041
    %v3058 = vrcp.pop %v3042
    %v3059 = vrcp.pop %v3043
    %v3060 = vrcp.pop %v3044
    %v3061 = vrcp.pop %v3045
    %v3062 = vrcp.pop %v3046
    %v3063 = vrcp.pop %v3047
    %v3064 = vrcp.pop %v3048
    %v3065 = vmul.f32 %v3017, %v3049
    %v3066 = vmul.f32 %v3018, %v3050
    %v3067 = vmul.f32 %v3019, %v3051
    %v3068 = vmul.f32 %v3020, %v3052
    %v3069 = vmul.f32 %v3021, %v3053
    %v3070 = vmul.f32 %v3022, %v3054
    %v3071 = vmul.f32 %v3023, %v3055
    %v3072 = vmul.f32 %v3024, %v3056
    %v3073 = vmul.f32 %v3025, %v3057
    %v3074 = vmul.f32 %v3026, %v3058
    %v3075 = vmul.f32 %v3027, %v3059
    %v3076 = vmul.f32 %v3028, %v3060
    %v3077 = vmul.f32 %v3029, %v3061
    %v3078 = vmul.f32 %v3030, %v3062
    %v3079 = vmul.f32 %v3031, %v3063
    %v3080 = vmul.f32 %v3032, %v3064
    %v3081 = vld [vmem:[%s0] sm:$0xf]
    %v3082 = vld [vmem:[%s0 + $0x4] sm:$0xf]
    %v3083 = vld [vmem:[%s0 + $0x8] sm:$0x1]
    %v3084 = vld [vmem:[%s0 + $0xc] sm:$0xf]
    %v3085 = vld [vmem:[%s0 + $0x10] sm:$0xf]
    %v3086 = vld [vmem:[%s0 + $0x14] sm:$0x1]
    %v3087 = vld [vmem:[%s0 + $0x18] sm:$0xf]
    %v3088 = vld [vmem:[%s0 + $0x1c] sm:$0xf]
    %v3089 = vld [vmem:[%s0 + $0x20] sm:$0x1]
    %v3090 = vld [vmem:[%s0 + $0x24] sm:$0xf]
    %v3091 = vld [vmem:[%s0 + $0x28] sm:$0xf]
    %v3092 = vld [vmem:[%s0 + $0x2c] sm:$0x1]
    %v3093 = vld [vmem:[%s0 + $0x30] sm:$0xf]
    %v3094 = vld [vmem:[%s0 + $0x34] sm:$0xf]
    %v3095 = vld [vmem:[%s0 + $0x38] sm:$0x1]
    %v3096 = vld [vmem:[%s0 + $0x3c] sm:$0xf]
    %v3097 = vld [vmem:[%s0 + $0x40] sm:$0xf]
    %v3098 = vld [vmem:[%s0 + $0x44] sm:$0x1]
    %v3099 = vld [vmem:[%s0 + $0x48] sm:$0xf]
    %v3100 = vld [vmem:[%s0 + $0x4c] sm:$0xf]
    %v3101 = vld [vmem:[%s0 + $0x50] sm:$0x1]
    %v3102 = vld [vmem:[%s0 + $0x54] sm:$0xf]
    %v3103 = vld [vmem:[%s0 + $0x58] sm:$0xf]
    %v3104 = vld [vmem:[%s0 + $0x5c] sm:$0x1]
    %v3106 = vshrl.u32 %v3081, 16
    %v3108 = vrot.slane %v3106, 4
    %v3109 = vshll.u32 %v3081, 16
    %v3111 = vrot.slane %v3109, 5
    %v3112 = vor.u32 %v3108, %v3111
    %v3113 = vrot.slane %v3112, 4
    %v3115 = vshll.u32 %v3082, 16
    %v3117 = vrot.slane %v3115, 5
    %v3118 = vsel %vm109, %v3113, %v3117
    %v3119 = vshrl.u32 %v3082, 16
    %v3121 = vrot.slane %v3119, 4
    %v3122 = vor.u32 %v3121, %v3117
    %v3123 = vrot.slane %v3122, 4
    %v3125 = vshll.u32 %v3083, 16
    %v3127 = vrot.slane %v3125, 5
    %v3128 = vsel %vm109, %v3123, %v3127
    %v3130 = vshrl.u32 %v3084, 16
    %v3132 = vrot.slane %v3130, 4
    %v3133 = vshll.u32 %v3084, 16
    %v3135 = vrot.slane %v3133, 5
    %v3136 = vor.u32 %v3132, %v3135
    %v3137 = vrot.slane %v3136, 4
    %v3139 = vshll.u32 %v3085, 16
    %v3141 = vrot.slane %v3139, 5
    %v3142 = vsel %vm109, %v3137, %v3141
    %v3143 = vshrl.u32 %v3085, 16
    %v3145 = vrot.slane %v3143, 4
    %v3146 = vor.u32 %v3145, %v3141
    %v3147 = vrot.slane %v3146, 4
    %v3149 = vshll.u32 %v3086, 16
    %v3151 = vrot.slane %v3149, 5
    %v3152 = vsel %vm109, %v3147, %v3151
    %v3154 = vshrl.u32 %v3087, 16
    %v3156 = vrot.slane %v3154, 4
    %v3157 = vshll.u32 %v3087, 16
    %v3159 = vrot.slane %v3157, 5
    %v3160 = vor.u32 %v3156, %v3159
    %v3161 = vrot.slane %v3160, 4
    %v3163 = vshll.u32 %v3088, 16
    %v3165 = vrot.slane %v3163, 5
    %v3166 = vsel %vm109, %v3161, %v3165
    %v3167 = vshrl.u32 %v3088, 16
    %v3169 = vrot.slane %v3167, 4
    %v3170 = vor.u32 %v3169, %v3165
    %v3171 = vrot.slane %v3170, 4
    %v3173 = vshll.u32 %v3089, 16
    %v3175 = vrot.slane %v3173, 5
    %v3176 = vsel %vm109, %v3171, %v3175
    %v3178 = vshrl.u32 %v3090, 16
    %v3180 = vrot.slane %v3178, 4
    %v3181 = vshll.u32 %v3090, 16
    %v3183 = vrot.slane %v3181, 5
    %v3184 = vor.u32 %v3180, %v3183
    %v3185 = vrot.slane %v3184, 4
    %v3187 = vshll.u32 %v3091, 16
    %v3189 = vrot.slane %v3187, 5
    %v3190 = vsel %vm109, %v3185, %v3189
    %v3191 = vshrl.u32 %v3091, 16
    %v3193 = vrot.slane %v3191, 4
    %v3194 = vor.u32 %v3193, %v3189
    %v3195 = vrot.slane %v3194, 4
    %v3197 = vshll.u32 %v3092, 16
    %v3199 = vrot.slane %v3197, 5
    %v3200 = vsel %vm109, %v3195, %v3199
    %v3202 = vshrl.u32 %v3093, 16
    %v3204 = vrot.slane %v3202, 4
    %v3205 = vshll.u32 %v3093, 16
    %v3207 = vrot.slane %v3205, 5
    %v3208 = vor.u32 %v3204, %v3207
    %v3209 = vrot.slane %v3208, 4
    %v3211 = vshll.u32 %v3094, 16
    %v3213 = vrot.slane %v3211, 5
    %v3214 = vsel %vm109, %v3209, %v3213
    %v3215 = vshrl.u32 %v3094, 16
    %v3217 = vrot.slane %v3215, 4
    %v3218 = vor.u32 %v3217, %v3213
    %v3219 = vrot.slane %v3218, 4
    %v3221 = vshll.u32 %v3095, 16
    %v3223 = vrot.slane %v3221, 5
    %v3224 = vsel %vm109, %v3219, %v3223
    %v3226 = vshrl.u32 %v3096, 16
    %v3228 = vrot.slane %v3226, 4
    %v3229 = vshll.u32 %v3096, 16
    %v3231 = vrot.slane %v3229, 5
    %v3232 = vor.u32 %v3228, %v3231
    %v3233 = vrot.slane %v3232, 4
    %v3235 = vshll.u32 %v3097, 16
    %v3237 = vrot.slane %v3235, 5
    %v3238 = vsel %vm109, %v3233, %v3237
    %v3239 = vshrl.u32 %v3097, 16
    %v3241 = vrot.slane %v3239, 4
    %v3242 = vor.u32 %v3241, %v3237
    %v3243 = vrot.slane %v3242, 4
    %v3245 = vshll.u32 %v3098, 16
    %v3247 = vrot.slane %v3245, 5
    %v3248 = vsel %vm109, %v3243, %v3247
    %v3250 = vshrl.u32 %v3099, 16
    %v3252 = vrot.slane %v3250, 4
    %v3253 = vshll.u32 %v3099, 16
    %v3255 = vrot.slane %v3253, 5
    %v3256 = vor.u32 %v3252, %v3255
    %v3257 = vrot.slane %v3256, 4
    %v3259 = vshll.u32 %v3100, 16
    %v3261 = vrot.slane %v3259, 5
    %v3262 = vsel %vm109, %v3257, %v3261
    %v3263 = vshrl.u32 %v3100, 16
    %v3265 = vrot.slane %v3263, 4
    %v3266 = vor.u32 %v3265, %v3261
    %v3267 = vrot.slane %v3266, 4
    %v3269 = vshll.u32 %v3101, 16
    %v3271 = vrot.slane %v3269, 5
    %v3272 = vsel %vm109, %v3267, %v3271
    %v3274 = vshrl.u32 %v3102, 16
    %v3276 = vrot.slane %v3274, 4
    %v3277 = vshll.u32 %v3102, 16
    %v3279 = vrot.slane %v3277, 5
    %v3280 = vor.u32 %v3276, %v3279
    %v3281 = vrot.slane %v3280, 4
    %v3283 = vshll.u32 %v3103, 16
    %v3285 = vrot.slane %v3283, 5
    %v3286 = vsel %vm109, %v3281, %v3285
    %v3287 = vshrl.u32 %v3103, 16
    %v3289 = vrot.slane %v3287, 4
    %v3290 = vor.u32 %v3289, %v3285
    %v3291 = vrot.slane %v3290, 4
    %v3293 = vshll.u32 %v3104, 16
    %v3295 = vrot.slane %v3293, 5
    %v3296 = vsel %vm109, %v3291, %v3295
    %v3297 = vld [vmem:[%s13] sm:$0xf]
    %v3298 = vld [vmem:[%s13 + $0x4] sm:$0xf]
    %v3299 = vld [vmem:[%s13 + $0x8] sm:$0xf]
    %v3300 = vld [vmem:[%s13 + $0xc] sm:$0xf]
    %v3301 = vld [vmem:[%s13 + $0x10] sm:$0xf]
    %v3302 = vld [vmem:[%s13 + $0x14] sm:$0xf]
    %v3303 = vld [vmem:[%s13 + $0x18] sm:$0xf]
    %v3304 = vld [vmem:[%s13 + $0x1c] sm:$0xf]
    %v3305 = vld [vmem:[%s13 + $0x20] sm:$0xf]
    %v3306 = vld [vmem:[%s13 + $0x24] sm:$0xf]
    %v3307 = vld [vmem:[%s13 + $0x28] sm:$0xf]
    %v3308 = vld [vmem:[%s13 + $0x2c] sm:$0xf]
    %v3309 = vld [vmem:[%s13 + $0x30] sm:$0xf]
    %v3310 = vld [vmem:[%s13 + $0x34] sm:$0xf]
    %v3311 = vld [vmem:[%s13 + $0x38] sm:$0xf]
    %v3312 = vld [vmem:[%s13 + $0x3c] sm:$0xf]
    %v3313 = vld [vmem:[%s14] sm:$0x1]
    %v3315 = vlaneseq
    %v3316 = vshrl.u32 %v3315, 7
    %v3317 = vsub.s32 0, %v3316
    %v3318 = vrot.slane %v3313, %v3317
    %v3320 = vunpack.c.l.b16 %v3118
    %v3321 = vunpack.c.l.b16 %v3128
    %v3322 = vunpack.c.l.b16 %v3142
    %v3323 = vunpack.c.l.b16 %v3152
    %v3324 = vunpack.c.l.b16 %v3166
    %v3325 = vunpack.c.l.b16 %v3176
    %v3326 = vunpack.c.l.b16 %v3190
    %v3327 = vunpack.c.l.b16 %v3200
    %v3328 = vunpack.c.l.b16 %v3214
    %v3329 = vunpack.c.l.b16 %v3224
    %v3330 = vunpack.c.l.b16 %v3238
    %v3331 = vunpack.c.l.b16 %v3248
    %v3332 = vunpack.c.l.b16 %v3262
    %v3333 = vunpack.c.l.b16 %v3272
    %v3334 = vunpack.c.l.b16 %v3286
    %v3335 = vunpack.c.l.b16 %v3296
    %v3336 = vpack.c.b16 %v3321, %v3320
    %v3337 = vpack.c.b16 %v3323, %v3322
    %v3338 = vpack.c.b16 %v3325, %v3324
    %v3339 = vpack.c.b16 %v3327, %v3326
    %v3340 = vpack.c.b16 %v3329, %v3328
    %v3341 = vpack.c.b16 %v3331, %v3330
    %v3342 = vpack.c.b16 %v3333, %v3332
    %v3343 = vpack.c.b16 %v3335, %v3334
    %v3368 = vunpack.c.l.b16 %v3297
    %v3369 = vunpack.c.l.b16 %v3298
    %v3370 = vunpack.c.l.b16 %v3299
    %v3371 = vunpack.c.l.b16 %v3300
    %v3372 = vunpack.c.l.b16 %v3301
    %v3373 = vunpack.c.l.b16 %v3302
    %v3374 = vunpack.c.l.b16 %v3303
    %v3375 = vunpack.c.l.b16 %v3304
    %v3376 = vunpack.c.l.b16 %v3305
    %v3377 = vunpack.c.l.b16 %v3306
    %v3378 = vunpack.c.l.b16 %v3307
    %v3379 = vunpack.c.l.b16 %v3308
    %v3380 = vunpack.c.l.b16 %v3309
    %v3381 = vunpack.c.l.b16 %v3310
    %v3382 = vunpack.c.l.b16 %v3311
    %v3383 = vunpack.c.l.b16 %v3312
    %v3384 = vpack.c.b16 %v3369, %v3368
    %v3385 = vpack.c.b16 %v3371, %v3370
    %v3386 = vpack.c.b16 %v3373, %v3372
    %v3387 = vpack.c.b16 %v3375, %v3374
    %v3388 = vpack.c.b16 %v3377, %v3376
    %v3389 = vpack.c.b16 %v3379, %v3378
    %v3390 = vpack.c.b16 %v3381, %v3380
    %v3391 = vpack.c.b16 %v3383, %v3382
    %3400 = vmatprep.subr.bf16.mxu0 0
    %3401 = vmatpush1.bf16.msra.mxu0 %v3391
    %3402 = vmatprep.subr.bf16.mxu0 0
    %3403 = vmatpush1.bf16.msra.mxu0 %v3390
    %3404 = vmatprep.subr.bf16.mxu0 0
    %3405 = vmatpush1.bf16.msra.mxu0 %v3389
    %3406 = vmatprep.subr.bf16.mxu0 0
    %3407 = vmatpush1.bf16.msra.mxu0 %v3388
    %3408 = vmatprep.subr.bf16.mxu0 0
    %3409 = vmatpush1.bf16.msra.mxu0 %v3387
    %3410 = vmatprep.subr.bf16.mxu0 0
    %3411 = vmatpush1.bf16.msra.mxu0 %v3386
    %3412 = vmatprep.subr.bf16.mxu0 0
    %3413 = vmatpush1.bf16.msra.mxu0 %v3385
    %3414 = vmatprep.subr.bf16.mxu0 0
    %3415 = vmatpush1.bf16.msra.mxu0 %v3384
    %3416 = vmatprep.subr.bf16.mxu0 0
    %3417 = vmatpush2.bf16.msra.mxu0 0
    %3418 = vmatprep.subr.bf16.mxu0 0
    %3419 = vmatpush2.bf16.msra.mxu0 0
    %3420 = vmatprep.subr.bf16.mxu0 0
    %3421 = vmatpush2.bf16.msra.mxu0 0
    %3422 = vmatprep.subr.bf16.mxu0 0
    %3423 = vmatpush2.bf16.msra.mxu0 0
    %3424 = vmatprep.subr.bf16.mxu0 0
    %3425 = vmatpush2.bf16.msra.mxu0 0
    %3426 = vmatprep.subr.bf16.mxu0 0
    %3427 = vmatpush2.bf16.msra.mxu0 0
    %3428 = vmatprep.subr.bf16.mxu0 0
    %3429 = vmatpush2.bf16.msra.mxu0 0
    %3430 = vmatprep.subr.bf16.mxu0 0
    %3431 = vmatpush2.bf16.msra.mxu0 0
    %3432 = vmatprep.mubr.bf16.mxu0 0
    %3433 = vmatmul.mubr.bf16.gmra.mxu0 %v3336
    %v3434 = vpop.f32.mrf.mxu0
    %v3435 = vadd.f32 %v3318, %v3434
    %v3436 = vpop.f32.mrf.mxu0
    %v3437 = vpop.f32.mrf.mxu0
    %v3438 = vadd.f32 %v3318, %v3437
    %v3439 = vpop.f32.mrf.mxu0
    %3440 = vmatprep.mubr.bf16.mxu0 0
    %3441 = vmatmul.mubr.bf16.gmra.mxu0 %v3337
    %v3442 = vpop.f32.mrf.mxu0
    %v3443 = vadd.f32 %v3318, %v3442
    %v3444 = vpop.f32.mrf.mxu0
    %v3445 = vpop.f32.mrf.mxu0
    %v3446 = vadd.f32 %v3318, %v3445
    %v3447 = vpop.f32.mrf.mxu0
    %3448 = vmatprep.mubr.bf16.mxu0 0
    %3449 = vmatmul.mubr.bf16.gmra.mxu0 %v3338
    %v3450 = vpop.f32.mrf.mxu0
    %v3451 = vadd.f32 %v3318, %v3450
    %v3452 = vpop.f32.mrf.mxu0
    %v3453 = vpop.f32.mrf.mxu0
    %v3454 = vadd.f32 %v3318, %v3453
    %v3455 = vpop.f32.mrf.mxu0
    %3456 = vmatprep.mubr.bf16.mxu0 0
    %3457 = vmatmul.mubr.bf16.gmra.mxu0 %v3339
    %v3458 = vpop.f32.mrf.mxu0
    %v3459 = vadd.f32 %v3318, %v3458
    %v3460 = vpop.f32.mrf.mxu0
    %v3461 = vpop.f32.mrf.mxu0
    %v3462 = vadd.f32 %v3318, %v3461
    %v3463 = vpop.f32.mrf.mxu0
    %3464 = vmatprep.mubr.bf16.mxu0 0
    %3465 = vmatmul.mubr.bf16.gmra.mxu0 %v3340
    %v3466 = vpop.f32.mrf.mxu0
    %v3467 = vadd.f32 %v3318, %v3466
    %v3468 = vpop.f32.mrf.mxu0
    %v3469 = vpop.f32.mrf.mxu0
    %v3470 = vadd.f32 %v3318, %v3469
    %v3471 = vpop.f32.mrf.mxu0
    %3472 = vmatprep.mubr.bf16.mxu0 0
    %3473 = vmatmul.mubr.bf16.gmra.mxu0 %v3341
    %v3474 = vpop.f32.mrf.mxu0
    %v3475 = vadd.f32 %v3318, %v3474
    %v3476 = vpop.f32.mrf.mxu0
    %v3477 = vpop.f32.mrf.mxu0
    %v3478 = vadd.f32 %v3318, %v3477
    %v3479 = vpop.f32.mrf.mxu0
    %3480 = vmatprep.mubr.bf16.mxu0 0
    %3481 = vmatmul.mubr.bf16.gmra.mxu0 %v3342
    %v3482 = vpop.f32.mrf.mxu0
    %v3483 = vadd.f32 %v3318, %v3482
    %v3484 = vpop.f32.mrf.mxu0
    %v3485 = vpop.f32.mrf.mxu0
    %v3486 = vadd.f32 %v3318, %v3485
    %v3487 = vpop.f32.mrf.mxu0
    %3488 = vmatprep.mubr.bf16.mxu0 0
    %3489 = vmatmul.mubr.bf16.gmra.mxu0 %v3343
    %v3490 = vpop.f32.mrf.mxu0
    %v3491 = vadd.f32 %v3318, %v3490
    %v3492 = vpop.f32.mrf.mxu0
    %v3493 = vpop.f32.mrf.mxu0
    %v3494 = vadd.f32 %v3318, %v3493
    %v3495 = vpop.f32.mrf.mxu0
    %3496 = vdwg.mxu0
    %v3497 = vadd.f32 %v3065, %v3435
    %v3498 = vadd.f32 %v3066, %v3438
    %v3499 = vadd.f32 %v3067, %v3443
    %v3500 = vadd.f32 %v3068, %v3446
    %v3501 = vadd.f32 %v3069, %v3451
    %v3502 = vadd.f32 %v3070, %v3454
    %v3503 = vadd.f32 %v3071, %v3459
    %v3504 = vadd.f32 %v3072, %v3462
    %v3505 = vadd.f32 %v3073, %v3467
    %v3506 = vadd.f32 %v3074, %v3470
    %v3507 = vadd.f32 %v3075, %v3475
    %v3508 = vadd.f32 %v3076, %v3478
    %v3509 = vadd.f32 %v3077, %v3483
    %v3510 = vadd.f32 %v3078, %v3486
    %v3511 = vadd.f32 %v3079, %v3491
    %v3512 = vadd.f32 %v3080, %v3494
    %3513 = vst [vmem:[#allocation6] sm:$0xff] %v3497
    %3514 = vst [vmem:[#allocation6 + $0x8] sm:$0xff] %v3498
    %3515 = vst [vmem:[#allocation6 + $0x10] sm:$0xff] %v3499
    %3516 = vst [vmem:[#allocation6 + $0x18] sm:$0xff] %v3500
    %3517 = vst [vmem:[#allocation6 + $0x20] sm:$0xff] %v3501
    %3518 = vst [vmem:[#allocation6 + $0x28] sm:$0xff] %v3502
    %3519 = vst [vmem:[#allocation6 + $0x30] sm:$0xff] %v3503
    %3520 = vst [vmem:[#allocation6 + $0x38] sm:$0xff] %v3504
    %3521 = vst [vmem:[#allocation6 + $0x40] sm:$0xff] %v3505
    %3522 = vst [vmem:[#allocation6 + $0x48] sm:$0xff] %v3506
    %3523 = vst [vmem:[#allocation6 + $0x50] sm:$0xff] %v3507
    %3524 = vst [vmem:[#allocation6 + $0x58] sm:$0xff] %v3508
    %3525 = vst [vmem:[#allocation6 + $0x60] sm:$0xff] %v3509
    %3526 = vst [vmem:[#allocation6 + $0x68] sm:$0xff] %v3510
    %3527 = vst [vmem:[#allocation6 + $0x70] sm:$0xff] %v3511
    %3528 = vst [vmem:[#allocation6 + $0x78] sm:$0xff] %v3512
    // Predicated region
    $region66: #{tpu_custom_call.1} parent=1 // pred_check
      _
    $region67: #{tpu_custom_call.1} parent=1 // pred_check_branch
      %3530 = sbr.rel (0) target = $region69
    $region68: #{tpu_custom_call.1} parent=1 // pred_region
      %s3532 = ssub.s32 2048, 2048
      %3533 = vsyncadd [#allocation5], %s3532
      %s3534 = sshll.u32 [#allocation6], 4
      %s3535 = int_to_ptr.vmem [resolvable:$true] %s3534
      %3540 = dma.vmem_to_hbm [thread:$0]  %s3535, 2048, %s15, [#allocation5], 128, 128, 8
    $region69: #{tpu_custom_call.1} parent=1 // pred_fallthru
      _
    // Predicated region
    $region70: #{tpu_custom_call.1} parent=1 // pred_check
      _
    $region71: #{tpu_custom_call.1} parent=1 // pred_check_branch
      %3542 = sbr.rel (0) target = $region73
    $region72: #{tpu_custom_call.1} parent=1 // pred_region
      %3543 = dma.done [#allocation5], 2048
    $region73: #{tpu_custom_call.1} parent=1 // pred_fallthru
      _
    %3544 = vsyncpa [#allocation4], 1
    %3545 = vsyncpa [#allocation5], 1

// kernel: tpu_custom_call.1
$region0: #{tpu_custom_call.1}
  #allocation0 [shape = 'u32[]', space=smem, size = 0x4, offset = 0x4, fixed_abs, tag = 'smem constant byte address 0x4 - core index']
  #allocation1 [shape = 'u32[144,128]{1,0:T(1,128)}', space=vmem, size = 0x12000, scoped, tag = 'internal scratch']
  #allocation2 [shape = 'f32[8,18,128]{2,1,0:T(8,128)}', space=vmem, size = 0x18000, scoped, tag = 'scratch operand']
  %s0 = inlined_call_operand.vmem [shape: bf16[8,18,128], index: 0, kind: input, shape index: {}]
  %s1 = inlined_call_operand.vmem [shape: f32[8,1,128], index: 1, kind: input, shape index: {}]
  %s2 = inlined_call_operand.vmem [shape: f32[8,1,128], index: 2, kind: input, shape index: {}]
  %s3 = inlined_call_operand.vmem [shape: bf16[384,128], index: 3, kind: input, shape index: {}]
  %s4 = inlined_call_operand.vmem [shape: f32[1,128], index: 4, kind: input, shape index: {}]
  %s5 = inlined_call_operand.vmem [shape: f32[1,128], index: 5, kind: input, shape index: {}]
  %s6 = inlined_call_operand.vmem [shape: f32[1,128], index: 6, kind: input, shape index: {}]
  %s7 = inlined_call_operand.hbm [shape: bf16[384,128], index: 7, kind: input, shape index: {}]
  %s8 = inlined_call_operand.vmem [shape: f32[1,128], index: 8, kind: input, shape index: {}]
  %s9 = inlined_call_operand.vmem [shape: f32[1,128], index: 9, kind: input, shape index: {}]
  %s10 = inlined_call_operand.vmem [shape: f32[1,128], index: 10, kind: input, shape index: {}]
  %s11 = inlined_call_operand.vmem [shape: f32[128,8], index: 11, kind: input, shape index: {}]
  %s12 = inlined_call_operand.vmem [shape: f32[8,128], index: 12, kind: input, shape index: {}]
  %s13 = inlined_call_operand.vmem [shape: bf16[128,128], index: 13, kind: input, shape index: {}]
  %s14 = inlined_call_operand.vmem [shape: f32[1,128], index: 14, kind: input, shape index: {}]
  %s15 = inlined_call_operand.hbm [shape: f32[8,16,128], index: 15, kind: output, shape index: {}]
  %s16 = sld [smem:[#allocation0]]
  $region74: #{tpu_custom_call.1} parent=0
    _
  %s18 = ssub.s32 1, %s16
  %s19 = scalar_select 0, %s18, %s16
  $region1: #{tpu_custom_call.1} parent=0
    #allocation3 [shape = 'u8[98304]{0}', space=vmem, size = 0x18000, scoped, tag = 'input window, operand 7, single buffered']
    #allocation4 [shape = 's32[1]{0}', space=sflag, size = 0x4, scoped, tag = 'scoped memory for tpu_custom_call.1']
    #allocation5 [shape = 's32[1]{0}', space=sflag, size = 0x4, scoped, tag = 'scoped memory for tpu_custom_call.1']
    #allocation6 [shape = 'u8[65536]{0}', space=vmem, size = 0x10000, scoped, tag = 'output window, operand 0, single buffered']
    %20 = vsyncpa [#allocation4], 0
    %21 = vsyncpa [#allocation5], 0
    // Predicated region
    $region2: #{tpu_custom_call.1} parent=1 // pred_check
      _
    $region3: #{tpu_custom_call.1} parent=1 // pred_check_branch
      %23 = sbr.rel (0) target = $region5
    $region4: #{tpu_custom_call.1} parent=1 // pred_region
      _
    $region5: #{tpu_custom_call.1} parent=1 // pred_fallthru
      _
    // Predicated region
    $region6: #{tpu_custom_call.1} parent=1 // pred_check
      _
    $region7: #{tpu_custom_call.1} parent=1 // pred_check_branch
      %25 = sbr.rel (0) target = $region9
    $region8: #{tpu_custom_call.1} parent=1 // pred_region
      _
    $region9: #{tpu_custom_call.1} parent=1 // pred_fallthru
      _
    // Predicated region
    $region10: #{tpu_custom_call.1} parent=1 // pred_check
      _
    $region11: #{tpu_custom_call.1} parent=1 // pred_check_branch
      %27 = sbr.rel (0) target = $region13
    $region12: #{tpu_custom_call.1} parent=1 // pred_region
      _
    $region13: #{tpu_custom_call.1} parent=1 // pred_fallthru
      _
    // Predicated region
    $region14: #{tpu_custom_call.1} parent=1 // pred_check
      _
    $region15: #{tpu_custom_call.1} parent=1 // pred_check_branch
      %29 = sbr.rel (0) target = $region17
    $region16: #{tpu_custom_call.1} parent=1 // pred_region
      _
    $region17: #{tpu_custom_call.1} parent=1 // pred_fallthru
      _
    // Predicated region
    $region18: #{tpu_custom_call.1} parent=1 // pred_check
      _
    $region19: #{tpu_custom_call.1} parent=1 // pred_check_branch
      %31 = sbr.rel (0) target = $region21
    $region20: #{tpu_custom_call.1} parent=1 // pred_region
      _
    $region21: #{tpu_custom_call.1} parent=1 // pred_fallthru
      _
    // Predicated region
    $region22: #{tpu_custom_call.1} parent=1 // pred_check
      _
    $region23: #{tpu_custom_call.1} parent=1 // pred_check_branch
      %33 = sbr.rel (0) target = $region25
    $region24: #{tpu_custom_call.1} parent=1 // pred_region
      _
    $region25: #{tpu_custom_call.1} parent=1 // pred_fallthru
      _
    // Predicated region
    $region26: #{tpu_custom_call.1} parent=1 // pred_check
      _
    $region27: #{tpu_custom_call.1} parent=1 // pred_check_branch
      %35 = sbr.rel (0) target = $region29
    $region28: #{tpu_custom_call.1} parent=1 // pred_region
      _
    $region29: #{tpu_custom_call.1} parent=1 // pred_fallthru
      _
    // Predicated region
    $region30: #{tpu_custom_call.1} parent=1 // pred_check
      _
    $region31: #{tpu_custom_call.1} parent=1 // pred_check_branch
      %37 = sbr.rel (0) target = $region33
    $region32: #{tpu_custom_call.1} parent=1 // pred_region
      %s39 = ssub.s32 3072, 3072
      %40 = vsyncadd [#allocation4], %s39
      %s41 = sshll.u32 [#allocation3], 4
      %s42 = int_to_ptr.vmem [resolvable:$true] %s41
      %47 = dma.hbm_to_vmem [thread:$0]  %s7, 3072, %s42, [#allocation4], 64, 64, 4
    $region33: #{tpu_custom_call.1} parent=1 // pred_fallthru
      _
    // Predicated region
    $region34: #{tpu_custom_call.1} parent=1 // pred_check
      _
    $region35: #{tpu_custom_call.1} parent=1 // pred_check_branch
      %49 = sbr.rel (0) target = $region37
    $region36: #{tpu_custom_call.1} parent=1 // pred_region
      _
    $region37: #{tpu_custom_call.1} parent=1 // pred_fallthru
      _
    // Predicated region
    $region38: #{tpu_custom_call.1} parent=1 // pred_check
      _
    $region39: #{tpu_custom_call.1} parent=1 // pred_check_branch
      %51 = sbr.rel (0) target = $region41
    $region40: #{tpu_custom_call.1} parent=1 // pred_region
      _
    $region41: #{tpu_custom_call.1} parent=1 // pred_fallthru
      _
    // Predicated region
    $region42: #{tpu_custom_call.1} parent=1 // pred_check
      _
    $region43: #{tpu_custom_call.1} parent=1 // pred_check_branch
      %53 = sbr.rel (0) target = $region45
    $region44: #{tpu_custom_call.1} parent=1 // pred_region
      _
    $region45: #{tpu_custom_call.1} parent=1 // pred_fallthru
      _
    // Predicated region
    $region46: #{tpu_custom_call.1} parent=1 // pred_check
      _
    $region47: #{tpu_custom_call.1} parent=1 // pred_check_branch
      %55 = sbr.rel (0) target = $region49
    $region48: #{tpu_custom_call.1} parent=1 // pred_region
      _
    $region49: #{tpu_custom_call.1} parent=1 // pred_fallthru
      _
    // Predicated region
    $region50: #{tpu_custom_call.1} parent=1 // pred_check
      _
    $region51: #{tpu_custom_call.1} parent=1 // pred_check_branch
      %57 = sbr.rel (0) target = $region53
    $region52: #{tpu_custom_call.1} parent=1 // pred_region
      _
    $region53: #{tpu_custom_call.1} parent=1 // pred_fallthru
      _
    // Predicated region
    $region54: #{tpu_custom_call.1} parent=1 // pred_check
      _
    $region55: #{tpu_custom_call.1} parent=1 // pred_check_branch
      %59 = sbr.rel (0) target = $region57
    $region56: #{tpu_custom_call.1} parent=1 // pred_region
      _
    $region57: #{tpu_custom_call.1} parent=1 // pred_fallthru
      _
    // Predicated region
    $region58: #{tpu_custom_call.1} parent=1 // pred_check
      _
    $region59: #{tpu_custom_call.1} parent=1 // pred_check_branch
      %61 = sbr.rel (0) target = $region61
    $region60: #{tpu_custom_call.1} parent=1 // pred_region
      _
    $region61: #{tpu_custom_call.1} parent=1 // pred_fallthru
      _
    // Predicated region
    $region62: #{tpu_custom_call.1} parent=1 // pred_check
      _
    $region63: #{tpu_custom_call.1} parent=1 // pred_check_branch
      %63 = sbr.rel (0) target = $region65
    $region64: #{tpu_custom_call.1} parent=1 // pred_region
      %64 = dma.done [#allocation4], 3072
    $region65: #{tpu_custom_call.1} parent=1 // pred_fallthru
      _
    %v66 = vld [vmem:[%s11] sm:$0xff]
    %v67 = vld [vmem:[%s11 + $0x8] sm:$0xff]
    %v68 = vld [vmem:[%s11 + $0x10] sm:$0xff]
    %v69 = vld [vmem:[%s11 + $0x18] sm:$0xff]
    %v70 = vld [vmem:[%s11 + $0x20] sm:$0xff]
    %v71 = vld [vmem:[%s11 + $0x28] sm:$0xff]
    %v72 = vld [vmem:[%s11 + $0x30] sm:$0xff]
    %v73 = vld [vmem:[%s11 + $0x38] sm:$0xff]
    %v74 = vld [vmem:[%s11 + $0x40] sm:$0xff]
    %v75 = vld [vmem:[%s11 + $0x48] sm:$0xff]
    %v76 = vld [vmem:[%s11 + $0x50] sm:$0xff]
    %v77 = vld [vmem:[%s11 + $0x58] sm:$0xff]
    %v78 = vld [vmem:[%s11 + $0x60] sm:$0xff]
    %v79 = vld [vmem:[%s11 + $0x68] sm:$0xff]
    %v80 = vld [vmem:[%s11 + $0x70] sm:$0xff]
    %v81 = vld [vmem:[%s11 + $0x78] sm:$0xff]
    %v82 = vld [vmem:[%s12] sm:$0xff]
    %v83 = vld [vmem:[%s0] sm:$0xf]
    %v84 = vld [vmem:[%s0 + $0x4] sm:$0xf]
    %v85 = vld [vmem:[%s0 + $0xc] sm:$0xf]
    %v86 = vld [vmem:[%s0 + $0x10] sm:$0xf]
    %v87 = vld [vmem:[%s0 + $0x18] sm:$0xf]
    %v88 = vld [vmem:[%s0 + $0x1c] sm:$0xf]
    %v89 = vld [vmem:[%s0 + $0x24] sm:$0xf]
    %v90 = vld [vmem:[%s0 + $0x28] sm:$0xf]
    %v91 = vld [vmem:[%s0 + $0x30] sm:$0xf]
    %v92 = vld [vmem:[%s0 + $0x34] sm:$0xf]
    %v93 = vld [vmem:[%s0 + $0x3c] sm:$0xf]
    %v94 = vld [vmem:[%s0 + $0x40] sm:$0xf]
    %v95 = vld [vmem:[%s0 + $0x48] sm:$0xf]
    %v96 = vld [vmem:[%s0 + $0x4c] sm:$0xf]
    %v97 = vld [vmem:[%s0 + $0x54] sm:$0xf]
    %v98 = vld [vmem:[%s0 + $0x58] sm:$0xf]
    %v99 = vld [vmem:[%s0 + $0x8] sm:$0x1]
    %v100 = vld [vmem:[%s0 + $0x14] sm:$0x1]
    %v101 = vld [vmem:[%s0 + $0x20] sm:$0x1]
    %v102 = vld [vmem:[%s0 + $0x2c] sm:$0x1]
    %v103 = vld [vmem:[%s0 + $0x38] sm:$0x1]
    %v104 = vld [vmem:[%s0 + $0x44] sm:$0x1]
    %v105 = vld [vmem:[%s0 + $0x50] sm:$0x1]
    %v106 = vld [vmem:[%s0 + $0x5c] sm:$0x1]
    %vm107 = vsmask.f32 3328
    %vm108 = vsmask.f32 7440
    %vm109 = vmor %vm107, %vm108
    %v111 = vshrl.u32 %v83, 16
    %v113 = vrot.slane %v111, 4
    %v114 = vshll.u32 %v83, 16
    %v116 = vrot.slane %v114, 5
    %v117 = vor.u32 %v113, %v116
    %v118 = vrot.slane %v117, 4
    %v120 = vshll.u32 %v84, 16
    %v122 = vrot.slane %v120, 5
    %v123 = vsel %vm109, %v118, %v122
    %v124 = vshrl.u32 %v84, 16
    %v126 = vrot.slane %v124, 4
    %v127 = vor.u32 %v126, %v122
    %v128 = vrot.slane %v127, 4
    %v130 = vshll.u32 %v99, 16
    %v132 = vrot.slane %v130, 5
    %v133 = vsel %vm109, %v128, %v132
    %v135 = vshrl.u32 %v85, 16
    %v137 = vrot.slane %v135, 4
    %v138 = vshll.u32 %v85, 16
    %v140 = vrot.slane %v138, 5
    %v141 = vor.u32 %v137, %v140
    %v142 = vrot.slane %v141, 4
    %v144 = vshll.u32 %v86, 16
    %v146 = vrot.slane %v144, 5
    %v147 = vsel %vm109, %v142, %v146
    %v148 = vshrl.u32 %v86, 16
    %v150 = vrot.slane %v148, 4
    %v151 = vor.u32 %v150, %v146
    %v152 = vrot.slane %v151, 4
    %v154 = vshll.u32 %v100, 16
    %v156 = vrot.slane %v154, 5
    %v157 = vsel %vm109, %v152, %v156
    %v159 = vshrl.u32 %v87, 16
    %v161 = vrot.slane %v159, 4
    %v162 = vshll.u32 %v87, 16
    %v164 = vrot.slane %v162, 5
    %v165 = vor.u32 %v161, %v164
    %v166 = vrot.slane %v165, 4
    %v168 = vshll.u32 %v88, 16
    %v170 = vrot.slane %v168, 5
    %v171 = vsel %vm109, %v166, %v170
    %v172 = vshrl.u32 %v88, 16
    %v174 = vrot.slane %v172, 4
    %v175 = vor.u32 %v174, %v170
    %v176 = vrot.slane %v175, 4
    %v178 = vshll.u32 %v101, 16
    %v180 = vrot.slane %v178, 5
    %v181 = vsel %vm109, %v176, %v180
    %v183 = vshrl.u32 %v89, 16
    %v185 = vrot.slane %v183, 4
    %v186 = vshll.u32 %v89, 16
    %v188 = vrot.slane %v186, 5
    %v189 = vor.u32 %v185, %v188
    %v190 = vrot.slane %v189, 4
    %v192 = vshll.u32 %v90, 16
    %v194 = vrot.slane %v192, 5
    %v195 = vsel %vm109, %v190, %v194
    %v196 = vshrl.u32 %v90, 16
    %v198 = vrot.slane %v196, 4
    %v199 = vor.u32 %v198, %v194
    %v200 = vrot.slane %v199, 4
    %v202 = vshll.u32 %v102, 16
    %v204 = vrot.slane %v202, 5
    %v205 = vsel %vm109, %v200, %v204
    %v207 = vshrl.u32 %v91, 16
    %v209 = vrot.slane %v207, 4
    %v210 = vshll.u32 %v91, 16
    %v212 = vrot.slane %v210, 5
    %v213 = vor.u32 %v209, %v212
    %v214 = vrot.slane %v213, 4
    %v216 = vshll.u32 %v92, 16
    %v218 = vrot.slane %v216, 5
    %v219 = vsel %vm109, %v214, %v218
    %v220 = vshrl.u32 %v92, 16
    %v222 = vrot.slane %v220, 4
    %v223 = vor.u32 %v222, %v218
    %v224 = vrot.slane %v223, 4
    %v226 = vshll.u32 %v103, 16
    %v228 = vrot.slane %v226, 5
    %v229 = vsel %vm109, %v224, %v228
    %v231 = vshrl.u32 %v93, 16
    %v233 = vrot.slane %v231, 4
    %v234 = vshll.u32 %v93, 16
    %v236 = vrot.slane %v234, 5
    %v237 = vor.u32 %v233, %v236
    %v238 = vrot.slane %v237, 4
    %v240 = vshll.u32 %v94, 16
    %v242 = vrot.slane %v240, 5
    %v243 = vsel %vm109, %v238, %v242
    %v244 = vshrl.u32 %v94, 16
    %v246 = vrot.slane %v244, 4
    %v247 = vor.u32 %v246, %v242
    %v248 = vrot.slane %v247, 4
    %v250 = vshll.u32 %v104, 16
    %v252 = vrot.slane %v250, 5
    %v253 = vsel %vm109, %v248, %v252
    %v255 = vshrl.u32 %v95, 16
    %v257 = vrot.slane %v255, 4
    %v258 = vshll.u32 %v95, 16
    %v260 = vrot.slane %v258, 5
    %v261 = vor.u32 %v257, %v260
    %v262 = vrot.slane %v261, 4
    %v264 = vshll.u32 %v96, 16
    %v266 = vrot.slane %v264, 5
    %v267 = vsel %vm109, %v262, %v266
    %v268 = vshrl.u32 %v96, 16
    %v270 = vrot.slane %v268, 4
    %v271 = vor.u32 %v270, %v266
    %v272 = vrot.slane %v271, 4
    %v274 = vshll.u32 %v105, 16
    %v276 = vrot.slane %v274, 5
    %v277 = vsel %vm109, %v272, %v276
    %v279 = vshrl.u32 %v97, 16
    %v281 = vrot.slane %v279, 4
    %v282 = vshll.u32 %v97, 16
    %v284 = vrot.slane %v282, 5
    %v285 = vor.u32 %v281, %v284
    %v286 = vrot.slane %v285, 4
    %v288 = vshll.u32 %v98, 16
    %v290 = vrot.slane %v288, 5
    %v291 = vsel %vm109, %v286, %v290
    %v292 = vshrl.u32 %v98, 16
    %v294 = vrot.slane %v292, 4
    %v295 = vor.u32 %v294, %v290
    %v296 = vrot.slane %v295, 4
    %v298 = vshll.u32 %v106, 16
    %v300 = vrot.slane %v298, 5
    %v301 = vsel %vm109, %v296, %v300
    %v302 = vld [vmem:[%s0] sm:$0xe]
    %v303 = vld [vmem:[%s0 + $0xc] sm:$0xe]
    %v304 = vld [vmem:[%s0 + $0x18] sm:$0xe]
    %v305 = vld [vmem:[%s0 + $0x24] sm:$0xe]
    %v306 = vld [vmem:[%s0 + $0x30] sm:$0xe]
    %v307 = vld [vmem:[%s0 + $0x3c] sm:$0xe]
    %v308 = vld [vmem:[%s0 + $0x48] sm:$0xe]
    %v309 = vld [vmem:[%s0 + $0x54] sm:$0xe]
    %vm334 = vcmask 1042432
    %vm335 = vcmask 1046532
    %vm336 = vmor %vm334, %vm335
    %v337 = vrot.slane %v302, 5
    %v338 = vrot.slane %v337, 4
    %v339 = vrot.slane %v84, 5
    %v340 = vsel %vm336, %v338, %v339
    %v341 = vrot.slane %v339, 4
    %v342 = vrot.slane %v99, 5
    %v343 = vsel %vm336, %v341, %v342
    %v344 = vrot.slane %v303, 5
    %v345 = vrot.slane %v344, 4
    %v346 = vrot.slane %v86, 5
    %v347 = vsel %vm336, %v345, %v346
    %v348 = vrot.slane %v346, 4
    %v349 = vrot.slane %v100, 5
    %v350 = vsel %vm336, %v348, %v349
    %v351 = vrot.slane %v304, 5
    %v352 = vrot.slane %v351, 4
    %v353 = vrot.slane %v88, 5
    %v354 = vsel %vm336, %v352, %v353
    %v355 = vrot.slane %v353, 4
    %v356 = vrot.slane %v101, 5
    %v357 = vsel %vm336, %v355, %v356
    %v358 = vrot.slane %v305, 5
    %v359 = vrot.slane %v358, 4
    %v360 = vrot.slane %v90, 5
    %v361 = vsel %vm336, %v359, %v360
    %v362 = vrot.slane %v360, 4
    %v363 = vrot.slane %v102, 5
    %v364 = vsel %vm336, %v362, %v363
    %v365 = vrot.slane %v306, 5
    %v366 = vrot.slane %v365, 4
    %v367 = vrot.slane %v92, 5
    %v368 = vsel %vm336, %v366, %v367
    %v369 = vrot.slane %v367, 4
    %v370 = vrot.slane %v103, 5
    %v371 = vsel %vm336, %v369, %v370
    %v372 = vrot.slane %v307, 5
    %v373 = vrot.slane %v372, 4
    %v374 = vrot.slane %v94, 5
    %v375 = vsel %vm336, %v373, %v374
    %v376 = vrot.slane %v374, 4
    %v377 = vrot.slane %v104, 5
    %v378 = vsel %vm336, %v376, %v377
    %v379 = vrot.slane %v308, 5
    %v380 = vrot.slane %v379, 4
    %v381 = vrot.slane %v96, 5
    %v382 = vsel %vm336, %v380, %v381
    %v383 = vrot.slane %v381, 4
    %v384 = vrot.slane %v105, 5
    %v385 = vsel %vm336, %v383, %v384
    %v386 = vrot.slane %v309, 5
    %v387 = vrot.slane %v386, 4
    %v388 = vrot.slane %v98, 5
    %v389 = vsel %vm336, %v387, %v388
    %v390 = vrot.slane %v388, 4
    %v391 = vrot.slane %v106, 5
    %v392 = vsel %vm336, %v390, %v391
    %v401 = vunpack.c.l.b16 %v83
    %v402 = vunpack.c.l.b16 %v84
    %v403 = vunpack.c.l.b16 %v85
    %v404 = vunpack.c.l.b16 %v86
    %v405 = vunpack.c.l.b16 %v87
    %v406 = vunpack.c.l.b16 %v88
    %v407 = vunpack.c.l.b16 %v89
    %v408 = vunpack.c.l.b16 %v90
    %v409 = vunpack.c.l.b16 %v91
    %v410 = vunpack.c.l.b16 %v92
    %v411 = vunpack.c.l.b16 %v93
    %v412 = vunpack.c.l.b16 %v94
    %v413 = vunpack.c.l.b16 %v95
    %v414 = vunpack.c.l.b16 %v96
    %v415 = vunpack.c.l.b16 %v97
    %v416 = vunpack.c.l.b16 %v98
    %v417 = vpack.c.b16 %v402, %v401
    %v418 = vpack.c.b16 %v404, %v403
    %v419 = vpack.c.b16 %v406, %v405
    %v420 = vpack.c.b16 %v408, %v407
    %v421 = vpack.c.b16 %v410, %v409
    %v422 = vpack.c.b16 %v412, %v411
    %v423 = vpack.c.b16 %v414, %v413
    %v424 = vpack.c.b16 %v416, %v415
    %v433 = vunpack.c.l.b16 %v123
    %v434 = vunpack.c.l.b16 %v133
    %v435 = vunpack.c.l.b16 %v147
    %v436 = vunpack.c.l.b16 %v157
    %v437 = vunpack.c.l.b16 %v171
    %v438 = vunpack.c.l.b16 %v181
    %v439 = vunpack.c.l.b16 %v195
    %v440 = vunpack.c.l.b16 %v205
    %v441 = vunpack.c.l.b16 %v219
    %v442 = vunpack.c.l.b16 %v229
    %v443 = vunpack.c.l.b16 %v243
    %v444 = vunpack.c.l.b16 %v253
    %v445 = vunpack.c.l.b16 %v267
    %v446 = vunpack.c.l.b16 %v277
    %v447 = vunpack.c.l.b16 %v291
    %v448 = vunpack.c.l.b16 %v301
    %v449 = vpack.c.b16 %v434, %v433
    %v450 = vpack.c.b16 %v436, %v435
    %v451 = vpack.c.b16 %v438, %v437
    %v452 = vpack.c.b16 %v440, %v439
    %v453 = vpack.c.b16 %v442, %v441
    %v454 = vpack.c.b16 %v444, %v443
    %v455 = vpack.c.b16 %v446, %v445
    %v456 = vpack.c.b16 %v448, %v447
    %v465 = vunpack.c.l.b16 %v340
    %v466 = vunpack.c.l.b16 %v343
    %v467 = vunpack.c.l.b16 %v347
    %v468 = vunpack.c.l.b16 %v350
    %v469 = vunpack.c.l.b16 %v354
    %v470 = vunpack.c.l.b16 %v357
    %v471 = vunpack.c.l.b16 %v361
    %v472 = vunpack.c.l.b16 %v364
    %v473 = vunpack.c.l.b16 %v368
    %v474 = vunpack.c.l.b16 %v371
    %v475 = vunpack.c.l.b16 %v375
    %v476 = vunpack.c.l.b16 %v378
    %v477 = vunpack.c.l.b16 %v382
    %v478 = vunpack.c.l.b16 %v385
    %v479 = vunpack.c.l.b16 %v389
    %v480 = vunpack.c.l.b16 %v392
    %v481 = vpack.c.b16 %v466, %v465
    %v482 = vpack.c.b16 %v468, %v467
    %v483 = vpack.c.b16 %v470, %v469
    %v484 = vpack.c.b16 %v472, %v471
    %v485 = vpack.c.b16 %v474, %v473
    %v486 = vpack.c.b16 %v476, %v475
    %v487 = vpack.c.b16 %v478, %v477
    %v488 = vpack.c.b16 %v480, %v479
    %v497 = vld [vmem:[%s3] sm:$0xf]
    %v498 = vld [vmem:[%s3 + $0x4] sm:$0xf]
    %v499 = vld [vmem:[%s3 + $0x8] sm:$0xf]
    %v500 = vld [vmem:[%s3 + $0xc] sm:$0xf]
    %v501 = vld [vmem:[%s3 + $0x10] sm:$0xf]
    %v502 = vld [vmem:[%s3 + $0x14] sm:$0xf]
    %v503 = vld [vmem:[%s3 + $0x18] sm:$0xf]
    %v504 = vld [vmem:[%s3 + $0x1c] sm:$0xf]
    %v505 = vld [vmem:[%s3 + $0x20] sm:$0xf]
    %v506 = vld [vmem:[%s3 + $0x24] sm:$0xf]
    %v507 = vld [vmem:[%s3 + $0x28] sm:$0xf]
    %v508 = vld [vmem:[%s3 + $0x2c] sm:$0xf]
    %v509 = vld [vmem:[%s3 + $0x30] sm:$0xf]
    %v510 = vld [vmem:[%s3 + $0x34] sm:$0xf]
    %v511 = vld [vmem:[%s3 + $0x38] sm:$0xf]
    %v512 = vld [vmem:[%s3 + $0x3c] sm:$0xf]
    %v513 = vld [vmem:[%s3 + $0x40] sm:$0xf]
    %v514 = vld [vmem:[%s3 + $0x44] sm:$0xf]
    %v515 = vld [vmem:[%s3 + $0x48] sm:$0xf]
    %v516 = vld [vmem:[%s3 + $0x4c] sm:$0xf]
    %v517 = vld [vmem:[%s3 + $0x50] sm:$0xf]
    %v518 = vld [vmem:[%s3 + $0x54] sm:$0xf]
    %v519 = vld [vmem:[%s3 + $0x58] sm:$0xf]
    %v520 = vld [vmem:[%s3 + $0x5c] sm:$0xf]
    %v521 = vld [vmem:[%s3 + $0x60] sm:$0xf]
    %v522 = vld [vmem:[%s3 + $0x64] sm:$0xf]
    %v523 = vld [vmem:[%s3 + $0x68] sm:$0xf]
    %v524 = vld [vmem:[%s3 + $0x6c] sm:$0xf]
    %v525 = vld [vmem:[%s3 + $0x70] sm:$0xf]
    %v526 = vld [vmem:[%s3 + $0x74] sm:$0xf]
    %v527 = vld [vmem:[%s3 + $0x78] sm:$0xf]
    %v528 = vld [vmem:[%s3 + $0x7c] sm:$0xf]
    %v529 = vld [vmem:[%s3 + $0x80] sm:$0xf]
    %v530 = vld [vmem:[%s3 + $0x84] sm:$0xf]
    %v531 = vld [vmem:[%s3 + $0x88] sm:$0xf]
    %v532 = vld [vmem:[%s3 + $0x8c] sm:$0xf]
    %v533 = vld [vmem:[%s3 + $0x90] sm:$0xf]
    %v534 = vld [vmem:[%s3 + $0x94] sm:$0xf]
    %v535 = vld [vmem:[%s3 + $0x98] sm:$0xf]
    %v536 = vld [vmem:[%s3 + $0x9c] sm:$0xf]
    %v537 = vld [vmem:[%s3 + $0xa0] sm:$0xf]
    %v538 = vld [vmem:[%s3 + $0xa4] sm:$0xf]
    %v539 = vld [vmem:[%s3 + $0xa8] sm:$0xf]
    %v540 = vld [vmem:[%s3 + $0xac] sm:$0xf]
    %v541 = vld [vmem:[%s3 + $0xb0] sm:$0xf]
    %v542 = vld [vmem:[%s3 + $0xb4] sm:$0xf]
    %v543 = vld [vmem:[%s3 + $0xb8] sm:$0xf]
    %v544 = vld [vmem:[%s3 + $0xbc] sm:$0xf]
    %v545 = vld [vmem:[%s4] sm:$0x1]
    %v547 = vlaneseq
    %v548 = vshrl.u32 %v547, 7
    %v549 = vsub.s32 0, %v548
    %v550 = vrot.slane %v545, %v549
    %v600 = vunpack.c.l.b16 %v497
    %v601 = vunpack.c.l.b16 %v498
    %v602 = vunpack.c.l.b16 %v499
    %v603 = vunpack.c.l.b16 %v500
    %v604 = vunpack.c.l.b16 %v501
    %v605 = vunpack.c.l.b16 %v502
    %v606 = vunpack.c.l.b16 %v503
    %v607 = vunpack.c.l.b16 %v504
    %v608 = vunpack.c.l.b16 %v505
    %v609 = vunpack.c.l.b16 %v506
    %v610 = vunpack.c.l.b16 %v507
    %v611 = vunpack.c.l.b16 %v508
    %v612 = vunpack.c.l.b16 %v509
    %v613 = vunpack.c.l.b16 %v510
    %v614 = vunpack.c.l.b16 %v511
    %v615 = vunpack.c.l.b16 %v512
    %v616 = vunpack.c.l.b16 %v513
    %v617 = vunpack.c.l.b16 %v514
    %v618 = vunpack.c.l.b16 %v515
    %v619 = vunpack.c.l.b16 %v516
    %v620 = vunpack.c.l.b16 %v517
    %v621 = vunpack.c.l.b16 %v518
    %v622 = vunpack.c.l.b16 %v519
    %v623 = vunpack.c.l.b16 %v520
    %v624 = vunpack.c.l.b16 %v521
    %v625 = vunpack.c.l.b16 %v522
    %v626 = vunpack.c.l.b16 %v523
    %v627 = vunpack.c.l.b16 %v524
    %v628 = vunpack.c.l.b16 %v525
    %v629 = vunpack.c.l.b16 %v526
    %v630 = vunpack.c.l.b16 %v527
    %v631 = vunpack.c.l.b16 %v528
    %v632 = vunpack.c.l.b16 %v529
    %v633 = vunpack.c.l.b16 %v530
    %v634 = vunpack.c.l.b16 %v531
    %v635 = vunpack.c.l.b16 %v532
    %v636 = vunpack.c.l.b16 %v533
    %v637 = vunpack.c.l.b16 %v534
    %v638 = vunpack.c.l.b16 %v535
    %v639 = vunpack.c.l.b16 %v536
    %v640 = vunpack.c.l.b16 %v537
    %v641 = vunpack.c.l.b16 %v538
    %v642 = vunpack.c.l.b16 %v539
    %v643 = vunpack.c.l.b16 %v540
    %v644 = vunpack.c.l.b16 %v541
    %v645 = vunpack.c.l.b16 %v542
    %v646 = vunpack.c.l.b16 %v543
    %v647 = vunpack.c.l.b16 %v544
    %v648 = vpack.c.b16 %v601, %v600
    %v649 = vpack.c.b16 %v603, %v602
    %v650 = vpack.c.b16 %v605, %v604
    %v651 = vpack.c.b16 %v607, %v606
    %v652 = vpack.c.b16 %v609, %v608
    %v653 = vpack.c.b16 %v611, %v610
    %v654 = vpack.c.b16 %v613, %v612
    %v655 = vpack.c.b16 %v615, %v614
    %v656 = vpack.c.b16 %v617, %v616
    %v657 = vpack.c.b16 %v619, %v618
    %v658 = vpack.c.b16 %v621, %v620
    %v659 = vpack.c.b16 %v623, %v622
    %v660 = vpack.c.b16 %v625, %v624
    %v661 = vpack.c.b16 %v627, %v626
    %v662 = vpack.c.b16 %v629, %v628
    %v663 = vpack.c.b16 %v631, %v630
    %v664 = vpack.c.b16 %v633, %v632
    %v665 = vpack.c.b16 %v635, %v634
    %v666 = vpack.c.b16 %v637, %v636
    %v667 = vpack.c.b16 %v639, %v638
    %v668 = vpack.c.b16 %v641, %v640
    %v669 = vpack.c.b16 %v643, %v642
    %v670 = vpack.c.b16 %v645, %v644
    %v671 = vpack.c.b16 %v647, %v646
    %696 = vmatprep.subr.bf16.mxu0 0
    %697 = vmatpush1.bf16.msra.mxu0 %v655
    %698 = vmatprep.subr.bf16.mxu0 0
    %699 = vmatpush1.bf16.msra.mxu0 %v654
    %700 = vmatprep.subr.bf16.mxu0 0
    %701 = vmatpush1.bf16.msra.mxu0 %v653
    %702 = vmatprep.subr.bf16.mxu0 0
    %703 = vmatpush1.bf16.msra.mxu0 %v652
    %704 = vmatprep.subr.bf16.mxu0 0
    %705 = vmatpush1.bf16.msra.mxu0 %v651
    %706 = vmatprep.subr.bf16.mxu0 0
    %707 = vmatpush1.bf16.msra.mxu0 %v650
    %708 = vmatprep.subr.bf16.mxu0 0
    %709 = vmatpush1.bf16.msra.mxu0 %v649
    %710 = vmatprep.subr.bf16.mxu0 0
    %711 = vmatpush1.bf16.msra.mxu0 %v648
    %712 = vmatprep.subr.bf16.mxu0 0
    %713 = vmatpush2.bf16.msra.mxu0 %v663
    %714 = vmatprep.subr.bf16.mxu0 0
    %715 = vmatpush2.bf16.msra.mxu0 %v662
    %716 = vmatprep.subr.bf16.mxu0 0
    %717 = vmatpush2.bf16.msra.mxu0 %v661
    %718 = vmatprep.subr.bf16.mxu0 0
    %719 = vmatpush2.bf16.msra.mxu0 %v660
    %720 = vmatprep.subr.bf16.mxu0 0
    %721 = vmatpush2.bf16.msra.mxu0 %v659
    %722 = vmatprep.subr.bf16.mxu0 0
    %723 = vmatpush2.bf16.msra.mxu0 %v658
    %724 = vmatprep.subr.bf16.mxu0 0
    %725 = vmatpush2.bf16.msra.mxu0 %v657
    %726 = vmatprep.subr.bf16.mxu0 0
    %727 = vmatpush2.bf16.msra.mxu0 %v656
    %728 = vmatprep.mubr.bf16.mxu0 %v449
    %729 = vmatmul.mubr.bf16.gmra.mxu0 %v417
    %v730 = vpop.f32.mrf.mxu0
    %v731 = vadd.f32 %v550, %v730
    %v732 = vpop.f32.mrf.mxu0
    %v733 = vpop.f32.mrf.mxu0
    %v734 = vadd.f32 %v550, %v733
    %v735 = vpop.f32.mrf.mxu0
    %736 = vmatprep.mubr.bf16.mxu0 %v450
    %737 = vmatmul.mubr.bf16.gmra.mxu0 %v418
    %v738 = vpop.f32.mrf.mxu0
    %v739 = vadd.f32 %v550, %v738
    %v740 = vpop.f32.mrf.mxu0
    %v741 = vpop.f32.mrf.mxu0
    %v742 = vadd.f32 %v550, %v741
    %v743 = vpop.f32.mrf.mxu0
    %744 = vmatprep.mubr.bf16.mxu0 %v451
    %745 = vmatmul.mubr.bf16.gmra.mxu0 %v419
    %v746 = vpop.f32.mrf.mxu0
    %v747 = vadd.f32 %v550, %v746
    %v748 = vpop.f32.mrf.mxu0
    %v749 = vpop.f32.mrf.mxu0
    %v750 = vadd.f32 %v550, %v749
    %v751 = vpop.f32.mrf.mxu0
    %752 = vmatprep.mubr.bf16.mxu0 %v452
    %753 = vmatmul.mubr.bf16.gmra.mxu0 %v420
    %v754 = vpop.f32.mrf.mxu0
    %v755 = vadd.f32 %v550, %v754
    %v756 = vpop.f32.mrf.mxu0
    %v757 = vpop.f32.mrf.mxu0
    %v758 = vadd.f32 %v550, %v757
    %v759 = vpop.f32.mrf.mxu0
    %760 = vmatprep.mubr.bf16.mxu0 %v453
    %761 = vmatmul.mubr.bf16.gmra.mxu0 %v421
    %v762 = vpop.f32.mrf.mxu0
    %v763 = vadd.f32 %v550, %v762
    %v764 = vpop.f32.mrf.mxu0
    %v765 = vpop.f32.mrf.mxu0
    %v766 = vadd.f32 %v550, %v765
    %v767 = vpop.f32.mrf.mxu0
    %768 = vmatprep.mubr.bf16.mxu0 %v454
    %769 = vmatmul.mubr.bf16.gmra.mxu0 %v422
    %v770 = vpop.f32.mrf.mxu0
    %v771 = vadd.f32 %v550, %v770
    %v772 = vpop.f32.mrf.mxu0
    %v773 = vpop.f32.mrf.mxu0
    %v774 = vadd.f32 %v550, %v773
    %v775 = vpop.f32.mrf.mxu0
    %776 = vmatprep.mubr.bf16.mxu0 %v455
    %777 = vmatmul.mubr.bf16.gmra.mxu0 %v423
    %v778 = vpop.f32.mrf.mxu0
    %v779 = vadd.f32 %v550, %v778
    %v780 = vpop.f32.mrf.mxu0
    %v781 = vpop.f32.mrf.mxu0
    %v782 = vadd.f32 %v550, %v781
    %v783 = vpop.f32.mrf.mxu0
    %784 = vmatprep.mubr.bf16.mxu0 %v456
    %785 = vmatmul.mubr.bf16.gmra.mxu0 %v424
    %v786 = vpop.f32.mrf.mxu0
    %v787 = vadd.f32 %v550, %v786
    %v788 = vpop.f32.mrf.mxu0
    %v789 = vpop.f32.mrf.mxu0
    %v790 = vadd.f32 %v550, %v789
    %v791 = vpop.f32.mrf.mxu0
    %792 = vdwg.mxu0
    %793 = vmatprep.subr.bf16.mxu0 0
    %794 = vmatpush1.bf16.msra.mxu0 %v671
    %795 = vmatprep.subr.bf16.mxu0 0
    %796 = vmatpush1.bf16.msra.mxu0 %v670
    %797 = vmatprep.subr.bf16.mxu0 0
    %798 = vmatpush1.bf16.msra.mxu0 %v669
    %799 = vmatprep.subr.bf16.mxu0 0
    %800 = vmatpush1.bf16.msra.mxu0 %v668
    %801 = vmatprep.subr.bf16.mxu0 0
    %802 = vmatpush1.bf16.msra.mxu0 %v667
    %803 = vmatprep.subr.bf16.mxu0 0
    %804 = vmatpush1.bf16.msra.mxu0 %v666
    %805 = vmatprep.subr.bf16.mxu0 0
    %806 = vmatpush1.bf16.msra.mxu0 %v665
    %807 = vmatprep.subr.bf16.mxu0 0
    %808 = vmatpush1.bf16.msra.mxu0 %v664
    %809 = vmatprep.subr.bf16.mxu0 0
    %810 = vmatpush2.bf16.msra.mxu0 0
    %811 = vmatprep.subr.bf16.mxu0 0
    %812 = vmatpush2.bf16.msra.mxu0 0
    %813 = vmatprep.subr.bf16.mxu0 0
    %814 = vmatpush2.bf16.msra.mxu0 0
    %815 = vmatprep.subr.bf16.mxu0 0
    %816 = vmatpush2.bf16.msra.mxu0 0
    %817 = vmatprep.subr.bf16.mxu0 0
    %818 = vmatpush2.bf16.msra.mxu0 0
    %819 = vmatprep.subr.bf16.mxu0 0
    %820 = vmatpush2.bf16.msra.mxu0 0
    %821 = vmatprep.subr.bf16.mxu0 0
    %822 = vmatpush2.bf16.msra.mxu0 0
    %823 = vmatprep.subr.bf16.mxu0 0
    %824 = vmatpush2.bf16.msra.mxu0 0
    %825 = vmatprep.mubr.bf16.mxu0 0
    %826 = vmatmul.mubr.bf16.gmra.mxu0 %v481
    %v827 = vpop.f32.mrf.mxu0
    %v828 = vadd.f32 %v731, %v827
    %v829 = vpop.f32.mrf.mxu0
    %v830 = vpop.f32.mrf.mxu0
    %v831 = vadd.f32 %v734, %v830
    %v832 = vpop.f32.mrf.mxu0
    %833 = vmatprep.mubr.bf16.mxu0 0
    %834 = vmatmul.mubr.bf16.gmra.mxu0 %v482
    %v835 = vpop.f32.mrf.mxu0
    %v836 = vadd.f32 %v739, %v835
    %v837 = vpop.f32.mrf.mxu0
    %v838 = vpop.f32.mrf.mxu0
    %v839 = vadd.f32 %v742, %v838
    %v840 = vpop.f32.mrf.mxu0
    %841 = vmatprep.mubr.bf16.mxu0 0
    %842 = vmatmul.mubr.bf16.gmra.mxu0 %v483
    %v843 = vpop.f32.mrf.mxu0
    %v844 = vadd.f32 %v747, %v843
    %v845 = vpop.f32.mrf.mxu0
    %v846 = vpop.f32.mrf.mxu0
    %v847 = vadd.f32 %v750, %v846
    %v848 = vpop.f32.mrf.mxu0
    %849 = vmatprep.mubr.bf16.mxu0 0
    %850 = vmatmul.mubr.bf16.gmra.mxu0 %v484
    %v851 = vpop.f32.mrf.mxu0
    %v852 = vadd.f32 %v755, %v851
    %v853 = vpop.f32.mrf.mxu0
    %v854 = vpop.f32.mrf.mxu0
    %v855 = vadd.f32 %v758, %v854
    %v856 = vpop.f32.mrf.mxu0
    %857 = vmatprep.mubr.bf16.mxu0 0
    %858 = vmatmul.mubr.bf16.gmra.mxu0 %v485
    %v859 = vpop.f32.mrf.mxu0
    %v860 = vadd.f32 %v763, %v859
    %v861 = vpop.f32.mrf.mxu0
    %v862 = vpop.f32.mrf.mxu0
    %v863 = vadd.f32 %v766, %v862
    %v864 = vpop.f32.mrf.mxu0
    %865 = vmatprep.mubr.bf16.mxu0 0
    %866 = vmatmul.mubr.bf16.gmra.mxu0 %v486
    %v867 = vpop.f32.mrf.mxu0
    %v868 = vadd.f32 %v771, %v867
    %v869 = vpop.f32.mrf.mxu0
    %v870 = vpop.f32.mrf.mxu0
    %v871 = vadd.f32 %v774, %v870
    %v872 = vpop.f32.mrf.mxu0
    %873 = vmatprep.mubr.bf16.mxu0 0
    %874 = vmatmul.mubr.bf16.gmra.mxu0 %v487
    %v875 = vpop.f32.mrf.mxu0
    %v876 = vadd.f32 %v779, %v875
    %v877 = vpop.f32.mrf.mxu0
    %v878 = vpop.f32.mrf.mxu0
    %v879 = vadd.f32 %v782, %v878
    %v880 = vpop.f32.mrf.mxu0
    %881 = vmatprep.mubr.bf16.mxu0 0
    %882 = vmatmul.mubr.bf16.gmra.mxu0 %v488
    %v883 = vpop.f32.mrf.mxu0
    %v884 = vadd.f32 %v787, %v883
    %v885 = vpop.f32.mrf.mxu0
    %v886 = vpop.f32.mrf.mxu0
    %v887 = vadd.f32 %v790, %v886
    %v888 = vpop.f32.mrf.mxu0
    %889 = vdwg.mxu0
    %v890 = vld [vmem:[%s5] sm:$0x1]
    %v891 = vld [vmem:[%s6] sm:$0x1]
    %v892 = vadd.f32 %v828, %v831
    %v893 = vrot.slane %v892, 4
    %v894 = vadd.f32 %v892, %v893
    %v895 = vrot.slane %v894, 2
    %v896 = vadd.f32 %v894, %v895
    %v897 = vrot.slane %v896, 1
    %v898 = vadd.f32 %v896, %v897
    %v899 = vadd.f32 %v836, %v839
    %v900 = vrot.slane %v899, 4
    %v901 = vadd.f32 %v899, %v900
    %v902 = vrot.slane %v901, 2
    %v903 = vadd.f32 %v901, %v902
    %v904 = vrot.slane %v903, 1
    %v905 = vadd.f32 %v903, %v904
    %v906 = vadd.f32 %v844, %v847
    %v907 = vrot.slane %v906, 4
    %v908 = vadd.f32 %v906, %v907
    %v909 = vrot.slane %v908, 2
    %v910 = vadd.f32 %v908, %v909
    %v911 = vrot.slane %v910, 1
    %v912 = vadd.f32 %v910, %v911
    %v913 = vadd.f32 %v852, %v855
    %v914 = vrot.slane %v913, 4
    %v915 = vadd.f32 %v913, %v914
    %v916 = vrot.slane %v915, 2
    %v917 = vadd.f32 %v915, %v916
    %v918 = vrot.slane %v917, 1
    %v919 = vadd.f32 %v917, %v918
    %v920 = vadd.f32 %v860, %v863
    %v921 = vrot.slane %v920, 4
    %v922 = vadd.f32 %v920, %v921
    %v923 = vrot.slane %v922, 2
    %v924 = vadd.f32 %v922, %v923
    %v925 = vrot.slane %v924, 1
    %v926 = vadd.f32 %v924, %v925
    %v927 = vadd.f32 %v868, %v871
    %v928 = vrot.slane %v927, 4
    %v929 = vadd.f32 %v927, %v928
    %v930 = vrot.slane %v929, 2
    %v931 = vadd.f32 %v929, %v930
    %v932 = vrot.slane %v931, 1
    %v933 = vadd.f32 %v931, %v932
    %v934 = vadd.f32 %v876, %v879
    %v935 = vrot.slane %v934, 4
    %v936 = vadd.f32 %v934, %v935
    %v937 = vrot.slane %v936, 2
    %v938 = vadd.f32 %v936, %v937
    %v939 = vrot.slane %v938, 1
    %v940 = vadd.f32 %v938, %v939
    %v941 = vadd.f32 %v884, %v887
    %v942 = vrot.slane %v941, 4
    %v943 = vadd.f32 %v941, %v942
    %v944 = vrot.slane %v943, 2
    %v945 = vadd.f32 %v943, %v944
    %v946 = vrot.slane %v945, 1
    %v947 = vadd.f32 %v945, %v946
    %v948 = vmul.f32 %v828, %v828
    %v949 = vmul.f32 %v831, %v831
    %v950 = vmul.f32 %v836, %v836
    %v951 = vmul.f32 %v839, %v839
    %v952 = vmul.f32 %v844, %v844
    %v953 = vmul.f32 %v847, %v847
    %v954 = vmul.f32 %v852, %v852
    %v955 = vmul.f32 %v855, %v855
    %v956 = vmul.f32 %v860, %v860
    %v957 = vmul.f32 %v863, %v863
    %v958 = vmul.f32 %v868, %v868
    %v959 = vmul.f32 %v871, %v871
    %v960 = vmul.f32 %v876, %v876
    %v961 = vmul.f32 %v879, %v879
    %v962 = vmul.f32 %v884, %v884
    %v963 = vmul.f32 %v887, %v887
    %v964 = vadd.f32 %v948, %v949
    %v965 = vrot.slane %v964, 4
    %v966 = vadd.f32 %v964, %v965
    %v967 = vrot.slane %v966, 2
    %v968 = vadd.f32 %v966, %v967
    %v969 = vrot.slane %v968, 1
    %v970 = vadd.f32 %v968, %v969
    %v971 = vadd.f32 %v950, %v951
    %v972 = vrot.slane %v971, 4
    %v973 = vadd.f32 %v971, %v972
    %v974 = vrot.slane %v973, 2
    %v975 = vadd.f32 %v973, %v974
    %v976 = vrot.slane %v975, 1
    %v977 = vadd.f32 %v975, %v976
    %v978 = vadd.f32 %v952, %v953
    %v979 = vrot.slane %v978, 4
    %v980 = vadd.f32 %v978, %v979
    %v981 = vrot.slane %v980, 2
    %v982 = vadd.f32 %v980, %v981
    %v983 = vrot.slane %v982, 1
    %v984 = vadd.f32 %v982, %v983
    %v985 = vadd.f32 %v954, %v955
    %v986 = vrot.slane %v985, 4
    %v987 = vadd.f32 %v985, %v986
    %v988 = vrot.slane %v987, 2
    %v989 = vadd.f32 %v987, %v988
    %v990 = vrot.slane %v989, 1
    %v991 = vadd.f32 %v989, %v990
    %v992 = vadd.f32 %v956, %v957
    %v993 = vrot.slane %v992, 4
    %v994 = vadd.f32 %v992, %v993
    %v995 = vrot.slane %v994, 2
    %v996 = vadd.f32 %v994, %v995
    %v997 = vrot.slane %v996, 1
    %v998 = vadd.f32 %v996, %v997
    %v999 = vadd.f32 %v958, %v959
    %v1000 = vrot.slane %v999, 4
    %v1001 = vadd.f32 %v999, %v1000
    %v1002 = vrot.slane %v1001, 2
    %v1003 = vadd.f32 %v1001, %v1002
    %v1004 = vrot.slane %v1003, 1
    %v1005 = vadd.f32 %v1003, %v1004
    %v1006 = vadd.f32 %v960, %v961
    %v1007 = vrot.slane %v1006, 4
    %v1008 = vadd.f32 %v1006, %v1007
    %v1009 = vrot.slane %v1008, 2
    %v1010 = vadd.f32 %v1008, %v1009
    %v1011 = vrot.slane %v1010, 1
    %v1012 = vadd.f32 %v1010, %v1011
    %v1013 = vadd.f32 %v962, %v963
    %v1014 = vrot.slane %v1013, 4
    %v1015 = vadd.f32 %v1013, %v1014
    %v1016 = vrot.slane %v1015, 2
    %v1017 = vadd.f32 %v1015, %v1016
    %v1018 = vrot.slane %v1017, 1
    %v1019 = vadd.f32 %v1017, %v1018
    %vm1028 = vcmask 1041409
    %v1029 = vsel %vm1028, %v905, %v898
    %vm1030 = vcmask 1042434
    %v1031 = vsel %vm1030, %v912, %v1029
    %vm1032 = vcmask 1043459
    %v1033 = vsel %vm1032, %v919, %v1031
    %vm1034 = vcmask 1044484
    %v1035 = vsel %vm1034, %v926, %v1033
    %vm1036 = vcmask 1045509
    %v1037 = vsel %vm1036, %v933, %v1035
    %vm1038 = vcmask 1046534
    %v1039 = vsel %vm1038, %v940, %v1037
    %vm1040 = vcmask 1047559
    %v1041 = vsel %vm1040, %v947, %v1039
    %v1051 = vsel %vm1028, %v977, %v970
    %v1052 = vsel %vm1030, %v984, %v1051
    %v1053 = vsel %vm1032, %v991, %v1052
    %v1054 = vsel %vm1034, %v998, %v1053
    %v1055 = vsel %vm1036, %v1005, %v1054
    %v1056 = vsel %vm1038, %v1012, %v1055
    %v1057 = vsel %vm1040, %v1019, %v1056
    %1059 = vmatprep.subr.mxu0 0.0
    %1060 = vmatpush1.msra.mxu0 %v81
    %1061 = vmatprep.subr.mxu0 0.0
    %1062 = vmatpush1.msra.mxu0 %v80
    %1063 = vmatprep.subr.mxu0 0.0
    %1064 = vmatpush1.msra.mxu0 %v79
    %1065 = vmatprep.subr.mxu0 0.0
    %1066 = vmatpush1.msra.mxu0 %v78
    %1067 = vmatprep.subr.mxu0 0.0
    %1068 = vmatpush1.msra.mxu0 %v77
    %1069 = vmatprep.subr.mxu0 0.0
    %1070 = vmatpush1.msra.mxu0 %v76
    %1071 = vmatprep.subr.mxu0 0.0
    %1072 = vmatpush1.msra.mxu0 %v75
    %1073 = vmatprep.subr.mxu0 0.0
    %1074 = vmatpush1.msra.mxu0 %v74
    %1075 = vmatprep.subr.mxu0 0.0
    %1076 = vmatpush1.msra.mxu0 %v73
    %1077 = vmatprep.subr.mxu0 0.0
    %1078 = vmatpush1.msra.mxu0 %v72
    %1079 = vmatprep.subr.mxu0 0.0
    %1080 = vmatpush1.msra.mxu0 %v71
    %1081 = vmatprep.subr.mxu0 0.0
    %1082 = vmatpush1.msra.mxu0 %v70
    %1083 = vmatprep.subr.mxu0 0.0
    %1084 = vmatpush1.msra.mxu0 %v69
    %1085 = vmatprep.subr.mxu0 0.0
    %1086 = vmatpush1.msra.mxu0 %v68
    %1087 = vmatprep.subr.mxu0 0.0
    %1088 = vmatpush1.msra.mxu0 %v67
    %1089 = vmatprep.subr.mxu0 0.0
    %1090 = vmatpush1.msra.mxu0 %v66
    %1091 = vmatprep.subr.mxu0 0.0
    %1092 = vmatpush2.msra.mxu0 0.0
    %1093 = vmatprep.subr.mxu0 0.0
    %1094 = vmatpush2.msra.mxu0 0.0
    %1095 = vmatprep.subr.mxu0 0.0
    %1096 = vmatpush2.msra.mxu0 0.0
    %1097 = vmatprep.subr.mxu0 0.0
    %1098 = vmatpush2.msra.mxu0 0.0
    %1099 = vmatprep.subr.mxu0 0.0
    %1100 = vmatpush2.msra.mxu0 0.0
    %1101 = vmatprep.subr.mxu0 0.0
    %1102 = vmatpush2.msra.mxu0 0.0
    %1103 = vmatprep.subr.mxu0 0.0
    %1104 = vmatpush2.msra.mxu0 0.0
    %1105 = vmatprep.subr.mxu0 0.0
    %1106 = vmatpush2.msra.mxu0 0.0
    %1107 = vmatprep.subr.mxu0 0.0
    %1108 = vmatpush2.msra.mxu0 0.0
    %1109 = vmatprep.subr.mxu0 0.0
    %1110 = vmatpush2.msra.mxu0 0.0
    %1111 = vmatprep.subr.mxu0 0.0
    %1112 = vmatpush2.msra.mxu0 0.0
    %1113 = vmatprep.subr.mxu0 0.0
    %1114 = vmatpush2.msra.mxu0 0.0
    %1115 = vmatprep.subr.mxu0 0.0
    %1116 = vmatpush2.msra.mxu0 0.0
    %1117 = vmatprep.subr.mxu0 0.0
    %1118 = vmatpush2.msra.mxu0 0.0
    %1119 = vmatprep.subr.mxu0 0.0
    %1120 = vmatpush2.msra.mxu0 0.0
    %1121 = vmatprep.subr.mxu0 0.0
    %1122 = vmatpush2.msra.mxu0 0.0
    %1123 = vmatprep.mubr.f32.mxu0 0.0
    %1124 = vmatmul.mubr.f32.gmra.mxu0 %v1041
    %v1125 = vpop.f32.mrf.mxu0
    %v1126 = vadd.f32 0.0, %v1125
    %v1127 = vpop.f32.mrf.mxu0
    %1128 = vmatprep.mubr.f32.mxu0 0.0
    %1129 = vmatmul.mubr.f32.gmra.mxu0 %v1057
    %v1130 = vpop.f32.mrf.mxu0
    %v1131 = vadd.f32 0.0, %v1130
    %v1132 = vpop.f32.mrf.mxu0
    %1133 = vdwg.mxu0
    %v1134 = vmul.f32 %v1126, 0.03125
    %v1135 = vmul.f32 %v1131, 0.03125
    %v1136 = vmul.f32 %v1134, %v1134
    %v1137 = vsub.f32 %v1135, %v1136
    %v1138 = vmax.f32 %v1137, 0.0
    %vm1139 = vcmask 64512
    %v1141 = vsel %vm1139, %v1134, 0
    %v1144 = vsel %vm1139, %v1138, 0
    %1146 = vmatprep.subr.mxu0 0.0
    %1147 = vmatpush1.msra.mxu0 0.0
    %1148 = vmatprep.subr.mxu0 0.0
    %1149 = vmatpush1.msra.mxu0 0.0
    %1150 = vmatprep.subr.mxu0 0.0
    %1151 = vmatpush1.msra.mxu0 0.0
    %1152 = vmatprep.subr.mxu0 0.0
    %1153 = vmatpush1.msra.mxu0 0.0
    %1154 = vmatprep.subr.mxu0 0.0
    %1155 = vmatpush1.msra.mxu0 0.0
    %1156 = vmatprep.subr.mxu0 0.0
    %1157 = vmatpush1.msra.mxu0 0.0
    %1158 = vmatprep.subr.mxu0 0.0
    %1159 = vmatpush1.msra.mxu0 0.0
    %1160 = vmatprep.subr.mxu0 0.0
    %1161 = vmatpush1.msra.mxu0 0.0
    %1162 = vmatprep.subr.mxu0 0.0
    %1163 = vmatpush1.msra.mxu0 0.0
    %1164 = vmatprep.subr.mxu0 0.0
    %1165 = vmatpush1.msra.mxu0 0.0
    %1166 = vmatprep.subr.mxu0 0.0
    %1167 = vmatpush1.msra.mxu0 0.0
    %1168 = vmatprep.subr.mxu0 0.0
    %1169 = vmatpush1.msra.mxu0 0.0
    %1170 = vmatprep.subr.mxu0 0.0
    %1171 = vmatpush1.msra.mxu0 0.0
    %1172 = vmatprep.subr.mxu0 0.0
    %1173 = vmatpush1.msra.mxu0 0.0
    %1174 = vmatprep.subr.mxu0 0.0
    %1175 = vmatpush1.msra.mxu0 0.0
    %1176 = vmatprep.subr.mxu0 0.0
    %1177 = vmatpush1.msra.mxu0 %v82
    %1178 = vmatprep.subr.mxu0 0.0
    %1179 = vmatpush2.msra.mxu0 0.0
    %1180 = vmatprep.subr.mxu0 0.0
    %1181 = vmatpush2.msra.mxu0 0.0
    %1182 = vmatprep.subr.mxu0 0.0
    %1183 = vmatpush2.msra.mxu0 0.0
    %1184 = vmatprep.subr.mxu0 0.0
    %1185 = vmatpush2.msra.mxu0 0.0
    %1186 = vmatprep.subr.mxu0 0.0
    %1187 = vmatpush2.msra.mxu0 0.0
    %1188 = vmatprep.subr.mxu0 0.0
    %1189 = vmatpush2.msra.mxu0 0.0
    %1190 = vmatprep.subr.mxu0 0.0
    %1191 = vmatpush2.msra.mxu0 0.0
    %1192 = vmatprep.subr.mxu0 0.0
    %1193 = vmatpush2.msra.mxu0 0.0
    %1194 = vmatprep.subr.mxu0 0.0
    %1195 = vmatpush2.msra.mxu0 0.0
    %1196 = vmatprep.subr.mxu0 0.0
    %1197 = vmatpush2.msra.mxu0 0.0
    %1198 = vmatprep.subr.mxu0 0.0
    %1199 = vmatpush2.msra.mxu0 0.0
    %1200 = vmatprep.subr.mxu0 0.0
    %1201 = vmatpush2.msra.mxu0 0.0
    %1202 = vmatprep.subr.mxu0 0.0
    %1203 = vmatpush2.msra.mxu0 0.0
    %1204 = vmatprep.subr.mxu0 0.0
    %1205 = vmatpush2.msra.mxu0 0.0
    %1206 = vmatprep.subr.mxu0 0.0
    %1207 = vmatpush2.msra.mxu0 0.0
    %1208 = vmatprep.subr.mxu0 0.0
    %1209 = vmatpush2.msra.mxu0 0.0
    %1210 = vmatprep.mubr.f32.mxu0 0.0
    %1211 = vmatmul.mubr.f32.gmra.mxu0 %v1141
    %v1212 = vpop.f32.mrf.mxu0
    %v1213 = vadd.f32 0.0, %v1212
    %v1214 = vpop.f32.mrf.mxu0
    %1215 = vmatprep.mubr.f32.mxu0 0.0
    %1216 = vmatmul.mubr.f32.gmra.mxu0 %v1144
    %v1217 = vpop.f32.mrf.mxu0
    %v1218 = vadd.f32 0.0, %v1217
    %v1219 = vpop.f32.mrf.mxu0
    %1220 = vdwg.mxu0
    %v1222 = vcombine.high %v1213, %v1213
    %v1224 = vunpack.c.l.s4 1966171168
    %v1225 = vunpack.c.0.s8 %v1224
    %v1226 = vlaneseq
    %v1227 = vshrl.u32 %v1226, 7
    %v1228 = vsub.s32 %v1225, %v1227
    %v1229 = vrot.slane %v1213, %v1228
    %v1231 = vunpack.c.l.s4 1966171168
    %v1232 = vunpack.c.0.s8 %v1231
    %v1233 = vlaneseq
    %v1234 = vshrl.u32 %v1233, 7
    %v1235 = vsub.s32 %v1232, %v1234
    %v1236 = vrot.slane %v1222, %v1235
    %v1237 = vcombine.high %v1229, %v1229
    %v1238 = vcombine.high %v1236, %v1236
    %v1240 = vunpack.c.l.s4 1966171168
    %v1241 = vunpack.c.0.s8 %v1240
    %v1242 = vlaneseq
    %v1243 = vshrl.u32 %v1242, 7
    %v1244 = vsub.s32 %v1241, %v1243
    %v1245 = vrot.slane %v1229, %v1244
    %v1247 = vunpack.c.l.s4 1966171168
    %v1248 = vunpack.c.0.s8 %v1247
    %v1249 = vlaneseq
    %v1250 = vshrl.u32 %v1249, 7
    %v1251 = vsub.s32 %v1248, %v1250
    %v1252 = vrot.slane %v1236, %v1251
    %v1254 = vunpack.c.l.s4 1966171168
    %v1255 = vunpack.c.0.s8 %v1254
    %v1256 = vlaneseq
    %v1257 = vshrl.u32 %v1256, 7
    %v1258 = vsub.s32 %v1255, %v1257
    %v1259 = vrot.slane %v1237, %v1258
    %v1261 = vunpack.c.l.s4 1966171168
    %v1262 = vunpack.c.0.s8 %v1261
    %v1263 = vlaneseq
    %v1264 = vshrl.u32 %v1263, 7
    %v1265 = vsub.s32 %v1262, %v1264
    %v1266 = vrot.slane %v1238, %v1265
    %v1267 = vcombine.high %v1245, %v1245
    %v1268 = vcombine.high %v1252, %v1252
    %v1269 = vcombine.high %v1259, %v1259
    %v1270 = vcombine.high %v1266, %v1266
    %v1272 = vcombine.high %v1218, %v1218
    %v1274 = vunpack.c.l.s4 1966171168
    %v1275 = vunpack.c.0.s8 %v1274
    %v1276 = vlaneseq
    %v1277 = vshrl.u32 %v1276, 7
    %v1278 = vsub.s32 %v1275, %v1277
    %v1279 = vrot.slane %v1218, %v1278
    %v1281 = vunpack.c.l.s4 1966171168
    %v1282 = vunpack.c.0.s8 %v1281
    %v1283 = vlaneseq
    %v1284 = vshrl.u32 %v1283, 7
    %v1285 = vsub.s32 %v1282, %v1284
    %v1286 = vrot.slane %v1272, %v1285
    %v1287 = vcombine.high %v1279, %v1279
    %v1288 = vcombine.high %v1286, %v1286
    %v1290 = vunpack.c.l.s4 1966171168
    %v1291 = vunpack.c.0.s8 %v1290
    %v1292 = vlaneseq
    %v1293 = vshrl.u32 %v1292, 7
    %v1294 = vsub.s32 %v1291, %v1293
    %v1295 = vrot.slane %v1279, %v1294
    %v1297 = vunpack.c.l.s4 1966171168
    %v1298 = vunpack.c.0.s8 %v1297
    %v1299 = vlaneseq
    %v1300 = vshrl.u32 %v1299, 7
    %v1301 = vsub.s32 %v1298, %v1300
    %v1302 = vrot.slane %v1286, %v1301
    %v1304 = vunpack.c.l.s4 1966171168
    %v1305 = vunpack.c.0.s8 %v1304
    %v1306 = vlaneseq
    %v1307 = vshrl.u32 %v1306, 7
    %v1308 = vsub.s32 %v1305, %v1307
    %v1309 = vrot.slane %v1287, %v1308
    %v1311 = vunpack.c.l.s4 1966171168
    %v1312 = vunpack.c.0.s8 %v1311
    %v1313 = vlaneseq
    %v1314 = vshrl.u32 %v1313, 7
    %v1315 = vsub.s32 %v1312, %v1314
    %v1316 = vrot.slane %v1288, %v1315
    %v1317 = vcombine.high %v1295, %v1295
    %v1318 = vcombine.high %v1302, %v1302
    %v1319 = vcombine.high %v1309, %v1309
    %v1320 = vcombine.high %v1316, %v1316
    %v1329 = vlaneseq
    %v1330 = vshrl.u32 %v1329, 7
    %v1331 = vsub.s32 0, %v1330
    %v1332 = vrot.slane %v1245, %v1331
    %v1333 = vlaneseq
    %v1334 = vshrl.u32 %v1333, 7
    %v1335 = vsub.s32 0, %v1334
    %v1336 = vrot.slane %v1259, %v1335
    %v1337 = vlaneseq
    %v1338 = vshrl.u32 %v1337, 7
    %v1339 = vsub.s32 0, %v1338
    %v1340 = vrot.slane %v1267, %v1339
    %v1341 = vlaneseq
    %v1342 = vshrl.u32 %v1341, 7
    %v1343 = vsub.s32 0, %v1342
    %v1344 = vrot.slane %v1269, %v1343
    %v1345 = vlaneseq
    %v1346 = vshrl.u32 %v1345, 7
    %v1347 = vsub.s32 0, %v1346
    %v1348 = vrot.slane %v1252, %v1347
    %v1349 = vlaneseq
    %v1350 = vshrl.u32 %v1349, 7
    %v1351 = vsub.s32 0, %v1350
    %v1352 = vrot.slane %v1266, %v1351
    %v1353 = vlaneseq
    %v1354 = vshrl.u32 %v1353, 7
    %v1355 = vsub.s32 0, %v1354
    %v1356 = vrot.slane %v1268, %v1355
    %v1357 = vlaneseq
    %v1358 = vshrl.u32 %v1357, 7
    %v1359 = vsub.s32 0, %v1358
    %v1360 = vrot.slane %v1270, %v1359
    %v1369 = vsub.f32 %v828, %v1332
    %v1370 = vsub.f32 %v831, %v1332
    %v1371 = vsub.f32 %v836, %v1336
    %v1372 = vsub.f32 %v839, %v1336
    %v1373 = vsub.f32 %v844, %v1340
    %v1374 = vsub.f32 %v847, %v1340
    %v1375 = vsub.f32 %v852, %v1344
    %v1376 = vsub.f32 %v855, %v1344
    %v1377 = vsub.f32 %v860, %v1348
    %v1378 = vsub.f32 %v863, %v1348
    %v1379 = vsub.f32 %v868, %v1352
    %v1380 = vsub.f32 %v871, %v1352
    %v1381 = vsub.f32 %v876, %v1356
    %v1382 = vsub.f32 %v879, %v1356
    %v1383 = vsub.f32 %v884, %v1360
    %v1384 = vsub.f32 %v887, %v1360
    %v1385 = vadd.f32 %v1295, 1e-05
    %v1386 = vadd.f32 %v1309, 1e-05
    %v1387 = vadd.f32 %v1317, 1e-05
    %v1388 = vadd.f32 %v1319, 1e-05
    %v1389 = vadd.f32 %v1302, 1e-05
    %v1390 = vadd.f32 %v1316, 1e-05
    %v1391 = vadd.f32 %v1318, 1e-05
    %v1392 = vadd.f32 %v1320, 1e-05
    %v1393 = vrsqrt.pop %v1385
    %v1394 = vrsqrt.pop %v1386
    %v1395 = vrsqrt.pop %v1387
    %v1396 = vrsqrt.pop %v1388
    %v1397 = vrsqrt.pop %v1389
    %v1398 = vrsqrt.pop %v1390
    %v1399 = vrsqrt.pop %v1391
    %v1400 = vrsqrt.pop %v1392
    %v1409 = vlaneseq
    %v1410 = vshrl.u32 %v1409, 7
    %v1411 = vsub.s32 0, %v1410
    %v1412 = vrot.slane %v1393, %v1411
    %v1413 = vlaneseq
    %v1414 = vshrl.u32 %v1413, 7
    %v1415 = vsub.s32 0, %v1414
    %v1416 = vrot.slane %v1394, %v1415
    %v1417 = vlaneseq
    %v1418 = vshrl.u32 %v1417, 7
    %v1419 = vsub.s32 0, %v1418
    %v1420 = vrot.slane %v1395, %v1419
    %v1421 = vlaneseq
    %v1422 = vshrl.u32 %v1421, 7
    %v1423 = vsub.s32 0, %v1422
    %v1424 = vrot.slane %v1396, %v1423
    %v1425 = vlaneseq
    %v1426 = vshrl.u32 %v1425, 7
    %v1427 = vsub.s32 0, %v1426
    %v1428 = vrot.slane %v1397, %v1427
    %v1429 = vlaneseq
    %v1430 = vshrl.u32 %v1429, 7
    %v1431 = vsub.s32 0, %v1430
    %v1432 = vrot.slane %v1398, %v1431
    %v1433 = vlaneseq
    %v1434 = vshrl.u32 %v1433, 7
    %v1435 = vsub.s32 0, %v1434
    %v1436 = vrot.slane %v1399, %v1435
    %v1437 = vlaneseq
    %v1438 = vshrl.u32 %v1437, 7
    %v1439 = vsub.s32 0, %v1438
    %v1440 = vrot.slane %v1400, %v1439
    %v1449 = vmul.f32 %v1369, %v1412
    %v1450 = vmul.f32 %v1370, %v1412
    %v1451 = vmul.f32 %v1371, %v1416
    %v1452 = vmul.f32 %v1372, %v1416
    %v1453 = vmul.f32 %v1373, %v1420
    %v1454 = vmul.f32 %v1374, %v1420
    %v1455 = vmul.f32 %v1375, %v1424
    %v1456 = vmul.f32 %v1376, %v1424
    %v1457 = vmul.f32 %v1377, %v1428
    %v1458 = vmul.f32 %v1378, %v1428
    %v1459 = vmul.f32 %v1379, %v1432
    %v1460 = vmul.f32 %v1380, %v1432
    %v1461 = vmul.f32 %v1381, %v1436
    %v1462 = vmul.f32 %v1382, %v1436
    %v1463 = vmul.f32 %v1383, %v1440
    %v1464 = vmul.f32 %v1384, %v1440
    %v1466 = vlaneseq
    %v1467 = vshrl.u32 %v1466, 7
    %v1468 = vsub.s32 0, %v1467
    %v1469 = vrot.slane %v890, %v1468
    %v1471 = vmul.f32 %v1449, %v1469
    %v1472 = vmul.f32 %v1450, %v1469
    %v1473 = vmul.f32 %v1451, %v1469
    %v1474 = vmul.f32 %v1452, %v1469
    %v1475 = vmul.f32 %v1453, %v1469
    %v1476 = vmul.f32 %v1454, %v1469
    %v1477 = vmul.f32 %v1455, %v1469
    %v1478 = vmul.f32 %v1456, %v1469
    %v1479 = vmul.f32 %v1457, %v1469
    %v1480 = vmul.f32 %v1458, %v1469
    %v1481 = vmul.f32 %v1459, %v1469
    %v1482 = vmul.f32 %v1460, %v1469
    %v1483 = vmul.f32 %v1461, %v1469
    %v1484 = vmul.f32 %v1462, %v1469
    %v1485 = vmul.f32 %v1463, %v1469
    %v1486 = vmul.f32 %v1464, %v1469
    %v1488 = vlaneseq
    %v1489 = vshrl.u32 %v1488, 7
    %v1490 = vsub.s32 0, %v1489
    %v1491 = vrot.slane %v891, %v1490
    %v1493 = vadd.f32 %v1471, %v1491
    %v1494 = vadd.f32 %v1472, %v1491
    %v1495 = vadd.f32 %v1473, %v1491
    %v1496 = vadd.f32 %v1474, %v1491
    %v1497 = vadd.f32 %v1475, %v1491
    %v1498 = vadd.f32 %v1476, %v1491
    %v1499 = vadd.f32 %v1477, %v1491
    %v1500 = vadd.f32 %v1478, %v1491
    %v1501 = vadd.f32 %v1479, %v1491
    %v1502 = vadd.f32 %v1480, %v1491
    %v1503 = vadd.f32 %v1481, %v1491
    %v1504 = vadd.f32 %v1482, %v1491
    %v1505 = vadd.f32 %v1483, %v1491
    %v1506 = vadd.f32 %v1484, %v1491
    %v1507 = vadd.f32 %v1485, %v1491
    %v1508 = vadd.f32 %v1486, %v1491
    %v1509 = vmin.f32 %v1493, 20.0
    %v1510 = vmin.f32 %v1494, 20.0
    %v1511 = vmin.f32 %v1495, 20.0
    %v1512 = vmin.f32 %v1496, 20.0
    %v1513 = vmin.f32 %v1497, 20.0
    %v1514 = vmin.f32 %v1498, 20.0
    %v1515 = vmin.f32 %v1499, 20.0
    %v1516 = vmin.f32 %v1500, 20.0
    %v1517 = vmin.f32 %v1501, 20.0
    %v1518 = vmin.f32 %v1502, 20.0
    %v1519 = vmin.f32 %v1503, 20.0
    %v1520 = vmin.f32 %v1504, 20.0
    %v1521 = vmin.f32 %v1505, 20.0
    %v1522 = vmin.f32 %v1506, 20.0
    %v1523 = vmin.f32 %v1507, 20.0
    %v1524 = vmin.f32 %v1508, 20.0
    %v1525 = vmul.f32 %v1509, 1.442695
    %v1526 = vpow.pop %v1525
    %v1527 = vmul.f32 %v1510, 1.442695
    %v1528 = vpow.pop %v1527
    %v1529 = vmul.f32 %v1511, 1.442695
    %v1530 = vpow.pop %v1529
    %v1531 = vmul.f32 %v1512, 1.442695
    %v1532 = vpow.pop %v1531
    %v1533 = vmul.f32 %v1513, 1.442695
    %v1534 = vpow.pop %v1533
    %v1535 = vmul.f32 %v1514, 1.442695
    %v1536 = vpow.pop %v1535
    %v1537 = vmul.f32 %v1515, 1.442695
    %v1538 = vpow.pop %v1537
    %v1539 = vmul.f32 %v1516, 1.442695
    %v1540 = vpow.pop %v1539
    %v1541 = vmul.f32 %v1517, 1.442695
    %v1542 = vpow.pop %v1541
    %v1543 = vmul.f32 %v1518, 1.442695
    %v1544 = vpow.pop %v1543
    %v1545 = vmul.f32 %v1519, 1.442695
    %v1546 = vpow.pop %v1545
    %v1547 = vmul.f32 %v1520, 1.442695
    %v1548 = vpow.pop %v1547
    %v1549 = vmul.f32 %v1521, 1.442695
    %v1550 = vpow.pop %v1549
    %v1551 = vmul.f32 %v1522, 1.442695
    %v1552 = vpow.pop %v1551
    %v1553 = vmul.f32 %v1523, 1.442695
    %v1554 = vpow.pop %v1553
    %v1555 = vmul.f32 %v1524, 1.442695
    %v1556 = vpow.pop %v1555
    %v1557 = vadd.f32 %v1526, 1.0
    %v1558 = vadd.f32 %v1528, 1.0
    %v1559 = vadd.f32 %v1530, 1.0
    %v1560 = vadd.f32 %v1532, 1.0
    %v1561 = vadd.f32 %v1534, 1.0
    %v1562 = vadd.f32 %v1536, 1.0
    %v1563 = vadd.f32 %v1538, 1.0
    %v1564 = vadd.f32 %v1540, 1.0
    %v1565 = vadd.f32 %v1542, 1.0
    %v1566 = vadd.f32 %v1544, 1.0
    %v1567 = vadd.f32 %v1546, 1.0
    %v1568 = vadd.f32 %v1548, 1.0
    %v1569 = vadd.f32 %v1550, 1.0
    %v1570 = vadd.f32 %v1552, 1.0
    %v1571 = vadd.f32 %v1554, 1.0
    %v1572 = vadd.f32 %v1556, 1.0
    %v1573 = vmul.f32 %v1557, %v1557
    %v1574 = vmul.f32 %v1558, %v1558
    %v1575 = vmul.f32 %v1559, %v1559
    %v1576 = vmul.f32 %v1560, %v1560
    %v1577 = vmul.f32 %v1561, %v1561
    %v1578 = vmul.f32 %v1562, %v1562
    %v1579 = vmul.f32 %v1563, %v1563
    %v1580 = vmul.f32 %v1564, %v1564
    %v1581 = vmul.f32 %v1565, %v1565
    %v1582 = vmul.f32 %v1566, %v1566
    %v1583 = vmul.f32 %v1567, %v1567
    %v1584 = vmul.f32 %v1568, %v1568
    %v1585 = vmul.f32 %v1569, %v1569
    %v1586 = vmul.f32 %v1570, %v1570
    %v1587 = vmul.f32 %v1571, %v1571
    %v1588 = vmul.f32 %v1572, %v1572
    %v1589 = vsub.f32 %v1573, 1.0
    %v1590 = vsub.f32 %v1574, 1.0
    %v1591 = vsub.f32 %v1575, 1.0
    %v1592 = vsub.f32 %v1576, 1.0
    %v1593 = vsub.f32 %v1577, 1.0
    %v1594 = vsub.f32 %v1578, 1.0
    %v1595 = vsub.f32 %v1579, 1.0
    %v1596 = vsub.f32 %v1580, 1.0
    %v1597 = vsub.f32 %v1581, 1.0
    %v1598 = vsub.f32 %v1582, 1.0
    %v1599 = vsub.f32 %v1583, 1.0
    %v1600 = vsub.f32 %v1584, 1.0
    %v1601 = vsub.f32 %v1585, 1.0
    %v1602 = vsub.f32 %v1586, 1.0
    %v1603 = vsub.f32 %v1587, 1.0
    %v1604 = vsub.f32 %v1588, 1.0
    %v1605 = vmul.f32 %v1493, %v1589
    %v1606 = vmul.f32 %v1494, %v1590
    %v1607 = vmul.f32 %v1495, %v1591
    %v1608 = vmul.f32 %v1496, %v1592
    %v1609 = vmul.f32 %v1497, %v1593
    %v1610 = vmul.f32 %v1498, %v1594
    %v1611 = vmul.f32 %v1499, %v1595
    %v1612 = vmul.f32 %v1500, %v1596
    %v1613 = vmul.f32 %v1501, %v1597
    %v1614 = vmul.f32 %v1502, %v1598
    %v1615 = vmul.f32 %v1503, %v1599
    %v1616 = vmul.f32 %v1504, %v1600
    %v1617 = vmul.f32 %v1505, %v1601
    %v1618 = vmul.f32 %v1506, %v1602
    %v1619 = vmul.f32 %v1507, %v1603
    %v1620 = vmul.f32 %v1508, %v1604
    %v1621 = vadd.f32 %v1573, 1.0
    %v1622 = vadd.f32 %v1574, 1.0
    %v1623 = vadd.f32 %v1575, 1.0
    %v1624 = vadd.f32 %v1576, 1.0
    %v1625 = vadd.f32 %v1577, 1.0
    %v1626 = vadd.f32 %v1578, 1.0
    %v1627 = vadd.f32 %v1579, 1.0
    %v1628 = vadd.f32 %v1580, 1.0
    %v1629 = vadd.f32 %v1581, 1.0
    %v1630 = vadd.f32 %v1582, 1.0
    %v1631 = vadd.f32 %v1583, 1.0
    %v1632 = vadd.f32 %v1584, 1.0
    %v1633 = vadd.f32 %v1585, 1.0
    %v1634 = vadd.f32 %v1586, 1.0
    %v1635 = vadd.f32 %v1587, 1.0
    %v1636 = vadd.f32 %v1588, 1.0
    %v1637 = vrcp.pop %v1621
    %v1638 = vrcp.pop %v1622
    %v1639 = vrcp.pop %v1623
    %v1640 = vrcp.pop %v1624
    %v1641 = vrcp.pop %v1625
    %v1642 = vrcp.pop %v1626
    %v1643 = vrcp.pop %v1627
    %v1644 = vrcp.pop %v1628
    %v1645 = vrcp.pop %v1629
    %v1646 = vrcp.pop %v1630
    %v1647 = vrcp.pop %v1631
    %v1648 = vrcp.pop %v1632
    %v1649 = vrcp.pop %v1633
    %v1650 = vrcp.pop %v1634
    %v1651 = vrcp.pop %v1635
    %v1652 = vrcp.pop %v1636
    %v1653 = vmul.f32 %v1605, %v1637
    %v1654 = vmul.f32 %v1606, %v1638
    %v1655 = vmul.f32 %v1607, %v1639
    %v1656 = vmul.f32 %v1608, %v1640
    %v1657 = vmul.f32 %v1609, %v1641
    %v1658 = vmul.f32 %v1610, %v1642
    %v1659 = vmul.f32 %v1611, %v1643
    %v1660 = vmul.f32 %v1612, %v1644
    %v1661 = vmul.f32 %v1613, %v1645
    %v1662 = vmul.f32 %v1614, %v1646
    %v1663 = vmul.f32 %v1615, %v1647
    %v1664 = vmul.f32 %v1616, %v1648
    %v1665 = vmul.f32 %v1617, %v1649
    %v1666 = vmul.f32 %v1618, %v1650
    %v1667 = vmul.f32 %v1619, %v1651
    %v1668 = vmul.f32 %v1620, %v1652
    %v1669 = vld [vmem:[%s1] sm:$0x1]
    %v1670 = vld [vmem:[%s1 + $0x1] sm:$0x1]
    %v1671 = vld [vmem:[%s1 + $0x2] sm:$0x1]
    %v1672 = vld [vmem:[%s1 + $0x3] sm:$0x1]
    %v1673 = vld [vmem:[%s1 + $0x4] sm:$0x1]
    %v1674 = vld [vmem:[%s1 + $0x5] sm:$0x1]
    %v1675 = vld [vmem:[%s1 + $0x6] sm:$0x1]
    %v1676 = vld [vmem:[%s1 + $0x7] sm:$0x1]
    %v1685 = vlaneseq
    %v1686 = vshrl.u32 %v1685, 7
    %v1687 = vsub.s32 0, %v1686
    %v1688 = vrot.slane %v1669, %v1687
    %v1689 = vlaneseq
    %v1690 = vshrl.u32 %v1689, 7
    %v1691 = vsub.s32 0, %v1690
    %v1692 = vrot.slane %v1670, %v1691
    %v1693 = vlaneseq
    %v1694 = vshrl.u32 %v1693, 7
    %v1695 = vsub.s32 0, %v1694
    %v1696 = vrot.slane %v1671, %v1695
    %v1697 = vlaneseq
    %v1698 = vshrl.u32 %v1697, 7
    %v1699 = vsub.s32 0, %v1698
    %v1700 = vrot.slane %v1672, %v1699
    %v1701 = vlaneseq
    %v1702 = vshrl.u32 %v1701, 7
    %v1703 = vsub.s32 0, %v1702
    %v1704 = vrot.slane %v1673, %v1703
    %v1705 = vlaneseq
    %v1706 = vshrl.u32 %v1705, 7
    %v1707 = vsub.s32 0, %v1706
    %v1708 = vrot.slane %v1674, %v1707
    %v1709 = vlaneseq
    %v1710 = vshrl.u32 %v1709, 7
    %v1711 = vsub.s32 0, %v1710
    %v1712 = vrot.slane %v1675, %v1711
    %v1713 = vlaneseq
    %v1714 = vshrl.u32 %v1713, 7
    %v1715 = vsub.s32 0, %v1714
    %v1716 = vrot.slane %v1676, %v1715
    %v1725 = vmul.f32 %v1688, %v1653
    %v1726 = vmul.f32 %v1688, %v1654
    %v1727 = vmul.f32 %v1692, %v1655
    %v1728 = vmul.f32 %v1692, %v1656
    %v1729 = vmul.f32 %v1696, %v1657
    %v1730 = vmul.f32 %v1696, %v1658
    %v1731 = vmul.f32 %v1700, %v1659
    %v1732 = vmul.f32 %v1700, %v1660
    %v1733 = vmul.f32 %v1704, %v1661
    %v1734 = vmul.f32 %v1704, %v1662
    %v1735 = vmul.f32 %v1708, %v1663
    %v1736 = vmul.f32 %v1708, %v1664
    %v1737 = vmul.f32 %v1712, %v1665
    %v1738 = vmul.f32 %v1712, %v1666
    %v1739 = vmul.f32 %v1716, %v1667
    %v1740 = vmul.f32 %v1716, %v1668
    %v1741 = vld [vmem:[%s2] sm:$0x1]
    %v1742 = vld [vmem:[%s2 + $0x1] sm:$0x1]
    %v1743 = vld [vmem:[%s2 + $0x2] sm:$0x1]
    %v1744 = vld [vmem:[%s2 + $0x3] sm:$0x1]
    %v1745 = vld [vmem:[%s2 + $0x4] sm:$0x1]
    %v1746 = vld [vmem:[%s2 + $0x5] sm:$0x1]
    %v1747 = vld [vmem:[%s2 + $0x6] sm:$0x1]
    %v1748 = vld [vmem:[%s2 + $0x7] sm:$0x1]
    %v1757 = vlaneseq
    %v1758 = vshrl.u32 %v1757, 7
    %v1759 = vsub.s32 0, %v1758
    %v1760 = vrot.slane %v1741, %v1759
    %v1761 = vlaneseq
    %v1762 = vshrl.u32 %v1761, 7
    %v1763 = vsub.s32 0, %v1762
    %v1764 = vrot.slane %v1742, %v1763
    %v1765 = vlaneseq
    %v1766 = vshrl.u32 %v1765, 7
    %v1767 = vsub.s32 0, %v1766
    %v1768 = vrot.slane %v1743, %v1767
    %v1769 = vlaneseq
    %v1770 = vshrl.u32 %v1769, 7
    %v1771 = vsub.s32 0, %v1770
    %v1772 = vrot.slane %v1744, %v1771
    %v1773 = vlaneseq
    %v1774 = vshrl.u32 %v1773, 7
    %v1775 = vsub.s32 0, %v1774
    %v1776 = vrot.slane %v1745, %v1775
    %v1777 = vlaneseq
    %v1778 = vshrl.u32 %v1777, 7
    %v1779 = vsub.s32 0, %v1778
    %v1780 = vrot.slane %v1746, %v1779
    %v1781 = vlaneseq
    %v1782 = vshrl.u32 %v1781, 7
    %v1783 = vsub.s32 0, %v1782
    %v1784 = vrot.slane %v1747, %v1783
    %v1785 = vlaneseq
    %v1786 = vshrl.u32 %v1785, 7
    %v1787 = vsub.s32 0, %v1786
    %v1788 = vrot.slane %v1748, %v1787
    %v1797 = vadd.f32 %v1725, %v1760
    %v1798 = vadd.f32 %v1726, %v1760
    %v1799 = vadd.f32 %v1727, %v1764
    %v1800 = vadd.f32 %v1728, %v1764
    %v1801 = vadd.f32 %v1729, %v1768
    %v1802 = vadd.f32 %v1730, %v1768
    %v1803 = vadd.f32 %v1731, %v1772
    %v1804 = vadd.f32 %v1732, %v1772
    %v1805 = vadd.f32 %v1733, %v1776
    %v1806 = vadd.f32 %v1734, %v1776
    %v1807 = vadd.f32 %v1735, %v1780
    %v1808 = vadd.f32 %v1736, %v1780
    %v1809 = vadd.f32 %v1737, %v1784
    %v1810 = vadd.f32 %v1738, %v1784
    %v1811 = vadd.f32 %v1739, %v1788
    %v1812 = vadd.f32 %v1740, %v1788
    %1813 = vst [vmem:[#allocation2] sm:$0x1] 0.0
    %1814 = vst [vmem:[#allocation2 + $0x18] sm:$0x1] 0.0
    %1815 = vst [vmem:[#allocation2 + $0x30] sm:$0x1] 0.0
    %1816 = vst [vmem:[#allocation2 + $0x48] sm:$0x1] 0.0
    %1817 = vst [vmem:[#allocation2 + $0x60] sm:$0x1] 0.0
    %1818 = vst [vmem:[#allocation2 + $0x78] sm:$0x1] 0.0
    %1819 = vst [vmem:[#allocation2 + $0x90] sm:$0x1] 0.0
    %1820 = vst [vmem:[#allocation2 + $0xa8] sm:$0x1] 0.0
    %1821 = vst [vmem:[#allocation2 + $0x11] sm:$0x1] 0.0
    %1822 = vst [vmem:[#allocation2 + $0x29] sm:$0x1] 0.0
    %1823 = vst [vmem:[#allocation2 + $0x41] sm:$0x1] 0.0
    %1824 = vst [vmem:[#allocation2 + $0x59] sm:$0x1] 0.0
    %1825 = vst [vmem:[#allocation2 + $0x71] sm:$0x1] 0.0
    %1826 = vst [vmem:[#allocation2 + $0x89] sm:$0x1] 0.0
    %1827 = vst [vmem:[#allocation2 + $0xa1] sm:$0x1] 0.0
    %1828 = vst [vmem:[#allocation2 + $0xb9] sm:$0x1] 0.0
    %1829 = vst [vmem:[#allocation2 + $0x1] sm:$0xff] %v1797
    %1830 = vst [vmem:[#allocation2 + $0x9] sm:$0xff] %v1798
    %1831 = vst [vmem:[#allocation2 + $0x19] sm:$0xff] %v1799
    %1832 = vst [vmem:[#allocation2 + $0x21] sm:$0xff] %v1800
    %1833 = vst [vmem:[#allocation2 + $0x31] sm:$0xff] %v1801
    %1834 = vst [vmem:[#allocation2 + $0x39] sm:$0xff] %v1802
    %1835 = vst [vmem:[#allocation2 + $0x49] sm:$0xff] %v1803
    %1836 = vst [vmem:[#allocation2 + $0x51] sm:$0xff] %v1804
    %1837 = vst [vmem:[#allocation2 + $0x61] sm:$0xff] %v1805
    %1838 = vst [vmem:[#allocation2 + $0x69] sm:$0xff] %v1806
    %1839 = vst [vmem:[#allocation2 + $0x79] sm:$0xff] %v1807
    %1840 = vst [vmem:[#allocation2 + $0x81] sm:$0xff] %v1808
    %1841 = vst [vmem:[#allocation2 + $0x91] sm:$0xff] %v1809
    %1842 = vst [vmem:[#allocation2 + $0x99] sm:$0xff] %v1810
    %1843 = vst [vmem:[#allocation2 + $0xa9] sm:$0xff] %v1811
    %1844 = vst [vmem:[#allocation2 + $0xb1] sm:$0xff] %v1812
    %v1845 = vld [vmem:[#allocation2] sm:$0xff]
    %v1846 = vld [vmem:[#allocation2 + $0x8] sm:$0xff]
    %v1847 = vld [vmem:[#allocation2 + $0x18] sm:$0xff]
    %v1848 = vld [vmem:[#allocation2 + $0x20] sm:$0xff]
    %v1849 = vld [vmem:[#allocation2 + $0x30] sm:$0xff]
    %v1850 = vld [vmem:[#allocation2 + $0x38] sm:$0xff]
    %v1851 = vld [vmem:[#allocation2 + $0x48] sm:$0xff]
    %v1852 = vld [vmem:[#allocation2 + $0x50] sm:$0xff]
    %v1853 = vld [vmem:[#allocation2 + $0x60] sm:$0xff]
    %v1854 = vld [vmem:[#allocation2 + $0x68] sm:$0xff]
    %v1855 = vld [vmem:[#allocation2 + $0x78] sm:$0xff]
    %v1856 = vld [vmem:[#allocation2 + $0x80] sm:$0xff]
    %v1857 = vld [vmem:[#allocation2 + $0x90] sm:$0xff]
    %v1858 = vld [vmem:[#allocation2 + $0x98] sm:$0xff]
    %v1859 = vld [vmem:[#allocation2 + $0xa8] sm:$0xff]
    %v1860 = vld [vmem:[#allocation2 + $0xb0] sm:$0xff]
    %v1861 = vpack.c.bf16 %v1846, %v1845
    %v1862 = vpack.c.bf16 %v1848, %v1847
    %v1863 = vpack.c.bf16 %v1850, %v1849
    %v1864 = vpack.c.bf16 %v1852, %v1851
    %v1865 = vpack.c.bf16 %v1854, %v1853
    %v1866 = vpack.c.bf16 %v1856, %v1855
    %v1867 = vpack.c.bf16 %v1858, %v1857
    %v1868 = vpack.c.bf16 %v1860, %v1859
    %v1869 = vld [vmem:[#allocation2 + $0x1] sm:$0xff]
    %v1870 = vld [vmem:[#allocation2 + $0x9] sm:$0xff]
    %v1871 = vld [vmem:[#allocation2 + $0x19] sm:$0xff]
    %v1872 = vld [vmem:[#allocation2 + $0x21] sm:$0xff]
    %v1873 = vld [vmem:[#allocation2 + $0x31] sm:$0xff]
    %v1874 = vld [vmem:[#allocation2 + $0x39] sm:$0xff]
    %v1875 = vld [vmem:[#allocation2 + $0x49] sm:$0xff]
    %v1876 = vld [vmem:[#allocation2 + $0x51] sm:$0xff]
    %v1877 = vld [vmem:[#allocation2 + $0x61] sm:$0xff]
    %v1878 = vld [vmem:[#allocation2 + $0x69] sm:$0xff]
    %v1879 = vld [vmem:[#allocation2 + $0x79] sm:$0xff]
    %v1880 = vld [vmem:[#allocation2 + $0x81] sm:$0xff]
    %v1881 = vld [vmem:[#allocation2 + $0x91] sm:$0xff]
    %v1882 = vld [vmem:[#allocation2 + $0x99] sm:$0xff]
    %v1883 = vld [vmem:[#allocation2 + $0xa9] sm:$0xff]
    %v1884 = vld [vmem:[#allocation2 + $0xb1] sm:$0xff]
    %v1885 = vpack.c.bf16 %v1870, %v1869
    %v1886 = vpack.c.bf16 %v1872, %v1871
    %v1887 = vpack.c.bf16 %v1874, %v1873
    %v1888 = vpack.c.bf16 %v1876, %v1875
    %v1889 = vpack.c.bf16 %v1878, %v1877
    %v1890 = vpack.c.bf16 %v1880, %v1879
    %v1891 = vpack.c.bf16 %v1882, %v1881
    %v1892 = vpack.c.bf16 %v1884, %v1883
    %v1893 = vld [vmem:[#allocation2 + $0x2] sm:$0xff]
    %v1894 = vld [vmem:[#allocation2 + $0xa] sm:$0xff]
    %v1895 = vld [vmem:[#allocation2 + $0x1a] sm:$0xff]
    %v1896 = vld [vmem:[#allocation2 + $0x22] sm:$0xff]
    %v1897 = vld [vmem:[#allocation2 + $0x32] sm:$0xff]
    %v1898 = vld [vmem:[#allocation2 + $0x3a] sm:$0xff]
    %v1899 = vld [vmem:[#allocation2 + $0x4a] sm:$0xff]
    %v1900 = vld [vmem:[#allocation2 + $0x52] sm:$0xff]
    %v1901 = vld [vmem:[#allocation2 + $0x62] sm:$0xff]
    %v1902 = vld [vmem:[#allocation2 + $0x6a] sm:$0xff]
    %v1903 = vld [vmem:[#allocation2 + $0x7a] sm:$0xff]
    %v1904 = vld [vmem:[#allocation2 + $0x82] sm:$0xff]
    %v1905 = vld [vmem:[#allocation2 + $0x92] sm:$0xff]
    %v1906 = vld [vmem:[#allocation2 + $0x9a] sm:$0xff]
    %v1907 = vld [vmem:[#allocation2 + $0xaa] sm:$0xff]
    %v1908 = vld [vmem:[#allocation2 + $0xb2] sm:$0xff]
    %v1909 = vpack.c.bf16 %v1894, %v1893
    %v1910 = vpack.c.bf16 %v1896, %v1895
    %v1911 = vpack.c.bf16 %v1898, %v1897
    %v1912 = vpack.c.bf16 %v1900, %v1899
    %v1913 = vpack.c.bf16 %v1902, %v1901
    %v1914 = vpack.c.bf16 %v1904, %v1903
    %v1915 = vpack.c.bf16 %v1906, %v1905
    %v1916 = vpack.c.bf16 %v1908, %v1907
    %v1917 = vld [vmem:[#allocation3] sm:$0xf]
    %v1918 = vld [vmem:[#allocation3 + $0x4] sm:$0xf]
    %v1919 = vld [vmem:[#allocation3 + $0x8] sm:$0xf]
    %v1920 = vld [vmem:[#allocation3 + $0xc] sm:$0xf]
    %v1921 = vld [vmem:[#allocation3 + $0x10] sm:$0xf]
    %v1922 = vld [vmem:[#allocation3 + $0x14] sm:$0xf]
    %v1923 = vld [vmem:[#allocation3 + $0x18] sm:$0xf]
    %v1924 = vld [vmem:[#allocation3 + $0x1c] sm:$0xf]
    %v1925 = vld [vmem:[#allocation3 + $0x20] sm:$0xf]
    %v1926 = vld [vmem:[#allocation3 + $0x24] sm:$0xf]
    %v1927 = vld [vmem:[#allocation3 + $0x28] sm:$0xf]
    %v1928 = vld [vmem:[#allocation3 + $0x2c] sm:$0xf]
    %v1929 = vld [vmem:[#allocation3 + $0x30] sm:$0xf]
    %v1930 = vld [vmem:[#allocation3 + $0x34] sm:$0xf]
    %v1931 = vld [vmem:[#allocation3 + $0x38] sm:$0xf]
    %v1932 = vld [vmem:[#allocation3 + $0x3c] sm:$0xf]
    %v1933 = vld [vmem:[#allocation3 + $0x40] sm:$0xf]
    %v1934 = vld [vmem:[#allocation3 + $0x44] sm:$0xf]
    %v1935 = vld [vmem:[#allocation3 + $0x48] sm:$0xf]
    %v1936 = vld [vmem:[#allocation3 + $0x4c] sm:$0xf]
    %v1937 = vld [vmem:[#allocation3 + $0x50] sm:$0xf]
    %v1938 = vld [vmem:[#allocation3 + $0x54] sm:$0xf]
    %v1939 = vld [vmem:[#allocation3 + $0x58] sm:$0xf]
    %v1940 = vld [vmem:[#allocation3 + $0x5c] sm:$0xf]
    %v1941 = vld [vmem:[#allocation3 + $0x60] sm:$0xf]
    %v1942 = vld [vmem:[#allocation3 + $0x64] sm:$0xf]
    %v1943 = vld [vmem:[#allocation3 + $0x68] sm:$0xf]
    %v1944 = vld [vmem:[#allocation3 + $0x6c] sm:$0xf]
    %v1945 = vld [vmem:[#allocation3 + $0x70] sm:$0xf]
    %v1946 = vld [vmem:[#allocation3 + $0x74] sm:$0xf]
    %v1947 = vld [vmem:[#allocation3 + $0x78] sm:$0xf]
    %v1948 = vld [vmem:[#allocation3 + $0x7c] sm:$0xf]
    %v1949 = vld [vmem:[#allocation3 + $0x80] sm:$0xf]
    %v1950 = vld [vmem:[#allocation3 + $0x84] sm:$0xf]
    %v1951 = vld [vmem:[#allocation3 + $0x88] sm:$0xf]
    %v1952 = vld [vmem:[#allocation3 + $0x8c] sm:$0xf]
    %v1953 = vld [vmem:[#allocation3 + $0x90] sm:$0xf]
    %v1954 = vld [vmem:[#allocation3 + $0x94] sm:$0xf]
    %v1955 = vld [vmem:[#allocation3 + $0x98] sm:$0xf]
    %v1956 = vld [vmem:[#allocation3 + $0x9c] sm:$0xf]
    %v1957 = vld [vmem:[#allocation3 + $0xa0] sm:$0xf]
    %v1958 = vld [vmem:[#allocation3 + $0xa4] sm:$0xf]
    %v1959 = vld [vmem:[#allocation3 + $0xa8] sm:$0xf]
    %v1960 = vld [vmem:[#allocation3 + $0xac] sm:$0xf]
    %v1961 = vld [vmem:[#allocation3 + $0xb0] sm:$0xf]
    %v1962 = vld [vmem:[#allocation3 + $0xb4] sm:$0xf]
    %v1963 = vld [vmem:[#allocation3 + $0xb8] sm:$0xf]
    %v1964 = vld [vmem:[#allocation3 + $0xbc] sm:$0xf]
    %v1965 = vld [vmem:[%s8] sm:$0x1]
    %v1967 = vlaneseq
    %v1968 = vshrl.u32 %v1967, 7
    %v1969 = vsub.s32 0, %v1968
    %v1970 = vrot.slane %v1965, %v1969
    %v2020 = vunpack.c.l.b16 %v1917
    %v2021 = vunpack.c.l.b16 %v1918
    %v2022 = vunpack.c.l.b16 %v1919
    %v2023 = vunpack.c.l.b16 %v1920
    %v2024 = vunpack.c.l.b16 %v1921
    %v2025 = vunpack.c.l.b16 %v1922
    %v2026 = vunpack.c.l.b16 %v1923
    %v2027 = vunpack.c.l.b16 %v1924
    %v2028 = vunpack.c.l.b16 %v1925
    %v2029 = vunpack.c.l.b16 %v1926
    %v2030 = vunpack.c.l.b16 %v1927
    %v2031 = vunpack.c.l.b16 %v1928
    %v2032 = vunpack.c.l.b16 %v1929
    %v2033 = vunpack.c.l.b16 %v1930
    %v2034 = vunpack.c.l.b16 %v1931
    %v2035 = vunpack.c.l.b16 %v1932
    %v2036 = vunpack.c.l.b16 %v1933
    %v2037 = vunpack.c.l.b16 %v1934
    %v2038 = vunpack.c.l.b16 %v1935
    %v2039 = vunpack.c.l.b16 %v1936
    %v2040 = vunpack.c.l.b16 %v1937
    %v2041 = vunpack.c.l.b16 %v1938
    %v2042 = vunpack.c.l.b16 %v1939
    %v2043 = vunpack.c.l.b16 %v1940
    %v2044 = vunpack.c.l.b16 %v1941
    %v2045 = vunpack.c.l.b16 %v1942
    %v2046 = vunpack.c.l.b16 %v1943
    %v2047 = vunpack.c.l.b16 %v1944
    %v2048 = vunpack.c.l.b16 %v1945
    %v2049 = vunpack.c.l.b16 %v1946
    %v2050 = vunpack.c.l.b16 %v1947
    %v2051 = vunpack.c.l.b16 %v1948
    %v2052 = vunpack.c.l.b16 %v1949
    %v2053 = vunpack.c.l.b16 %v1950
    %v2054 = vunpack.c.l.b16 %v1951
    %v2055 = vunpack.c.l.b16 %v1952
    %v2056 = vunpack.c.l.b16 %v1953
    %v2057 = vunpack.c.l.b16 %v1954
    %v2058 = vunpack.c.l.b16 %v1955
    %v2059 = vunpack.c.l.b16 %v1956
    %v2060 = vunpack.c.l.b16 %v1957
    %v2061 = vunpack.c.l.b16 %v1958
    %v2062 = vunpack.c.l.b16 %v1959
    %v2063 = vunpack.c.l.b16 %v1960
    %v2064 = vunpack.c.l.b16 %v1961
    %v2065 = vunpack.c.l.b16 %v1962
    %v2066 = vunpack.c.l.b16 %v1963
    %v2067 = vunpack.c.l.b16 %v1964
    %v2068 = vpack.c.b16 %v2021, %v2020
    %v2069 = vpack.c.b16 %v2023, %v2022
    %v2070 = vpack.c.b16 %v2025, %v2024
    %v2071 = vpack.c.b16 %v2027, %v2026
    %v2072 = vpack.c.b16 %v2029, %v2028
    %v2073 = vpack.c.b16 %v2031, %v2030
    %v2074 = vpack.c.b16 %v2033, %v2032
    %v2075 = vpack.c.b16 %v2035, %v2034
    %v2076 = vpack.c.b16 %v2037, %v2036
    %v2077 = vpack.c.b16 %v2039, %v2038
    %v2078 = vpack.c.b16 %v2041, %v2040
    %v2079 = vpack.c.b16 %v2043, %v2042
    %v2080 = vpack.c.b16 %v2045, %v2044
    %v2081 = vpack.c.b16 %v2047, %v2046
    %v2082 = vpack.c.b16 %v2049, %v2048
    %v2083 = vpack.c.b16 %v2051, %v2050
    %v2084 = vpack.c.b16 %v2053, %v2052
    %v2085 = vpack.c.b16 %v2055, %v2054
    %v2086 = vpack.c.b16 %v2057, %v2056
    %v2087 = vpack.c.b16 %v2059, %v2058
    %v2088 = vpack.c.b16 %v2061, %v2060
    %v2089 = vpack.c.b16 %v2063, %v2062
    %v2090 = vpack.c.b16 %v2065, %v2064
    %v2091 = vpack.c.b16 %v2067, %v2066
    %2116 = vmatprep.subr.bf16.mxu0 0
    %2117 = vmatpush1.bf16.msra.mxu0 %v2075
    %2118 = vmatprep.subr.bf16.mxu0 0
    %2119 = vmatpush1.bf16.msra.mxu0 %v2074
    %2120 = vmatprep.subr.bf16.mxu0 0
    %2121 = vmatpush1.bf16.msra.mxu0 %v2073
    %2122 = vmatprep.subr.bf16.mxu0 0
    %2123 = vmatpush1.bf16.msra.mxu0 %v2072
    %2124 = vmatprep.subr.bf16.mxu0 0
    %2125 = vmatpush1.bf16.msra.mxu0 %v2071
    %2126 = vmatprep.subr.bf16.mxu0 0
    %2127 = vmatpush1.bf16.msra.mxu0 %v2070
    %2128 = vmatprep.subr.bf16.mxu0 0
    %2129 = vmatpush1.bf16.msra.mxu0 %v2069
    %2130 = vmatprep.subr.bf16.mxu0 0
    %2131 = vmatpush1.bf16.msra.mxu0 %v2068
    %2132 = vmatprep.subr.bf16.mxu0 0
    %2133 = vmatpush2.bf16.msra.mxu0 %v2083
    %2134 = vmatprep.subr.bf16.mxu0 0
    %2135 = vmatpush2.bf16.msra.mxu0 %v2082
    %2136 = vmatprep.subr.bf16.mxu0 0
    %2137 = vmatpush2.bf16.msra.mxu0 %v2081
    %2138 = vmatprep.subr.bf16.mxu0 0
    %2139 = vmatpush2.bf16.msra.mxu0 %v2080
    %2140 = vmatprep.subr.bf16.mxu0 0
    %2141 = vmatpush2.bf16.msra.mxu0 %v2079
    %2142 = vmatprep.subr.bf16.mxu0 0
    %2143 = vmatpush2.bf16.msra.mxu0 %v2078
    %2144 = vmatprep.subr.bf16.mxu0 0
    %2145 = vmatpush2.bf16.msra.mxu0 %v2077
    %2146 = vmatprep.subr.bf16.mxu0 0
    %2147 = vmatpush2.bf16.msra.mxu0 %v2076
    %2148 = vmatprep.mubr.bf16.mxu0 %v1885
    %2149 = vmatmul.mubr.bf16.gmra.mxu0 %v1861
    %v2150 = vpop.f32.mrf.mxu0
    %v2151 = vadd.f32 %v1970, %v2150
    %v2152 = vpop.f32.mrf.mxu0
    %v2153 = vpop.f32.mrf.mxu0
    %v2154 = vadd.f32 %v1970, %v2153
    %v2155 = vpop.f32.mrf.mxu0
    %2156 = vmatprep.mubr.bf16.mxu0 %v1886
    %2157 = vmatmul.mubr.bf16.gmra.mxu0 %v1862
    %v2158 = vpop.f32.mrf.mxu0
    %v2159 = vadd.f32 %v1970, %v2158
    %v2160 = vpop.f32.mrf.mxu0
    %v2161 = vpop.f32.mrf.mxu0
    %v2162 = vadd.f32 %v1970, %v2161
    %v2163 = vpop.f32.mrf.mxu0
    %2164 = vmatprep.mubr.bf16.mxu0 %v1887
    %2165 = vmatmul.mubr.bf16.gmra.mxu0 %v1863
    %v2166 = vpop.f32.mrf.mxu0
    %v2167 = vadd.f32 %v1970, %v2166
    %v2168 = vpop.f32.mrf.mxu0
    %v2169 = vpop.f32.mrf.mxu0
    %v2170 = vadd.f32 %v1970, %v2169
    %v2171 = vpop.f32.mrf.mxu0
    %2172 = vmatprep.mubr.bf16.mxu0 %v1888
    %2173 = vmatmul.mubr.bf16.gmra.mxu0 %v1864
    %v2174 = vpop.f32.mrf.mxu0
    %v2175 = vadd.f32 %v1970, %v2174
    %v2176 = vpop.f32.mrf.mxu0
    %v2177 = vpop.f32.mrf.mxu0
    %v2178 = vadd.f32 %v1970, %v2177
    %v2179 = vpop.f32.mrf.mxu0
    %2180 = vmatprep.mubr.bf16.mxu0 %v1889
    %2181 = vmatmul.mubr.bf16.gmra.mxu0 %v1865
    %v2182 = vpop.f32.mrf.mxu0
    %v2183 = vadd.f32 %v1970, %v2182
    %v2184 = vpop.f32.mrf.mxu0
    %v2185 = vpop.f32.mrf.mxu0
    %v2186 = vadd.f32 %v1970, %v2185
    %v2187 = vpop.f32.mrf.mxu0
    %2188 = vmatprep.mubr.bf16.mxu0 %v1890
    %2189 = vmatmul.mubr.bf16.gmra.mxu0 %v1866
    %v2190 = vpop.f32.mrf.mxu0
    %v2191 = vadd.f32 %v1970, %v2190
    %v2192 = vpop.f32.mrf.mxu0
    %v2193 = vpop.f32.mrf.mxu0
    %v2194 = vadd.f32 %v1970, %v2193
    %v2195 = vpop.f32.mrf.mxu0
    %2196 = vmatprep.mubr.bf16.mxu0 %v1891
    %2197 = vmatmul.mubr.bf16.gmra.mxu0 %v1867
    %v2198 = vpop.f32.mrf.mxu0
    %v2199 = vadd.f32 %v1970, %v2198
    %v2200 = vpop.f32.mrf.mxu0
    %v2201 = vpop.f32.mrf.mxu0
    %v2202 = vadd.f32 %v1970, %v2201
    %v2203 = vpop.f32.mrf.mxu0
    %2204 = vmatprep.mubr.bf16.mxu0 %v1892
    %2205 = vmatmul.mubr.bf16.gmra.mxu0 %v1868
    %v2206 = vpop.f32.mrf.mxu0
    %v2207 = vadd.f32 %v1970, %v2206
    %v2208 = vpop.f32.mrf.mxu0
    %v2209 = vpop.f32.mrf.mxu0
    %v2210 = vadd.f32 %v1970, %v2209
    %v2211 = vpop.f32.mrf.mxu0
    %2212 = vdwg.mxu0
    %2213 = vmatprep.subr.bf16.mxu0 0
    %2214 = vmatpush1.bf16.msra.mxu0 %v2091
    %2215 = vmatprep.subr.bf16.mxu0 0
    %2216 = vmatpush1.bf16.msra.mxu0 %v2090
    %2217 = vmatprep.subr.bf16.mxu0 0
    %2218 = vmatpush1.bf16.msra.mxu0 %v2089
    %2219 = vmatprep.subr.bf16.mxu0 0
    %2220 = vmatpush1.bf16.msra.mxu0 %v2088
    %2221 = vmatprep.subr.bf16.mxu0 0
    %2222 = vmatpush1.bf16.msra.mxu0 %v2087
    %2223 = vmatprep.subr.bf16.mxu0 0
    %2224 = vmatpush1.bf16.msra.mxu0 %v2086
    %2225 = vmatprep.subr.bf16.mxu0 0
    %2226 = vmatpush1.bf16.msra.mxu0 %v2085
    %2227 = vmatprep.subr.bf16.mxu0 0
    %2228 = vmatpush1.bf16.msra.mxu0 %v2084
    %2229 = vmatprep.subr.bf16.mxu0 0
    %2230 = vmatpush2.bf16.msra.mxu0 0
    %2231 = vmatprep.subr.bf16.mxu0 0
    %2232 = vmatpush2.bf16.msra.mxu0 0
    %2233 = vmatprep.subr.bf16.mxu0 0
    %2234 = vmatpush2.bf16.msra.mxu0 0
    %2235 = vmatprep.subr.bf16.mxu0 0
    %2236 = vmatpush2.bf16.msra.mxu0 0
    %2237 = vmatprep.subr.bf16.mxu0 0
    %2238 = vmatpush2.bf16.msra.mxu0 0
    %2239 = vmatprep.subr.bf16.mxu0 0
    %2240 = vmatpush2.bf16.msra.mxu0 0
    %2241 = vmatprep.subr.bf16.mxu0 0
    %2242 = vmatpush2.bf16.msra.mxu0 0
    %2243 = vmatprep.subr.bf16.mxu0 0
    %2244 = vmatpush2.bf16.msra.mxu0 0
    %2245 = vmatprep.mubr.bf16.mxu0 0
    %2246 = vmatmul.mubr.bf16.gmra.mxu0 %v1909
    %v2247 = vpop.f32.mrf.mxu0
    %v2248 = vadd.f32 %v2151, %v2247
    %v2249 = vpop.f32.mrf.mxu0
    %v2250 = vpop.f32.mrf.mxu0
    %v2251 = vadd.f32 %v2154, %v2250
    %v2252 = vpop.f32.mrf.mxu0
    %2253 = vmatprep.mubr.bf16.mxu0 0
    %2254 = vmatmul.mubr.bf16.gmra.mxu0 %v1910
    %v2255 = vpop.f32.mrf.mxu0
    %v2256 = vadd.f32 %v2159, %v2255
    %v2257 = vpop.f32.mrf.mxu0
    %v2258 = vpop.f32.mrf.mxu0
    %v2259 = vadd.f32 %v2162, %v2258
    %v2260 = vpop.f32.mrf.mxu0
    %2261 = vmatprep.mubr.bf16.mxu0 0
    %2262 = vmatmul.mubr.bf16.gmra.mxu0 %v1911
    %v2263 = vpop.f32.mrf.mxu0
    %v2264 = vadd.f32 %v2167, %v2263
    %v2265 = vpop.f32.mrf.mxu0
    %v2266 = vpop.f32.mrf.mxu0
    %v2267 = vadd.f32 %v2170, %v2266
    %v2268 = vpop.f32.mrf.mxu0
    %2269 = vmatprep.mubr.bf16.mxu0 0
    %2270 = vmatmul.mubr.bf16.gmra.mxu0 %v1912
    %v2271 = vpop.f32.mrf.mxu0
    %v2272 = vadd.f32 %v2175, %v2271
    %v2273 = vpop.f32.mrf.mxu0
    %v2274 = vpop.f32.mrf.mxu0
    %v2275 = vadd.f32 %v2178, %v2274
    %v2276 = vpop.f32.mrf.mxu0
    %2277 = vmatprep.mubr.bf16.mxu0 0
    %2278 = vmatmul.mubr.bf16.gmra.mxu0 %v1913
    %v2279 = vpop.f32.mrf.mxu0
    %v2280 = vadd.f32 %v2183, %v2279
    %v2281 = vpop.f32.mrf.mxu0
    %v2282 = vpop.f32.mrf.mxu0
    %v2283 = vadd.f32 %v2186, %v2282
    %v2284 = vpop.f32.mrf.mxu0
    %2285 = vmatprep.mubr.bf16.mxu0 0
    %2286 = vmatmul.mubr.bf16.gmra.mxu0 %v1914
    %v2287 = vpop.f32.mrf.mxu0
    %v2288 = vadd.f32 %v2191, %v2287
    %v2289 = vpop.f32.mrf.mxu0
    %v2290 = vpop.f32.mrf.mxu0
    %v2291 = vadd.f32 %v2194, %v2290
    %v2292 = vpop.f32.mrf.mxu0
    %2293 = vmatprep.mubr.bf16.mxu0 0
    %2294 = vmatmul.mubr.bf16.gmra.mxu0 %v1915
    %v2295 = vpop.f32.mrf.mxu0
    %v2296 = vadd.f32 %v2199, %v2295
    %v2297 = vpop.f32.mrf.mxu0
    %v2298 = vpop.f32.mrf.mxu0
    %v2299 = vadd.f32 %v2202, %v2298
    %v2300 = vpop.f32.mrf.mxu0
    %2301 = vmatprep.mubr.bf16.mxu0 0
    %2302 = vmatmul.mubr.bf16.gmra.mxu0 %v1916
    %v2303 = vpop.f32.mrf.mxu0
    %v2304 = vadd.f32 %v2207, %v2303
    %v2305 = vpop.f32.mrf.mxu0
    %v2306 = vpop.f32.mrf.mxu0
    %v2307 = vadd.f32 %v2210, %v2306
    %v2308 = vpop.f32.mrf.mxu0
    %2309 = vdwg.mxu0
    %v2310 = vld [vmem:[%s9] sm:$0x1]
    %v2311 = vld [vmem:[%s10] sm:$0x1]
    %v2312 = vadd.f32 %v2248, %v2251
    %v2313 = vrot.slane %v2312, 4
    %v2314 = vadd.f32 %v2312, %v2313
    %v2315 = vrot.slane %v2314, 2
    %v2316 = vadd.f32 %v2314, %v2315
    %v2317 = vrot.slane %v2316, 1
    %v2318 = vadd.f32 %v2316, %v2317
    %v2319 = vadd.f32 %v2256, %v2259
    %v2320 = vrot.slane %v2319, 4
    %v2321 = vadd.f32 %v2319, %v2320
    %v2322 = vrot.slane %v2321, 2
    %v2323 = vadd.f32 %v2321, %v2322
    %v2324 = vrot.slane %v2323, 1
    %v2325 = vadd.f32 %v2323, %v2324
    %v2326 = vadd.f32 %v2264, %v2267
    %v2327 = vrot.slane %v2326, 4
    %v2328 = vadd.f32 %v2326, %v2327
    %v2329 = vrot.slane %v2328, 2
    %v2330 = vadd.f32 %v2328, %v2329
    %v2331 = vrot.slane %v2330, 1
    %v2332 = vadd.f32 %v2330, %v2331
    %v2333 = vadd.f32 %v2272, %v2275
    %v2334 = vrot.slane %v2333, 4
    %v2335 = vadd.f32 %v2333, %v2334
    %v2336 = vrot.slane %v2335, 2
    %v2337 = vadd.f32 %v2335, %v2336
    %v2338 = vrot.slane %v2337, 1
    %v2339 = vadd.f32 %v2337, %v2338
    %v2340 = vadd.f32 %v2280, %v2283
    %v2341 = vrot.slane %v2340, 4
    %v2342 = vadd.f32 %v2340, %v2341
    %v2343 = vrot.slane %v2342, 2
    %v2344 = vadd.f32 %v2342, %v2343
    %v2345 = vrot.slane %v2344, 1
    %v2346 = vadd.f32 %v2344, %v2345
    %v2347 = vadd.f32 %v2288, %v2291
    %v2348 = vrot.slane %v2347, 4
    %v2349 = vadd.f32 %v2347, %v2348
    %v2350 = vrot.slane %v2349, 2
    %v2351 = vadd.f32 %v2349, %v2350
    %v2352 = vrot.slane %v2351, 1
    %v2353 = vadd.f32 %v2351, %v2352
    %v2354 = vadd.f32 %v2296, %v2299
    %v2355 = vrot.slane %v2354, 4
    %v2356 = vadd.f32 %v2354, %v2355
    %v2357 = vrot.slane %v2356, 2
    %v2358 = vadd.f32 %v2356, %v2357
    %v2359 = vrot.slane %v2358, 1
    %v2360 = vadd.f32 %v2358, %v2359
    %v2361 = vadd.f32 %v2304, %v2307
    %v2362 = vrot.slane %v2361, 4
    %v2363 = vadd.f32 %v2361, %v2362
    %v2364 = vrot.slane %v2363, 2
    %v2365 = vadd.f32 %v2363, %v2364
    %v2366 = vrot.slane %v2365, 1
    %v2367 = vadd.f32 %v2365, %v2366
    %v2368 = vmul.f32 %v2248, %v2248
    %v2369 = vmul.f32 %v2251, %v2251
    %v2370 = vmul.f32 %v2256, %v2256
    %v2371 = vmul.f32 %v2259, %v2259
    %v2372 = vmul.f32 %v2264, %v2264
    %v2373 = vmul.f32 %v2267, %v2267
    %v2374 = vmul.f32 %v2272, %v2272
    %v2375 = vmul.f32 %v2275, %v2275
    %v2376 = vmul.f32 %v2280, %v2280
    %v2377 = vmul.f32 %v2283, %v2283
    %v2378 = vmul.f32 %v2288, %v2288
    %v2379 = vmul.f32 %v2291, %v2291
    %v2380 = vmul.f32 %v2296, %v2296
    %v2381 = vmul.f32 %v2299, %v2299
    %v2382 = vmul.f32 %v2304, %v2304
    %v2383 = vmul.f32 %v2307, %v2307
    %v2384 = vadd.f32 %v2368, %v2369
    %v2385 = vrot.slane %v2384, 4
    %v2386 = vadd.f32 %v2384, %v2385
    %v2387 = vrot.slane %v2386, 2
    %v2388 = vadd.f32 %v2386, %v2387
    %v2389 = vrot.slane %v2388, 1
    %v2390 = vadd.f32 %v2388, %v2389
    %v2391 = vadd.f32 %v2370, %v2371
    %v2392 = vrot.slane %v2391, 4
    %v2393 = vadd.f32 %v2391, %v2392
    %v2394 = vrot.slane %v2393, 2
    %v2395 = vadd.f32 %v2393, %v2394
    %v2396 = vrot.slane %v2395, 1
    %v2397 = vadd.f32 %v2395, %v2396
    %v2398 = vadd.f32 %v2372, %v2373
    %v2399 = vrot.slane %v2398, 4
    %v2400 = vadd.f32 %v2398, %v2399
    %v2401 = vrot.slane %v2400, 2
    %v2402 = vadd.f32 %v2400, %v2401
    %v2403 = vrot.slane %v2402, 1
    %v2404 = vadd.f32 %v2402, %v2403
    %v2405 = vadd.f32 %v2374, %v2375
    %v2406 = vrot.slane %v2405, 4
    %v2407 = vadd.f32 %v2405, %v2406
    %v2408 = vrot.slane %v2407, 2
    %v2409 = vadd.f32 %v2407, %v2408
    %v2410 = vrot.slane %v2409, 1
    %v2411 = vadd.f32 %v2409, %v2410
    %v2412 = vadd.f32 %v2376, %v2377
    %v2413 = vrot.slane %v2412, 4
    %v2414 = vadd.f32 %v2412, %v2413
    %v2415 = vrot.slane %v2414, 2
    %v2416 = vadd.f32 %v2414, %v2415
    %v2417 = vrot.slane %v2416, 1
    %v2418 = vadd.f32 %v2416, %v2417
    %v2419 = vadd.f32 %v2378, %v2379
    %v2420 = vrot.slane %v2419, 4
    %v2421 = vadd.f32 %v2419, %v2420
    %v2422 = vrot.slane %v2421, 2
    %v2423 = vadd.f32 %v2421, %v2422
    %v2424 = vrot.slane %v2423, 1
    %v2425 = vadd.f32 %v2423, %v2424
    %v2426 = vadd.f32 %v2380, %v2381
    %v2427 = vrot.slane %v2426, 4
    %v2428 = vadd.f32 %v2426, %v2427
    %v2429 = vrot.slane %v2428, 2
    %v2430 = vadd.f32 %v2428, %v2429
    %v2431 = vrot.slane %v2430, 1
    %v2432 = vadd.f32 %v2430, %v2431
    %v2433 = vadd.f32 %v2382, %v2383
    %v2434 = vrot.slane %v2433, 4
    %v2435 = vadd.f32 %v2433, %v2434
    %v2436 = vrot.slane %v2435, 2
    %v2437 = vadd.f32 %v2435, %v2436
    %v2438 = vrot.slane %v2437, 1
    %v2439 = vadd.f32 %v2437, %v2438
    %v2448 = vsel %vm1028, %v2325, %v2318
    %v2449 = vsel %vm1030, %v2332, %v2448
    %v2450 = vsel %vm1032, %v2339, %v2449
    %v2451 = vsel %vm1034, %v2346, %v2450
    %v2452 = vsel %vm1036, %v2353, %v2451
    %v2453 = vsel %vm1038, %v2360, %v2452
    %v2454 = vsel %vm1040, %v2367, %v2453
    %v2464 = vsel %vm1028, %v2397, %v2390
    %v2465 = vsel %vm1030, %v2404, %v2464
    %v2466 = vsel %vm1032, %v2411, %v2465
    %v2467 = vsel %vm1034, %v2418, %v2466
    %v2468 = vsel %vm1036, %v2425, %v2467
    %v2469 = vsel %vm1038, %v2432, %v2468
    %v2470 = vsel %vm1040, %v2439, %v2469
    %2472 = vmatprep.subr.mxu0 0.0
    %2473 = vmatpush1.msra.mxu0 %v81
    %2474 = vmatprep.subr.mxu0 0.0
    %2475 = vmatpush1.msra.mxu0 %v80
    %2476 = vmatprep.subr.mxu0 0.0
    %2477 = vmatpush1.msra.mxu0 %v79
    %2478 = vmatprep.subr.mxu0 0.0
    %2479 = vmatpush1.msra.mxu0 %v78
    %2480 = vmatprep.subr.mxu0 0.0
    %2481 = vmatpush1.msra.mxu0 %v77
    %2482 = vmatprep.subr.mxu0 0.0
    %2483 = vmatpush1.msra.mxu0 %v76
    %2484 = vmatprep.subr.mxu0 0.0
    %2485 = vmatpush1.msra.mxu0 %v75
    %2486 = vmatprep.subr.mxu0 0.0
    %2487 = vmatpush1.msra.mxu0 %v74
    %2488 = vmatprep.subr.mxu0 0.0
    %2489 = vmatpush1.msra.mxu0 %v73
    %2490 = vmatprep.subr.mxu0 0.0
    %2491 = vmatpush1.msra.mxu0 %v72
    %2492 = vmatprep.subr.mxu0 0.0
    %2493 = vmatpush1.msra.mxu0 %v71
    %2494 = vmatprep.subr.mxu0 0.0
    %2495 = vmatpush1.msra.mxu0 %v70
    %2496 = vmatprep.subr.mxu0 0.0
    %2497 = vmatpush1.msra.mxu0 %v69
    %2498 = vmatprep.subr.mxu0 0.0
    %2499 = vmatpush1.msra.mxu0 %v68
    %2500 = vmatprep.subr.mxu0 0.0
    %2501 = vmatpush1.msra.mxu0 %v67
    %2502 = vmatprep.subr.mxu0 0.0
    %2503 = vmatpush1.msra.mxu0 %v66
    %2504 = vmatprep.subr.mxu0 0.0
    %2505 = vmatpush2.msra.mxu0 0.0
    %2506 = vmatprep.subr.mxu0 0.0
    %2507 = vmatpush2.msra.mxu0 0.0
    %2508 = vmatprep.subr.mxu0 0.0
    %2509 = vmatpush2.msra.mxu0 0.0
    %2510 = vmatprep.subr.mxu0 0.0
    %2511 = vmatpush2.msra.mxu0 0.0
    %2512 = vmatprep.subr.mxu0 0.0
    %2513 = vmatpush2.msra.mxu0 0.0
    %2514 = vmatprep.subr.mxu0 0.0
    %2515 = vmatpush2.msra.mxu0 0.0
    %2516 = vmatprep.subr.mxu0 0.0
    %2517 = vmatpush2.msra.mxu0 0.0
    %2518 = vmatprep.subr.mxu0 0.0
    %2519 = vmatpush2.msra.mxu0 0.0
    %2520 = vmatprep.subr.mxu0 0.0
    %2521 = vmatpush2.msra.mxu0 0.0
    %2522 = vmatprep.subr.mxu0 0.0
    %2523 = vmatpush2.msra.mxu0 0.0
    %2524 = vmatprep.subr.mxu0 0.0
    %2525 = vmatpush2.msra.mxu0 0.0
    %2526 = vmatprep.subr.mxu0 0.0
    %2527 = vmatpush2.msra.mxu0 0.0
    %2528 = vmatprep.subr.mxu0 0.0
    %2529 = vmatpush2.msra.mxu0 0.0
    %2530 = vmatprep.subr.mxu0 0.0
    %2531 = vmatpush2.msra.mxu0 0.0
    %2532 = vmatprep.subr.mxu0 0.0
    %2533 = vmatpush2.msra.mxu0 0.0
    %2534 = vmatprep.subr.mxu0 0.0
    %2535 = vmatpush2.msra.mxu0 0.0
    %2536 = vmatprep.mubr.f32.mxu0 0.0
    %2537 = vmatmul.mubr.f32.gmra.mxu0 %v2454
    %v2538 = vpop.f32.mrf.mxu0
    %v2539 = vadd.f32 0.0, %v2538
    %v2540 = vpop.f32.mrf.mxu0
    %2541 = vmatprep.mubr.f32.mxu0 0.0
    %2542 = vmatmul.mubr.f32.gmra.mxu0 %v2470
    %v2543 = vpop.f32.mrf.mxu0
    %v2544 = vadd.f32 0.0, %v2543
    %v2545 = vpop.f32.mrf.mxu0
    %2546 = vdwg.mxu0
    %v2547 = vmul.f32 %v2539, 0.03125
    %v2548 = vmul.f32 %v2544, 0.03125
    %v2549 = vmul.f32 %v2547, %v2547
    %v2550 = vsub.f32 %v2548, %v2549
    %v2551 = vmax.f32 %v2550, 0.0
    %v2553 = vsel %vm1139, %v2547, 0
    %v2556 = vsel %vm1139, %v2551, 0
    %2558 = vmatprep.subr.mxu0 0.0
    %2559 = vmatpush1.msra.mxu0 0.0
    %2560 = vmatprep.subr.mxu0 0.0
    %2561 = vmatpush1.msra.mxu0 0.0
    %2562 = vmatprep.subr.mxu0 0.0
    %2563 = vmatpush1.msra.mxu0 0.0
    %2564 = vmatprep.subr.mxu0 0.0
    %2565 = vmatpush1.msra.mxu0 0.0
    %2566 = vmatprep.subr.mxu0 0.0
    %2567 = vmatpush1.msra.mxu0 0.0
    %2568 = vmatprep.subr.mxu0 0.0
    %2569 = vmatpush1.msra.mxu0 0.0
    %2570 = vmatprep.subr.mxu0 0.0
    %2571 = vmatpush1.msra.mxu0 0.0
    %2572 = vmatprep.subr.mxu0 0.0
    %2573 = vmatpush1.msra.mxu0 0.0
    %2574 = vmatprep.subr.mxu0 0.0
    %2575 = vmatpush1.msra.mxu0 0.0
    %2576 = vmatprep.subr.mxu0 0.0
    %2577 = vmatpush1.msra.mxu0 0.0
    %2578 = vmatprep.subr.mxu0 0.0
    %2579 = vmatpush1.msra.mxu0 0.0
    %2580 = vmatprep.subr.mxu0 0.0
    %2581 = vmatpush1.msra.mxu0 0.0
    %2582 = vmatprep.subr.mxu0 0.0
    %2583 = vmatpush1.msra.mxu0 0.0
    %2584 = vmatprep.subr.mxu0 0.0
    %2585 = vmatpush1.msra.mxu0 0.0
    %2586 = vmatprep.subr.mxu0 0.0
    %2587 = vmatpush1.msra.mxu0 0.0
    %2588 = vmatprep.subr.mxu0 0.0
    %2589 = vmatpush1.msra.mxu0 %v82
    %2590 = vmatprep.subr.mxu0 0.0
    %2591 = vmatpush2.msra.mxu0 0.0
    %2592 = vmatprep.subr.mxu0 0.0
    %2593 = vmatpush2.msra.mxu0 0.0
    %2594 = vmatprep.subr.mxu0 0.0
    %2595 = vmatpush2.msra.mxu0 0.0
    %2596 = vmatprep.subr.mxu0 0.0
    %2597 = vmatpush2.msra.mxu0 0.0
    %2598 = vmatprep.subr.mxu0 0.0
    %2599 = vmatpush2.msra.mxu0 0.0
    %2600 = vmatprep.subr.mxu0 0.0
    %2601 = vmatpush2.msra.mxu0 0.0
    %2602 = vmatprep.subr.mxu0 0.0
    %2603 = vmatpush2.msra.mxu0 0.0
    %2604 = vmatprep.subr.mxu0 0.0
    %2605 = vmatpush2.msra.mxu0 0.0
    %2606 = vmatprep.subr.mxu0 0.0
    %2607 = vmatpush2.msra.mxu0 0.0
    %2608 = vmatprep.subr.mxu0 0.0
    %2609 = vmatpush2.msra.mxu0 0.0
    %2610 = vmatprep.subr.mxu0 0.0
    %2611 = vmatpush2.msra.mxu0 0.0
    %2612 = vmatprep.subr.mxu0 0.0
    %2613 = vmatpush2.msra.mxu0 0.0
    %2614 = vmatprep.subr.mxu0 0.0
    %2615 = vmatpush2.msra.mxu0 0.0
    %2616 = vmatprep.subr.mxu0 0.0
    %2617 = vmatpush2.msra.mxu0 0.0
    %2618 = vmatprep.subr.mxu0 0.0
    %2619 = vmatpush2.msra.mxu0 0.0
    %2620 = vmatprep.subr.mxu0 0.0
    %2621 = vmatpush2.msra.mxu0 0.0
    %2622 = vmatprep.mubr.f32.mxu0 0.0
    %2623 = vmatmul.mubr.f32.gmra.mxu0 %v2553
    %v2624 = vpop.f32.mrf.mxu0
    %v2625 = vadd.f32 0.0, %v2624
    %v2626 = vpop.f32.mrf.mxu0
    %2627 = vmatprep.mubr.f32.mxu0 0.0
    %2628 = vmatmul.mubr.f32.gmra.mxu0 %v2556
    %v2629 = vpop.f32.mrf.mxu0
    %v2630 = vadd.f32 0.0, %v2629
    %v2631 = vpop.f32.mrf.mxu0
    %2632 = vdwg.mxu0
    %v2634 = vcombine.high %v2625, %v2625
    %v2636 = vunpack.c.l.s4 1966171168
    %v2637 = vunpack.c.0.s8 %v2636
    %v2638 = vlaneseq
    %v2639 = vshrl.u32 %v2638, 7
    %v2640 = vsub.s32 %v2637, %v2639
    %v2641 = vrot.slane %v2625, %v2640
    %v2643 = vunpack.c.l.s4 1966171168
    %v2644 = vunpack.c.0.s8 %v2643
    %v2645 = vlaneseq
    %v2646 = vshrl.u32 %v2645, 7
    %v2647 = vsub.s32 %v2644, %v2646
    %v2648 = vrot.slane %v2634, %v2647
    %v2649 = vcombine.high %v2641, %v2641
    %v2650 = vcombine.high %v2648, %v2648
    %v2652 = vunpack.c.l.s4 1966171168
    %v2653 = vunpack.c.0.s8 %v2652
    %v2654 = vlaneseq
    %v2655 = vshrl.u32 %v2654, 7
    %v2656 = vsub.s32 %v2653, %v2655
    %v2657 = vrot.slane %v2641, %v2656
    %v2659 = vunpack.c.l.s4 1966171168
    %v2660 = vunpack.c.0.s8 %v2659
    %v2661 = vlaneseq
    %v2662 = vshrl.u32 %v2661, 7
    %v2663 = vsub.s32 %v2660, %v2662
    %v2664 = vrot.slane %v2648, %v2663
    %v2666 = vunpack.c.l.s4 1966171168
    %v2667 = vunpack.c.0.s8 %v2666
    %v2668 = vlaneseq
    %v2669 = vshrl.u32 %v2668, 7
    %v2670 = vsub.s32 %v2667, %v2669
    %v2671 = vrot.slane %v2649, %v2670
    %v2673 = vunpack.c.l.s4 1966171168
    %v2674 = vunpack.c.0.s8 %v2673
    %v2675 = vlaneseq
    %v2676 = vshrl.u32 %v2675, 7
    %v2677 = vsub.s32 %v2674, %v2676
    %v2678 = vrot.slane %v2650, %v2677
    %v2679 = vcombine.high %v2657, %v2657
    %v2680 = vcombine.high %v2664, %v2664
    %v2681 = vcombine.high %v2671, %v2671
    %v2682 = vcombine.high %v2678, %v2678
    %v2684 = vcombine.high %v2630, %v2630
    %v2686 = vunpack.c.l.s4 1966171168
    %v2687 = vunpack.c.0.s8 %v2686
    %v2688 = vlaneseq
    %v2689 = vshrl.u32 %v2688, 7
    %v2690 = vsub.s32 %v2687, %v2689
    %v2691 = vrot.slane %v2630, %v2690
    %v2693 = vunpack.c.l.s4 1966171168
    %v2694 = vunpack.c.0.s8 %v2693
    %v2695 = vlaneseq
    %v2696 = vshrl.u32 %v2695, 7
    %v2697 = vsub.s32 %v2694, %v2696
    %v2698 = vrot.slane %v2684, %v2697
    %v2699 = vcombine.high %v2691, %v2691
    %v2700 = vcombine.high %v2698, %v2698
    %v2702 = vunpack.c.l.s4 1966171168
    %v2703 = vunpack.c.0.s8 %v2702
    %v2704 = vlaneseq
    %v2705 = vshrl.u32 %v2704, 7
    %v2706 = vsub.s32 %v2703, %v2705
    %v2707 = vrot.slane %v2691, %v2706
    %v2709 = vunpack.c.l.s4 1966171168
    %v2710 = vunpack.c.0.s8 %v2709
    %v2711 = vlaneseq
    %v2712 = vshrl.u32 %v2711, 7
    %v2713 = vsub.s32 %v2710, %v2712
    %v2714 = vrot.slane %v2698, %v2713
    %v2716 = vunpack.c.l.s4 1966171168
    %v2717 = vunpack.c.0.s8 %v2716
    %v2718 = vlaneseq
    %v2719 = vshrl.u32 %v2718, 7
    %v2720 = vsub.s32 %v2717, %v2719
    %v2721 = vrot.slane %v2699, %v2720
    %v2723 = vunpack.c.l.s4 1966171168
    %v2724 = vunpack.c.0.s8 %v2723
    %v2725 = vlaneseq
    %v2726 = vshrl.u32 %v2725, 7
    %v2727 = vsub.s32 %v2724, %v2726
    %v2728 = vrot.slane %v2700, %v2727
    %v2729 = vcombine.high %v2707, %v2707
    %v2730 = vcombine.high %v2714, %v2714
    %v2731 = vcombine.high %v2721, %v2721
    %v2732 = vcombine.high %v2728, %v2728
    %v2741 = vlaneseq
    %v2742 = vshrl.u32 %v2741, 7
    %v2743 = vsub.s32 0, %v2742
    %v2744 = vrot.slane %v2657, %v2743
    %v2745 = vlaneseq
    %v2746 = vshrl.u32 %v2745, 7
    %v2747 = vsub.s32 0, %v2746
    %v2748 = vrot.slane %v2671, %v2747
    %v2749 = vlaneseq
    %v2750 = vshrl.u32 %v2749, 7
    %v2751 = vsub.s32 0, %v2750
    %v2752 = vrot.slane %v2679, %v2751
    %v2753 = vlaneseq
    %v2754 = vshrl.u32 %v2753, 7
    %v2755 = vsub.s32 0, %v2754
    %v2756 = vrot.slane %v2681, %v2755
    %v2757 = vlaneseq
    %v2758 = vshrl.u32 %v2757, 7
    %v2759 = vsub.s32 0, %v2758
    %v2760 = vrot.slane %v2664, %v2759
    %v2761 = vlaneseq
    %v2762 = vshrl.u32 %v2761, 7
    %v2763 = vsub.s32 0, %v2762
    %v2764 = vrot.slane %v2678, %v2763
    %v2765 = vlaneseq
    %v2766 = vshrl.u32 %v2765, 7
    %v2767 = vsub.s32 0, %v2766
    %v2768 = vrot.slane %v2680, %v2767
    %v2769 = vlaneseq
    %v2770 = vshrl.u32 %v2769, 7
    %v2771 = vsub.s32 0, %v2770
    %v2772 = vrot.slane %v2682, %v2771
    %v2781 = vsub.f32 %v2248, %v2744
    %v2782 = vsub.f32 %v2251, %v2744
    %v2783 = vsub.f32 %v2256, %v2748
    %v2784 = vsub.f32 %v2259, %v2748
    %v2785 = vsub.f32 %v2264, %v2752
    %v2786 = vsub.f32 %v2267, %v2752
    %v2787 = vsub.f32 %v2272, %v2756
    %v2788 = vsub.f32 %v2275, %v2756
    %v2789 = vsub.f32 %v2280, %v2760
    %v2790 = vsub.f32 %v2283, %v2760
    %v2791 = vsub.f32 %v2288, %v2764
    %v2792 = vsub.f32 %v2291, %v2764
    %v2793 = vsub.f32 %v2296, %v2768
    %v2794 = vsub.f32 %v2299, %v2768
    %v2795 = vsub.f32 %v2304, %v2772
    %v2796 = vsub.f32 %v2307, %v2772
    %v2797 = vadd.f32 %v2707, 1e-05
    %v2798 = vadd.f32 %v2721, 1e-05
    %v2799 = vadd.f32 %v2729, 1e-05
    %v2800 = vadd.f32 %v2731, 1e-05
    %v2801 = vadd.f32 %v2714, 1e-05
    %v2802 = vadd.f32 %v2728, 1e-05
    %v2803 = vadd.f32 %v2730, 1e-05
    %v2804 = vadd.f32 %v2732, 1e-05
    %v2805 = vrsqrt.pop %v2797
    %v2806 = vrsqrt.pop %v2798
    %v2807 = vrsqrt.pop %v2799
    %v2808 = vrsqrt.pop %v2800
    %v2809 = vrsqrt.pop %v2801
    %v2810 = vrsqrt.pop %v2802
    %v2811 = vrsqrt.pop %v2803
    %v2812 = vrsqrt.pop %v2804
    %v2821 = vlaneseq
    %v2822 = vshrl.u32 %v2821, 7
    %v2823 = vsub.s32 0, %v2822
    %v2824 = vrot.slane %v2805, %v2823
    %v2825 = vlaneseq
    %v2826 = vshrl.u32 %v2825, 7
    %v2827 = vsub.s32 0, %v2826
    %v2828 = vrot.slane %v2806, %v2827
    %v2829 = vlaneseq
    %v2830 = vshrl.u32 %v2829, 7
    %v2831 = vsub.s32 0, %v2830
    %v2832 = vrot.slane %v2807, %v2831
    %v2833 = vlaneseq
    %v2834 = vshrl.u32 %v2833, 7
    %v2835 = vsub.s32 0, %v2834
    %v2836 = vrot.slane %v2808, %v2835
    %v2837 = vlaneseq
    %v2838 = vshrl.u32 %v2837, 7
    %v2839 = vsub.s32 0, %v2838
    %v2840 = vrot.slane %v2809, %v2839
    %v2841 = vlaneseq
    %v2842 = vshrl.u32 %v2841, 7
    %v2843 = vsub.s32 0, %v2842
    %v2844 = vrot.slane %v2810, %v2843
    %v2845 = vlaneseq
    %v2846 = vshrl.u32 %v2845, 7
    %v2847 = vsub.s32 0, %v2846
    %v2848 = vrot.slane %v2811, %v2847
    %v2849 = vlaneseq
    %v2850 = vshrl.u32 %v2849, 7
    %v2851 = vsub.s32 0, %v2850
    %v2852 = vrot.slane %v2812, %v2851
    %v2861 = vmul.f32 %v2781, %v2824
    %v2862 = vmul.f32 %v2782, %v2824
    %v2863 = vmul.f32 %v2783, %v2828
    %v2864 = vmul.f32 %v2784, %v2828
    %v2865 = vmul.f32 %v2785, %v2832
    %v2866 = vmul.f32 %v2786, %v2832
    %v2867 = vmul.f32 %v2787, %v2836
    %v2868 = vmul.f32 %v2788, %v2836
    %v2869 = vmul.f32 %v2789, %v2840
    %v2870 = vmul.f32 %v2790, %v2840
    %v2871 = vmul.f32 %v2791, %v2844
    %v2872 = vmul.f32 %v2792, %v2844
    %v2873 = vmul.f32 %v2793, %v2848
    %v2874 = vmul.f32 %v2794, %v2848
    %v2875 = vmul.f32 %v2795, %v2852
    %v2876 = vmul.f32 %v2796, %v2852
    %v2878 = vlaneseq
    %v2879 = vshrl.u32 %v2878, 7
    %v2880 = vsub.s32 0, %v2879
    %v2881 = vrot.slane %v2310, %v2880
    %v2883 = vmul.f32 %v2861, %v2881
    %v2884 = vmul.f32 %v2862, %v2881
    %v2885 = vmul.f32 %v2863, %v2881
    %v2886 = vmul.f32 %v2864, %v2881
    %v2887 = vmul.f32 %v2865, %v2881
    %v2888 = vmul.f32 %v2866, %v2881
    %v2889 = vmul.f32 %v2867, %v2881
    %v2890 = vmul.f32 %v2868, %v2881
    %v2891 = vmul.f32 %v2869, %v2881
    %v2892 = vmul.f32 %v2870, %v2881
    %v2893 = vmul.f32 %v2871, %v2881
    %v2894 = vmul.f32 %v2872, %v2881
    %v2895 = vmul.f32 %v2873, %v2881
    %v2896 = vmul.f32 %v2874, %v2881
    %v2897 = vmul.f32 %v2875, %v2881
    %v2898 = vmul.f32 %v2876, %v2881
    %v2900 = vlaneseq
    %v2901 = vshrl.u32 %v2900, 7
    %v2902 = vsub.s32 0, %v2901
    %v2903 = vrot.slane %v2311, %v2902
    %v2905 = vadd.f32 %v2883, %v2903
    %v2906 = vadd.f32 %v2884, %v2903
    %v2907 = vadd.f32 %v2885, %v2903
    %v2908 = vadd.f32 %v2886, %v2903
    %v2909 = vadd.f32 %v2887, %v2903
    %v2910 = vadd.f32 %v2888, %v2903
    %v2911 = vadd.f32 %v2889, %v2903
    %v2912 = vadd.f32 %v2890, %v2903
    %v2913 = vadd.f32 %v2891, %v2903
    %v2914 = vadd.f32 %v2892, %v2903
    %v2915 = vadd.f32 %v2893, %v2903
    %v2916 = vadd.f32 %v2894, %v2903
    %v2917 = vadd.f32 %v2895, %v2903
    %v2918 = vadd.f32 %v2896, %v2903
    %v2919 = vadd.f32 %v2897, %v2903
    %v2920 = vadd.f32 %v2898, %v2903
    %v2921 = vmin.f32 %v2905, 20.0
    %v2922 = vmin.f32 %v2906, 20.0
    %v2923 = vmin.f32 %v2907, 20.0
    %v2924 = vmin.f32 %v2908, 20.0
    %v2925 = vmin.f32 %v2909, 20.0
    %v2926 = vmin.f32 %v2910, 20.0
    %v2927 = vmin.f32 %v2911, 20.0
    %v2928 = vmin.f32 %v2912, 20.0
    %v2929 = vmin.f32 %v2913, 20.0
    %v2930 = vmin.f32 %v2914, 20.0
    %v2931 = vmin.f32 %v2915, 20.0
    %v2932 = vmin.f32 %v2916, 20.0
    %v2933 = vmin.f32 %v2917, 20.0
    %v2934 = vmin.f32 %v2918, 20.0
    %v2935 = vmin.f32 %v2919, 20.0
    %v2936 = vmin.f32 %v2920, 20.0
    %v2937 = vmul.f32 %v2921, 1.442695
    %v2938 = vpow.pop %v2937
    %v2939 = vmul.f32 %v2922, 1.442695
    %v2940 = vpow.pop %v2939
    %v2941 = vmul.f32 %v2923, 1.442695
    %v2942 = vpow.pop %v2941
    %v2943 = vmul.f32 %v2924, 1.442695
    %v2944 = vpow.pop %v2943
    %v2945 = vmul.f32 %v2925, 1.442695
    %v2946 = vpow.pop %v2945
    %v2947 = vmul.f32 %v2926, 1.442695
    %v2948 = vpow.pop %v2947
    %v2949 = vmul.f32 %v2927, 1.442695
    %v2950 = vpow.pop %v2949
    %v2951 = vmul.f32 %v2928, 1.442695
    %v2952 = vpow.pop %v2951
    %v2953 = vmul.f32 %v2929, 1.442695
    %v2954 = vpow.pop %v2953
    %v2955 = vmul.f32 %v2930, 1.442695
    %v2956 = vpow.pop %v2955
    %v2957 = vmul.f32 %v2931, 1.442695
    %v2958 = vpow.pop %v2957
    %v2959 = vmul.f32 %v2932, 1.442695
    %v2960 = vpow.pop %v2959
    %v2961 = vmul.f32 %v2933, 1.442695
    %v2962 = vpow.pop %v2961
    %v2963 = vmul.f32 %v2934, 1.442695
    %v2964 = vpow.pop %v2963
    %v2965 = vmul.f32 %v2935, 1.442695
    %v2966 = vpow.pop %v2965
    %v2967 = vmul.f32 %v2936, 1.442695
    %v2968 = vpow.pop %v2967
    %v2969 = vadd.f32 %v2938, 1.0
    %v2970 = vadd.f32 %v2940, 1.0
    %v2971 = vadd.f32 %v2942, 1.0
    %v2972 = vadd.f32 %v2944, 1.0
    %v2973 = vadd.f32 %v2946, 1.0
    %v2974 = vadd.f32 %v2948, 1.0
    %v2975 = vadd.f32 %v2950, 1.0
    %v2976 = vadd.f32 %v2952, 1.0
    %v2977 = vadd.f32 %v2954, 1.0
    %v2978 = vadd.f32 %v2956, 1.0
    %v2979 = vadd.f32 %v2958, 1.0
    %v2980 = vadd.f32 %v2960, 1.0
    %v2981 = vadd.f32 %v2962, 1.0
    %v2982 = vadd.f32 %v2964, 1.0
    %v2983 = vadd.f32 %v2966, 1.0
    %v2984 = vadd.f32 %v2968, 1.0
    %v2985 = vmul.f32 %v2969, %v2969
    %v2986 = vmul.f32 %v2970, %v2970
    %v2987 = vmul.f32 %v2971, %v2971
    %v2988 = vmul.f32 %v2972, %v2972
    %v2989 = vmul.f32 %v2973, %v2973
    %v2990 = vmul.f32 %v2974, %v2974
    %v2991 = vmul.f32 %v2975, %v2975
    %v2992 = vmul.f32 %v2976, %v2976
    %v2993 = vmul.f32 %v2977, %v2977
    %v2994 = vmul.f32 %v2978, %v2978
    %v2995 = vmul.f32 %v2979, %v2979
    %v2996 = vmul.f32 %v2980, %v2980
    %v2997 = vmul.f32 %v2981, %v2981
    %v2998 = vmul.f32 %v2982, %v2982
    %v2999 = vmul.f32 %v2983, %v2983
    %v3000 = vmul.f32 %v2984, %v2984
    %v3001 = vsub.f32 %v2985, 1.0
    %v3002 = vsub.f32 %v2986, 1.0
    %v3003 = vsub.f32 %v2987, 1.0
    %v3004 = vsub.f32 %v2988, 1.0
    %v3005 = vsub.f32 %v2989, 1.0
    %v3006 = vsub.f32 %v2990, 1.0
    %v3007 = vsub.f32 %v2991, 1.0
    %v3008 = vsub.f32 %v2992, 1.0
    %v3009 = vsub.f32 %v2993, 1.0
    %v3010 = vsub.f32 %v2994, 1.0
    %v3011 = vsub.f32 %v2995, 1.0
    %v3012 = vsub.f32 %v2996, 1.0
    %v3013 = vsub.f32 %v2997, 1.0
    %v3014 = vsub.f32 %v2998, 1.0
    %v3015 = vsub.f32 %v2999, 1.0
    %v3016 = vsub.f32 %v3000, 1.0
    %v3017 = vmul.f32 %v2905, %v3001
    %v3018 = vmul.f32 %v2906, %v3002
    %v3019 = vmul.f32 %v2907, %v3003
    %v3020 = vmul.f32 %v2908, %v3004
    %v3021 = vmul.f32 %v2909, %v3005
    %v3022 = vmul.f32 %v2910, %v3006
    %v3023 = vmul.f32 %v2911, %v3007
    %v3024 = vmul.f32 %v2912, %v3008
    %v3025 = vmul.f32 %v2913, %v3009
    %v3026 = vmul.f32 %v2914, %v3010
    %v3027 = vmul.f32 %v2915, %v3011
    %v3028 = vmul.f32 %v2916, %v3012
    %v3029 = vmul.f32 %v2917, %v3013
    %v3030 = vmul.f32 %v2918, %v3014
    %v3031 = vmul.f32 %v2919, %v3015
    %v3032 = vmul.f32 %v2920, %v3016
    %v3033 = vadd.f32 %v2985, 1.0
    %v3034 = vadd.f32 %v2986, 1.0
    %v3035 = vadd.f32 %v2987, 1.0
    %v3036 = vadd.f32 %v2988, 1.0
    %v3037 = vadd.f32 %v2989, 1.0
    %v3038 = vadd.f32 %v2990, 1.0
    %v3039 = vadd.f32 %v2991, 1.0
    %v3040 = vadd.f32 %v2992, 1.0
    %v3041 = vadd.f32 %v2993, 1.0
    %v3042 = vadd.f32 %v2994, 1.0
    %v3043 = vadd.f32 %v2995, 1.0
    %v3044 = vadd.f32 %v2996, 1.0
    %v3045 = vadd.f32 %v2997, 1.0
    %v3046 = vadd.f32 %v2998, 1.0
    %v3047 = vadd.f32 %v2999, 1.0
    %v3048 = vadd.f32 %v3000, 1.0
    %v3049 = vrcp.pop %v3033
    %v3050 = vrcp.pop %v3034
    %v3051 = vrcp.pop %v3035
    %v3052 = vrcp.pop %v3036
    %v3053 = vrcp.pop %v3037
    %v3054 = vrcp.pop %v3038
    %v3055 = vrcp.pop %v3039
    %v3056 = vrcp.pop %v3040
    %v3057 = vrcp.pop %v3041
    %v3058 = vrcp.pop %v3042
    %v3059 = vrcp.pop %v3043
    %v3060 = vrcp.pop %v3044
    %v3061 = vrcp.pop %v3045
    %v3062 = vrcp.pop %v3046
    %v3063 = vrcp.pop %v3047
    %v3064 = vrcp.pop %v3048
    %v3065 = vmul.f32 %v3017, %v3049
    %v3066 = vmul.f32 %v3018, %v3050
    %v3067 = vmul.f32 %v3019, %v3051
    %v3068 = vmul.f32 %v3020, %v3052
    %v3069 = vmul.f32 %v3021, %v3053
    %v3070 = vmul.f32 %v3022, %v3054
    %v3071 = vmul.f32 %v3023, %v3055
    %v3072 = vmul.f32 %v3024, %v3056
    %v3073 = vmul.f32 %v3025, %v3057
    %v3074 = vmul.f32 %v3026, %v3058
    %v3075 = vmul.f32 %v3027, %v3059
    %v3076 = vmul.f32 %v3028, %v3060
    %v3077 = vmul.f32 %v3029, %v3061
    %v3078 = vmul.f32 %v3030, %v3062
    %v3079 = vmul.f32 %v3031, %v3063
    %v3080 = vmul.f32 %v3032, %v3064
    %v3081 = vld [vmem:[%s0] sm:$0xf]
    %v3082 = vld [vmem:[%s0 + $0x4] sm:$0xf]
    %v3083 = vld [vmem:[%s0 + $0x8] sm:$0x1]
    %v3084 = vld [vmem:[%s0 + $0xc] sm:$0xf]
    %v3085 = vld [vmem:[%s0 + $0x10] sm:$0xf]
    %v3086 = vld [vmem:[%s0 + $0x14] sm:$0x1]
    %v3087 = vld [vmem:[%s0 + $0x18] sm:$0xf]
    %v3088 = vld [vmem:[%s0 + $0x1c] sm:$0xf]
    %v3089 = vld [vmem:[%s0 + $0x20] sm:$0x1]
    %v3090 = vld [vmem:[%s0 + $0x24] sm:$0xf]
    %v3091 = vld [vmem:[%s0 + $0x28] sm:$0xf]
    %v3092 = vld [vmem:[%s0 + $0x2c] sm:$0x1]
    %v3093 = vld [vmem:[%s0 + $0x30] sm:$0xf]
    %v3094 = vld [vmem:[%s0 + $0x34] sm:$0xf]
    %v3095 = vld [vmem:[%s0 + $0x38] sm:$0x1]
    %v3096 = vld [vmem:[%s0 + $0x3c] sm:$0xf]
    %v3097 = vld [vmem:[%s0 + $0x40] sm:$0xf]
    %v3098 = vld [vmem:[%s0 + $0x44] sm:$0x1]
    %v3099 = vld [vmem:[%s0 + $0x48] sm:$0xf]
    %v3100 = vld [vmem:[%s0 + $0x4c] sm:$0xf]
    %v3101 = vld [vmem:[%s0 + $0x50] sm:$0x1]
    %v3102 = vld [vmem:[%s0 + $0x54] sm:$0xf]
    %v3103 = vld [vmem:[%s0 + $0x58] sm:$0xf]
    %v3104 = vld [vmem:[%s0 + $0x5c] sm:$0x1]
    %v3106 = vshrl.u32 %v3081, 16
    %v3108 = vrot.slane %v3106, 4
    %v3109 = vshll.u32 %v3081, 16
    %v3111 = vrot.slane %v3109, 5
    %v3112 = vor.u32 %v3108, %v3111
    %v3113 = vrot.slane %v3112, 4
    %v3115 = vshll.u32 %v3082, 16
    %v3117 = vrot.slane %v3115, 5
    %v3118 = vsel %vm109, %v3113, %v3117
    %v3119 = vshrl.u32 %v3082, 16
    %v3121 = vrot.slane %v3119, 4
    %v3122 = vor.u32 %v3121, %v3117
    %v3123 = vrot.slane %v3122, 4
    %v3125 = vshll.u32 %v3083, 16
    %v3127 = vrot.slane %v3125, 5
    %v3128 = vsel %vm109, %v3123, %v3127
    %v3130 = vshrl.u32 %v3084, 16
    %v3132 = vrot.slane %v3130, 4
    %v3133 = vshll.u32 %v3084, 16
    %v3135 = vrot.slane %v3133, 5
    %v3136 = vor.u32 %v3132, %v3135
    %v3137 = vrot.slane %v3136, 4
    %v3139 = vshll.u32 %v3085, 16
    %v3141 = vrot.slane %v3139, 5
    %v3142 = vsel %vm109, %v3137, %v3141
    %v3143 = vshrl.u32 %v3085, 16
    %v3145 = vrot.slane %v3143, 4
    %v3146 = vor.u32 %v3145, %v3141
    %v3147 = vrot.slane %v3146, 4
    %v3149 = vshll.u32 %v3086, 16
    %v3151 = vrot.slane %v3149, 5
    %v3152 = vsel %vm109, %v3147, %v3151
    %v3154 = vshrl.u32 %v3087, 16
    %v3156 = vrot.slane %v3154, 4
    %v3157 = vshll.u32 %v3087, 16
    %v3159 = vrot.slane %v3157, 5
    %v3160 = vor.u32 %v3156, %v3159
    %v3161 = vrot.slane %v3160, 4
    %v3163 = vshll.u32 %v3088, 16
    %v3165 = vrot.slane %v3163, 5
    %v3166 = vsel %vm109, %v3161, %v3165
    %v3167 = vshrl.u32 %v3088, 16
    %v3169 = vrot.slane %v3167, 4
    %v3170 = vor.u32 %v3169, %v3165
    %v3171 = vrot.slane %v3170, 4
    %v3173 = vshll.u32 %v3089, 16
    %v3175 = vrot.slane %v3173, 5
    %v3176 = vsel %vm109, %v3171, %v3175
    %v3178 = vshrl.u32 %v3090, 16
    %v3180 = vrot.slane %v3178, 4
    %v3181 = vshll.u32 %v3090, 16
    %v3183 = vrot.slane %v3181, 5
    %v3184 = vor.u32 %v3180, %v3183
    %v3185 = vrot.slane %v3184, 4
    %v3187 = vshll.u32 %v3091, 16
    %v3189 = vrot.slane %v3187, 5
    %v3190 = vsel %vm109, %v3185, %v3189
    %v3191 = vshrl.u32 %v3091, 16
    %v3193 = vrot.slane %v3191, 4
    %v3194 = vor.u32 %v3193, %v3189
    %v3195 = vrot.slane %v3194, 4
    %v3197 = vshll.u32 %v3092, 16
    %v3199 = vrot.slane %v3197, 5
    %v3200 = vsel %vm109, %v3195, %v3199
    %v3202 = vshrl.u32 %v3093, 16
    %v3204 = vrot.slane %v3202, 4
    %v3205 = vshll.u32 %v3093, 16
    %v3207 = vrot.slane %v3205, 5
    %v3208 = vor.u32 %v3204, %v3207
    %v3209 = vrot.slane %v3208, 4
    %v3211 = vshll.u32 %v3094, 16
    %v3213 = vrot.slane %v3211, 5
    %v3214 = vsel %vm109, %v3209, %v3213
    %v3215 = vshrl.u32 %v3094, 16
    %v3217 = vrot.slane %v3215, 4
    %v3218 = vor.u32 %v3217, %v3213
    %v3219 = vrot.slane %v3218, 4
    %v3221 = vshll.u32 %v3095, 16
    %v3223 = vrot.slane %v3221, 5
    %v3224 = vsel %vm109, %v3219, %v3223
    %v3226 = vshrl.u32 %v3096, 16
    %v3228 = vrot.slane %v3226, 4
    %v3229 = vshll.u32 %v3096, 16
    %v3231 = vrot.slane %v3229, 5
    %v3232 = vor.u32 %v3228, %v3231
    %v3233 = vrot.slane %v3232, 4
    %v3235 = vshll.u32 %v3097, 16
    %v3237 = vrot.slane %v3235, 5
    %v3238 = vsel %vm109, %v3233, %v3237
    %v3239 = vshrl.u32 %v3097, 16
    %v3241 = vrot.slane %v3239, 4
    %v3242 = vor.u32 %v3241, %v3237
    %v3243 = vrot.slane %v3242, 4
    %v3245 = vshll.u32 %v3098, 16
    %v3247 = vrot.slane %v3245, 5
    %v3248 = vsel %vm109, %v3243, %v3247
    %v3250 = vshrl.u32 %v3099, 16
    %v3252 = vrot.slane %v3250, 4
    %v3253 = vshll.u32 %v3099, 16
    %v3255 = vrot.slane %v3253, 5
    %v3256 = vor.u32 %v3252, %v3255
    %v3257 = vrot.slane %v3256, 4
    %v3259 = vshll.u32 %v3100, 16
    %v3261 = vrot.slane %v3259, 5
    %v3262 = vsel %vm109, %v3257, %v3261
    %v3263 = vshrl.u32 %v3100, 16
    %v3265 = vrot.slane %v3263, 4
    %v3266 = vor.u32 %v3265, %v3261
    %v3267 = vrot.slane %v3266, 4
    %v3269 = vshll.u32 %v3101, 16
    %v3271 = vrot.slane %v3269, 5
    %v3272 = vsel %vm109, %v3267, %v3271
    %v3274 = vshrl.u32 %v3102, 16
    %v3276 = vrot.slane %v3274, 4
    %v3277 = vshll.u32 %v3102, 16
    %v3279 = vrot.slane %v3277, 5
    %v3280 = vor.u32 %v3276, %v3279
    %v3281 = vrot.slane %v3280, 4
    %v3283 = vshll.u32 %v3103, 16
    %v3285 = vrot.slane %v3283, 5
    %v3286 = vsel %vm109, %v3281, %v3285
    %v3287 = vshrl.u32 %v3103, 16
    %v3289 = vrot.slane %v3287, 4
    %v3290 = vor.u32 %v3289, %v3285
    %v3291 = vrot.slane %v3290, 4
    %v3293 = vshll.u32 %v3104, 16
    %v3295 = vrot.slane %v3293, 5
    %v3296 = vsel %vm109, %v3291, %v3295
    %v3297 = vld [vmem:[%s13] sm:$0xf]
    %v3298 = vld [vmem:[%s13 + $0x4] sm:$0xf]
    %v3299 = vld [vmem:[%s13 + $0x8] sm:$0xf]
    %v3300 = vld [vmem:[%s13 + $0xc] sm:$0xf]
    %v3301 = vld [vmem:[%s13 + $0x10] sm:$0xf]
    %v3302 = vld [vmem:[%s13 + $0x14] sm:$0xf]
    %v3303 = vld [vmem:[%s13 + $0x18] sm:$0xf]
    %v3304 = vld [vmem:[%s13 + $0x1c] sm:$0xf]
    %v3305 = vld [vmem:[%s13 + $0x20] sm:$0xf]
    %v3306 = vld [vmem:[%s13 + $0x24] sm:$0xf]
    %v3307 = vld [vmem:[%s13 + $0x28] sm:$0xf]
    %v3308 = vld [vmem:[%s13 + $0x2c] sm:$0xf]
    %v3309 = vld [vmem:[%s13 + $0x30] sm:$0xf]
    %v3310 = vld [vmem:[%s13 + $0x34] sm:$0xf]
    %v3311 = vld [vmem:[%s13 + $0x38] sm:$0xf]
    %v3312 = vld [vmem:[%s13 + $0x3c] sm:$0xf]
    %v3313 = vld [vmem:[%s14] sm:$0x1]
    %v3315 = vlaneseq
    %v3316 = vshrl.u32 %v3315, 7
    %v3317 = vsub.s32 0, %v3316
    %v3318 = vrot.slane %v3313, %v3317
    %v3320 = vunpack.c.l.b16 %v3118
    %v3321 = vunpack.c.l.b16 %v3128
    %v3322 = vunpack.c.l.b16 %v3142
    %v3323 = vunpack.c.l.b16 %v3152
    %v3324 = vunpack.c.l.b16 %v3166
    %v3325 = vunpack.c.l.b16 %v3176
    %v3326 = vunpack.c.l.b16 %v3190
    %v3327 = vunpack.c.l.b16 %v3200
    %v3328 = vunpack.c.l.b16 %v3214
    %v3329 = vunpack.c.l.b16 %v3224
    %v3330 = vunpack.c.l.b16 %v3238
    %v3331 = vunpack.c.l.b16 %v3248
    %v3332 = vunpack.c.l.b16 %v3262
    %v3333 = vunpack.c.l.b16 %v3272
    %v3334 = vunpack.c.l.b16 %v3286
    %v3335 = vunpack.c.l.b16 %v3296
    %v3336 = vpack.c.b16 %v3321, %v3320
    %v3337 = vpack.c.b16 %v3323, %v3322
    %v3338 = vpack.c.b16 %v3325, %v3324
    %v3339 = vpack.c.b16 %v3327, %v3326
    %v3340 = vpack.c.b16 %v3329, %v3328
    %v3341 = vpack.c.b16 %v3331, %v3330
    %v3342 = vpack.c.b16 %v3333, %v3332
    %v3343 = vpack.c.b16 %v3335, %v3334
    %v3368 = vunpack.c.l.b16 %v3297
    %v3369 = vunpack.c.l.b16 %v3298
    %v3370 = vunpack.c.l.b16 %v3299
    %v3371 = vunpack.c.l.b16 %v3300
    %v3372 = vunpack.c.l.b16 %v3301
    %v3373 = vunpack.c.l.b16 %v3302
    %v3374 = vunpack.c.l.b16 %v3303
    %v3375 = vunpack.c.l.b16 %v3304
    %v3376 = vunpack.c.l.b16 %v3305
    %v3377 = vunpack.c.l.b16 %v3306
    %v3378 = vunpack.c.l.b16 %v3307
    %v3379 = vunpack.c.l.b16 %v3308
    %v3380 = vunpack.c.l.b16 %v3309
    %v3381 = vunpack.c.l.b16 %v3310
    %v3382 = vunpack.c.l.b16 %v3311
    %v3383 = vunpack.c.l.b16 %v3312
    %v3384 = vpack.c.b16 %v3369, %v3368
    %v3385 = vpack.c.b16 %v3371, %v3370
    %v3386 = vpack.c.b16 %v3373, %v3372
    %v3387 = vpack.c.b16 %v3375, %v3374
    %v3388 = vpack.c.b16 %v3377, %v3376
    %v3389 = vpack.c.b16 %v3379, %v3378
    %v3390 = vpack.c.b16 %v3381, %v3380
    %v3391 = vpack.c.b16 %v3383, %v3382
    %3400 = vmatprep.subr.bf16.mxu0 0
    %3401 = vmatpush1.bf16.msra.mxu0 %v3391
    %3402 = vmatprep.subr.bf16.mxu0 0
    %3403 = vmatpush1.bf16.msra.mxu0 %v3390
    %3404 = vmatprep.subr.bf16.mxu0 0
    %3405 = vmatpush1.bf16.msra.mxu0 %v3389
    %3406 = vmatprep.subr.bf16.mxu0 0
    %3407 = vmatpush1.bf16.msra.mxu0 %v3388
    %3408 = vmatprep.subr.bf16.mxu0 0
    %3409 = vmatpush1.bf16.msra.mxu0 %v3387
    %3410 = vmatprep.subr.bf16.mxu0 0
    %3411 = vmatpush1.bf16.msra.mxu0 %v3386
    %3412 = vmatprep.subr.bf16.mxu0 0
    %3413 = vmatpush1.bf16.msra.mxu0 %v3385
    %3414 = vmatprep.subr.bf16.mxu0 0
    %3415 = vmatpush1.bf16.msra.mxu0 %v3384
    %3416 = vmatprep.subr.bf16.mxu0 0
    %3417 = vmatpush2.bf16.msra.mxu0 0
    %3418 = vmatprep.subr.bf16.mxu0 0
    %3419 = vmatpush2.bf16.msra.mxu0 0
    %3420 = vmatprep.subr.bf16.mxu0 0
    %3421 = vmatpush2.bf16.msra.mxu0 0
    %3422 = vmatprep.subr.bf16.mxu0 0
    %3423 = vmatpush2.bf16.msra.mxu0 0
    %3424 = vmatprep.subr.bf16.mxu0 0
    %3425 = vmatpush2.bf16.msra.mxu0 0
    %3426 = vmatprep.subr.bf16.mxu0 0
    %3427 = vmatpush2.bf16.msra.mxu0 0
    %3428 = vmatprep.subr.bf16.mxu0 0
    %3429 = vmatpush2.bf16.msra.mxu0 0
    %3430 = vmatprep.subr.bf16.mxu0 0
    %3431 = vmatpush2.bf16.msra.mxu0 0
    %3432 = vmatprep.mubr.bf16.mxu0 0
    %3433 = vmatmul.mubr.bf16.gmra.mxu0 %v3336
    %v3434 = vpop.f32.mrf.mxu0
    %v3435 = vadd.f32 %v3318, %v3434
    %v3436 = vpop.f32.mrf.mxu0
    %v3437 = vpop.f32.mrf.mxu0
    %v3438 = vadd.f32 %v3318, %v3437
    %v3439 = vpop.f32.mrf.mxu0
    %3440 = vmatprep.mubr.bf16.mxu0 0
    %3441 = vmatmul.mubr.bf16.gmra.mxu0 %v3337
    %v3442 = vpop.f32.mrf.mxu0
    %v3443 = vadd.f32 %v3318, %v3442
    %v3444 = vpop.f32.mrf.mxu0
    %v3445 = vpop.f32.mrf.mxu0
    %v3446 = vadd.f32 %v3318, %v3445
    %v3447 = vpop.f32.mrf.mxu0
    %3448 = vmatprep.mubr.bf16.mxu0 0
    %3449 = vmatmul.mubr.bf16.gmra.mxu0 %v3338
    %v3450 = vpop.f32.mrf.mxu0
    %v3451 = vadd.f32 %v3318, %v3450
    %v3452 = vpop.f32.mrf.mxu0
    %v3453 = vpop.f32.mrf.mxu0
    %v3454 = vadd.f32 %v3318, %v3453
    %v3455 = vpop.f32.mrf.mxu0
    %3456 = vmatprep.mubr.bf16.mxu0 0
    %3457 = vmatmul.mubr.bf16.gmra.mxu0 %v3339
    %v3458 = vpop.f32.mrf.mxu0
    %v3459 = vadd.f32 %v3318, %v3458
    %v3460 = vpop.f32.mrf.mxu0
    %v3461 = vpop.f32.mrf.mxu0
    %v3462 = vadd.f32 %v3318, %v3461
    %v3463 = vpop.f32.mrf.mxu0
    %3464 = vmatprep.mubr.bf16.mxu0 0
    %3465 = vmatmul.mubr.bf16.gmra.mxu0 %v3340
    %v3466 = vpop.f32.mrf.mxu0
    %v3467 = vadd.f32 %v3318, %v3466
    %v3468 = vpop.f32.mrf.mxu0
    %v3469 = vpop.f32.mrf.mxu0
    %v3470 = vadd.f32 %v3318, %v3469
    %v3471 = vpop.f32.mrf.mxu0
    %3472 = vmatprep.mubr.bf16.mxu0 0
    %3473 = vmatmul.mubr.bf16.gmra.mxu0 %v3341
    %v3474 = vpop.f32.mrf.mxu0
    %v3475 = vadd.f32 %v3318, %v3474
    %v3476 = vpop.f32.mrf.mxu0
    %v3477 = vpop.f32.mrf.mxu0
    %v3478 = vadd.f32 %v3318, %v3477
    %v3479 = vpop.f32.mrf.mxu0
    %3480 = vmatprep.mubr.bf16.mxu0 0
    %3481 = vmatmul.mubr.bf16.gmra.mxu0 %v3342
    %v3482 = vpop.f32.mrf.mxu0
    %v3483 = vadd.f32 %v3318, %v3482
    %v3484 = vpop.f32.mrf.mxu0
    %v3485 = vpop.f32.mrf.mxu0
    %v3486 = vadd.f32 %v3318, %v3485
    %v3487 = vpop.f32.mrf.mxu0
    %3488 = vmatprep.mubr.bf16.mxu0 0
    %3489 = vmatmul.mubr.bf16.gmra.mxu0 %v3343
    %v3490 = vpop.f32.mrf.mxu0
    %v3491 = vadd.f32 %v3318, %v3490
    %v3492 = vpop.f32.mrf.mxu0
    %v3493 = vpop.f32.mrf.mxu0
    %v3494 = vadd.f32 %v3318, %v3493
    %v3495 = vpop.f32.mrf.mxu0
    %3496 = vdwg.mxu0
    %v3497 = vadd.f32 %v3065, %v3435
    %v3498 = vadd.f32 %v3066, %v3438
    %v3499 = vadd.f32 %v3067, %v3443
    %v3500 = vadd.f32 %v3068, %v3446
    %v3501 = vadd.f32 %v3069, %v3451
    %v3502 = vadd.f32 %v3070, %v3454
    %v3503 = vadd.f32 %v3071, %v3459
    %v3504 = vadd.f32 %v3072, %v3462
    %v3505 = vadd.f32 %v3073, %v3467
    %v3506 = vadd.f32 %v3074, %v3470
    %v3507 = vadd.f32 %v3075, %v3475
    %v3508 = vadd.f32 %v3076, %v3478
    %v3509 = vadd.f32 %v3077, %v3483
    %v3510 = vadd.f32 %v3078, %v3486
    %v3511 = vadd.f32 %v3079, %v3491
    %v3512 = vadd.f32 %v3080, %v3494
    %3513 = vst [vmem:[#allocation6] sm:$0xff] %v3497
    %3514 = vst [vmem:[#allocation6 + $0x8] sm:$0xff] %v3498
    %3515 = vst [vmem:[#allocation6 + $0x10] sm:$0xff] %v3499
    %3516 = vst [vmem:[#allocation6 + $0x18] sm:$0xff] %v3500
    %3517 = vst [vmem:[#allocation6 + $0x20] sm:$0xff] %v3501
    %3518 = vst [vmem:[#allocation6 + $0x28] sm:$0xff] %v3502
    %3519 = vst [vmem:[#allocation6 + $0x30] sm:$0xff] %v3503
    %3520 = vst [vmem:[#allocation6 + $0x38] sm:$0xff] %v3504
    %3521 = vst [vmem:[#allocation6 + $0x40] sm:$0xff] %v3505
    %3522 = vst [vmem:[#allocation6 + $0x48] sm:$0xff] %v3506
    %3523 = vst [vmem:[#allocation6 + $0x50] sm:$0xff] %v3507
    %3524 = vst [vmem:[#allocation6 + $0x58] sm:$0xff] %v3508
    %3525 = vst [vmem:[#allocation6 + $0x60] sm:$0xff] %v3509
    %3526 = vst [vmem:[#allocation6 + $0x68] sm:$0xff] %v3510
    %3527 = vst [vmem:[#allocation6 + $0x70] sm:$0xff] %v3511
    %3528 = vst [vmem:[#allocation6 + $0x78] sm:$0xff] %v3512
    // Predicated region
    $region66: #{tpu_custom_call.1} parent=1 // pred_check
      _
    $region67: #{tpu_custom_call.1} parent=1 // pred_check_branch
      %3530 = sbr.rel (0) target = $region69
    $region68: #{tpu_custom_call.1} parent=1 // pred_region
      %s3532 = ssub.s32 2048, 2048
      %3533 = vsyncadd [#allocation5], %s3532
      %s3534 = sshll.u32 [#allocation6], 4
      %s3535 = int_to_ptr.vmem [resolvable:$true] %s3534
      %3540 = dma.vmem_to_hbm [thread:$0]  %s3535, 2048, %s15, [#allocation5], 128, 128, 8
    $region69: #{tpu_custom_call.1} parent=1 // pred_fallthru
      _
    // Predicated region
    $region70: #{tpu_custom_call.1} parent=1 // pred_check
      _
    $region71: #{tpu_custom_call.1} parent=1 // pred_check_branch
      %3542 = sbr.rel (0) target = $region73
    $region72: #{tpu_custom_call.1} parent=1 // pred_region
      %3543 = dma.done [#allocation5], 2048
    $region73: #{tpu_custom_call.1} parent=1 // pred_fallthru
      _
    %3544 = vsyncpa [#allocation4], 1
    %3545 = vsyncpa [#allocation5], 1

</llo_original>
